<compile_context>
chip_gen: v7x
topology: tpu7x:2x2x1
jax: 0.10.0
libtpu: 0.0.40
codegen_flags: <defaults>
</compile_context>

<pallas_src>
import numpy as np

import jax
import jax.numpy as jnp
from jax.experimental import pallas as pl
from jax.experimental.pallas import tpu as pltpu


EXP_DIM = 32      # number of predicted expression / PCA coefficients
HIDDEN = 64
H_IN = W_IN = 16  # input mel-chunk spatial size


# ----------------------------------------------------------------------------
# Fused Pallas kernel: conv1 -> conv2 -> conv3 -> fc1 -> fc2, all in VMEM.
# ----------------------------------------------------------------------------
def _audio2exp_kernel(cols1_ref, w1_ref, b1_ref,
                      s2_ref, w2_ref, b2_ref,
                      s3_ref, w3_ref, b3_ref,
                      hsel_ref, wfc1_ref, bfc1_ref,
                      wfc2_ref, bfc2_ref,
                      out_ref):
    f32 = jnp.float32

    # ---- conv1: 1->8, 3x3, stride 1, pad 1 (im2col rows built in wrapper) ---
    a1 = jnp.dot(cols1_ref[...], w1_ref[...], preferred_element_type=f32)
    a1 = jnp.maximum(a1 + b1_ref[...], 0.0)                     # (B*256, 8)

    # ---- conv2: 8->16, 3x3, stride 2, pad 1 --------------------------------
    # Each tap t: gather shifted/strided/zero-padded rows with a constant 0/1
    # matrix (MXU), then apply that tap's (Cin, Cout) weight slice.
    acc2 = jnp.zeros((s2_ref.shape[1], w2_ref.shape[2]), f32)
    for t in range(9):
        g = jnp.dot(s2_ref[t], a1, preferred_element_type=f32)           # (B*64, 8)
        acc2 = acc2 + jnp.dot(g, w2_ref[t], preferred_element_type=f32)  # (B*64, 16)
    a2 = jnp.maximum(acc2 + b2_ref[...], 0.0)                   # (B*64, 16)

    # ---- conv3: 16->32, 3x3, stride 2, pad 1 -------------------------------
    acc3 = jnp.zeros((s3_ref.shape[1], w3_ref.shape[2]), f32)
    for t in range(9):
        g = jnp.dot(s3_ref[t], a2, preferred_element_type=f32)           # (B*16, 16)
        acc3 = acc3 + jnp.dot(g, w3_ref[t], preferred_element_type=f32)  # (B*16, 32)
    a3 = jnp.maximum(acc3 + b3_ref[...], 0.0)                   # (B*16, 32)

    # ---- fc1 over the flattened (C, 4, 4) features + ReLU ------------------
    # h[b] = sum_p a3[row(b, p)] @ Wfc1[p]; hsel[p] is a tiny row-picker.
    n_pos = wfc1_ref.shape[0]
    h = jnp.zeros((hsel_ref.shape[1], wfc1_ref.shape[2]), f32)
    for p in range(n_pos):
        rows = jnp.dot(hsel_ref[p], a3, preferred_element_type=f32)      # (B, 32)
        h = h + jnp.dot(rows, wfc1_ref[p], preferred_element_type=f32)   # (B, 64)
    h = jnp.maximum(h + bfc1_ref[...], 0.0)

    # ---- fc2 ----------------------------------------------------------------
    out = jnp.dot(h, wfc2_ref[...], preferred_element_type=f32) + bfc2_ref[...]
    out_ref[...] = out.astype(out_ref.dtype)


# ----------------------------------------------------------------------------
# Host-side constant / weight preparation (trace-time, tiny).
# ----------------------------------------------------------------------------
def _im2col_stride1_pad1(x):
    """x: (B, C, H, W) NCHW -> (B*H*W, C*9) with (c, kh, kw) K-order."""
    B, C, H, W = x.shape
    xp = jnp.pad(x, ((0, 0), (0, 0), (1, 1), (1, 1)))
    cols = []
    for kh in range(3):
        for kw in range(3):
            cols.append(xp[:, :, kh:kh + H, kw:kw + W])         # (B, C, H, W)
    cols = jnp.stack(cols, axis=-1)                             # (B, C, H, W, 9)
    cols = jnp.transpose(cols, (0, 2, 3, 1, 4))                 # (B, H, W, C, 9)
    return cols.reshape(B * H * W, C * 9)


def _conv_tap_selectors(B, H, W, stride, pad=1, k=3):
    """Constant 0/1 matrices: sel[t] @ act_2d gathers the (kh, kw) tap rows
    (with zero padding and stride baked in) for an activation laid out as
    rows = (b, h, w), cols = channels."""
    Ho = (H + 2 * pad - k) // stride + 1
    Wo = (W + 2 * pad - k) // stride + 1
    sel = np.zeros((k * k, B * Ho * Wo, B * H * W), np.float32)
    for kh in range(k):
        for kw in range(k):
            t = kh * k + kw
            for b in range(B):
                for ho in range(Ho):
                    hi = stride * ho + kh - pad
                    if hi < 0 or hi >= H:
                        continue
                    for wo in range(Wo):
                        wi = stride * wo + kw - pad
                        if 0 <= wi < W:
                            sel[t, b * Ho * Wo + ho * Wo + wo,
                                b * H * W + hi * W + wi] = 1.0
    return jnp.asarray(sel), Ho, Wo


def _head_row_selectors(B, P):
    """sel[p] (B, B*P) picks rows {b*P + p} of the (B*P, C) conv3 output."""
    sel = np.zeros((P, B, B * P), np.float32)
    for p in range(P):
        for b in range(B):
            sel[p, b, b * P + p] = 1.0
    return jnp.asarray(sel)


def _per_tap_weights(w):
    """PyTorch conv weight (Cout, Cin, 3, 3) -> (9, Cin, Cout), tap = kh*3+kw."""
    Cout, Cin = w.shape[0], w.shape[1]
    return jnp.transpose(w, (2, 3, 1, 0)).reshape(9, Cin, Cout)


# ----------------------------------------------------------------------------
# Synthetic Audio2Exp parameters (deterministic init) and forward pass
# ----------------------------------------------------------------------------
def init_params(key):
    def norm(k, shape, scale):
        return scale * jax.random.normal(k, shape, dtype=jnp.float32)

    ks = jax.random.split(key, 10)
    p = {}
    # encoder: Conv(1->8, s1) / Conv(8->16, s2) / Conv(16->32, s2), all 3x3 pad 1
    p["c1_w"] = norm(ks[0], (8, 1, 3, 3), 0.3)
    p["c1_b"] = norm(ks[1], (8,), 0.05)
    p["c2_w"] = norm(ks[2], (16, 8, 3, 3), 0.1)
    p["c2_b"] = norm(ks[3], (16,), 0.05)
    p["c3_w"] = norm(ks[4], (32, 16, 3, 3), 0.08)
    p["c3_b"] = norm(ks[5], (32,), 0.05)
    # head: Linear(32*4*4 -> 64) + ReLU, Linear(64 -> EXP_DIM)
    p["fc1_w"] = norm(ks[6], (32 * 4 * 4, HIDDEN), 0.05)
    p["fc1_b"] = norm(ks[7], (HIDDEN,), 0.02)
    p["fc2_w"] = norm(ks[8], (HIDDEN, EXP_DIM), 0.1)
    p["fc2_b"] = norm(ks[9], (EXP_DIM,), 0.02)
    return p


def lip_trainer_forward(params, audio):
    """Equivalent of LipTrainer.forward: exp_pred = self.audio2exp(audio).

    audio: (B, 1, 16, 16) f32 (NCHW mel-spectrogram chunk) -> (B, EXP_DIM) f32.
    """
    B = audio.shape[0]

    # conv1 im2col (tiny, input comes straight from HBM).
    cols1 = _im2col_stride1_pad1(audio)                          # (B*256, 9)
    w1 = params["c1_w"].reshape(8, 9).T                          # (9, 8)
    b1 = params["c1_b"].reshape(1, -1)

    # conv2 / conv3 constants: per-tap gather selectors + per-tap weights.
    s2, H2, W2 = _conv_tap_selectors(B, H_IN, W_IN, stride=2)    # (9, B*64, B*256)
    w2 = _per_tap_weights(params["c2_w"])                        # (9, 8, 16)
    b2 = params["c2_b"].reshape(1, -1)
    s3, H3, W3 = _conv_tap_selectors(B, H2, W2, stride=2)        # (9, B*16, B*64)
    w3 = _per_tap_weights(params["c3_w"])                        # (9, 16, 32)
    b3 = params["c3_b"].reshape(1, -1)

    # Head: fc1 weight rows are in PyTorch NCHW-flatten order (c*16 + p);
    # regroup to (p, c, n) so the kernel consumes conv3's (b, p)-row layout.
    P = H3 * W3                                                  # 16 positions
    hsel = _head_row_selectors(B, P)                             # (16, B, B*16)
    wfc1 = params["fc1_w"].reshape(32, P, HIDDEN).transpose(1, 0, 2)   # (16, 32, 64)
    bfc1 = params["fc1_b"].reshape(1, -1)
    wfc2 = params["fc2_w"]                                       # (64, 32)
    bfc2 = params["fc2_b"].reshape(1, -1)

    inputs = (cols1, w1, b1, s2, w2, b2, s3, w3, b3, hsel, wfc1, bfc1, wfc2, bfc2)

    def full_spec(x):
        nd = x.ndim
        return pl.BlockSpec(x.shape, lambda i, nd=nd: (0,) * nd)

    flops = 2 * (cols1.size * 8
                 + 9 * (s2.shape[1] * s2.shape[2] * 8 + s2.shape[1] * 8 * 16)
                 + 9 * (s3.shape[1] * s3.shape[2] * 16 + s3.shape[1] * 16 * 32)
                 + P * (B * B * P * 32 + B * 32 * HIDDEN)
                 + B * HIDDEN * EXP_DIM)
    bytes_accessed = sum(int(np.prod(x.shape)) * 4 for x in inputs) + B * EXP_DIM * 4

    return pl.pallas_call(
        _audio2exp_kernel,
        out_shape=jax.ShapeDtypeStruct((B, EXP_DIM), jnp.float32),
        grid=(1,),
        in_specs=[full_spec(x) for x in inputs],
        out_specs=pl.BlockSpec((B, EXP_DIM), lambda i: (0, 0)),
        compiler_params=pltpu.CompilerParams(
            dimension_semantics=("arbitrary",)),
        cost_estimate=pl.CostEstimate(
            flops=flops, transcendentals=0, bytes_accessed=bytes_accessed),
    )(*inputs)


if __name__ == "__main__":
    key = jax.random.PRNGKey(0)
    k_param, k_audio = jax.random.split(key)
    params = init_params(k_param)
    audio = jax.random.normal(k_audio, (2, 1, 16, 16), dtype=jnp.float32)

    exp_pred = jax.jit(lip_trainer_forward)(params, audio)
    exp_pred = jax.block_until_ready(exp_pred)

    assert exp_pred.shape == (2, EXP_DIM)
    assert exp_pred.dtype == jnp.float32
    assert bool(jnp.all(jnp.isfinite(exp_pred)))
    print("KERNEL_OK")
</pallas_src>

<mosaic_0001>
module attributes {stable_mosaic.version = 11 : i64} {
  func.func @_audio2exp_kernel(%arg0: i32, %arg1: memref<512x9xf32, #tpu.memory_space<vmem>>, %arg2: memref<9x8xf32, #tpu.memory_space<vmem>>, %arg3: memref<1x8xf32, #tpu.memory_space<vmem>>, %arg4: memref<9x128x512xf32, #tpu.memory_space<vmem>>, %arg5: memref<9x8x16xf32, #tpu.memory_space<vmem>>, %arg6: memref<1x16xf32, #tpu.memory_space<vmem>>, %arg7: memref<9x32x128xf32, #tpu.memory_space<vmem>>, %arg8: memref<9x16x32xf32, #tpu.memory_space<vmem>>, %arg9: memref<1x32xf32, #tpu.memory_space<vmem>>, %arg10: memref<16x2x32xf32, #tpu.memory_space<vmem>>, %arg11: memref<16x32x64xf32, #tpu.memory_space<vmem>>, %arg12: memref<1x64xf32, #tpu.memory_space<vmem>>, %arg13: memref<64x32xf32, #tpu.memory_space<vmem>>, %arg14: memref<1x32xf32, #tpu.memory_space<vmem>>, %arg15: memref<2x32xf32, #tpu.memory_space<vmem>>) attributes {dimension_semantics = [#tpu.dimension_semantics<arbitrary>], iteration_bounds = array<i64: 1>, scalar_prefetch = 0 : i64, scratch_operands = 0 : i64, tpu.core_type = #tpu.core_type<tc>, window_params = [{pipeline_mode = #tpu.pipeline_mode<synchronous>, transform_indices = @transform_0, window_bounds = array<i64: 512, 9>}, {pipeline_mode = #tpu.pipeline_mode<synchronous>, transform_indices = @transform_1, window_bounds = array<i64: 9, 8>}, {pipeline_mode = #tpu.pipeline_mode<synchronous>, transform_indices = @transform_2, window_bounds = array<i64: 1, 8>}, {pipeline_mode = #tpu.pipeline_mode<synchronous>, transform_indices = @transform_3, window_bounds = array<i64: 9, 128, 512>}, {pipeline_mode = #tpu.pipeline_mode<synchronous>, transform_indices = @transform_4, window_bounds = array<i64: 9, 8, 16>}, {pipeline_mode = #tpu.pipeline_mode<synchronous>, transform_indices = @transform_5, window_bounds = array<i64: 1, 16>}, {pipeline_mode = #tpu.pipeline_mode<synchronous>, transform_indices = @transform_6, window_bounds = array<i64: 9, 32, 128>}, {pipeline_mode = #tpu.pipeline_mode<synchronous>, transform_indices = @transform_7, window_bounds = array<i64: 9, 16, 32>}, {pipeline_mode = #tpu.pipeline_mode<synchronous>, transform_indices = @transform_8, window_bounds = array<i64: 1, 32>}, {pipeline_mode = #tpu.pipeline_mode<synchronous>, transform_indices = @transform_9, window_bounds = array<i64: 16, 2, 32>}, {pipeline_mode = #tpu.pipeline_mode<synchronous>, transform_indices = @transform_10, window_bounds = array<i64: 16, 32, 64>}, {pipeline_mode = #tpu.pipeline_mode<synchronous>, transform_indices = @transform_11, window_bounds = array<i64: 1, 64>}, {pipeline_mode = #tpu.pipeline_mode<synchronous>, transform_indices = @transform_12, window_bounds = array<i64: 64, 32>}, {pipeline_mode = #tpu.pipeline_mode<synchronous>, transform_indices = @transform_13, window_bounds = array<i64: 1, 32>}, {pipeline_mode = #tpu.pipeline_mode<synchronous>, transform_indices = @transform_14, window_bounds = array<i64: 2, 32>}]} {
    %c0 = arith.constant 0 : index
    %c0_0 = arith.constant 0 : index
    %0 = vector.load %arg1[%c0, %c0_0] : memref<512x9xf32, #tpu.memory_space<vmem>>, vector<512x9xf32>
    %c0_1 = arith.constant 0 : index
    %c0_2 = arith.constant 0 : index
    %1 = vector.load %arg2[%c0_1, %c0_2] : memref<9x8xf32, #tpu.memory_space<vmem>>, vector<9x8xf32>
    %cst = arith.constant dense<0.000000e+00> : vector<512x8xf32>
    %2 = tpu.matmul %0, %1, %cst {dimension_numbers = #tpu.dot_dimension_numbers<[1], [0], [0], [1], [0, 0, 1, 1], [], []>} : vector<512x9xf32>, vector<9x8xf32>, vector<512x8xf32> -> vector<512x8xf32>
    %c0_3 = arith.constant 0 : index
    %c0_4 = arith.constant 0 : index
    %3 = vector.load %arg3[%c0_3, %c0_4] : memref<1x8xf32, #tpu.memory_space<vmem>>, vector<1x8xf32>
    %4 = vector.broadcast %3 : vector<1x8xf32> to vector<512x8xf32>
    %5 = arith.addf %2, %4 : vector<512x8xf32>
    %cst_5 = arith.constant 0.000000e+00 : f32
    %6 = vector.broadcast %cst_5 : f32 to vector<512x8xf32>
    %7 = arith.maximumf %5, %6 : vector<512x8xf32>
    %cst_6 = arith.constant 0.000000e+00 : f32
    %8 = vector.broadcast %cst_6 : f32 to vector<128x16xf32>
    %c0_7 = arith.constant 0 : index
    %c0_8 = arith.constant 0 : index
    %c0_9 = arith.constant 0 : index
    %9 = vector.load %arg4[%c0_7, %c0_8, %c0_9] : memref<9x128x512xf32, #tpu.memory_space<vmem>>, vector<1x128x512xf32>
    %10 = vector.shape_cast %9 : vector<1x128x512xf32> to vector<128x512xf32>
    %cst_10 = arith.constant dense<0.000000e+00> : vector<128x8xf32>
    %11 = tpu.matmul %10, %7, %cst_10 {dimension_numbers = #tpu.dot_dimension_numbers<[1], [0], [0], [1], [0, 0, 1, 1], [], []>} : vector<128x512xf32>, vector<512x8xf32>, vector<128x8xf32> -> vector<128x8xf32>
    %c0_11 = arith.constant 0 : index
    %c0_12 = arith.constant 0 : index
    %c0_13 = arith.constant 0 : index
    %12 = vector.load %arg5[%c0_11, %c0_12, %c0_13] : memref<9x8x16xf32, #tpu.memory_space<vmem>>, vector<1x8x16xf32>
    %13 = vector.shape_cast %12 : vector<1x8x16xf32> to vector<8x16xf32>
    %cst_14 = arith.constant dense<0.000000e+00> : vector<128x16xf32>
    %14 = tpu.matmul %11, %13, %cst_14 {dimension_numbers = #tpu.dot_dimension_numbers<[1], [0], [0], [1], [0, 0, 1, 1], [], []>} : vector<128x8xf32>, vector<8x16xf32>, vector<128x16xf32> -> vector<128x16xf32>
    %15 = arith.addf %8, %14 : vector<128x16xf32>
    %c1 = arith.constant 1 : index
    %c0_15 = arith.constant 0 : index
    %c0_16 = arith.constant 0 : index
    %16 = vector.load %arg4[%c1, %c0_15, %c0_16] : memref<9x128x512xf32, #tpu.memory_space<vmem>>, vector<1x128x512xf32>
    %17 = vector.shape_cast %16 : vector<1x128x512xf32> to vector<128x512xf32>
    %cst_17 = arith.constant dense<0.000000e+00> : vector<128x8xf32>
    %18 = tpu.matmul %17, %7, %cst_17 {dimension_numbers = #tpu.dot_dimension_numbers<[1], [0], [0], [1], [0, 0, 1, 1], [], []>} : vector<128x512xf32>, vector<512x8xf32>, vector<128x8xf32> -> vector<128x8xf32>
    %c1_18 = arith.constant 1 : index
    %c0_19 = arith.constant 0 : index
    %c0_20 = arith.constant 0 : index
    %19 = vector.load %arg5[%c1_18, %c0_19, %c0_20] : memref<9x8x16xf32, #tpu.memory_space<vmem>>, vector<1x8x16xf32>
    %20 = vector.shape_cast %19 : vector<1x8x16xf32> to vector<8x16xf32>
    %cst_21 = arith.constant dense<0.000000e+00> : vector<128x16xf32>
    %21 = tpu.matmul %18, %20, %cst_21 {dimension_numbers = #tpu.dot_dimension_numbers<[1], [0], [0], [1], [0, 0, 1, 1], [], []>} : vector<128x8xf32>, vector<8x16xf32>, vector<128x16xf32> -> vector<128x16xf32>
    %22 = arith.addf %15, %21 : vector<128x16xf32>
    %c2 = arith.constant 2 : index
    %c0_22 = arith.constant 0 : index
    %c0_23 = arith.constant 0 : index
    %23 = vector.load %arg4[%c2, %c0_22, %c0_23] : memref<9x128x512xf32, #tpu.memory_space<vmem>>, vector<1x128x512xf32>
    %24 = vector.shape_cast %23 : vector<1x128x512xf32> to vector<128x512xf32>
    %cst_24 = arith.constant dense<0.000000e+00> : vector<128x8xf32>
    %25 = tpu.matmul %24, %7, %cst_24 {dimension_numbers = #tpu.dot_dimension_numbers<[1], [0], [0], [1], [0, 0, 1, 1], [], []>} : vector<128x512xf32>, vector<512x8xf32>, vector<128x8xf32> -> vector<128x8xf32>
    %c2_25 = arith.constant 2 : index
    %c0_26 = arith.constant 0 : index
    %c0_27 = arith.constant 0 : index
    %26 = vector.load %arg5[%c2_25, %c0_26, %c0_27] : memref<9x8x16xf32, #tpu.memory_space<vmem>>, vector<1x8x16xf32>
    %27 = vector.shape_cast %26 : vector<1x8x16xf32> to vector<8x16xf32>
    %cst_28 = arith.constant dense<0.000000e+00> : vector<128x16xf32>
    %28 = tpu.matmul %25, %27, %cst_28 {dimension_numbers = #tpu.dot_dimension_numbers<[1], [0], [0], [1], [0, 0, 1, 1], [], []>} : vector<128x8xf32>, vector<8x16xf32>, vector<128x16xf32> -> vector<128x16xf32>
    %29 = arith.addf %22, %28 : vector<128x16xf32>
    %c3 = arith.constant 3 : index
    %c0_29 = arith.constant 0 : index
    %c0_30 = arith.constant 0 : index
    %30 = vector.load %arg4[%c3, %c0_29, %c0_30] : memref<9x128x512xf32, #tpu.memory_space<vmem>>, vector<1x128x512xf32>
    %31 = vector.shape_cast %30 : vector<1x128x512xf32> to vector<128x512xf32>
    %cst_31 = arith.constant dense<0.000000e+00> : vector<128x8xf32>
    %32 = tpu.matmul %31, %7, %cst_31 {dimension_numbers = #tpu.dot_dimension_numbers<[1], [0], [0], [1], [0, 0, 1, 1], [], []>} : vector<128x512xf32>, vector<512x8xf32>, vector<128x8xf32> -> vector<128x8xf32>
    %c3_32 = arith.constant 3 : index
    %c0_33 = arith.constant 0 : index
    %c0_34 = arith.constant 0 : index
    %33 = vector.load %arg5[%c3_32, %c0_33, %c0_34] : memref<9x8x16xf32, #tpu.memory_space<vmem>>, vector<1x8x16xf32>
    %34 = vector.shape_cast %33 : vector<1x8x16xf32> to vector<8x16xf32>
    %cst_35 = arith.constant dense<0.000000e+00> : vector<128x16xf32>
    %35 = tpu.matmul %32, %34, %cst_35 {dimension_numbers = #tpu.dot_dimension_numbers<[1], [0], [0], [1], [0, 0, 1, 1], [], []>} : vector<128x8xf32>, vector<8x16xf32>, vector<128x16xf32> -> vector<128x16xf32>
    %36 = arith.addf %29, %35 : vector<128x16xf32>
    %c4 = arith.constant 4 : index
    %c0_36 = arith.constant 0 : index
    %c0_37 = arith.constant 0 : index
    %37 = vector.load %arg4[%c4, %c0_36, %c0_37] : memref<9x128x512xf32, #tpu.memory_space<vmem>>, vector<1x128x512xf32>
    %38 = vector.shape_cast %37 : vector<1x128x512xf32> to vector<128x512xf32>
    %cst_38 = arith.constant dense<0.000000e+00> : vector<128x8xf32>
    %39 = tpu.matmul %38, %7, %cst_38 {dimension_numbers = #tpu.dot_dimension_numbers<[1], [0], [0], [1], [0, 0, 1, 1], [], []>} : vector<128x512xf32>, vector<512x8xf32>, vector<128x8xf32> -> vector<128x8xf32>
    %c4_39 = arith.constant 4 : index
    %c0_40 = arith.constant 0 : index
    %c0_41 = arith.constant 0 : index
    %40 = vector.load %arg5[%c4_39, %c0_40, %c0_41] : memref<9x8x16xf32, #tpu.memory_space<vmem>>, vector<1x8x16xf32>
    %41 = vector.shape_cast %40 : vector<1x8x16xf32> to vector<8x16xf32>
    %cst_42 = arith.constant dense<0.000000e+00> : vector<128x16xf32>
    %42 = tpu.matmul %39, %41, %cst_42 {dimension_numbers = #tpu.dot_dimension_numbers<[1], [0], [0], [1], [0, 0, 1, 1], [], []>} : vector<128x8xf32>, vector<8x16xf32>, vector<128x16xf32> -> vector<128x16xf32>
    %43 = arith.addf %36, %42 : vector<128x16xf32>
    %c5 = arith.constant 5 : index
    %c0_43 = arith.constant 0 : index
    %c0_44 = arith.constant 0 : index
    %44 = vector.load %arg4[%c5, %c0_43, %c0_44] : memref<9x128x512xf32, #tpu.memory_space<vmem>>, vector<1x128x512xf32>
    %45 = vector.shape_cast %44 : vector<1x128x512xf32> to vector<128x512xf32>
    %cst_45 = arith.constant dense<0.000000e+00> : vector<128x8xf32>
    %46 = tpu.matmul %45, %7, %cst_45 {dimension_numbers = #tpu.dot_dimension_numbers<[1], [0], [0], [1], [0, 0, 1, 1], [], []>} : vector<128x512xf32>, vector<512x8xf32>, vector<128x8xf32> -> vector<128x8xf32>
    %c5_46 = arith.constant 5 : index
    %c0_47 = arith.constant 0 : index
    %c0_48 = arith.constant 0 : index
    %47 = vector.load %arg5[%c5_46, %c0_47, %c0_48] : memref<9x8x16xf32, #tpu.memory_space<vmem>>, vector<1x8x16xf32>
    %48 = vector.shape_cast %47 : vector<1x8x16xf32> to vector<8x16xf32>
    %cst_49 = arith.constant dense<0.000000e+00> : vector<128x16xf32>
    %49 = tpu.matmul %46, %48, %cst_49 {dimension_numbers = #tpu.dot_dimension_numbers<[1], [0], [0], [1], [0, 0, 1, 1], [], []>} : vector<128x8xf32>, vector<8x16xf32>, vector<128x16xf32> -> vector<128x16xf32>
    %50 = arith.addf %43, %49 : vector<128x16xf32>
    %c6 = arith.constant 6 : index
    %c0_50 = arith.constant 0 : index
    %c0_51 = arith.constant 0 : index
    %51 = vector.load %arg4[%c6, %c0_50, %c0_51] : memref<9x128x512xf32, #tpu.memory_space<vmem>>, vector<1x128x512xf32>
    %52 = vector.shape_cast %51 : vector<1x128x512xf32> to vector<128x512xf32>
    %cst_52 = arith.constant dense<0.000000e+00> : vector<128x8xf32>
    %53 = tpu.matmul %52, %7, %cst_52 {dimension_numbers = #tpu.dot_dimension_numbers<[1], [0], [0], [1], [0, 0, 1, 1], [], []>} : vector<128x512xf32>, vector<512x8xf32>, vector<128x8xf32> -> vector<128x8xf32>
    %c6_53 = arith.constant 6 : index
    %c0_54 = arith.constant 0 : index
    %c0_55 = arith.constant 0 : index
    %54 = vector.load %arg5[%c6_53, %c0_54, %c0_55] : memref<9x8x16xf32, #tpu.memory_space<vmem>>, vector<1x8x16xf32>
    %55 = vector.shape_cast %54 : vector<1x8x16xf32> to vector<8x16xf32>
    %cst_56 = arith.constant dense<0.000000e+00> : vector<128x16xf32>
    %56 = tpu.matmul %53, %55, %cst_56 {dimension_numbers = #tpu.dot_dimension_numbers<[1], [0], [0], [1], [0, 0, 1, 1], [], []>} : vector<128x8xf32>, vector<8x16xf32>, vector<128x16xf32> -> vector<128x16xf32>
    %57 = arith.addf %50, %56 : vector<128x16xf32>
    %c7 = arith.constant 7 : index
    %c0_57 = arith.constant 0 : index
    %c0_58 = arith.constant 0 : index
    %58 = vector.load %arg4[%c7, %c0_57, %c0_58] : memref<9x128x512xf32, #tpu.memory_space<vmem>>, vector<1x128x512xf32>
    %59 = vector.shape_cast %58 : vector<1x128x512xf32> to vector<128x512xf32>
    %cst_59 = arith.constant dense<0.000000e+00> : vector<128x8xf32>
    %60 = tpu.matmul %59, %7, %cst_59 {dimension_numbers = #tpu.dot_dimension_numbers<[1], [0], [0], [1], [0, 0, 1, 1], [], []>} : vector<128x512xf32>, vector<512x8xf32>, vector<128x8xf32> -> vector<128x8xf32>
    %c7_60 = arith.constant 7 : index
    %c0_61 = arith.constant 0 : index
    %c0_62 = arith.constant 0 : index
    %61 = vector.load %arg5[%c7_60, %c0_61, %c0_62] : memref<9x8x16xf32, #tpu.memory_space<vmem>>, vector<1x8x16xf32>
    %62 = vector.shape_cast %61 : vector<1x8x16xf32> to vector<8x16xf32>
    %cst_63 = arith.constant dense<0.000000e+00> : vector<128x16xf32>
    %63 = tpu.matmul %60, %62, %cst_63 {dimension_numbers = #tpu.dot_dimension_numbers<[1], [0], [0], [1], [0, 0, 1, 1], [], []>} : vector<128x8xf32>, vector<8x16xf32>, vector<128x16xf32> -> vector<128x16xf32>
    %64 = arith.addf %57, %63 : vector<128x16xf32>
    %c8 = arith.constant 8 : index
    %c0_64 = arith.constant 0 : index
    %c0_65 = arith.constant 0 : index
    %65 = vector.load %arg4[%c8, %c0_64, %c0_65] : memref<9x128x512xf32, #tpu.memory_space<vmem>>, vector<1x128x512xf32>
    %66 = vector.shape_cast %65 : vector<1x128x512xf32> to vector<128x512xf32>
    %cst_66 = arith.constant dense<0.000000e+00> : vector<128x8xf32>
    %67 = tpu.matmul %66, %7, %cst_66 {dimension_numbers = #tpu.dot_dimension_numbers<[1], [0], [0], [1], [0, 0, 1, 1], [], []>} : vector<128x512xf32>, vector<512x8xf32>, vector<128x8xf32> -> vector<128x8xf32>
    %c8_67 = arith.constant 8 : index
    %c0_68 = arith.constant 0 : index
    %c0_69 = arith.constant 0 : index
    %68 = vector.load %arg5[%c8_67, %c0_68, %c0_69] : memref<9x8x16xf32, #tpu.memory_space<vmem>>, vector<1x8x16xf32>
    %69 = vector.shape_cast %68 : vector<1x8x16xf32> to vector<8x16xf32>
    %cst_70 = arith.constant dense<0.000000e+00> : vector<128x16xf32>
    %70 = tpu.matmul %67, %69, %cst_70 {dimension_numbers = #tpu.dot_dimension_numbers<[1], [0], [0], [1], [0, 0, 1, 1], [], []>} : vector<128x8xf32>, vector<8x16xf32>, vector<128x16xf32> -> vector<128x16xf32>
    %71 = arith.addf %64, %70 : vector<128x16xf32>
    %c0_71 = arith.constant 0 : index
    %c0_72 = arith.constant 0 : index
    %72 = vector.load %arg6[%c0_71, %c0_72] : memref<1x16xf32, #tpu.memory_space<vmem>>, vector<1x16xf32>
    %73 = vector.broadcast %72 : vector<1x16xf32> to vector<128x16xf32>
    %74 = arith.addf %71, %73 : vector<128x16xf32>
    %cst_73 = arith.constant 0.000000e+00 : f32
    %75 = vector.broadcast %cst_73 : f32 to vector<128x16xf32>
    %76 = arith.maximumf %74, %75 : vector<128x16xf32>
    %cst_74 = arith.constant 0.000000e+00 : f32
    %77 = vector.broadcast %cst_74 : f32 to vector<32x32xf32>
    %c0_75 = arith.constant 0 : index
    %c0_76 = arith.constant 0 : index
    %c0_77 = arith.constant 0 : index
    %78 = vector.load %arg7[%c0_75, %c0_76, %c0_77] : memref<9x32x128xf32, #tpu.memory_space<vmem>>, vector<1x32x128xf32>
    %79 = vector.shape_cast %78 : vector<1x32x128xf32> to vector<32x128xf32>
    %cst_78 = arith.constant dense<0.000000e+00> : vector<32x16xf32>
    %80 = tpu.matmul %79, %76, %cst_78 {dimension_numbers = #tpu.dot_dimension_numbers<[1], [0], [0], [1], [0, 0, 1, 1], [], []>} : vector<32x128xf32>, vector<128x16xf32>, vector<32x16xf32> -> vector<32x16xf32>
    %c0_79 = arith.constant 0 : index
    %c0_80 = arith.constant 0 : index
    %c0_81 = arith.constant 0 : index
    %81 = vector.load %arg8[%c0_79, %c0_80, %c0_81] : memref<9x16x32xf32, #tpu.memory_space<vmem>>, vector<1x16x32xf32>
    %82 = vector.shape_cast %81 : vector<1x16x32xf32> to vector<16x32xf32>
    %cst_82 = arith.constant dense<0.000000e+00> : vector<32x32xf32>
    %83 = tpu.matmul %80, %82, %cst_82 {dimension_numbers = #tpu.dot_dimension_numbers<[1], [0], [0], [1], [0, 0, 1, 1], [], []>} : vector<32x16xf32>, vector<16x32xf32>, vector<32x32xf32> -> vector<32x32xf32>
    %84 = arith.addf %77, %83 : vector<32x32xf32>
    %c1_83 = arith.constant 1 : index
    %c0_84 = arith.constant 0 : index
    %c0_85 = arith.constant 0 : index
    %85 = vector.load %arg7[%c1_83, %c0_84, %c0_85] : memref<9x32x128xf32, #tpu.memory_space<vmem>>, vector<1x32x128xf32>
    %86 = vector.shape_cast %85 : vector<1x32x128xf32> to vector<32x128xf32>
    %cst_86 = arith.constant dense<0.000000e+00> : vector<32x16xf32>
    %87 = tpu.matmul %86, %76, %cst_86 {dimension_numbers = #tpu.dot_dimension_numbers<[1], [0], [0], [1], [0, 0, 1, 1], [], []>} : vector<32x128xf32>, vector<128x16xf32>, vector<32x16xf32> -> vector<32x16xf32>
    %c1_87 = arith.constant 1 : index
    %c0_88 = arith.constant 0 : index
    %c0_89 = arith.constant 0 : index
    %88 = vector.load %arg8[%c1_87, %c0_88, %c0_89] : memref<9x16x32xf32, #tpu.memory_space<vmem>>, vector<1x16x32xf32>
    %89 = vector.shape_cast %88 : vector<1x16x32xf32> to vector<16x32xf32>
    %cst_90 = arith.constant dense<0.000000e+00> : vector<32x32xf32>
    %90 = tpu.matmul %87, %89, %cst_90 {dimension_numbers = #tpu.dot_dimension_numbers<[1], [0], [0], [1], [0, 0, 1, 1], [], []>} : vector<32x16xf32>, vector<16x32xf32>, vector<32x32xf32> -> vector<32x32xf32>
    %91 = arith.addf %84, %90 : vector<32x32xf32>
    %c2_91 = arith.constant 2 : index
    %c0_92 = arith.constant 0 : index
    %c0_93 = arith.constant 0 : index
    %92 = vector.load %arg7[%c2_91, %c0_92, %c0_93] : memref<9x32x128xf32, #tpu.memory_space<vmem>>, vector<1x32x128xf32>
    %93 = vector.shape_cast %92 : vector<1x32x128xf32> to vector<32x128xf32>
    %cst_94 = arith.constant dense<0.000000e+00> : vector<32x16xf32>
    %94 = tpu.matmul %93, %76, %cst_94 {dimension_numbers = #tpu.dot_dimension_numbers<[1], [0], [0], [1], [0, 0, 1, 1], [], []>} : vector<32x128xf32>, vector<128x16xf32>, vector<32x16xf32> -> vector<32x16xf32>
    %c2_95 = arith.constant 2 : index
    %c0_96 = arith.constant 0 : index
    %c0_97 = arith.constant 0 : index
    %95 = vector.load %arg8[%c2_95, %c0_96, %c0_97] : memref<9x16x32xf32, #tpu.memory_space<vmem>>, vector<1x16x32xf32>
    %96 = vector.shape_cast %95 : vector<1x16x32xf32> to vector<16x32xf32>
    %cst_98 = arith.constant dense<0.000000e+00> : vector<32x32xf32>
    %97 = tpu.matmul %94, %96, %cst_98 {dimension_numbers = #tpu.dot_dimension_numbers<[1], [0], [0], [1], [0, 0, 1, 1], [], []>} : vector<32x16xf32>, vector<16x32xf32>, vector<32x32xf32> -> vector<32x32xf32>
    %98 = arith.addf %91, %97 : vector<32x32xf32>
    %c3_99 = arith.constant 3 : index
    %c0_100 = arith.constant 0 : index
    %c0_101 = arith.constant 0 : index
    %99 = vector.load %arg7[%c3_99, %c0_100, %c0_101] : memref<9x32x128xf32, #tpu.memory_space<vmem>>, vector<1x32x128xf32>
    %100 = vector.shape_cast %99 : vector<1x32x128xf32> to vector<32x128xf32>
    %cst_102 = arith.constant dense<0.000000e+00> : vector<32x16xf32>
    %101 = tpu.matmul %100, %76, %cst_102 {dimension_numbers = #tpu.dot_dimension_numbers<[1], [0], [0], [1], [0, 0, 1, 1], [], []>} : vector<32x128xf32>, vector<128x16xf32>, vector<32x16xf32> -> vector<32x16xf32>
    %c3_103 = arith.constant 3 : index
    %c0_104 = arith.constant 0 : index
    %c0_105 = arith.constant 0 : index
    %102 = vector.load %arg8[%c3_103, %c0_104, %c0_105] : memref<9x16x32xf32, #tpu.memory_space<vmem>>, vector<1x16x32xf32>
    %103 = vector.shape_cast %102 : vector<1x16x32xf32> to vector<16x32xf32>
    %cst_106 = arith.constant dense<0.000000e+00> : vector<32x32xf32>
    %104 = tpu.matmul %101, %103, %cst_106 {dimension_numbers = #tpu.dot_dimension_numbers<[1], [0], [0], [1], [0, 0, 1, 1], [], []>} : vector<32x16xf32>, vector<16x32xf32>, vector<32x32xf32> -> vector<32x32xf32>
    %105 = arith.addf %98, %104 : vector<32x32xf32>
    %c4_107 = arith.constant 4 : index
    %c0_108 = arith.constant 0 : index
    %c0_109 = arith.constant 0 : index
    %106 = vector.load %arg7[%c4_107, %c0_108, %c0_109] : memref<9x32x128xf32, #tpu.memory_space<vmem>>, vector<1x32x128xf32>
    %107 = vector.shape_cast %106 : vector<1x32x128xf32> to vector<32x128xf32>
    %cst_110 = arith.constant dense<0.000000e+00> : vector<32x16xf32>
    %108 = tpu.matmul %107, %76, %cst_110 {dimension_numbers = #tpu.dot_dimension_numbers<[1], [0], [0], [1], [0, 0, 1, 1], [], []>} : vector<32x128xf32>, vector<128x16xf32>, vector<32x16xf32> -> vector<32x16xf32>
    %c4_111 = arith.constant 4 : index
    %c0_112 = arith.constant 0 : index
    %c0_113 = arith.constant 0 : index
    %109 = vector.load %arg8[%c4_111, %c0_112, %c0_113] : memref<9x16x32xf32, #tpu.memory_space<vmem>>, vector<1x16x32xf32>
    %110 = vector.shape_cast %109 : vector<1x16x32xf32> to vector<16x32xf32>
    %cst_114 = arith.constant dense<0.000000e+00> : vector<32x32xf32>
    %111 = tpu.matmul %108, %110, %cst_114 {dimension_numbers = #tpu.dot_dimension_numbers<[1], [0], [0], [1], [0, 0, 1, 1], [], []>} : vector<32x16xf32>, vector<16x32xf32>, vector<32x32xf32> -> vector<32x32xf32>
    %112 = arith.addf %105, %111 : vector<32x32xf32>
    %c5_115 = arith.constant 5 : index
    %c0_116 = arith.constant 0 : index
    %c0_117 = arith.constant 0 : index
    %113 = vector.load %arg7[%c5_115, %c0_116, %c0_117] : memref<9x32x128xf32, #tpu.memory_space<vmem>>, vector<1x32x128xf32>
    %114 = vector.shape_cast %113 : vector<1x32x128xf32> to vector<32x128xf32>
    %cst_118 = arith.constant dense<0.000000e+00> : vector<32x16xf32>
    %115 = tpu.matmul %114, %76, %cst_118 {dimension_numbers = #tpu.dot_dimension_numbers<[1], [0], [0], [1], [0, 0, 1, 1], [], []>} : vector<32x128xf32>, vector<128x16xf32>, vector<32x16xf32> -> vector<32x16xf32>
    %c5_119 = arith.constant 5 : index
    %c0_120 = arith.constant 0 : index
    %c0_121 = arith.constant 0 : index
    %116 = vector.load %arg8[%c5_119, %c0_120, %c0_121] : memref<9x16x32xf32, #tpu.memory_space<vmem>>, vector<1x16x32xf32>
    %117 = vector.shape_cast %116 : vector<1x16x32xf32> to vector<16x32xf32>
    %cst_122 = arith.constant dense<0.000000e+00> : vector<32x32xf32>
    %118 = tpu.matmul %115, %117, %cst_122 {dimension_numbers = #tpu.dot_dimension_numbers<[1], [0], [0], [1], [0, 0, 1, 1], [], []>} : vector<32x16xf32>, vector<16x32xf32>, vector<32x32xf32> -> vector<32x32xf32>
    %119 = arith.addf %112, %118 : vector<32x32xf32>
    %c6_123 = arith.constant 6 : index
    %c0_124 = arith.constant 0 : index
    %c0_125 = arith.constant 0 : index
    %120 = vector.load %arg7[%c6_123, %c0_124, %c0_125] : memref<9x32x128xf32, #tpu.memory_space<vmem>>, vector<1x32x128xf32>
    %121 = vector.shape_cast %120 : vector<1x32x128xf32> to vector<32x128xf32>
    %cst_126 = arith.constant dense<0.000000e+00> : vector<32x16xf32>
    %122 = tpu.matmul %121, %76, %cst_126 {dimension_numbers = #tpu.dot_dimension_numbers<[1], [0], [0], [1], [0, 0, 1, 1], [], []>} : vector<32x128xf32>, vector<128x16xf32>, vector<32x16xf32> -> vector<32x16xf32>
    %c6_127 = arith.constant 6 : index
    %c0_128 = arith.constant 0 : index
    %c0_129 = arith.constant 0 : index
    %123 = vector.load %arg8[%c6_127, %c0_128, %c0_129] : memref<9x16x32xf32, #tpu.memory_space<vmem>>, vector<1x16x32xf32>
    %124 = vector.shape_cast %123 : vector<1x16x32xf32> to vector<16x32xf32>
    %cst_130 = arith.constant dense<0.000000e+00> : vector<32x32xf32>
    %125 = tpu.matmul %122, %124, %cst_130 {dimension_numbers = #tpu.dot_dimension_numbers<[1], [0], [0], [1], [0, 0, 1, 1], [], []>} : vector<32x16xf32>, vector<16x32xf32>, vector<32x32xf32> -> vector<32x32xf32>
    %126 = arith.addf %119, %125 : vector<32x32xf32>
    %c7_131 = arith.constant 7 : index
    %c0_132 = arith.constant 0 : index
    %c0_133 = arith.constant 0 : index
    %127 = vector.load %arg7[%c7_131, %c0_132, %c0_133] : memref<9x32x128xf32, #tpu.memory_space<vmem>>, vector<1x32x128xf32>
    %128 = vector.shape_cast %127 : vector<1x32x128xf32> to vector<32x128xf32>
    %cst_134 = arith.constant dense<0.000000e+00> : vector<32x16xf32>
    %129 = tpu.matmul %128, %76, %cst_134 {dimension_numbers = #tpu.dot_dimension_numbers<[1], [0], [0], [1], [0, 0, 1, 1], [], []>} : vector<32x128xf32>, vector<128x16xf32>, vector<32x16xf32> -> vector<32x16xf32>
    %c7_135 = arith.constant 7 : index
    %c0_136 = arith.constant 0 : index
    %c0_137 = arith.constant 0 : index
    %130 = vector.load %arg8[%c7_135, %c0_136, %c0_137] : memref<9x16x32xf32, #tpu.memory_space<vmem>>, vector<1x16x32xf32>
    %131 = vector.shape_cast %130 : vector<1x16x32xf32> to vector<16x32xf32>
    %cst_138 = arith.constant dense<0.000000e+00> : vector<32x32xf32>
    %132 = tpu.matmul %129, %131, %cst_138 {dimension_numbers = #tpu.dot_dimension_numbers<[1], [0], [0], [1], [0, 0, 1, 1], [], []>} : vector<32x16xf32>, vector<16x32xf32>, vector<32x32xf32> -> vector<32x32xf32>
    %133 = arith.addf %126, %132 : vector<32x32xf32>
    %c8_139 = arith.constant 8 : index
    %c0_140 = arith.constant 0 : index
    %c0_141 = arith.constant 0 : index
    %134 = vector.load %arg7[%c8_139, %c0_140, %c0_141] : memref<9x32x128xf32, #tpu.memory_space<vmem>>, vector<1x32x128xf32>
    %135 = vector.shape_cast %134 : vector<1x32x128xf32> to vector<32x128xf32>
    %cst_142 = arith.constant dense<0.000000e+00> : vector<32x16xf32>
    %136 = tpu.matmul %135, %76, %cst_142 {dimension_numbers = #tpu.dot_dimension_numbers<[1], [0], [0], [1], [0, 0, 1, 1], [], []>} : vector<32x128xf32>, vector<128x16xf32>, vector<32x16xf32> -> vector<32x16xf32>
    %c8_143 = arith.constant 8 : index
    %c0_144 = arith.constant 0 : index
    %c0_145 = arith.constant 0 : index
    %137 = vector.load %arg8[%c8_143, %c0_144, %c0_145] : memref<9x16x32xf32, #tpu.memory_space<vmem>>, vector<1x16x32xf32>
    %138 = vector.shape_cast %137 : vector<1x16x32xf32> to vector<16x32xf32>
    %cst_146 = arith.constant dense<0.000000e+00> : vector<32x32xf32>
    %139 = tpu.matmul %136, %138, %cst_146 {dimension_numbers = #tpu.dot_dimension_numbers<[1], [0], [0], [1], [0, 0, 1, 1], [], []>} : vector<32x16xf32>, vector<16x32xf32>, vector<32x32xf32> -> vector<32x32xf32>
    %140 = arith.addf %133, %139 : vector<32x32xf32>
    %c0_147 = arith.constant 0 : index
    %c0_148 = arith.constant 0 : index
    %141 = vector.load %arg9[%c0_147, %c0_148] : memref<1x32xf32, #tpu.memory_space<vmem>>, vector<1x32xf32>
    %142 = vector.broadcast %141 : vector<1x32xf32> to vector<32x32xf32>
    %143 = arith.addf %140, %142 : vector<32x32xf32>
    %cst_149 = arith.constant 0.000000e+00 : f32
    %144 = vector.broadcast %cst_149 : f32 to vector<32x32xf32>
    %145 = arith.maximumf %143, %144 : vector<32x32xf32>
    %cst_150 = arith.constant 0.000000e+00 : f32
    %146 = vector.broadcast %cst_150 : f32 to vector<2x64xf32>
    %c0_151 = arith.constant 0 : index
    %c0_152 = arith.constant 0 : index
    %c0_153 = arith.constant 0 : index
    %147 = vector.load %arg10[%c0_151, %c0_152, %c0_153] : memref<16x2x32xf32, #tpu.memory_space<vmem>>, vector<1x2x32xf32>
    %148 = vector.shape_cast %147 : vector<1x2x32xf32> to vector<2x32xf32>
    %cst_154 = arith.constant dense<0.000000e+00> : vector<2x32xf32>
    %149 = tpu.matmul %148, %145, %cst_154 {dimension_numbers = #tpu.dot_dimension_numbers<[1], [0], [0], [1], [0, 0, 1, 1], [], []>} : vector<2x32xf32>, vector<32x32xf32>, vector<2x32xf32> -> vector<2x32xf32>
    %c0_155 = arith.constant 0 : index
    %c0_156 = arith.constant 0 : index
    %c0_157 = arith.constant 0 : index
    %150 = vector.load %arg11[%c0_155, %c0_156, %c0_157] : memref<16x32x64xf32, #tpu.memory_space<vmem>>, vector<1x32x64xf32>
    %151 = vector.shape_cast %150 : vector<1x32x64xf32> to vector<32x64xf32>
    %cst_158 = arith.constant dense<0.000000e+00> : vector<2x64xf32>
    %152 = tpu.matmul %149, %151, %cst_158 {dimension_numbers = #tpu.dot_dimension_numbers<[1], [0], [0], [1], [0, 0, 1, 1], [], []>} : vector<2x32xf32>, vector<32x64xf32>, vector<2x64xf32> -> vector<2x64xf32>
    %153 = arith.addf %146, %152 : vector<2x64xf32>
    %c1_159 = arith.constant 1 : index
    %c0_160 = arith.constant 0 : index
    %c0_161 = arith.constant 0 : index
    %154 = vector.load %arg10[%c1_159, %c0_160, %c0_161] : memref<16x2x32xf32, #tpu.memory_space<vmem>>, vector<1x2x32xf32>
    %155 = vector.shape_cast %154 : vector<1x2x32xf32> to vector<2x32xf32>
    %cst_162 = arith.constant dense<0.000000e+00> : vector<2x32xf32>
    %156 = tpu.matmul %155, %145, %cst_162 {dimension_numbers = #tpu.dot_dimension_numbers<[1], [0], [0], [1], [0, 0, 1, 1], [], []>} : vector<2x32xf32>, vector<32x32xf32>, vector<2x32xf32> -> vector<2x32xf32>
    %c1_163 = arith.constant 1 : index
    %c0_164 = arith.constant 0 : index
    %c0_165 = arith.constant 0 : index
    %157 = vector.load %arg11[%c1_163, %c0_164, %c0_165] : memref<16x32x64xf32, #tpu.memory_space<vmem>>, vector<1x32x64xf32>
    %158 = vector.shape_cast %157 : vector<1x32x64xf32> to vector<32x64xf32>
    %cst_166 = arith.constant dense<0.000000e+00> : vector<2x64xf32>
    %159 = tpu.matmul %156, %158, %cst_166 {dimension_numbers = #tpu.dot_dimension_numbers<[1], [0], [0], [1], [0, 0, 1, 1], [], []>} : vector<2x32xf32>, vector<32x64xf32>, vector<2x64xf32> -> vector<2x64xf32>
    %160 = arith.addf %153, %159 : vector<2x64xf32>
    %c2_167 = arith.constant 2 : index
    %c0_168 = arith.constant 0 : index
    %c0_169 = arith.constant 0 : index
    %161 = vector.load %arg10[%c2_167, %c0_168, %c0_169] : memref<16x2x32xf32, #tpu.memory_space<vmem>>, vector<1x2x32xf32>
    %162 = vector.shape_cast %161 : vector<1x2x32xf32> to vector<2x32xf32>
    %cst_170 = arith.constant dense<0.000000e+00> : vector<2x32xf32>
    %163 = tpu.matmul %162, %145, %cst_170 {dimension_numbers = #tpu.dot_dimension_numbers<[1], [0], [0], [1], [0, 0, 1, 1], [], []>} : vector<2x32xf32>, vector<32x32xf32>, vector<2x32xf32> -> vector<2x32xf32>
    %c2_171 = arith.constant 2 : index
    %c0_172 = arith.constant 0 : index
    %c0_173 = arith.constant 0 : index
    %164 = vector.load %arg11[%c2_171, %c0_172, %c0_173] : memref<16x32x64xf32, #tpu.memory_space<vmem>>, vector<1x32x64xf32>
    %165 = vector.shape_cast %164 : vector<1x32x64xf32> to vector<32x64xf32>
    %cst_174 = arith.constant dense<0.000000e+00> : vector<2x64xf32>
    %166 = tpu.matmul %163, %165, %cst_174 {dimension_numbers = #tpu.dot_dimension_numbers<[1], [0], [0], [1], [0, 0, 1, 1], [], []>} : vector<2x32xf32>, vector<32x64xf32>, vector<2x64xf32> -> vector<2x64xf32>
    %167 = arith.addf %160, %166 : vector<2x64xf32>
    %c3_175 = arith.constant 3 : index
    %c0_176 = arith.constant 0 : index
    %c0_177 = arith.constant 0 : index
    %168 = vector.load %arg10[%c3_175, %c0_176, %c0_177] : memref<16x2x32xf32, #tpu.memory_space<vmem>>, vector<1x2x32xf32>
    %169 = vector.shape_cast %168 : vector<1x2x32xf32> to vector<2x32xf32>
    %cst_178 = arith.constant dense<0.000000e+00> : vector<2x32xf32>
    %170 = tpu.matmul %169, %145, %cst_178 {dimension_numbers = #tpu.dot_dimension_numbers<[1], [0], [0], [1], [0, 0, 1, 1], [], []>} : vector<2x32xf32>, vector<32x32xf32>, vector<2x32xf32> -> vector<2x32xf32>
    %c3_179 = arith.constant 3 : index
    %c0_180 = arith.constant 0 : index
    %c0_181 = arith.constant 0 : index
    %171 = vector.load %arg11[%c3_179, %c0_180, %c0_181] : memref<16x32x64xf32, #tpu.memory_space<vmem>>, vector<1x32x64xf32>
    %172 = vector.shape_cast %171 : vector<1x32x64xf32> to vector<32x64xf32>
    %cst_182 = arith.constant dense<0.000000e+00> : vector<2x64xf32>
    %173 = tpu.matmul %170, %172, %cst_182 {dimension_numbers = #tpu.dot_dimension_numbers<[1], [0], [0], [1], [0, 0, 1, 1], [], []>} : vector<2x32xf32>, vector<32x64xf32>, vector<2x64xf32> -> vector<2x64xf32>
    %174 = arith.addf %167, %173 : vector<2x64xf32>
    %c4_183 = arith.constant 4 : index
    %c0_184 = arith.constant 0 : index
    %c0_185 = arith.constant 0 : index
    %175 = vector.load %arg10[%c4_183, %c0_184, %c0_185] : memref<16x2x32xf32, #tpu.memory_space<vmem>>, vector<1x2x32xf32>
    %176 = vector.shape_cast %175 : vector<1x2x32xf32> to vector<2x32xf32>
    %cst_186 = arith.constant dense<0.000000e+00> : vector<2x32xf32>
    %177 = tpu.matmul %176, %145, %cst_186 {dimension_numbers = #tpu.dot_dimension_numbers<[1], [0], [0], [1], [0, 0, 1, 1], [], []>} : vector<2x32xf32>, vector<32x32xf32>, vector<2x32xf32> -> vector<2x32xf32>
    %c4_187 = arith.constant 4 : index
    %c0_188 = arith.constant 0 : index
    %c0_189 = arith.constant 0 : index
    %178 = vector.load %arg11[%c4_187, %c0_188, %c0_189] : memref<16x32x64xf32, #tpu.memory_space<vmem>>, vector<1x32x64xf32>
    %179 = vector.shape_cast %178 : vector<1x32x64xf32> to vector<32x64xf32>
    %cst_190 = arith.constant dense<0.000000e+00> : vector<2x64xf32>
    %180 = tpu.matmul %177, %179, %cst_190 {dimension_numbers = #tpu.dot_dimension_numbers<[1], [0], [0], [1], [0, 0, 1, 1], [], []>} : vector<2x32xf32>, vector<32x64xf32>, vector<2x64xf32> -> vector<2x64xf32>
    %181 = arith.addf %174, %180 : vector<2x64xf32>
    %c5_191 = arith.constant 5 : index
    %c0_192 = arith.constant 0 : index
    %c0_193 = arith.constant 0 : index
    %182 = vector.load %arg10[%c5_191, %c0_192, %c0_193] : memref<16x2x32xf32, #tpu.memory_space<vmem>>, vector<1x2x32xf32>
    %183 = vector.shape_cast %182 : vector<1x2x32xf32> to vector<2x32xf32>
    %cst_194 = arith.constant dense<0.000000e+00> : vector<2x32xf32>
    %184 = tpu.matmul %183, %145, %cst_194 {dimension_numbers = #tpu.dot_dimension_numbers<[1], [0], [0], [1], [0, 0, 1, 1], [], []>} : vector<2x32xf32>, vector<32x32xf32>, vector<2x32xf32> -> vector<2x32xf32>
    %c5_195 = arith.constant 5 : index
    %c0_196 = arith.constant 0 : index
    %c0_197 = arith.constant 0 : index
    %185 = vector.load %arg11[%c5_195, %c0_196, %c0_197] : memref<16x32x64xf32, #tpu.memory_space<vmem>>, vector<1x32x64xf32>
    %186 = vector.shape_cast %185 : vector<1x32x64xf32> to vector<32x64xf32>
    %cst_198 = arith.constant dense<0.000000e+00> : vector<2x64xf32>
    %187 = tpu.matmul %184, %186, %cst_198 {dimension_numbers = #tpu.dot_dimension_numbers<[1], [0], [0], [1], [0, 0, 1, 1], [], []>} : vector<2x32xf32>, vector<32x64xf32>, vector<2x64xf32> -> vector<2x64xf32>
    %188 = arith.addf %181, %187 : vector<2x64xf32>
    %c6_199 = arith.constant 6 : index
    %c0_200 = arith.constant 0 : index
    %c0_201 = arith.constant 0 : index
    %189 = vector.load %arg10[%c6_199, %c0_200, %c0_201] : memref<16x2x32xf32, #tpu.memory_space<vmem>>, vector<1x2x32xf32>
    %190 = vector.shape_cast %189 : vector<1x2x32xf32> to vector<2x32xf32>
    %cst_202 = arith.constant dense<0.000000e+00> : vector<2x32xf32>
    %191 = tpu.matmul %190, %145, %cst_202 {dimension_numbers = #tpu.dot_dimension_numbers<[1], [0], [0], [1], [0, 0, 1, 1], [], []>} : vector<2x32xf32>, vector<32x32xf32>, vector<2x32xf32> -> vector<2x32xf32>
    %c6_203 = arith.constant 6 : index
    %c0_204 = arith.constant 0 : index
    %c0_205 = arith.constant 0 : index
    %192 = vector.load %arg11[%c6_203, %c0_204, %c0_205] : memref<16x32x64xf32, #tpu.memory_space<vmem>>, vector<1x32x64xf32>
    %193 = vector.shape_cast %192 : vector<1x32x64xf32> to vector<32x64xf32>
    %cst_206 = arith.constant dense<0.000000e+00> : vector<2x64xf32>
    %194 = tpu.matmul %191, %193, %cst_206 {dimension_numbers = #tpu.dot_dimension_numbers<[1], [0], [0], [1], [0, 0, 1, 1], [], []>} : vector<2x32xf32>, vector<32x64xf32>, vector<2x64xf32> -> vector<2x64xf32>
    %195 = arith.addf %188, %194 : vector<2x64xf32>
    %c7_207 = arith.constant 7 : index
    %c0_208 = arith.constant 0 : index
    %c0_209 = arith.constant 0 : index
    %196 = vector.load %arg10[%c7_207, %c0_208, %c0_209] : memref<16x2x32xf32, #tpu.memory_space<vmem>>, vector<1x2x32xf32>
    %197 = vector.shape_cast %196 : vector<1x2x32xf32> to vector<2x32xf32>
    %cst_210 = arith.constant dense<0.000000e+00> : vector<2x32xf32>
    %198 = tpu.matmul %197, %145, %cst_210 {dimension_numbers = #tpu.dot_dimension_numbers<[1], [0], [0], [1], [0, 0, 1, 1], [], []>} : vector<2x32xf32>, vector<32x32xf32>, vector<2x32xf32> -> vector<2x32xf32>
    %c7_211 = arith.constant 7 : index
    %c0_212 = arith.constant 0 : index
    %c0_213 = arith.constant 0 : index
    %199 = vector.load %arg11[%c7_211, %c0_212, %c0_213] : memref<16x32x64xf32, #tpu.memory_space<vmem>>, vector<1x32x64xf32>
    %200 = vector.shape_cast %199 : vector<1x32x64xf32> to vector<32x64xf32>
    %cst_214 = arith.constant dense<0.000000e+00> : vector<2x64xf32>
    %201 = tpu.matmul %198, %200, %cst_214 {dimension_numbers = #tpu.dot_dimension_numbers<[1], [0], [0], [1], [0, 0, 1, 1], [], []>} : vector<2x32xf32>, vector<32x64xf32>, vector<2x64xf32> -> vector<2x64xf32>
    %202 = arith.addf %195, %201 : vector<2x64xf32>
    %c8_215 = arith.constant 8 : index
    %c0_216 = arith.constant 0 : index
    %c0_217 = arith.constant 0 : index
    %203 = vector.load %arg10[%c8_215, %c0_216, %c0_217] : memref<16x2x32xf32, #tpu.memory_space<vmem>>, vector<1x2x32xf32>
    %204 = vector.shape_cast %203 : vector<1x2x32xf32> to vector<2x32xf32>
    %cst_218 = arith.constant dense<0.000000e+00> : vector<2x32xf32>
    %205 = tpu.matmul %204, %145, %cst_218 {dimension_numbers = #tpu.dot_dimension_numbers<[1], [0], [0], [1], [0, 0, 1, 1], [], []>} : vector<2x32xf32>, vector<32x32xf32>, vector<2x32xf32> -> vector<2x32xf32>
    %c8_219 = arith.constant 8 : index
    %c0_220 = arith.constant 0 : index
    %c0_221 = arith.constant 0 : index
    %206 = vector.load %arg11[%c8_219, %c0_220, %c0_221] : memref<16x32x64xf32, #tpu.memory_space<vmem>>, vector<1x32x64xf32>
    %207 = vector.shape_cast %206 : vector<1x32x64xf32> to vector<32x64xf32>
    %cst_222 = arith.constant dense<0.000000e+00> : vector<2x64xf32>
    %208 = tpu.matmul %205, %207, %cst_222 {dimension_numbers = #tpu.dot_dimension_numbers<[1], [0], [0], [1], [0, 0, 1, 1], [], []>} : vector<2x32xf32>, vector<32x64xf32>, vector<2x64xf32> -> vector<2x64xf32>
    %209 = arith.addf %202, %208 : vector<2x64xf32>
    %c9 = arith.constant 9 : index
    %c0_223 = arith.constant 0 : index
    %c0_224 = arith.constant 0 : index
    %210 = vector.load %arg10[%c9, %c0_223, %c0_224] : memref<16x2x32xf32, #tpu.memory_space<vmem>>, vector<1x2x32xf32>
    %211 = vector.shape_cast %210 : vector<1x2x32xf32> to vector<2x32xf32>
    %cst_225 = arith.constant dense<0.000000e+00> : vector<2x32xf32>
    %212 = tpu.matmul %211, %145, %cst_225 {dimension_numbers = #tpu.dot_dimension_numbers<[1], [0], [0], [1], [0, 0, 1, 1], [], []>} : vector<2x32xf32>, vector<32x32xf32>, vector<2x32xf32> -> vector<2x32xf32>
    %c9_226 = arith.constant 9 : index
    %c0_227 = arith.constant 0 : index
    %c0_228 = arith.constant 0 : index
    %213 = vector.load %arg11[%c9_226, %c0_227, %c0_228] : memref<16x32x64xf32, #tpu.memory_space<vmem>>, vector<1x32x64xf32>
    %214 = vector.shape_cast %213 : vector<1x32x64xf32> to vector<32x64xf32>
    %cst_229 = arith.constant dense<0.000000e+00> : vector<2x64xf32>
    %215 = tpu.matmul %212, %214, %cst_229 {dimension_numbers = #tpu.dot_dimension_numbers<[1], [0], [0], [1], [0, 0, 1, 1], [], []>} : vector<2x32xf32>, vector<32x64xf32>, vector<2x64xf32> -> vector<2x64xf32>
    %216 = arith.addf %209, %215 : vector<2x64xf32>
    %c10 = arith.constant 10 : index
    %c0_230 = arith.constant 0 : index
    %c0_231 = arith.constant 0 : index
    %217 = vector.load %arg10[%c10, %c0_230, %c0_231] : memref<16x2x32xf32, #tpu.memory_space<vmem>>, vector<1x2x32xf32>
    %218 = vector.shape_cast %217 : vector<1x2x32xf32> to vector<2x32xf32>
    %cst_232 = arith.constant dense<0.000000e+00> : vector<2x32xf32>
    %219 = tpu.matmul %218, %145, %cst_232 {dimension_numbers = #tpu.dot_dimension_numbers<[1], [0], [0], [1], [0, 0, 1, 1], [], []>} : vector<2x32xf32>, vector<32x32xf32>, vector<2x32xf32> -> vector<2x32xf32>
    %c10_233 = arith.constant 10 : index
    %c0_234 = arith.constant 0 : index
    %c0_235 = arith.constant 0 : index
    %220 = vector.load %arg11[%c10_233, %c0_234, %c0_235] : memref<16x32x64xf32, #tpu.memory_space<vmem>>, vector<1x32x64xf32>
    %221 = vector.shape_cast %220 : vector<1x32x64xf32> to vector<32x64xf32>
    %cst_236 = arith.constant dense<0.000000e+00> : vector<2x64xf32>
    %222 = tpu.matmul %219, %221, %cst_236 {dimension_numbers = #tpu.dot_dimension_numbers<[1], [0], [0], [1], [0, 0, 1, 1], [], []>} : vector<2x32xf32>, vector<32x64xf32>, vector<2x64xf32> -> vector<2x64xf32>
    %223 = arith.addf %216, %222 : vector<2x64xf32>
    %c11 = arith.constant 11 : index
    %c0_237 = arith.constant 0 : index
    %c0_238 = arith.constant 0 : index
    %224 = vector.load %arg10[%c11, %c0_237, %c0_238] : memref<16x2x32xf32, #tpu.memory_space<vmem>>, vector<1x2x32xf32>
    %225 = vector.shape_cast %224 : vector<1x2x32xf32> to vector<2x32xf32>
    %cst_239 = arith.constant dense<0.000000e+00> : vector<2x32xf32>
    %226 = tpu.matmul %225, %145, %cst_239 {dimension_numbers = #tpu.dot_dimension_numbers<[1], [0], [0], [1], [0, 0, 1, 1], [], []>} : vector<2x32xf32>, vector<32x32xf32>, vector<2x32xf32> -> vector<2x32xf32>
    %c11_240 = arith.constant 11 : index
    %c0_241 = arith.constant 0 : index
    %c0_242 = arith.constant 0 : index
    %227 = vector.load %arg11[%c11_240, %c0_241, %c0_242] : memref<16x32x64xf32, #tpu.memory_space<vmem>>, vector<1x32x64xf32>
    %228 = vector.shape_cast %227 : vector<1x32x64xf32> to vector<32x64xf32>
    %cst_243 = arith.constant dense<0.000000e+00> : vector<2x64xf32>
    %229 = tpu.matmul %226, %228, %cst_243 {dimension_numbers = #tpu.dot_dimension_numbers<[1], [0], [0], [1], [0, 0, 1, 1], [], []>} : vector<2x32xf32>, vector<32x64xf32>, vector<2x64xf32> -> vector<2x64xf32>
    %230 = arith.addf %223, %229 : vector<2x64xf32>
    %c12 = arith.constant 12 : index
    %c0_244 = arith.constant 0 : index
    %c0_245 = arith.constant 0 : index
    %231 = vector.load %arg10[%c12, %c0_244, %c0_245] : memref<16x2x32xf32, #tpu.memory_space<vmem>>, vector<1x2x32xf32>
    %232 = vector.shape_cast %231 : vector<1x2x32xf32> to vector<2x32xf32>
    %cst_246 = arith.constant dense<0.000000e+00> : vector<2x32xf32>
    %233 = tpu.matmul %232, %145, %cst_246 {dimension_numbers = #tpu.dot_dimension_numbers<[1], [0], [0], [1], [0, 0, 1, 1], [], []>} : vector<2x32xf32>, vector<32x32xf32>, vector<2x32xf32> -> vector<2x32xf32>
    %c12_247 = arith.constant 12 : index
    %c0_248 = arith.constant 0 : index
    %c0_249 = arith.constant 0 : index
    %234 = vector.load %arg11[%c12_247, %c0_248, %c0_249] : memref<16x32x64xf32, #tpu.memory_space<vmem>>, vector<1x32x64xf32>
    %235 = vector.shape_cast %234 : vector<1x32x64xf32> to vector<32x64xf32>
    %cst_250 = arith.constant dense<0.000000e+00> : vector<2x64xf32>
    %236 = tpu.matmul %233, %235, %cst_250 {dimension_numbers = #tpu.dot_dimension_numbers<[1], [0], [0], [1], [0, 0, 1, 1], [], []>} : vector<2x32xf32>, vector<32x64xf32>, vector<2x64xf32> -> vector<2x64xf32>
    %237 = arith.addf %230, %236 : vector<2x64xf32>
    %c13 = arith.constant 13 : index
    %c0_251 = arith.constant 0 : index
    %c0_252 = arith.constant 0 : index
    %238 = vector.load %arg10[%c13, %c0_251, %c0_252] : memref<16x2x32xf32, #tpu.memory_space<vmem>>, vector<1x2x32xf32>
    %239 = vector.shape_cast %238 : vector<1x2x32xf32> to vector<2x32xf32>
    %cst_253 = arith.constant dense<0.000000e+00> : vector<2x32xf32>
    %240 = tpu.matmul %239, %145, %cst_253 {dimension_numbers = #tpu.dot_dimension_numbers<[1], [0], [0], [1], [0, 0, 1, 1], [], []>} : vector<2x32xf32>, vector<32x32xf32>, vector<2x32xf32> -> vector<2x32xf32>
    %c13_254 = arith.constant 13 : index
    %c0_255 = arith.constant 0 : index
    %c0_256 = arith.constant 0 : index
    %241 = vector.load %arg11[%c13_254, %c0_255, %c0_256] : memref<16x32x64xf32, #tpu.memory_space<vmem>>, vector<1x32x64xf32>
    %242 = vector.shape_cast %241 : vector<1x32x64xf32> to vector<32x64xf32>
    %cst_257 = arith.constant dense<0.000000e+00> : vector<2x64xf32>
    %243 = tpu.matmul %240, %242, %cst_257 {dimension_numbers = #tpu.dot_dimension_numbers<[1], [0], [0], [1], [0, 0, 1, 1], [], []>} : vector<2x32xf32>, vector<32x64xf32>, vector<2x64xf32> -> vector<2x64xf32>
    %244 = arith.addf %237, %243 : vector<2x64xf32>
    %c14 = arith.constant 14 : index
    %c0_258 = arith.constant 0 : index
    %c0_259 = arith.constant 0 : index
    %245 = vector.load %arg10[%c14, %c0_258, %c0_259] : memref<16x2x32xf32, #tpu.memory_space<vmem>>, vector<1x2x32xf32>
    %246 = vector.shape_cast %245 : vector<1x2x32xf32> to vector<2x32xf32>
    %cst_260 = arith.constant dense<0.000000e+00> : vector<2x32xf32>
    %247 = tpu.matmul %246, %145, %cst_260 {dimension_numbers = #tpu.dot_dimension_numbers<[1], [0], [0], [1], [0, 0, 1, 1], [], []>} : vector<2x32xf32>, vector<32x32xf32>, vector<2x32xf32> -> vector<2x32xf32>
    %c14_261 = arith.constant 14 : index
    %c0_262 = arith.constant 0 : index
    %c0_263 = arith.constant 0 : index
    %248 = vector.load %arg11[%c14_261, %c0_262, %c0_263] : memref<16x32x64xf32, #tpu.memory_space<vmem>>, vector<1x32x64xf32>
    %249 = vector.shape_cast %248 : vector<1x32x64xf32> to vector<32x64xf32>
    %cst_264 = arith.constant dense<0.000000e+00> : vector<2x64xf32>
    %250 = tpu.matmul %247, %249, %cst_264 {dimension_numbers = #tpu.dot_dimension_numbers<[1], [0], [0], [1], [0, 0, 1, 1], [], []>} : vector<2x32xf32>, vector<32x64xf32>, vector<2x64xf32> -> vector<2x64xf32>
    %251 = arith.addf %244, %250 : vector<2x64xf32>
    %c15 = arith.constant 15 : index
    %c0_265 = arith.constant 0 : index
    %c0_266 = arith.constant 0 : index
    %252 = vector.load %arg10[%c15, %c0_265, %c0_266] : memref<16x2x32xf32, #tpu.memory_space<vmem>>, vector<1x2x32xf32>
    %253 = vector.shape_cast %252 : vector<1x2x32xf32> to vector<2x32xf32>
    %cst_267 = arith.constant dense<0.000000e+00> : vector<2x32xf32>
    %254 = tpu.matmul %253, %145, %cst_267 {dimension_numbers = #tpu.dot_dimension_numbers<[1], [0], [0], [1], [0, 0, 1, 1], [], []>} : vector<2x32xf32>, vector<32x32xf32>, vector<2x32xf32> -> vector<2x32xf32>
    %c15_268 = arith.constant 15 : index
    %c0_269 = arith.constant 0 : index
    %c0_270 = arith.constant 0 : index
    %255 = vector.load %arg11[%c15_268, %c0_269, %c0_270] : memref<16x32x64xf32, #tpu.memory_space<vmem>>, vector<1x32x64xf32>
    %256 = vector.shape_cast %255 : vector<1x32x64xf32> to vector<32x64xf32>
    %cst_271 = arith.constant dense<0.000000e+00> : vector<2x64xf32>
    %257 = tpu.matmul %254, %256, %cst_271 {dimension_numbers = #tpu.dot_dimension_numbers<[1], [0], [0], [1], [0, 0, 1, 1], [], []>} : vector<2x32xf32>, vector<32x64xf32>, vector<2x64xf32> -> vector<2x64xf32>
    %258 = arith.addf %251, %257 : vector<2x64xf32>
    %c0_272 = arith.constant 0 : index
    %c0_273 = arith.constant 0 : index
    %259 = vector.load %arg12[%c0_272, %c0_273] : memref<1x64xf32, #tpu.memory_space<vmem>>, vector<1x64xf32>
    %260 = vector.broadcast %259 : vector<1x64xf32> to vector<2x64xf32>
    %261 = arith.addf %258, %260 : vector<2x64xf32>
    %cst_274 = arith.constant 0.000000e+00 : f32
    %262 = vector.broadcast %cst_274 : f32 to vector<2x64xf32>
    %263 = arith.maximumf %261, %262 : vector<2x64xf32>
    %c0_275 = arith.constant 0 : index
    %c0_276 = arith.constant 0 : index
    %264 = vector.load %arg13[%c0_275, %c0_276] : memref<64x32xf32, #tpu.memory_space<vmem>>, vector<64x32xf32>
    %cst_277 = arith.constant dense<0.000000e+00> : vector<2x32xf32>
    %265 = tpu.matmul %263, %264, %cst_277 {dimension_numbers = #tpu.dot_dimension_numbers<[1], [0], [0], [1], [0, 0, 1, 1], [], []>} : vector<2x64xf32>, vector<64x32xf32>, vector<2x32xf32> -> vector<2x32xf32>
    %c0_278 = arith.constant 0 : index
    %c0_279 = arith.constant 0 : index
    %266 = vector.load %arg14[%c0_278, %c0_279] : memref<1x32xf32, #tpu.memory_space<vmem>>, vector<1x32xf32>
    %267 = vector.broadcast %266 : vector<1x32xf32> to vector<2x32xf32>
    %268 = arith.addf %265, %267 : vector<2x32xf32>
    %c0_280 = arith.constant 0 : index
    %c0_281 = arith.constant 0 : index
    %269 = vector.load %arg15[%c0_280, %c0_281] : memref<2x32xf32, #tpu.memory_space<vmem>>, vector<2x32xf32>
    tpu.vector_store %arg15[%c0_280, %c0_281], %268 {strides = array<i32>} : memref<2x32xf32, #tpu.memory_space<vmem>>, vector<2x32xf32>,
    return
  }
  func.func @transform_0(%arg0: i32) -> (i32, i32) {
    %c0_i32 = arith.constant 0 : i32
    %c0_i32_0 = arith.constant 0 : i32
    %c0_i32_1 = arith.constant 0 : i32
    return %c0_i32, %c0_i32_0 : i32, i32
  }
  func.func @transform_1(%arg0: i32) -> (i32, i32) {
    %c0_i32 = arith.constant 0 : i32
    %c0_i32_0 = arith.constant 0 : i32
    %c0_i32_1 = arith.constant 0 : i32
    return %c0_i32, %c0_i32_0 : i32, i32
  }
  func.func @transform_2(%arg0: i32) -> (i32, i32) {
    %c0_i32 = arith.constant 0 : i32
    %c0_i32_0 = arith.constant 0 : i32
    %c0_i32_1 = arith.constant 0 : i32
    return %c0_i32, %c0_i32_0 : i32, i32
  }
  func.func @transform_3(%arg0: i32) -> (i32, i32, i32) {
    %c0_i32 = arith.constant 0 : i32
    %c0_i32_0 = arith.constant 0 : i32
    %c0_i32_1 = arith.constant 0 : i32
    %c0_i32_2 = arith.constant 0 : i32
    return %c0_i32, %c0_i32_0, %c0_i32_1 : i32, i32, i32
  }
  func.func @transform_4(%arg0: i32) -> (i32, i32, i32) {
    %c0_i32 = arith.constant 0 : i32
    %c0_i32_0 = arith.constant 0 : i32
    %c0_i32_1 = arith.constant 0 : i32
    %c0_i32_2 = arith.constant 0 : i32
    return %c0_i32, %c0_i32_0, %c0_i32_1 : i32, i32, i32
  }
  func.func @transform_5(%arg0: i32) -> (i32, i32) {
    %c0_i32 = arith.constant 0 : i32
    %c0_i32_0 = arith.constant 0 : i32
    %c0_i32_1 = arith.constant 0 : i32
    return %c0_i32, %c0_i32_0 : i32, i32
  }
  func.func @transform_6(%arg0: i32) -> (i32, i32, i32) {
    %c0_i32 = arith.constant 0 : i32
    %c0_i32_0 = arith.constant 0 : i32
    %c0_i32_1 = arith.constant 0 : i32
    %c0_i32_2 = arith.constant 0 : i32
    return %c0_i32, %c0_i32_0, %c0_i32_1 : i32, i32, i32
  }
  func.func @transform_7(%arg0: i32) -> (i32, i32, i32) {
    %c0_i32 = arith.constant 0 : i32
    %c0_i32_0 = arith.constant 0 : i32
    %c0_i32_1 = arith.constant 0 : i32
    %c0_i32_2 = arith.constant 0 : i32
    return %c0_i32, %c0_i32_0, %c0_i32_1 : i32, i32, i32
  }
  func.func @transform_8(%arg0: i32) -> (i32, i32) {
    %c0_i32 = arith.constant 0 : i32
    %c0_i32_0 = arith.constant 0 : i32
    %c0_i32_1 = arith.constant 0 : i32
    return %c0_i32, %c0_i32_0 : i32, i32
  }
  func.func @transform_9(%arg0: i32) -> (i32, i32, i32) {
    %c0_i32 = arith.constant 0 : i32
    %c0_i32_0 = arith.constant 0 : i32
    %c0_i32_1 = arith.constant 0 : i32
    %c0_i32_2 = arith.constant 0 : i32
    return %c0_i32, %c0_i32_0, %c0_i32_1 : i32, i32, i32
  }
  func.func @transform_10(%arg0: i32) -> (i32, i32, i32) {
    %c0_i32 = arith.constant 0 : i32
    %c0_i32_0 = arith.constant 0 : i32
    %c0_i32_1 = arith.constant 0 : i32
    %c0_i32_2 = arith.constant 0 : i32
    return %c0_i32, %c0_i32_0, %c0_i32_1 : i32, i32, i32
  }
  func.func @transform_11(%arg0: i32) -> (i32, i32) {
    %c0_i32 = arith.constant 0 : i32
    %c0_i32_0 = arith.constant 0 : i32
    %c0_i32_1 = arith.constant 0 : i32
    return %c0_i32, %c0_i32_0 : i32, i32
  }
  func.func @transform_12(%arg0: i32) -> (i32, i32) {
    %c0_i32 = arith.constant 0 : i32
    %c0_i32_0 = arith.constant 0 : i32
    %c0_i32_1 = arith.constant 0 : i32
    return %c0_i32, %c0_i32_0 : i32, i32
  }
  func.func @transform_13(%arg0: i32) -> (i32, i32) {
    %c0_i32 = arith.constant 0 : i32
    %c0_i32_0 = arith.constant 0 : i32
    %c0_i32_1 = arith.constant 0 : i32
    return %c0_i32, %c0_i32_0 : i32, i32
  }
  func.func @transform_14(%arg0: i32) -> (i32, i32) {
    %c0_i32 = arith.constant 0 : i32
    %c0_i32_0 = arith.constant 0 : i32
    %c0_i32_1 = arith.constant 0 : i32
    return %c0_i32, %c0_i32_0 : i32, i32
  }
}

</mosaic_0001>

<llo_original>
// kernel: lip_trainer_forward.1
$region0: #{lip_trainer_forward.1}
  #allocation0 [shape = 'u32[]', space=smem, size = 0x4, offset = 0x4, fixed_abs, tag = 'smem constant byte address 0x4 - core index']
  #allocation1 [shape = 'u32[144,128]{1,0:T(1,128)}', space=vmem, size = 0x12000, scoped, tag = 'internal scratch']
  %s0 = inlined_call_operand.vmem [shape: f32[512,9], index: 0, kind: input, shape index: {}]
  %s1 = inlined_call_operand.vmem [shape: f32[9,8], index: 1, kind: input, shape index: {}]
  %s2 = inlined_call_operand.hbm [shape: f32[1,8], index: 2, kind: input, shape index: {}]
  %s3 = inlined_call_operand.hbm [shape: f32[9,128,512], index: 3, kind: input, shape index: {}]
  %s4 = inlined_call_operand.hbm [shape: f32[9,8,16], index: 4, kind: input, shape index: {}]
  %s5 = inlined_call_operand.hbm [shape: f32[1,16], index: 5, kind: input, shape index: {}]
  %s6 = inlined_call_operand.hbm [shape: f32[9,32,128], index: 6, kind: input, shape index: {}]
  %s7 = inlined_call_operand.hbm [shape: f32[9,16,32], index: 7, kind: input, shape index: {}]
  %s8 = inlined_call_operand.hbm [shape: f32[1,32], index: 8, kind: input, shape index: {}]
  %s9 = inlined_call_operand.hbm [shape: f32[16,2,32], index: 9, kind: input, shape index: {}]
  %s10 = inlined_call_operand.vmem [shape: f32[16,32,64], index: 10, kind: input, shape index: {}]
  %s11 = inlined_call_operand.hbm [shape: f32[1,64], index: 11, kind: input, shape index: {}]
  %s12 = inlined_call_operand.vmem [shape: f32[64,32], index: 12, kind: input, shape index: {}]
  %s13 = inlined_call_operand.hbm [shape: f32[1,32], index: 13, kind: input, shape index: {}]
  %s14 = inlined_call_operand.hbm [shape: f32[2,32], index: 14, kind: output, shape index: {}]
  %s15 = sld [smem:[#allocation0]]
  $region106: #{lip_trainer_forward.1} parent=0
    _
  %s17 = ssub.s32 1, %s15
  %s18 = scalar_select 0, %s17, %s15
  $region1: #{lip_trainer_forward.1} parent=0
    #allocation2 [shape = 'u8[512]{0}', space=vmem, size = 0x400, scoped, tag = 'input window, operand 2, single buffered']
    #allocation3 [shape = 's32[1]{0}', space=sflag, size = 0x4, scoped, tag = 'scoped memory for lip_trainer_forward.1']
    #allocation4 [shape = 's32[1]{0}', space=sflag, size = 0x4, scoped, tag = 'scoped memory for lip_trainer_forward.1']
    #allocation5 [shape = 'u8[2359296]{0}', space=vmem, size = 0x240000, scoped, tag = 'input window, operand 3, single buffered']
    #allocation6 [shape = 's32[1]{0}', space=sflag, size = 0x4, scoped, tag = 'scoped memory for lip_trainer_forward.1']
    #allocation7 [shape = 'u8[36864]{0}', space=vmem, size = 0x9000, scoped, tag = 'input window, operand 4, single buffered']
    #allocation8 [shape = 'u8[512]{0}', space=vmem, size = 0x400, scoped, tag = 'input window, operand 5, single buffered']
    #allocation9 [shape = 's32[1]{0}', space=sflag, size = 0x4, scoped, tag = 'scoped memory for lip_trainer_forward.1']
    #allocation10 [shape = 'u8[147456]{0}', space=vmem, size = 0x24000, scoped, tag = 'input window, operand 6, single buffered']
    #allocation11 [shape = 'u8[73728]{0}', space=vmem, size = 0x12000, scoped, tag = 'input window, operand 7, single buffered']
    #allocation12 [shape = 's32[1]{0}', space=sflag, size = 0x4, scoped, tag = 'scoped memory for lip_trainer_forward.1']
    #allocation13 [shape = 'u8[512]{0}', space=vmem, size = 0x400, scoped, tag = 'input window, operand 8, single buffered']
    #allocation14 [shape = 'u8[16384]{0}', space=vmem, size = 0x4000, scoped, tag = 'input window, operand 9, single buffered']
    #allocation15 [shape = 's32[1]{0}', space=sflag, size = 0x4, scoped, tag = 'scoped memory for lip_trainer_forward.1']
    #allocation16 [shape = 'u8[512]{0}', space=vmem, size = 0x400, scoped, tag = 'input window, operand 11, single buffered']
    #allocation17 [shape = 'u8[512]{0}', space=vmem, size = 0x400, scoped, tag = 'input window, operand 13, single buffered']
    #allocation18 [shape = 's32[1]{0}', space=sflag, size = 0x4, scoped, tag = 'scoped memory for lip_trainer_forward.1']
    #allocation19 [shape = 'u8[1024]{0}', space=vmem, size = 0x400, scoped, tag = 'output window, operand 0, single buffered']
    %19 = vsyncpa [#allocation3], 0
    %20 = vsyncpa [#allocation6], 0
    %21 = vsyncpa [#allocation9], 0
    %22 = vsyncpa [#allocation12], 0
    %23 = vsyncpa [#allocation15], 0
    %24 = vsyncpa [#allocation18], 0
    %25 = vsyncpa [#allocation4], 0
    // Predicated region
    $region2: #{lip_trainer_forward.1} parent=1 // pred_check
      _
    $region3: #{lip_trainer_forward.1} parent=1 // pred_check_branch
      %27 = sbr.rel (0) target = $region5
    $region4: #{lip_trainer_forward.1} parent=1 // pred_region
      _
    $region5: #{lip_trainer_forward.1} parent=1 // pred_fallthru
      _
    // Predicated region
    $region6: #{lip_trainer_forward.1} parent=1 // pred_check
      _
    $region7: #{lip_trainer_forward.1} parent=1 // pred_check_branch
      %29 = sbr.rel (0) target = $region9
    $region8: #{lip_trainer_forward.1} parent=1 // pred_region
      _
    $region9: #{lip_trainer_forward.1} parent=1 // pred_fallthru
      _
    // Predicated region
    $region10: #{lip_trainer_forward.1} parent=1 // pred_check
      _
    $region11: #{lip_trainer_forward.1} parent=1 // pred_check_branch
      %31 = sbr.rel (0) target = $region13
    $region12: #{lip_trainer_forward.1} parent=1 // pred_region
      %s33 = ssub.s32 16, 16
      %34 = vsyncadd [#allocation3], %s33
      %s36 = sshll.u32 [#allocation2], 4
      %s37 = int_to_ptr.vmem [resolvable:$true] %s36
      %39 = dma.hbm_to_vmem [thread:$0]  %s2, 16, %s37, [#allocation3]
    $region13: #{lip_trainer_forward.1} parent=1 // pred_fallthru
      _
    // Predicated region
    $region14: #{lip_trainer_forward.1} parent=1 // pred_check
      _
    $region15: #{lip_trainer_forward.1} parent=1 // pred_check_branch
      %41 = sbr.rel (0) target = $region17
    $region16: #{lip_trainer_forward.1} parent=1 // pred_region
      %s43 = ssub.s32 73728, 73728
      %44 = vsyncadd [#allocation6], %s43
      %s45 = sshll.u32 [#allocation5], 4
      %s46 = int_to_ptr.vmem [resolvable:$true] %s45
      %51 = dma.hbm_to_vmem [thread:$0]  %s3, 73728, %s46, [#allocation6], 512, 512, 32
    $region17: #{lip_trainer_forward.1} parent=1 // pred_fallthru
      _
    // Predicated region
    $region18: #{lip_trainer_forward.1} parent=1 // pred_check
      _
    $region19: #{lip_trainer_forward.1} parent=1 // pred_check_branch
      %53 = sbr.rel (0) target = $region21
    $region20: #{lip_trainer_forward.1} parent=1 // pred_region
      %s55 = ssub.s32 1152, 1152
      %56 = vsyncadd [#allocation6], %s55
      %s57 = sshll.u32 [#allocation7], 4
      %s58 = int_to_ptr.vmem [resolvable:$true] %s57
      %63 = dma.hbm_to_vmem [thread:$0]  %s4, 1152, %s58, [#allocation6], 128, 128, 8
    $region21: #{lip_trainer_forward.1} parent=1 // pred_fallthru
      _
    // Predicated region
    $region22: #{lip_trainer_forward.1} parent=1 // pred_check
      _
    $region23: #{lip_trainer_forward.1} parent=1 // pred_check_branch
      %65 = sbr.rel (0) target = $region25
    $region24: #{lip_trainer_forward.1} parent=1 // pred_region
      %s67 = ssub.s32 16, 16
      %68 = vsyncadd [#allocation9], %s67
      %s70 = sshll.u32 [#allocation8], 4
      %s71 = int_to_ptr.vmem [resolvable:$true] %s70
      %73 = dma.hbm_to_vmem [thread:$0]  %s5, 16, %s71, [#allocation9]
    $region25: #{lip_trainer_forward.1} parent=1 // pred_fallthru
      _
    // Predicated region
    $region26: #{lip_trainer_forward.1} parent=1 // pred_check
      _
    $region27: #{lip_trainer_forward.1} parent=1 // pred_check_branch
      %75 = sbr.rel (0) target = $region29
    $region28: #{lip_trainer_forward.1} parent=1 // pred_region
      %s77 = ssub.s32 4608, 4608
      %78 = vsyncadd [#allocation9], %s77
      %s79 = sshll.u32 [#allocation10], 4
      %s80 = int_to_ptr.vmem [resolvable:$true] %s79
      %85 = dma.hbm_to_vmem [thread:$0]  %s6, 4608, %s80, [#allocation9], 128, 128, 8
    $region29: #{lip_trainer_forward.1} parent=1 // pred_fallthru
      _
    // Predicated region
    $region30: #{lip_trainer_forward.1} parent=1 // pred_check
      _
    $region31: #{lip_trainer_forward.1} parent=1 // pred_check_branch
      %87 = sbr.rel (0) target = $region33
    $region32: #{lip_trainer_forward.1} parent=1 // pred_region
      %s89 = ssub.s32 2304, 2304
      %90 = vsyncadd [#allocation12], %s89
      %s91 = sshll.u32 [#allocation11], 4
      %s92 = int_to_ptr.vmem [resolvable:$true] %s91
      %97 = dma.hbm_to_vmem [thread:$0]  %s7, 2304, %s92, [#allocation12], 128, 128, 8
    $region33: #{lip_trainer_forward.1} parent=1 // pred_fallthru
      _
    // Predicated region
    $region34: #{lip_trainer_forward.1} parent=1 // pred_check
      _
    $region35: #{lip_trainer_forward.1} parent=1 // pred_check_branch
      %99 = sbr.rel (0) target = $region37
    $region36: #{lip_trainer_forward.1} parent=1 // pred_region
      %s101 = ssub.s32 16, 16
      %102 = vsyncadd [#allocation12], %s101
      %s104 = sshll.u32 [#allocation13], 4
      %s105 = int_to_ptr.vmem [resolvable:$true] %s104
      %107 = dma.hbm_to_vmem [thread:$0]  %s8, 16, %s105, [#allocation12]
    $region37: #{lip_trainer_forward.1} parent=1 // pred_fallthru
      _
    // Predicated region
    $region38: #{lip_trainer_forward.1} parent=1 // pred_check
      _
    $region39: #{lip_trainer_forward.1} parent=1 // pred_check_branch
      %109 = sbr.rel (0) target = $region41
    $region40: #{lip_trainer_forward.1} parent=1 // pred_region
      %s111 = ssub.s32 512, 512
      %112 = vsyncadd [#allocation15], %s111
      %s113 = sshll.u32 [#allocation14], 4
      %s114 = int_to_ptr.vmem [resolvable:$true] %s113
      %119 = dma.hbm_to_vmem [thread:$0]  %s9, 512, %s114, [#allocation15], 32, 32, 2
    $region41: #{lip_trainer_forward.1} parent=1 // pred_fallthru
      _
    // Predicated region
    $region42: #{lip_trainer_forward.1} parent=1 // pred_check
      _
    $region43: #{lip_trainer_forward.1} parent=1 // pred_check_branch
      %121 = sbr.rel (0) target = $region45
    $region44: #{lip_trainer_forward.1} parent=1 // pred_region
      _
    $region45: #{lip_trainer_forward.1} parent=1 // pred_fallthru
      _
    // Predicated region
    $region46: #{lip_trainer_forward.1} parent=1 // pred_check
      _
    $region47: #{lip_trainer_forward.1} parent=1 // pred_check_branch
      %123 = sbr.rel (0) target = $region49
    $region48: #{lip_trainer_forward.1} parent=1 // pred_region
      %s125 = ssub.s32 16, 16
      %126 = vsyncadd [#allocation15], %s125
      %s128 = sshll.u32 [#allocation16], 4
      %s129 = int_to_ptr.vmem [resolvable:$true] %s128
      %131 = dma.hbm_to_vmem [thread:$0]  %s11, 16, %s129, [#allocation15]
    $region49: #{lip_trainer_forward.1} parent=1 // pred_fallthru
      _
    // Predicated region
    $region50: #{lip_trainer_forward.1} parent=1 // pred_check
      _
    $region51: #{lip_trainer_forward.1} parent=1 // pred_check_branch
      %133 = sbr.rel (0) target = $region53
    $region52: #{lip_trainer_forward.1} parent=1 // pred_region
      _
    $region53: #{lip_trainer_forward.1} parent=1 // pred_fallthru
      _
    // Predicated region
    $region54: #{lip_trainer_forward.1} parent=1 // pred_check
      _
    $region55: #{lip_trainer_forward.1} parent=1 // pred_check_branch
      %135 = sbr.rel (0) target = $region57
    $region56: #{lip_trainer_forward.1} parent=1 // pred_region
      %s137 = ssub.s32 16, 16
      %138 = vsyncadd [#allocation18], %s137
      %s140 = sshll.u32 [#allocation17], 4
      %s141 = int_to_ptr.vmem [resolvable:$true] %s140
      %143 = dma.hbm_to_vmem [thread:$0]  %s13, 16, %s141, [#allocation18]
    $region57: #{lip_trainer_forward.1} parent=1 // pred_fallthru
      _
    // Predicated region
    $region58: #{lip_trainer_forward.1} parent=1 // pred_check
      _
    $region59: #{lip_trainer_forward.1} parent=1 // pred_check_branch
      %145 = sbr.rel (0) target = $region61
    $region60: #{lip_trainer_forward.1} parent=1 // pred_region
      %146 = dma.done [#allocation3], 16
    $region61: #{lip_trainer_forward.1} parent=1 // pred_fallthru
      _
    // Predicated region
    $region62: #{lip_trainer_forward.1} parent=1 // pred_check
      _
    $region63: #{lip_trainer_forward.1} parent=1 // pred_check_branch
      %148 = sbr.rel (0) target = $region65
    $region64: #{lip_trainer_forward.1} parent=1 // pred_region
      %149 = dma.done [#allocation6], 73728
    $region65: #{lip_trainer_forward.1} parent=1 // pred_fallthru
      _
    // Predicated region
    $region66: #{lip_trainer_forward.1} parent=1 // pred_check
      _
    $region67: #{lip_trainer_forward.1} parent=1 // pred_check_branch
      %151 = sbr.rel (0) target = $region69
    $region68: #{lip_trainer_forward.1} parent=1 // pred_region
      %152 = dma.done [#allocation6], 1152
    $region69: #{lip_trainer_forward.1} parent=1 // pred_fallthru
      _
    // Predicated region
    $region70: #{lip_trainer_forward.1} parent=1 // pred_check
      _
    $region71: #{lip_trainer_forward.1} parent=1 // pred_check_branch
      %154 = sbr.rel (0) target = $region73
    $region72: #{lip_trainer_forward.1} parent=1 // pred_region
      %155 = dma.done [#allocation9], 16
    $region73: #{lip_trainer_forward.1} parent=1 // pred_fallthru
      _
    // Predicated region
    $region74: #{lip_trainer_forward.1} parent=1 // pred_check
      _
    $region75: #{lip_trainer_forward.1} parent=1 // pred_check_branch
      %157 = sbr.rel (0) target = $region77
    $region76: #{lip_trainer_forward.1} parent=1 // pred_region
      %158 = dma.done [#allocation9], 4608
    $region77: #{lip_trainer_forward.1} parent=1 // pred_fallthru
      _
    // Predicated region
    $region78: #{lip_trainer_forward.1} parent=1 // pred_check
      _
    $region79: #{lip_trainer_forward.1} parent=1 // pred_check_branch
      %160 = sbr.rel (0) target = $region81
    $region80: #{lip_trainer_forward.1} parent=1 // pred_region
      %161 = dma.done [#allocation12], 2304
    $region81: #{lip_trainer_forward.1} parent=1 // pred_fallthru
      _
    // Predicated region
    $region82: #{lip_trainer_forward.1} parent=1 // pred_check
      _
    $region83: #{lip_trainer_forward.1} parent=1 // pred_check_branch
      %163 = sbr.rel (0) target = $region85
    $region84: #{lip_trainer_forward.1} parent=1 // pred_region
      %164 = dma.done [#allocation12], 16
    $region85: #{lip_trainer_forward.1} parent=1 // pred_fallthru
      _
    // Predicated region
    $region86: #{lip_trainer_forward.1} parent=1 // pred_check
      _
    $region87: #{lip_trainer_forward.1} parent=1 // pred_check_branch
      %166 = sbr.rel (0) target = $region89
    $region88: #{lip_trainer_forward.1} parent=1 // pred_region
      %167 = dma.done [#allocation15], 512
    $region89: #{lip_trainer_forward.1} parent=1 // pred_fallthru
      _
    // Predicated region
    $region90: #{lip_trainer_forward.1} parent=1 // pred_check
      _
    $region91: #{lip_trainer_forward.1} parent=1 // pred_check_branch
      %169 = sbr.rel (0) target = $region93
    $region92: #{lip_trainer_forward.1} parent=1 // pred_region
      %170 = dma.done [#allocation15], 16
    $region93: #{lip_trainer_forward.1} parent=1 // pred_fallthru
      _
    // Predicated region
    $region94: #{lip_trainer_forward.1} parent=1 // pred_check
      _
    $region95: #{lip_trainer_forward.1} parent=1 // pred_check_branch
      %172 = sbr.rel (0) target = $region97
    $region96: #{lip_trainer_forward.1} parent=1 // pred_region
      %173 = dma.done [#allocation18], 16
    $region97: #{lip_trainer_forward.1} parent=1 // pred_fallthru
      _
    %v174 = vld [vmem:[%s0] sm:$0xff]
    %v175 = vld [vmem:[%s0 + $0x8] sm:$0xff]
    %v176 = vld [vmem:[%s0 + $0x10] sm:$0xff]
    %v177 = vld [vmem:[%s0 + $0x18] sm:$0xff]
    %v178 = vld [vmem:[%s0 + $0x20] sm:$0xff]
    %v179 = vld [vmem:[%s0 + $0x28] sm:$0xff]
    %v180 = vld [vmem:[%s0 + $0x30] sm:$0xff]
    %v181 = vld [vmem:[%s0 + $0x38] sm:$0xff]
    %v182 = vld [vmem:[%s0 + $0x40] sm:$0xff]
    %v183 = vld [vmem:[%s0 + $0x48] sm:$0xff]
    %v184 = vld [vmem:[%s0 + $0x50] sm:$0xff]
    %v185 = vld [vmem:[%s0 + $0x58] sm:$0xff]
    %v186 = vld [vmem:[%s0 + $0x60] sm:$0xff]
    %v187 = vld [vmem:[%s0 + $0x68] sm:$0xff]
    %v188 = vld [vmem:[%s0 + $0x70] sm:$0xff]
    %v189 = vld [vmem:[%s0 + $0x78] sm:$0xff]
    %v190 = vld [vmem:[%s0 + $0x80] sm:$0xff]
    %v191 = vld [vmem:[%s0 + $0x88] sm:$0xff]
    %v192 = vld [vmem:[%s0 + $0x90] sm:$0xff]
    %v193 = vld [vmem:[%s0 + $0x98] sm:$0xff]
    %v194 = vld [vmem:[%s0 + $0xa0] sm:$0xff]
    %v195 = vld [vmem:[%s0 + $0xa8] sm:$0xff]
    %v196 = vld [vmem:[%s0 + $0xb0] sm:$0xff]
    %v197 = vld [vmem:[%s0 + $0xb8] sm:$0xff]
    %v198 = vld [vmem:[%s0 + $0xc0] sm:$0xff]
    %v199 = vld [vmem:[%s0 + $0xc8] sm:$0xff]
    %v200 = vld [vmem:[%s0 + $0xd0] sm:$0xff]
    %v201 = vld [vmem:[%s0 + $0xd8] sm:$0xff]
    %v202 = vld [vmem:[%s0 + $0xe0] sm:$0xff]
    %v203 = vld [vmem:[%s0 + $0xe8] sm:$0xff]
    %v204 = vld [vmem:[%s0 + $0xf0] sm:$0xff]
    %v205 = vld [vmem:[%s0 + $0xf8] sm:$0xff]
    %v206 = vld [vmem:[%s0 + $0x100] sm:$0xff]
    %v207 = vld [vmem:[%s0 + $0x108] sm:$0xff]
    %v208 = vld [vmem:[%s0 + $0x110] sm:$0xff]
    %v209 = vld [vmem:[%s0 + $0x118] sm:$0xff]
    %v210 = vld [vmem:[%s0 + $0x120] sm:$0xff]
    %v211 = vld [vmem:[%s0 + $0x128] sm:$0xff]
    %v212 = vld [vmem:[%s0 + $0x130] sm:$0xff]
    %v213 = vld [vmem:[%s0 + $0x138] sm:$0xff]
    %v214 = vld [vmem:[%s0 + $0x140] sm:$0xff]
    %v215 = vld [vmem:[%s0 + $0x148] sm:$0xff]
    %v216 = vld [vmem:[%s0 + $0x150] sm:$0xff]
    %v217 = vld [vmem:[%s0 + $0x158] sm:$0xff]
    %v218 = vld [vmem:[%s0 + $0x160] sm:$0xff]
    %v219 = vld [vmem:[%s0 + $0x168] sm:$0xff]
    %v220 = vld [vmem:[%s0 + $0x170] sm:$0xff]
    %v221 = vld [vmem:[%s0 + $0x178] sm:$0xff]
    %v222 = vld [vmem:[%s0 + $0x180] sm:$0xff]
    %v223 = vld [vmem:[%s0 + $0x188] sm:$0xff]
    %v224 = vld [vmem:[%s0 + $0x190] sm:$0xff]
    %v225 = vld [vmem:[%s0 + $0x198] sm:$0xff]
    %v226 = vld [vmem:[%s0 + $0x1a0] sm:$0xff]
    %v227 = vld [vmem:[%s0 + $0x1a8] sm:$0xff]
    %v228 = vld [vmem:[%s0 + $0x1b0] sm:$0xff]
    %v229 = vld [vmem:[%s0 + $0x1b8] sm:$0xff]
    %v230 = vld [vmem:[%s0 + $0x1c0] sm:$0xff]
    %v231 = vld [vmem:[%s0 + $0x1c8] sm:$0xff]
    %v232 = vld [vmem:[%s0 + $0x1d0] sm:$0xff]
    %v233 = vld [vmem:[%s0 + $0x1d8] sm:$0xff]
    %v234 = vld [vmem:[%s0 + $0x1e0] sm:$0xff]
    %v235 = vld [vmem:[%s0 + $0x1e8] sm:$0xff]
    %v236 = vld [vmem:[%s0 + $0x1f0] sm:$0xff]
    %v237 = vld [vmem:[%s0 + $0x1f8] sm:$0xff]
    %v238 = vld [vmem:[%s1] sm:$0xff]
    %v239 = vld [vmem:[%s1 + $0x8] sm:$0x1]
    %v240 = vld [vmem:[#allocation2] sm:$0x1]
    %v242 = vlaneseq
    %v243 = vshrl.u32 %v242, 7
    %v244 = vsub.s32 0, %v243
    %v245 = vrot.slane %v240, %v244
    %vm247 = vcmask 72704
    %v249 = vsel %vm247, %v174, 0
    %v252 = vsel %vm247, %v175, 0
    %v255 = vsel %vm247, %v176, 0
    %v258 = vsel %vm247, %v177, 0
    %v261 = vsel %vm247, %v178, 0
    %v264 = vsel %vm247, %v179, 0
    %v267 = vsel %vm247, %v180, 0
    %v270 = vsel %vm247, %v181, 0
    %v273 = vsel %vm247, %v182, 0
    %v276 = vsel %vm247, %v183, 0
    %v279 = vsel %vm247, %v184, 0
    %v282 = vsel %vm247, %v185, 0
    %v285 = vsel %vm247, %v186, 0
    %v288 = vsel %vm247, %v187, 0
    %v291 = vsel %vm247, %v188, 0
    %v294 = vsel %vm247, %v189, 0
    %v297 = vsel %vm247, %v190, 0
    %v300 = vsel %vm247, %v191, 0
    %v303 = vsel %vm247, %v192, 0
    %v306 = vsel %vm247, %v193, 0
    %v309 = vsel %vm247, %v194, 0
    %v312 = vsel %vm247, %v195, 0
    %v315 = vsel %vm247, %v196, 0
    %v318 = vsel %vm247, %v197, 0
    %v321 = vsel %vm247, %v198, 0
    %v324 = vsel %vm247, %v199, 0
    %v327 = vsel %vm247, %v200, 0
    %v330 = vsel %vm247, %v201, 0
    %v333 = vsel %vm247, %v202, 0
    %v336 = vsel %vm247, %v203, 0
    %v339 = vsel %vm247, %v204, 0
    %v342 = vsel %vm247, %v205, 0
    %v345 = vsel %vm247, %v206, 0
    %v348 = vsel %vm247, %v207, 0
    %v351 = vsel %vm247, %v208, 0
    %v354 = vsel %vm247, %v209, 0
    %v357 = vsel %vm247, %v210, 0
    %v360 = vsel %vm247, %v211, 0
    %v363 = vsel %vm247, %v212, 0
    %v366 = vsel %vm247, %v213, 0
    %v369 = vsel %vm247, %v214, 0
    %v372 = vsel %vm247, %v215, 0
    %v375 = vsel %vm247, %v216, 0
    %v378 = vsel %vm247, %v217, 0
    %v381 = vsel %vm247, %v218, 0
    %v384 = vsel %vm247, %v219, 0
    %v387 = vsel %vm247, %v220, 0
    %v390 = vsel %vm247, %v221, 0
    %v393 = vsel %vm247, %v222, 0
    %v396 = vsel %vm247, %v223, 0
    %v399 = vsel %vm247, %v224, 0
    %v402 = vsel %vm247, %v225, 0
    %v405 = vsel %vm247, %v226, 0
    %v408 = vsel %vm247, %v227, 0
    %v411 = vsel %vm247, %v228, 0
    %v414 = vsel %vm247, %v229, 0
    %v417 = vsel %vm247, %v230, 0
    %v420 = vsel %vm247, %v231, 0
    %v423 = vsel %vm247, %v232, 0
    %v426 = vsel %vm247, %v233, 0
    %v429 = vsel %vm247, %v234, 0
    %v432 = vsel %vm247, %v235, 0
    %v435 = vsel %vm247, %v236, 0
    %v438 = vsel %vm247, %v237, 0
    %vm440 = vcmask 1040384
    %v442 = vsel %vm440, %v239, 0
    %444 = vmatprep.subr.mxu0 0.0
    %445 = vmatpush1.msra.mxu0 %v238
    %446 = vmatprep.subr.mxu0 0.0
    %447 = vmatpush1.msra.mxu0 %v442
    %448 = vmatprep.subr.mxu0 0.0
    %449 = vmatpush1.msra.mxu0 0.0
    %450 = vmatprep.subr.mxu0 0.0
    %451 = vmatpush1.msra.mxu0 0.0
    %452 = vmatprep.subr.mxu0 0.0
    %453 = vmatpush1.msra.mxu0 0.0
    %454 = vmatprep.subr.mxu0 0.0
    %455 = vmatpush1.msra.mxu0 0.0
    %456 = vmatprep.subr.mxu0 0.0
    %457 = vmatpush1.msra.mxu0 0.0
    %458 = vmatprep.subr.mxu0 0.0
    %459 = vmatpush1.msra.mxu0 0.0
    %460 = vmatprep.subr.mxu0 0.0
    %461 = vmatpush1.msra.mxu0 0.0
    %462 = vmatprep.subr.mxu0 0.0
    %463 = vmatpush1.msra.mxu0 0.0
    %464 = vmatprep.subr.mxu0 0.0
    %465 = vmatpush1.msra.mxu0 0.0
    %466 = vmatprep.subr.mxu0 0.0
    %467 = vmatpush1.msra.mxu0 0.0
    %468 = vmatprep.subr.mxu0 0.0
    %469 = vmatpush1.msra.mxu0 0.0
    %470 = vmatprep.subr.mxu0 0.0
    %471 = vmatpush1.msra.mxu0 0.0
    %472 = vmatprep.subr.mxu0 0.0
    %473 = vmatpush1.msra.mxu0 0.0
    %474 = vmatprep.subr.mxu0 0.0
    %475 = vmatpush1.msra.mxu0 0.0
    %476 = vmatprep.subr.mxu0 0.0
    %477 = vmatpush1.msra.mxu0 0.0
    %478 = vmatprep.subr.mxu0 0.0
    %479 = vmatpush1.msra.mxu0 0.0
    %480 = vmatprep.subr.mxu0 0.0
    %481 = vmatpush1.msra.mxu0 0.0
    %482 = vmatprep.subr.mxu0 0.0
    %483 = vmatpush1.msra.mxu0 0.0
    %484 = vmatprep.subr.mxu0 0.0
    %485 = vmatpush1.msra.mxu0 0.0
    %486 = vmatprep.subr.mxu0 0.0
    %487 = vmatpush1.msra.mxu0 0.0
    %488 = vmatprep.subr.mxu0 0.0
    %489 = vmatpush1.msra.mxu0 0.0
    %490 = vmatprep.subr.mxu0 0.0
    %491 = vmatpush1.msra.mxu0 0.0
    %492 = vmatprep.subr.mxu0 0.0
    %493 = vmatpush1.msra.mxu0 0.0
    %494 = vmatprep.subr.mxu0 0.0
    %495 = vmatpush1.msra.mxu0 0.0
    %496 = vmatprep.subr.mxu0 0.0
    %497 = vmatpush1.msra.mxu0 0.0
    %498 = vmatprep.subr.mxu0 0.0
    %499 = vmatpush1.msra.mxu0 0.0
    %500 = vmatprep.subr.mxu0 0.0
    %501 = vmatpush1.msra.mxu0 0.0
    %502 = vmatprep.subr.mxu0 0.0
    %503 = vmatpush1.msra.mxu0 0.0
    %504 = vmatprep.subr.mxu0 0.0
    %505 = vmatpush1.msra.mxu0 0.0
    %506 = vmatprep.subr.mxu0 0.0
    %507 = vmatpush1.msra.mxu0 0.0
    %508 = vmatprep.mubr.f32.mxu0 0.0
    %509 = vmatmul.mubr.f32.gmra.mrb[0].mxu0 %v249
    %v510 = vpop.f32.mrb[0].mxu0
    %v511 = vadd.f32 %v245, %v510
    %v512 = vpop.f32.mrb[0].mxu0
    %513 = vmatprep.mubr.f32.mxu0 0.0
    %514 = vmatmul.mubr.f32.gmra.mrb[0].mxu0 %v252
    %v515 = vpop.f32.mrb[0].mxu0
    %v516 = vadd.f32 %v245, %v515
    %v517 = vpop.f32.mrb[0].mxu0
    %518 = vmatprep.mubr.f32.mxu0 0.0
    %519 = vmatmul.mubr.f32.gmra.mrb[0].mxu0 %v255
    %v520 = vpop.f32.mrb[0].mxu0
    %v521 = vadd.f32 %v245, %v520
    %v522 = vpop.f32.mrb[0].mxu0
    %523 = vmatprep.mubr.f32.mxu0 0.0
    %524 = vmatmul.mubr.f32.gmra.mrb[0].mxu0 %v258
    %v525 = vpop.f32.mrb[0].mxu0
    %v526 = vadd.f32 %v245, %v525
    %v527 = vpop.f32.mrb[0].mxu0
    %528 = vmatprep.mubr.f32.mxu0 0.0
    %529 = vmatmul.mubr.f32.gmra.mrb[0].mxu0 %v261
    %v530 = vpop.f32.mrb[0].mxu0
    %v531 = vadd.f32 %v245, %v530
    %v532 = vpop.f32.mrb[0].mxu0
    %533 = vmatprep.mubr.f32.mxu0 0.0
    %534 = vmatmul.mubr.f32.gmra.mrb[0].mxu0 %v264
    %v535 = vpop.f32.mrb[0].mxu0
    %v536 = vadd.f32 %v245, %v535
    %v537 = vpop.f32.mrb[0].mxu0
    %538 = vmatprep.mubr.f32.mxu0 0.0
    %539 = vmatmul.mubr.f32.gmra.mrb[0].mxu0 %v267
    %v540 = vpop.f32.mrb[0].mxu0
    %v541 = vadd.f32 %v245, %v540
    %v542 = vpop.f32.mrb[0].mxu0
    %543 = vmatprep.mubr.f32.mxu0 0.0
    %544 = vmatmul.mubr.f32.gmra.mrb[0].mxu0 %v270
    %v545 = vpop.f32.mrb[0].mxu0
    %v546 = vadd.f32 %v245, %v545
    %v547 = vpop.f32.mrb[0].mxu0
    %548 = vmatprep.mubr.f32.mxu0 0.0
    %549 = vmatmul.mubr.f32.gmra.mrb[0].mxu0 %v273
    %v550 = vpop.f32.mrb[0].mxu0
    %v551 = vadd.f32 %v245, %v550
    %v552 = vpop.f32.mrb[0].mxu0
    %553 = vmatprep.mubr.f32.mxu0 0.0
    %554 = vmatmul.mubr.f32.gmra.mrb[0].mxu0 %v276
    %v555 = vpop.f32.mrb[0].mxu0
    %v556 = vadd.f32 %v245, %v555
    %v557 = vpop.f32.mrb[0].mxu0
    %558 = vmatprep.mubr.f32.mxu0 0.0
    %559 = vmatmul.mubr.f32.gmra.mrb[0].mxu0 %v279
    %v560 = vpop.f32.mrb[0].mxu0
    %v561 = vadd.f32 %v245, %v560
    %v562 = vpop.f32.mrb[0].mxu0
    %563 = vmatprep.mubr.f32.mxu0 0.0
    %564 = vmatmul.mubr.f32.gmra.mrb[0].mxu0 %v282
    %v565 = vpop.f32.mrb[0].mxu0
    %v566 = vadd.f32 %v245, %v565
    %v567 = vpop.f32.mrb[0].mxu0
    %568 = vmatprep.mubr.f32.mxu0 0.0
    %569 = vmatmul.mubr.f32.gmra.mrb[0].mxu0 %v285
    %v570 = vpop.f32.mrb[0].mxu0
    %v571 = vadd.f32 %v245, %v570
    %v572 = vpop.f32.mrb[0].mxu0
    %573 = vmatprep.mubr.f32.mxu0 0.0
    %574 = vmatmul.mubr.f32.gmra.mrb[0].mxu0 %v288
    %v575 = vpop.f32.mrb[0].mxu0
    %v576 = vadd.f32 %v245, %v575
    %v577 = vpop.f32.mrb[0].mxu0
    %578 = vmatprep.mubr.f32.mxu0 0.0
    %579 = vmatmul.mubr.f32.gmra.mrb[0].mxu0 %v291
    %v580 = vpop.f32.mrb[0].mxu0
    %v581 = vadd.f32 %v245, %v580
    %v582 = vpop.f32.mrb[0].mxu0
    %583 = vmatprep.mubr.f32.mxu0 0.0
    %584 = vmatmul.mubr.f32.gmra.mrb[0].mxu0 %v294
    %v585 = vpop.f32.mrb[0].mxu0
    %v586 = vadd.f32 %v245, %v585
    %v587 = vpop.f32.mrb[0].mxu0
    %588 = vmatprep.mubr.f32.mxu0 0.0
    %589 = vmatmul.mubr.f32.gmra.mrb[0].mxu0 %v297
    %v590 = vpop.f32.mrb[0].mxu0
    %v591 = vadd.f32 %v245, %v590
    %v592 = vpop.f32.mrb[0].mxu0
    %593 = vmatprep.mubr.f32.mxu0 0.0
    %594 = vmatmul.mubr.f32.gmra.mrb[0].mxu0 %v300
    %v595 = vpop.f32.mrb[0].mxu0
    %v596 = vadd.f32 %v245, %v595
    %v597 = vpop.f32.mrb[0].mxu0
    %598 = vmatprep.mubr.f32.mxu0 0.0
    %599 = vmatmul.mubr.f32.gmra.mrb[0].mxu0 %v303
    %v600 = vpop.f32.mrb[0].mxu0
    %v601 = vadd.f32 %v245, %v600
    %v602 = vpop.f32.mrb[0].mxu0
    %603 = vmatprep.mubr.f32.mxu0 0.0
    %604 = vmatmul.mubr.f32.gmra.mrb[0].mxu0 %v306
    %v605 = vpop.f32.mrb[0].mxu0
    %v606 = vadd.f32 %v245, %v605
    %v607 = vpop.f32.mrb[0].mxu0
    %608 = vmatprep.mubr.f32.mxu0 0.0
    %609 = vmatmul.mubr.f32.gmra.mrb[0].mxu0 %v309
    %v610 = vpop.f32.mrb[0].mxu0
    %v611 = vadd.f32 %v245, %v610
    %v612 = vpop.f32.mrb[0].mxu0
    %613 = vmatprep.mubr.f32.mxu0 0.0
    %614 = vmatmul.mubr.f32.gmra.mrb[0].mxu0 %v312
    %v615 = vpop.f32.mrb[0].mxu0
    %v616 = vadd.f32 %v245, %v615
    %v617 = vpop.f32.mrb[0].mxu0
    %618 = vmatprep.mubr.f32.mxu0 0.0
    %619 = vmatmul.mubr.f32.gmra.mrb[0].mxu0 %v315
    %v620 = vpop.f32.mrb[0].mxu0
    %v621 = vadd.f32 %v245, %v620
    %v622 = vpop.f32.mrb[0].mxu0
    %623 = vmatprep.mubr.f32.mxu0 0.0
    %624 = vmatmul.mubr.f32.gmra.mrb[0].mxu0 %v318
    %v625 = vpop.f32.mrb[0].mxu0
    %v626 = vadd.f32 %v245, %v625
    %v627 = vpop.f32.mrb[0].mxu0
    %628 = vmatprep.mubr.f32.mxu0 0.0
    %629 = vmatmul.mubr.f32.gmra.mrb[0].mxu0 %v321
    %v630 = vpop.f32.mrb[0].mxu0
    %v631 = vadd.f32 %v245, %v630
    %v632 = vpop.f32.mrb[0].mxu0
    %633 = vmatprep.mubr.f32.mxu0 0.0
    %634 = vmatmul.mubr.f32.gmra.mrb[0].mxu0 %v324
    %v635 = vpop.f32.mrb[0].mxu0
    %v636 = vadd.f32 %v245, %v635
    %v637 = vpop.f32.mrb[0].mxu0
    %638 = vmatprep.mubr.f32.mxu0 0.0
    %639 = vmatmul.mubr.f32.gmra.mrb[0].mxu0 %v327
    %v640 = vpop.f32.mrb[0].mxu0
    %v641 = vadd.f32 %v245, %v640
    %v642 = vpop.f32.mrb[0].mxu0
    %643 = vmatprep.mubr.f32.mxu0 0.0
    %644 = vmatmul.mubr.f32.gmra.mrb[0].mxu0 %v330
    %v645 = vpop.f32.mrb[0].mxu0
    %v646 = vadd.f32 %v245, %v645
    %v647 = vpop.f32.mrb[0].mxu0
    %648 = vmatprep.mubr.f32.mxu0 0.0
    %649 = vmatmul.mubr.f32.gmra.mrb[0].mxu0 %v333
    %v650 = vpop.f32.mrb[0].mxu0
    %v651 = vadd.f32 %v245, %v650
    %v652 = vpop.f32.mrb[0].mxu0
    %653 = vmatprep.mubr.f32.mxu0 0.0
    %654 = vmatmul.mubr.f32.gmra.mrb[0].mxu0 %v336
    %v655 = vpop.f32.mrb[0].mxu0
    %v656 = vadd.f32 %v245, %v655
    %v657 = vpop.f32.mrb[0].mxu0
    %658 = vmatprep.mubr.f32.mxu0 0.0
    %659 = vmatmul.mubr.f32.gmra.mrb[0].mxu0 %v339
    %v660 = vpop.f32.mrb[0].mxu0
    %v661 = vadd.f32 %v245, %v660
    %v662 = vpop.f32.mrb[0].mxu0
    %663 = vmatprep.mubr.f32.mxu0 0.0
    %664 = vmatmul.mubr.f32.gmra.mrb[0].mxu0 %v342
    %v665 = vpop.f32.mrb[0].mxu0
    %v666 = vadd.f32 %v245, %v665
    %v667 = vpop.f32.mrb[0].mxu0
    %668 = vmatprep.mubr.f32.mxu0 0.0
    %669 = vmatmul.mubr.f32.gmra.mrb[0].mxu0 %v345
    %v670 = vpop.f32.mrb[0].mxu0
    %v671 = vadd.f32 %v245, %v670
    %v672 = vpop.f32.mrb[0].mxu0
    %673 = vmatprep.mubr.f32.mxu0 0.0
    %674 = vmatmul.mubr.f32.gmra.mrb[0].mxu0 %v348
    %v675 = vpop.f32.mrb[0].mxu0
    %v676 = vadd.f32 %v245, %v675
    %v677 = vpop.f32.mrb[0].mxu0
    %678 = vmatprep.mubr.f32.mxu0 0.0
    %679 = vmatmul.mubr.f32.gmra.mrb[0].mxu0 %v351
    %v680 = vpop.f32.mrb[0].mxu0
    %v681 = vadd.f32 %v245, %v680
    %v682 = vpop.f32.mrb[0].mxu0
    %683 = vmatprep.mubr.f32.mxu0 0.0
    %684 = vmatmul.mubr.f32.gmra.mrb[0].mxu0 %v354
    %v685 = vpop.f32.mrb[0].mxu0
    %v686 = vadd.f32 %v245, %v685
    %v687 = vpop.f32.mrb[0].mxu0
    %688 = vmatprep.mubr.f32.mxu0 0.0
    %689 = vmatmul.mubr.f32.gmra.mrb[0].mxu0 %v357
    %v690 = vpop.f32.mrb[0].mxu0
    %v691 = vadd.f32 %v245, %v690
    %v692 = vpop.f32.mrb[0].mxu0
    %693 = vmatprep.mubr.f32.mxu0 0.0
    %694 = vmatmul.mubr.f32.gmra.mrb[0].mxu0 %v360
    %v695 = vpop.f32.mrb[0].mxu0
    %v696 = vadd.f32 %v245, %v695
    %v697 = vpop.f32.mrb[0].mxu0
    %698 = vmatprep.mubr.f32.mxu0 0.0
    %699 = vmatmul.mubr.f32.gmra.mrb[0].mxu0 %v363
    %v700 = vpop.f32.mrb[0].mxu0
    %v701 = vadd.f32 %v245, %v700
    %v702 = vpop.f32.mrb[0].mxu0
    %703 = vmatprep.mubr.f32.mxu0 0.0
    %704 = vmatmul.mubr.f32.gmra.mrb[0].mxu0 %v366
    %v705 = vpop.f32.mrb[0].mxu0
    %v706 = vadd.f32 %v245, %v705
    %v707 = vpop.f32.mrb[0].mxu0
    %708 = vmatprep.mubr.f32.mxu0 0.0
    %709 = vmatmul.mubr.f32.gmra.mrb[0].mxu0 %v369
    %v710 = vpop.f32.mrb[0].mxu0
    %v711 = vadd.f32 %v245, %v710
    %v712 = vpop.f32.mrb[0].mxu0
    %713 = vmatprep.mubr.f32.mxu0 0.0
    %714 = vmatmul.mubr.f32.gmra.mrb[0].mxu0 %v372
    %v715 = vpop.f32.mrb[0].mxu0
    %v716 = vadd.f32 %v245, %v715
    %v717 = vpop.f32.mrb[0].mxu0
    %718 = vmatprep.mubr.f32.mxu0 0.0
    %719 = vmatmul.mubr.f32.gmra.mrb[0].mxu0 %v375
    %v720 = vpop.f32.mrb[0].mxu0
    %v721 = vadd.f32 %v245, %v720
    %v722 = vpop.f32.mrb[0].mxu0
    %723 = vmatprep.mubr.f32.mxu0 0.0
    %724 = vmatmul.mubr.f32.gmra.mrb[0].mxu0 %v378
    %v725 = vpop.f32.mrb[0].mxu0
    %v726 = vadd.f32 %v245, %v725
    %v727 = vpop.f32.mrb[0].mxu0
    %728 = vmatprep.mubr.f32.mxu0 0.0
    %729 = vmatmul.mubr.f32.gmra.mrb[0].mxu0 %v381
    %v730 = vpop.f32.mrb[0].mxu0
    %v731 = vadd.f32 %v245, %v730
    %v732 = vpop.f32.mrb[0].mxu0
    %733 = vmatprep.mubr.f32.mxu0 0.0
    %734 = vmatmul.mubr.f32.gmra.mrb[0].mxu0 %v384
    %v735 = vpop.f32.mrb[0].mxu0
    %v736 = vadd.f32 %v245, %v735
    %v737 = vpop.f32.mrb[0].mxu0
    %738 = vmatprep.mubr.f32.mxu0 0.0
    %739 = vmatmul.mubr.f32.gmra.mrb[0].mxu0 %v387
    %v740 = vpop.f32.mrb[0].mxu0
    %v741 = vadd.f32 %v245, %v740
    %v742 = vpop.f32.mrb[0].mxu0
    %743 = vmatprep.mubr.f32.mxu0 0.0
    %744 = vmatmul.mubr.f32.gmra.mrb[0].mxu0 %v390
    %v745 = vpop.f32.mrb[0].mxu0
    %v746 = vadd.f32 %v245, %v745
    %v747 = vpop.f32.mrb[0].mxu0
    %748 = vmatprep.mubr.f32.mxu0 0.0
    %749 = vmatmul.mubr.f32.gmra.mrb[0].mxu0 %v393
    %v750 = vpop.f32.mrb[0].mxu0
    %v751 = vadd.f32 %v245, %v750
    %v752 = vpop.f32.mrb[0].mxu0
    %753 = vmatprep.mubr.f32.mxu0 0.0
    %754 = vmatmul.mubr.f32.gmra.mrb[0].mxu0 %v396
    %v755 = vpop.f32.mrb[0].mxu0
    %v756 = vadd.f32 %v245, %v755
    %v757 = vpop.f32.mrb[0].mxu0
    %758 = vmatprep.mubr.f32.mxu0 0.0
    %759 = vmatmul.mubr.f32.gmra.mrb[0].mxu0 %v399
    %v760 = vpop.f32.mrb[0].mxu0
    %v761 = vadd.f32 %v245, %v760
    %v762 = vpop.f32.mrb[0].mxu0
    %763 = vmatprep.mubr.f32.mxu0 0.0
    %764 = vmatmul.mubr.f32.gmra.mrb[0].mxu0 %v402
    %v765 = vpop.f32.mrb[0].mxu0
    %v766 = vadd.f32 %v245, %v765
    %v767 = vpop.f32.mrb[0].mxu0
    %768 = vmatprep.mubr.f32.mxu0 0.0
    %769 = vmatmul.mubr.f32.gmra.mrb[0].mxu0 %v405
    %v770 = vpop.f32.mrb[0].mxu0
    %v771 = vadd.f32 %v245, %v770
    %v772 = vpop.f32.mrb[0].mxu0
    %773 = vmatprep.mubr.f32.mxu0 0.0
    %774 = vmatmul.mubr.f32.gmra.mrb[0].mxu0 %v408
    %v775 = vpop.f32.mrb[0].mxu0
    %v776 = vadd.f32 %v245, %v775
    %v777 = vpop.f32.mrb[0].mxu0
    %778 = vmatprep.mubr.f32.mxu0 0.0
    %779 = vmatmul.mubr.f32.gmra.mrb[0].mxu0 %v411
    %v780 = vpop.f32.mrb[0].mxu0
    %v781 = vadd.f32 %v245, %v780
    %v782 = vpop.f32.mrb[0].mxu0
    %783 = vmatprep.mubr.f32.mxu0 0.0
    %784 = vmatmul.mubr.f32.gmra.mrb[0].mxu0 %v414
    %v785 = vpop.f32.mrb[0].mxu0
    %v786 = vadd.f32 %v245, %v785
    %v787 = vpop.f32.mrb[0].mxu0
    %788 = vmatprep.mubr.f32.mxu0 0.0
    %789 = vmatmul.mubr.f32.gmra.mrb[0].mxu0 %v417
    %v790 = vpop.f32.mrb[0].mxu0
    %v791 = vadd.f32 %v245, %v790
    %v792 = vpop.f32.mrb[0].mxu0
    %793 = vmatprep.mubr.f32.mxu0 0.0
    %794 = vmatmul.mubr.f32.gmra.mrb[0].mxu0 %v420
    %v795 = vpop.f32.mrb[0].mxu0
    %v796 = vadd.f32 %v245, %v795
    %v797 = vpop.f32.mrb[0].mxu0
    %798 = vmatprep.mubr.f32.mxu0 0.0
    %799 = vmatmul.mubr.f32.gmra.mrb[0].mxu0 %v423
    %v800 = vpop.f32.mrb[0].mxu0
    %v801 = vadd.f32 %v245, %v800
    %v802 = vpop.f32.mrb[0].mxu0
    %803 = vmatprep.mubr.f32.mxu0 0.0
    %804 = vmatmul.mubr.f32.gmra.mrb[0].mxu0 %v426
    %v805 = vpop.f32.mrb[0].mxu0
    %v806 = vadd.f32 %v245, %v805
    %v807 = vpop.f32.mrb[0].mxu0
    %808 = vmatprep.mubr.f32.mxu0 0.0
    %809 = vmatmul.mubr.f32.gmra.mrb[0].mxu0 %v429
    %v810 = vpop.f32.mrb[0].mxu0
    %v811 = vadd.f32 %v245, %v810
    %v812 = vpop.f32.mrb[0].mxu0
    %813 = vmatprep.mubr.f32.mxu0 0.0
    %814 = vmatmul.mubr.f32.gmra.mrb[0].mxu0 %v432
    %v815 = vpop.f32.mrb[0].mxu0
    %v816 = vadd.f32 %v245, %v815
    %v817 = vpop.f32.mrb[0].mxu0
    %818 = vmatprep.mubr.f32.mxu0 0.0
    %819 = vmatmul.mubr.f32.gmra.mrb[0].mxu0 %v435
    %v820 = vpop.f32.mrb[0].mxu0
    %v821 = vadd.f32 %v245, %v820
    %v822 = vpop.f32.mrb[0].mxu0
    %823 = vmatprep.mubr.f32.mxu0 0.0
    %824 = vmatmul.mubr.f32.gmra.mrb[0].mxu0 %v438
    %v825 = vpop.f32.mrb[0].mxu0
    %v826 = vadd.f32 %v245, %v825
    %v827 = vpop.f32.mrb[0].mxu0
    %828 = vdwg.mxu0
    %v829 = vmax.f32 %v511, 0.0
    %v830 = vmax.f32 %v516, 0.0
    %v831 = vmax.f32 %v521, 0.0
    %v832 = vmax.f32 %v526, 0.0
    %v833 = vmax.f32 %v531, 0.0
    %v834 = vmax.f32 %v536, 0.0
    %v835 = vmax.f32 %v541, 0.0
    %v836 = vmax.f32 %v546, 0.0
    %v837 = vmax.f32 %v551, 0.0
    %v838 = vmax.f32 %v556, 0.0
    %v839 = vmax.f32 %v561, 0.0
    %v840 = vmax.f32 %v566, 0.0
    %v841 = vmax.f32 %v571, 0.0
    %v842 = vmax.f32 %v576, 0.0
    %v843 = vmax.f32 %v581, 0.0
    %v844 = vmax.f32 %v586, 0.0
    %v845 = vmax.f32 %v591, 0.0
    %v846 = vmax.f32 %v596, 0.0
    %v847 = vmax.f32 %v601, 0.0
    %v848 = vmax.f32 %v606, 0.0
    %v849 = vmax.f32 %v611, 0.0
    %v850 = vmax.f32 %v616, 0.0
    %v851 = vmax.f32 %v621, 0.0
    %v852 = vmax.f32 %v626, 0.0
    %v853 = vmax.f32 %v631, 0.0
    %v854 = vmax.f32 %v636, 0.0
    %v855 = vmax.f32 %v641, 0.0
    %v856 = vmax.f32 %v646, 0.0
    %v857 = vmax.f32 %v651, 0.0
    %v858 = vmax.f32 %v656, 0.0
    %v859 = vmax.f32 %v661, 0.0
    %v860 = vmax.f32 %v666, 0.0
    %v861 = vmax.f32 %v671, 0.0
    %v862 = vmax.f32 %v676, 0.0
    %v863 = vmax.f32 %v681, 0.0
    %v864 = vmax.f32 %v686, 0.0
    %v865 = vmax.f32 %v691, 0.0
    %v866 = vmax.f32 %v696, 0.0
    %v867 = vmax.f32 %v701, 0.0
    %v868 = vmax.f32 %v706, 0.0
    %v869 = vmax.f32 %v711, 0.0
    %v870 = vmax.f32 %v716, 0.0
    %v871 = vmax.f32 %v721, 0.0
    %v872 = vmax.f32 %v726, 0.0
    %v873 = vmax.f32 %v731, 0.0
    %v874 = vmax.f32 %v736, 0.0
    %v875 = vmax.f32 %v741, 0.0
    %v876 = vmax.f32 %v746, 0.0
    %v877 = vmax.f32 %v751, 0.0
    %v878 = vmax.f32 %v756, 0.0
    %v879 = vmax.f32 %v761, 0.0
    %v880 = vmax.f32 %v766, 0.0
    %v881 = vmax.f32 %v771, 0.0
    %v882 = vmax.f32 %v776, 0.0
    %v883 = vmax.f32 %v781, 0.0
    %v884 = vmax.f32 %v786, 0.0
    %v885 = vmax.f32 %v791, 0.0
    %v886 = vmax.f32 %v796, 0.0
    %v887 = vmax.f32 %v801, 0.0
    %v888 = vmax.f32 %v806, 0.0
    %v889 = vmax.f32 %v811, 0.0
    %v890 = vmax.f32 %v816, 0.0
    %v891 = vmax.f32 %v821, 0.0
    %v892 = vmax.f32 %v826, 0.0
    %v893 = vld [vmem:[#allocation5] sm:$0xff]
    %v894 = vld [vmem:[#allocation5 + $0x8] sm:$0xff]
    %v895 = vld [vmem:[#allocation5 + $0x10] sm:$0xff]
    %v896 = vld [vmem:[#allocation5 + $0x18] sm:$0xff]
    %v897 = vld [vmem:[#allocation5 + $0x20] sm:$0xff]
    %v898 = vld [vmem:[#allocation5 + $0x28] sm:$0xff]
    %v899 = vld [vmem:[#allocation5 + $0x30] sm:$0xff]
    %v900 = vld [vmem:[#allocation5 + $0x38] sm:$0xff]
    %v901 = vld [vmem:[#allocation5 + $0x40] sm:$0xff]
    %v902 = vld [vmem:[#allocation5 + $0x48] sm:$0xff]
    %v903 = vld [vmem:[#allocation5 + $0x50] sm:$0xff]
    %v904 = vld [vmem:[#allocation5 + $0x58] sm:$0xff]
    %v905 = vld [vmem:[#allocation5 + $0x60] sm:$0xff]
    %v906 = vld [vmem:[#allocation5 + $0x68] sm:$0xff]
    %v907 = vld [vmem:[#allocation5 + $0x70] sm:$0xff]
    %v908 = vld [vmem:[#allocation5 + $0x78] sm:$0xff]
    %v909 = vld [vmem:[#allocation5 + $0x80] sm:$0xff]
    %v910 = vld [vmem:[#allocation5 + $0x88] sm:$0xff]
    %v911 = vld [vmem:[#allocation5 + $0x90] sm:$0xff]
    %v912 = vld [vmem:[#allocation5 + $0x98] sm:$0xff]
    %v913 = vld [vmem:[#allocation5 + $0xa0] sm:$0xff]
    %v914 = vld [vmem:[#allocation5 + $0xa8] sm:$0xff]
    %v915 = vld [vmem:[#allocation5 + $0xb0] sm:$0xff]
    %v916 = vld [vmem:[#allocation5 + $0xb8] sm:$0xff]
    %v917 = vld [vmem:[#allocation5 + $0xc0] sm:$0xff]
    %v918 = vld [vmem:[#allocation5 + $0xc8] sm:$0xff]
    %v919 = vld [vmem:[#allocation5 + $0xd0] sm:$0xff]
    %v920 = vld [vmem:[#allocation5 + $0xd8] sm:$0xff]
    %v921 = vld [vmem:[#allocation5 + $0xe0] sm:$0xff]
    %v922 = vld [vmem:[#allocation5 + $0xe8] sm:$0xff]
    %v923 = vld [vmem:[#allocation5 + $0xf0] sm:$0xff]
    %v924 = vld [vmem:[#allocation5 + $0xf8] sm:$0xff]
    %v925 = vld [vmem:[#allocation5 + $0x100] sm:$0xff]
    %v926 = vld [vmem:[#allocation5 + $0x108] sm:$0xff]
    %v927 = vld [vmem:[#allocation5 + $0x110] sm:$0xff]
    %v928 = vld [vmem:[#allocation5 + $0x118] sm:$0xff]
    %v929 = vld [vmem:[#allocation5 + $0x120] sm:$0xff]
    %v930 = vld [vmem:[#allocation5 + $0x128] sm:$0xff]
    %v931 = vld [vmem:[#allocation5 + $0x130] sm:$0xff]
    %v932 = vld [vmem:[#allocation5 + $0x138] sm:$0xff]
    %v933 = vld [vmem:[#allocation5 + $0x140] sm:$0xff]
    %v934 = vld [vmem:[#allocation5 + $0x148] sm:$0xff]
    %v935 = vld [vmem:[#allocation5 + $0x150] sm:$0xff]
    %v936 = vld [vmem:[#allocation5 + $0x158] sm:$0xff]
    %v937 = vld [vmem:[#allocation5 + $0x160] sm:$0xff]
    %v938 = vld [vmem:[#allocation5 + $0x168] sm:$0xff]
    %v939 = vld [vmem:[#allocation5 + $0x170] sm:$0xff]
    %v940 = vld [vmem:[#allocation5 + $0x178] sm:$0xff]
    %v941 = vld [vmem:[#allocation5 + $0x180] sm:$0xff]
    %v942 = vld [vmem:[#allocation5 + $0x188] sm:$0xff]
    %v943 = vld [vmem:[#allocation5 + $0x190] sm:$0xff]
    %v944 = vld [vmem:[#allocation5 + $0x198] sm:$0xff]
    %v945 = vld [vmem:[#allocation5 + $0x1a0] sm:$0xff]
    %v946 = vld [vmem:[#allocation5 + $0x1a8] sm:$0xff]
    %v947 = vld [vmem:[#allocation5 + $0x1b0] sm:$0xff]
    %v948 = vld [vmem:[#allocation5 + $0x1b8] sm:$0xff]
    %v949 = vld [vmem:[#allocation5 + $0x1c0] sm:$0xff]
    %v950 = vld [vmem:[#allocation5 + $0x1c8] sm:$0xff]
    %v951 = vld [vmem:[#allocation5 + $0x1d0] sm:$0xff]
    %v952 = vld [vmem:[#allocation5 + $0x1d8] sm:$0xff]
    %v953 = vld [vmem:[#allocation5 + $0x1e0] sm:$0xff]
    %v954 = vld [vmem:[#allocation5 + $0x1e8] sm:$0xff]
    %v955 = vld [vmem:[#allocation5 + $0x1f0] sm:$0xff]
    %v956 = vld [vmem:[#allocation5 + $0x1f8] sm:$0xff]
    %957 = vmatprep.subr.mxu0 0.0
    %958 = vmatpush1.msra.mxu0 %v829
    %959 = vmatprep.subr.mxu0 0.0
    %960 = vmatpush1.msra.mxu0 %v830
    %961 = vmatprep.subr.mxu0 0.0
    %962 = vmatpush1.msra.mxu0 %v831
    %963 = vmatprep.subr.mxu0 0.0
    %964 = vmatpush1.msra.mxu0 %v832
    %965 = vmatprep.subr.mxu0 0.0
    %966 = vmatpush1.msra.mxu0 %v833
    %967 = vmatprep.subr.mxu0 0.0
    %968 = vmatpush1.msra.mxu0 %v834
    %969 = vmatprep.subr.mxu0 0.0
    %970 = vmatpush1.msra.mxu0 %v835
    %971 = vmatprep.subr.mxu0 0.0
    %972 = vmatpush1.msra.mxu0 %v836
    %973 = vmatprep.subr.mxu0 0.0
    %974 = vmatpush1.msra.mxu0 %v837
    %975 = vmatprep.subr.mxu0 0.0
    %976 = vmatpush1.msra.mxu0 %v838
    %977 = vmatprep.subr.mxu0 0.0
    %978 = vmatpush1.msra.mxu0 %v839
    %979 = vmatprep.subr.mxu0 0.0
    %980 = vmatpush1.msra.mxu0 %v840
    %981 = vmatprep.subr.mxu0 0.0
    %982 = vmatpush1.msra.mxu0 %v841
    %983 = vmatprep.subr.mxu0 0.0
    %984 = vmatpush1.msra.mxu0 %v842
    %985 = vmatprep.subr.mxu0 0.0
    %986 = vmatpush1.msra.mxu0 %v843
    %987 = vmatprep.subr.mxu0 0.0
    %988 = vmatpush1.msra.mxu0 %v844
    %989 = vmatprep.subr.mxu0 0.0
    %990 = vmatpush1.msra.mxu0 %v845
    %991 = vmatprep.subr.mxu0 0.0
    %992 = vmatpush1.msra.mxu0 %v846
    %993 = vmatprep.subr.mxu0 0.0
    %994 = vmatpush1.msra.mxu0 %v847
    %995 = vmatprep.subr.mxu0 0.0
    %996 = vmatpush1.msra.mxu0 %v848
    %997 = vmatprep.subr.mxu0 0.0
    %998 = vmatpush1.msra.mxu0 %v849
    %999 = vmatprep.subr.mxu0 0.0
    %1000 = vmatpush1.msra.mxu0 %v850
    %1001 = vmatprep.subr.mxu0 0.0
    %1002 = vmatpush1.msra.mxu0 %v851
    %1003 = vmatprep.subr.mxu0 0.0
    %1004 = vmatpush1.msra.mxu0 %v852
    %1005 = vmatprep.subr.mxu0 0.0
    %1006 = vmatpush1.msra.mxu0 %v853
    %1007 = vmatprep.subr.mxu0 0.0
    %1008 = vmatpush1.msra.mxu0 %v854
    %1009 = vmatprep.subr.mxu0 0.0
    %1010 = vmatpush1.msra.mxu0 %v855
    %1011 = vmatprep.subr.mxu0 0.0
    %1012 = vmatpush1.msra.mxu0 %v856
    %1013 = vmatprep.subr.mxu0 0.0
    %1014 = vmatpush1.msra.mxu0 %v857
    %1015 = vmatprep.subr.mxu0 0.0
    %1016 = vmatpush1.msra.mxu0 %v858
    %1017 = vmatprep.subr.mxu0 0.0
    %1018 = vmatpush1.msra.mxu0 %v859
    %1019 = vmatprep.subr.mxu0 0.0
    %1020 = vmatpush1.msra.mxu0 %v860
    %1021 = vmatprep.mubr.f32.mxu0 %v894
    %1022 = vmatmul.mubr.f32.gmra.mrb[0].mxu0 %v893
    %v1023 = vpop.f32.mrb[0].mxu0
    %v1024 = vadd.f32 0.0, %v1023
    %v1025 = vpop.f32.mrb[0].mxu0
    %1026 = vmatprep.mubr.f32.mxu0 %v898
    %1027 = vmatmul.mubr.f32.gmra.mrb[0].mxu0 %v897
    %v1028 = vpop.f32.mrb[0].mxu0
    %v1029 = vadd.f32 0.0, %v1028
    %v1030 = vpop.f32.mrb[0].mxu0
    %1031 = vmatprep.mubr.f32.mxu0 %v902
    %1032 = vmatmul.mubr.f32.gmra.mrb[0].mxu0 %v901
    %v1033 = vpop.f32.mrb[0].mxu0
    %v1034 = vadd.f32 0.0, %v1033
    %v1035 = vpop.f32.mrb[0].mxu0
    %1036 = vmatprep.mubr.f32.mxu0 %v906
    %1037 = vmatmul.mubr.f32.gmra.mrb[0].mxu0 %v905
    %v1038 = vpop.f32.mrb[0].mxu0
    %v1039 = vadd.f32 0.0, %v1038
    %v1040 = vpop.f32.mrb[0].mxu0
    %1041 = vmatprep.mubr.f32.mxu0 %v910
    %1042 = vmatmul.mubr.f32.gmra.mrb[0].mxu0 %v909
    %v1043 = vpop.f32.mrb[0].mxu0
    %v1044 = vadd.f32 0.0, %v1043
    %v1045 = vpop.f32.mrb[0].mxu0
    %1046 = vmatprep.mubr.f32.mxu0 %v914
    %1047 = vmatmul.mubr.f32.gmra.mrb[0].mxu0 %v913
    %v1048 = vpop.f32.mrb[0].mxu0
    %v1049 = vadd.f32 0.0, %v1048
    %v1050 = vpop.f32.mrb[0].mxu0
    %1051 = vmatprep.mubr.f32.mxu0 %v918
    %1052 = vmatmul.mubr.f32.gmra.mrb[0].mxu0 %v917
    %v1053 = vpop.f32.mrb[0].mxu0
    %v1054 = vadd.f32 0.0, %v1053
    %v1055 = vpop.f32.mrb[0].mxu0
    %1056 = vmatprep.mubr.f32.mxu0 %v922
    %1057 = vmatmul.mubr.f32.gmra.mrb[0].mxu0 %v921
    %v1058 = vpop.f32.mrb[0].mxu0
    %v1059 = vadd.f32 0.0, %v1058
    %v1060 = vpop.f32.mrb[0].mxu0
    %1061 = vmatprep.mubr.f32.mxu0 %v926
    %1062 = vmatmul.mubr.f32.gmra.mrb[0].mxu0 %v925
    %v1063 = vpop.f32.mrb[0].mxu0
    %v1064 = vadd.f32 0.0, %v1063
    %v1065 = vpop.f32.mrb[0].mxu0
    %1066 = vmatprep.mubr.f32.mxu0 %v930
    %1067 = vmatmul.mubr.f32.gmra.mrb[0].mxu0 %v929
    %v1068 = vpop.f32.mrb[0].mxu0
    %v1069 = vadd.f32 0.0, %v1068
    %v1070 = vpop.f32.mrb[0].mxu0
    %1071 = vmatprep.mubr.f32.mxu0 %v934
    %1072 = vmatmul.mubr.f32.gmra.mrb[0].mxu0 %v933
    %v1073 = vpop.f32.mrb[0].mxu0
    %v1074 = vadd.f32 0.0, %v1073
    %v1075 = vpop.f32.mrb[0].mxu0
    %1076 = vmatprep.mubr.f32.mxu0 %v938
    %1077 = vmatmul.mubr.f32.gmra.mrb[0].mxu0 %v937
    %v1078 = vpop.f32.mrb[0].mxu0
    %v1079 = vadd.f32 0.0, %v1078
    %v1080 = vpop.f32.mrb[0].mxu0
    %1081 = vmatprep.mubr.f32.mxu0 %v942
    %1082 = vmatmul.mubr.f32.gmra.mrb[0].mxu0 %v941
    %v1083 = vpop.f32.mrb[0].mxu0
    %v1084 = vadd.f32 0.0, %v1083
    %v1085 = vpop.f32.mrb[0].mxu0
    %1086 = vmatprep.mubr.f32.mxu0 %v946
    %1087 = vmatmul.mubr.f32.gmra.mrb[0].mxu0 %v945
    %v1088 = vpop.f32.mrb[0].mxu0
    %v1089 = vadd.f32 0.0, %v1088
    %v1090 = vpop.f32.mrb[0].mxu0
    %1091 = vmatprep.mubr.f32.mxu0 %v950
    %1092 = vmatmul.mubr.f32.gmra.mrb[0].mxu0 %v949
    %v1093 = vpop.f32.mrb[0].mxu0
    %v1094 = vadd.f32 0.0, %v1093
    %v1095 = vpop.f32.mrb[0].mxu0
    %1096 = vmatprep.mubr.f32.mxu0 %v954
    %1097 = vmatmul.mubr.f32.gmra.mrb[0].mxu0 %v953
    %v1098 = vpop.f32.mrb[0].mxu0
    %v1099 = vadd.f32 0.0, %v1098
    %v1100 = vpop.f32.mrb[0].mxu0
    %1101 = vdwg.mxu0
    %1102 = vmatprep.subr.mxu0 0.0
    %1103 = vmatpush1.msra.mxu0 %v861
    %1104 = vmatprep.subr.mxu0 0.0
    %1105 = vmatpush1.msra.mxu0 %v862
    %1106 = vmatprep.subr.mxu0 0.0
    %1107 = vmatpush1.msra.mxu0 %v863
    %1108 = vmatprep.subr.mxu0 0.0
    %1109 = vmatpush1.msra.mxu0 %v864
    %1110 = vmatprep.subr.mxu0 0.0
    %1111 = vmatpush1.msra.mxu0 %v865
    %1112 = vmatprep.subr.mxu0 0.0
    %1113 = vmatpush1.msra.mxu0 %v866
    %1114 = vmatprep.subr.mxu0 0.0
    %1115 = vmatpush1.msra.mxu0 %v867
    %1116 = vmatprep.subr.mxu0 0.0
    %1117 = vmatpush1.msra.mxu0 %v868
    %1118 = vmatprep.subr.mxu0 0.0
    %1119 = vmatpush1.msra.mxu0 %v869
    %1120 = vmatprep.subr.mxu0 0.0
    %1121 = vmatpush1.msra.mxu0 %v870
    %1122 = vmatprep.subr.mxu0 0.0
    %1123 = vmatpush1.msra.mxu0 %v871
    %1124 = vmatprep.subr.mxu0 0.0
    %1125 = vmatpush1.msra.mxu0 %v872
    %1126 = vmatprep.subr.mxu0 0.0
    %1127 = vmatpush1.msra.mxu0 %v873
    %1128 = vmatprep.subr.mxu0 0.0
    %1129 = vmatpush1.msra.mxu0 %v874
    %1130 = vmatprep.subr.mxu0 0.0
    %1131 = vmatpush1.msra.mxu0 %v875
    %1132 = vmatprep.subr.mxu0 0.0
    %1133 = vmatpush1.msra.mxu0 %v876
    %1134 = vmatprep.subr.mxu0 0.0
    %1135 = vmatpush1.msra.mxu0 %v877
    %1136 = vmatprep.subr.mxu0 0.0
    %1137 = vmatpush1.msra.mxu0 %v878
    %1138 = vmatprep.subr.mxu0 0.0
    %1139 = vmatpush1.msra.mxu0 %v879
    %1140 = vmatprep.subr.mxu0 0.0
    %1141 = vmatpush1.msra.mxu0 %v880
    %1142 = vmatprep.subr.mxu0 0.0
    %1143 = vmatpush1.msra.mxu0 %v881
    %1144 = vmatprep.subr.mxu0 0.0
    %1145 = vmatpush1.msra.mxu0 %v882
    %1146 = vmatprep.subr.mxu0 0.0
    %1147 = vmatpush1.msra.mxu0 %v883
    %1148 = vmatprep.subr.mxu0 0.0
    %1149 = vmatpush1.msra.mxu0 %v884
    %1150 = vmatprep.subr.mxu0 0.0
    %1151 = vmatpush1.msra.mxu0 %v885
    %1152 = vmatprep.subr.mxu0 0.0
    %1153 = vmatpush1.msra.mxu0 %v886
    %1154 = vmatprep.subr.mxu0 0.0
    %1155 = vmatpush1.msra.mxu0 %v887
    %1156 = vmatprep.subr.mxu0 0.0
    %1157 = vmatpush1.msra.mxu0 %v888
    %1158 = vmatprep.subr.mxu0 0.0
    %1159 = vmatpush1.msra.mxu0 %v889
    %1160 = vmatprep.subr.mxu0 0.0
    %1161 = vmatpush1.msra.mxu0 %v890
    %1162 = vmatprep.subr.mxu0 0.0
    %1163 = vmatpush1.msra.mxu0 %v891
    %1164 = vmatprep.subr.mxu0 0.0
    %1165 = vmatpush1.msra.mxu0 %v892
    %1166 = vmatprep.mubr.f32.mxu0 %v896
    %1167 = vmatmul.mubr.f32.gmra.mrb[0].mxu0 %v895
    %v1168 = vpop.f32.mrb[0].mxu0
    %v1169 = vadd.f32 %v1024, %v1168
    %v1170 = vpop.f32.mrb[0].mxu0
    %1171 = vmatprep.mubr.f32.mxu0 %v900
    %1172 = vmatmul.mubr.f32.gmra.mrb[0].mxu0 %v899
    %v1173 = vpop.f32.mrb[0].mxu0
    %v1174 = vadd.f32 %v1029, %v1173
    %v1175 = vpop.f32.mrb[0].mxu0
    %1176 = vmatprep.mubr.f32.mxu0 %v904
    %1177 = vmatmul.mubr.f32.gmra.mrb[0].mxu0 %v903
    %v1178 = vpop.f32.mrb[0].mxu0
    %v1179 = vadd.f32 %v1034, %v1178
    %v1180 = vpop.f32.mrb[0].mxu0
    %1181 = vmatprep.mubr.f32.mxu0 %v908
    %1182 = vmatmul.mubr.f32.gmra.mrb[0].mxu0 %v907
    %v1183 = vpop.f32.mrb[0].mxu0
    %v1184 = vadd.f32 %v1039, %v1183
    %v1185 = vpop.f32.mrb[0].mxu0
    %1186 = vmatprep.mubr.f32.mxu0 %v912
    %1187 = vmatmul.mubr.f32.gmra.mrb[0].mxu0 %v911
    %v1188 = vpop.f32.mrb[0].mxu0
    %v1189 = vadd.f32 %v1044, %v1188
    %v1190 = vpop.f32.mrb[0].mxu0
    %1191 = vmatprep.mubr.f32.mxu0 %v916
    %1192 = vmatmul.mubr.f32.gmra.mrb[0].mxu0 %v915
    %v1193 = vpop.f32.mrb[0].mxu0
    %v1194 = vadd.f32 %v1049, %v1193
    %v1195 = vpop.f32.mrb[0].mxu0
    %1196 = vmatprep.mubr.f32.mxu0 %v920
    %1197 = vmatmul.mubr.f32.gmra.mrb[0].mxu0 %v919
    %v1198 = vpop.f32.mrb[0].mxu0
    %v1199 = vadd.f32 %v1054, %v1198
    %v1200 = vpop.f32.mrb[0].mxu0
    %1201 = vmatprep.mubr.f32.mxu0 %v924
    %1202 = vmatmul.mubr.f32.gmra.mrb[0].mxu0 %v923
    %v1203 = vpop.f32.mrb[0].mxu0
    %v1204 = vadd.f32 %v1059, %v1203
    %v1205 = vpop.f32.mrb[0].mxu0
    %1206 = vmatprep.mubr.f32.mxu0 %v928
    %1207 = vmatmul.mubr.f32.gmra.mrb[0].mxu0 %v927
    %v1208 = vpop.f32.mrb[0].mxu0
    %v1209 = vadd.f32 %v1064, %v1208
    %v1210 = vpop.f32.mrb[0].mxu0
    %1211 = vmatprep.mubr.f32.mxu0 %v932
    %1212 = vmatmul.mubr.f32.gmra.mrb[0].mxu0 %v931
    %v1213 = vpop.f32.mrb[0].mxu0
    %v1214 = vadd.f32 %v1069, %v1213
    %v1215 = vpop.f32.mrb[0].mxu0
    %1216 = vmatprep.mubr.f32.mxu0 %v936
    %1217 = vmatmul.mubr.f32.gmra.mrb[0].mxu0 %v935
    %v1218 = vpop.f32.mrb[0].mxu0
    %v1219 = vadd.f32 %v1074, %v1218
    %v1220 = vpop.f32.mrb[0].mxu0
    %1221 = vmatprep.mubr.f32.mxu0 %v940
    %1222 = vmatmul.mubr.f32.gmra.mrb[0].mxu0 %v939
    %v1223 = vpop.f32.mrb[0].mxu0
    %v1224 = vadd.f32 %v1079, %v1223
    %v1225 = vpop.f32.mrb[0].mxu0
    %1226 = vmatprep.mubr.f32.mxu0 %v944
    %1227 = vmatmul.mubr.f32.gmra.mrb[0].mxu0 %v943
    %v1228 = vpop.f32.mrb[0].mxu0
    %v1229 = vadd.f32 %v1084, %v1228
    %v1230 = vpop.f32.mrb[0].mxu0
    %1231 = vmatprep.mubr.f32.mxu0 %v948
    %1232 = vmatmul.mubr.f32.gmra.mrb[0].mxu0 %v947
    %v1233 = vpop.f32.mrb[0].mxu0
    %v1234 = vadd.f32 %v1089, %v1233
    %v1235 = vpop.f32.mrb[0].mxu0
    %1236 = vmatprep.mubr.f32.mxu0 %v952
    %1237 = vmatmul.mubr.f32.gmra.mrb[0].mxu0 %v951
    %v1238 = vpop.f32.mrb[0].mxu0
    %v1239 = vadd.f32 %v1094, %v1238
    %v1240 = vpop.f32.mrb[0].mxu0
    %1241 = vmatprep.mubr.f32.mxu0 %v956
    %1242 = vmatmul.mubr.f32.gmra.mrb[0].mxu0 %v955
    %v1243 = vpop.f32.mrb[0].mxu0
    %v1244 = vadd.f32 %v1099, %v1243
    %v1245 = vpop.f32.mrb[0].mxu0
    %1246 = vdwg.mxu0
    %v1247 = vld [vmem:[#allocation7] sm:$0xff]
    %s1248 = scalar_lea.vmem [#allocation5], 512
    %v1249 = vld [vmem:[%s1248] sm:$0xff]
    %v1250 = vld [vmem:[%s1248 + $0x8] sm:$0xff]
    %v1251 = vld [vmem:[%s1248 + $0x10] sm:$0xff]
    %v1252 = vld [vmem:[%s1248 + $0x18] sm:$0xff]
    %v1253 = vld [vmem:[%s1248 + $0x20] sm:$0xff]
    %v1254 = vld [vmem:[%s1248 + $0x28] sm:$0xff]
    %v1255 = vld [vmem:[%s1248 + $0x30] sm:$0xff]
    %v1256 = vld [vmem:[%s1248 + $0x38] sm:$0xff]
    %v1257 = vld [vmem:[%s1248 + $0x40] sm:$0xff]
    %v1258 = vld [vmem:[%s1248 + $0x48] sm:$0xff]
    %v1259 = vld [vmem:[%s1248 + $0x50] sm:$0xff]
    %v1260 = vld [vmem:[%s1248 + $0x58] sm:$0xff]
    %v1261 = vld [vmem:[%s1248 + $0x60] sm:$0xff]
    %v1262 = vld [vmem:[%s1248 + $0x68] sm:$0xff]
    %v1263 = vld [vmem:[%s1248 + $0x70] sm:$0xff]
    %v1264 = vld [vmem:[%s1248 + $0x78] sm:$0xff]
    %v1265 = vld [vmem:[%s1248 + $0x80] sm:$0xff]
    %v1266 = vld [vmem:[%s1248 + $0x88] sm:$0xff]
    %v1267 = vld [vmem:[%s1248 + $0x90] sm:$0xff]
    %v1268 = vld [vmem:[%s1248 + $0x98] sm:$0xff]
    %v1269 = vld [vmem:[%s1248 + $0xa0] sm:$0xff]
    %v1270 = vld [vmem:[%s1248 + $0xa8] sm:$0xff]
    %v1271 = vld [vmem:[%s1248 + $0xb0] sm:$0xff]
    %v1272 = vld [vmem:[%s1248 + $0xb8] sm:$0xff]
    %v1273 = vld [vmem:[%s1248 + $0xc0] sm:$0xff]
    %v1274 = vld [vmem:[%s1248 + $0xc8] sm:$0xff]
    %v1275 = vld [vmem:[%s1248 + $0xd0] sm:$0xff]
    %v1276 = vld [vmem:[%s1248 + $0xd8] sm:$0xff]
    %v1277 = vld [vmem:[%s1248 + $0xe0] sm:$0xff]
    %v1278 = vld [vmem:[%s1248 + $0xe8] sm:$0xff]
    %v1279 = vld [vmem:[%s1248 + $0xf0] sm:$0xff]
    %v1280 = vld [vmem:[%s1248 + $0xf8] sm:$0xff]
    %v1281 = vld [vmem:[%s1248 + $0x100] sm:$0xff]
    %v1282 = vld [vmem:[%s1248 + $0x108] sm:$0xff]
    %v1283 = vld [vmem:[%s1248 + $0x110] sm:$0xff]
    %v1284 = vld [vmem:[%s1248 + $0x118] sm:$0xff]
    %v1285 = vld [vmem:[%s1248 + $0x120] sm:$0xff]
    %v1286 = vld [vmem:[%s1248 + $0x128] sm:$0xff]
    %v1287 = vld [vmem:[%s1248 + $0x130] sm:$0xff]
    %v1288 = vld [vmem:[%s1248 + $0x138] sm:$0xff]
    %v1289 = vld [vmem:[%s1248 + $0x140] sm:$0xff]
    %v1290 = vld [vmem:[%s1248 + $0x148] sm:$0xff]
    %v1291 = vld [vmem:[%s1248 + $0x150] sm:$0xff]
    %v1292 = vld [vmem:[%s1248 + $0x158] sm:$0xff]
    %v1293 = vld [vmem:[%s1248 + $0x160] sm:$0xff]
    %v1294 = vld [vmem:[%s1248 + $0x168] sm:$0xff]
    %v1295 = vld [vmem:[%s1248 + $0x170] sm:$0xff]
    %v1296 = vld [vmem:[%s1248 + $0x178] sm:$0xff]
    %v1297 = vld [vmem:[%s1248 + $0x180] sm:$0xff]
    %v1298 = vld [vmem:[%s1248 + $0x188] sm:$0xff]
    %v1299 = vld [vmem:[%s1248 + $0x190] sm:$0xff]
    %v1300 = vld [vmem:[%s1248 + $0x198] sm:$0xff]
    %v1301 = vld [vmem:[%s1248 + $0x1a0] sm:$0xff]
    %v1302 = vld [vmem:[%s1248 + $0x1a8] sm:$0xff]
    %v1303 = vld [vmem:[%s1248 + $0x1b0] sm:$0xff]
    %v1304 = vld [vmem:[%s1248 + $0x1b8] sm:$0xff]
    %v1305 = vld [vmem:[%s1248 + $0x1c0] sm:$0xff]
    %v1306 = vld [vmem:[%s1248 + $0x1c8] sm:$0xff]
    %v1307 = vld [vmem:[%s1248 + $0x1d0] sm:$0xff]
    %v1308 = vld [vmem:[%s1248 + $0x1d8] sm:$0xff]
    %v1309 = vld [vmem:[%s1248 + $0x1e0] sm:$0xff]
    %v1310 = vld [vmem:[%s1248 + $0x1e8] sm:$0xff]
    %v1311 = vld [vmem:[%s1248 + $0x1f0] sm:$0xff]
    %v1312 = vld [vmem:[%s1248 + $0x1f8] sm:$0xff]
    %1313 = vmatprep.subr.mxu0 0.0
    %1314 = vmatpush1.msra.mxu0 %v829
    %1315 = vmatprep.subr.mxu0 0.0
    %1316 = vmatpush1.msra.mxu0 %v830
    %1317 = vmatprep.subr.mxu0 0.0
    %1318 = vmatpush1.msra.mxu0 %v831
    %1319 = vmatprep.subr.mxu0 0.0
    %1320 = vmatpush1.msra.mxu0 %v832
    %1321 = vmatprep.subr.mxu0 0.0
    %1322 = vmatpush1.msra.mxu0 %v833
    %1323 = vmatprep.subr.mxu0 0.0
    %1324 = vmatpush1.msra.mxu0 %v834
    %1325 = vmatprep.subr.mxu0 0.0
    %1326 = vmatpush1.msra.mxu0 %v835
    %1327 = vmatprep.subr.mxu0 0.0
    %1328 = vmatpush1.msra.mxu0 %v836
    %1329 = vmatprep.subr.mxu0 0.0
    %1330 = vmatpush1.msra.mxu0 %v837
    %1331 = vmatprep.subr.mxu0 0.0
    %1332 = vmatpush1.msra.mxu0 %v838
    %1333 = vmatprep.subr.mxu0 0.0
    %1334 = vmatpush1.msra.mxu0 %v839
    %1335 = vmatprep.subr.mxu0 0.0
    %1336 = vmatpush1.msra.mxu0 %v840
    %1337 = vmatprep.subr.mxu0 0.0
    %1338 = vmatpush1.msra.mxu0 %v841
    %1339 = vmatprep.subr.mxu0 0.0
    %1340 = vmatpush1.msra.mxu0 %v842
    %1341 = vmatprep.subr.mxu0 0.0
    %1342 = vmatpush1.msra.mxu0 %v843
    %1343 = vmatprep.subr.mxu0 0.0
    %1344 = vmatpush1.msra.mxu0 %v844
    %1345 = vmatprep.subr.mxu0 0.0
    %1346 = vmatpush1.msra.mxu0 %v845
    %1347 = vmatprep.subr.mxu0 0.0
    %1348 = vmatpush1.msra.mxu0 %v846
    %1349 = vmatprep.subr.mxu0 0.0
    %1350 = vmatpush1.msra.mxu0 %v847
    %1351 = vmatprep.subr.mxu0 0.0
    %1352 = vmatpush1.msra.mxu0 %v848
    %1353 = vmatprep.subr.mxu0 0.0
    %1354 = vmatpush1.msra.mxu0 %v849
    %1355 = vmatprep.subr.mxu0 0.0
    %1356 = vmatpush1.msra.mxu0 %v850
    %1357 = vmatprep.subr.mxu0 0.0
    %1358 = vmatpush1.msra.mxu0 %v851
    %1359 = vmatprep.subr.mxu0 0.0
    %1360 = vmatpush1.msra.mxu0 %v852
    %1361 = vmatprep.subr.mxu0 0.0
    %1362 = vmatpush1.msra.mxu0 %v853
    %1363 = vmatprep.subr.mxu0 0.0
    %1364 = vmatpush1.msra.mxu0 %v854
    %1365 = vmatprep.subr.mxu0 0.0
    %1366 = vmatpush1.msra.mxu0 %v855
    %1367 = vmatprep.subr.mxu0 0.0
    %1368 = vmatpush1.msra.mxu0 %v856
    %1369 = vmatprep.subr.mxu0 0.0
    %1370 = vmatpush1.msra.mxu0 %v857
    %1371 = vmatprep.subr.mxu0 0.0
    %1372 = vmatpush1.msra.mxu0 %v858
    %1373 = vmatprep.subr.mxu0 0.0
    %1374 = vmatpush1.msra.mxu0 %v859
    %1375 = vmatprep.subr.mxu0 0.0
    %1376 = vmatpush1.msra.mxu0 %v860
    %1377 = vmatprep.mubr.f32.mxu0 %v1250
    %1378 = vmatmul.mubr.f32.gmra.mrb[0].mxu0 %v1249
    %v1379 = vpop.f32.mrb[0].mxu0
    %v1380 = vadd.f32 0.0, %v1379
    %v1381 = vpop.f32.mrb[0].mxu0
    %1382 = vmatprep.mubr.f32.mxu0 %v1254
    %1383 = vmatmul.mubr.f32.gmra.mrb[0].mxu0 %v1253
    %v1384 = vpop.f32.mrb[0].mxu0
    %v1385 = vadd.f32 0.0, %v1384
    %v1386 = vpop.f32.mrb[0].mxu0
    %1387 = vmatprep.mubr.f32.mxu0 %v1258
    %1388 = vmatmul.mubr.f32.gmra.mrb[0].mxu0 %v1257
    %v1389 = vpop.f32.mrb[0].mxu0
    %v1390 = vadd.f32 0.0, %v1389
    %v1391 = vpop.f32.mrb[0].mxu0
    %1392 = vmatprep.mubr.f32.mxu0 %v1262
    %1393 = vmatmul.mubr.f32.gmra.mrb[0].mxu0 %v1261
    %v1394 = vpop.f32.mrb[0].mxu0
    %v1395 = vadd.f32 0.0, %v1394
    %v1396 = vpop.f32.mrb[0].mxu0
    %1397 = vmatprep.mubr.f32.mxu0 %v1266
    %1398 = vmatmul.mubr.f32.gmra.mrb[0].mxu0 %v1265
    %v1399 = vpop.f32.mrb[0].mxu0
    %v1400 = vadd.f32 0.0, %v1399
    %v1401 = vpop.f32.mrb[0].mxu0
    %1402 = vmatprep.mubr.f32.mxu0 %v1270
    %1403 = vmatmul.mubr.f32.gmra.mrb[0].mxu0 %v1269
    %v1404 = vpop.f32.mrb[0].mxu0
    %v1405 = vadd.f32 0.0, %v1404
    %v1406 = vpop.f32.mrb[0].mxu0
    %1407 = vmatprep.mubr.f32.mxu0 %v1274
    %1408 = vmatmul.mubr.f32.gmra.mrb[0].mxu0 %v1273
    %v1409 = vpop.f32.mrb[0].mxu0
    %v1410 = vadd.f32 0.0, %v1409
    %v1411 = vpop.f32.mrb[0].mxu0
    %1412 = vmatprep.mubr.f32.mxu0 %v1278
    %1413 = vmatmul.mubr.f32.gmra.mrb[0].mxu0 %v1277
    %v1414 = vpop.f32.mrb[0].mxu0
    %v1415 = vadd.f32 0.0, %v1414
    %v1416 = vpop.f32.mrb[0].mxu0
    %1417 = vmatprep.mubr.f32.mxu0 %v1282
    %1418 = vmatmul.mubr.f32.gmra.mrb[0].mxu0 %v1281
    %v1419 = vpop.f32.mrb[0].mxu0
    %v1420 = vadd.f32 0.0, %v1419
    %v1421 = vpop.f32.mrb[0].mxu0
    %1422 = vmatprep.mubr.f32.mxu0 %v1286
    %1423 = vmatmul.mubr.f32.gmra.mrb[0].mxu0 %v1285
    %v1424 = vpop.f32.mrb[0].mxu0
    %v1425 = vadd.f32 0.0, %v1424
    %v1426 = vpop.f32.mrb[0].mxu0
    %1427 = vmatprep.mubr.f32.mxu0 %v1290
    %1428 = vmatmul.mubr.f32.gmra.mrb[0].mxu0 %v1289
    %v1429 = vpop.f32.mrb[0].mxu0
    %v1430 = vadd.f32 0.0, %v1429
    %v1431 = vpop.f32.mrb[0].mxu0
    %1432 = vmatprep.mubr.f32.mxu0 %v1294
    %1433 = vmatmul.mubr.f32.gmra.mrb[0].mxu0 %v1293
    %v1434 = vpop.f32.mrb[0].mxu0
    %v1435 = vadd.f32 0.0, %v1434
    %v1436 = vpop.f32.mrb[0].mxu0
    %1437 = vmatprep.mubr.f32.mxu0 %v1298
    %1438 = vmatmul.mubr.f32.gmra.mrb[0].mxu0 %v1297
    %v1439 = vpop.f32.mrb[0].mxu0
    %v1440 = vadd.f32 0.0, %v1439
    %v1441 = vpop.f32.mrb[0].mxu0
    %1442 = vmatprep.mubr.f32.mxu0 %v1302
    %1443 = vmatmul.mubr.f32.gmra.mrb[0].mxu0 %v1301
    %v1444 = vpop.f32.mrb[0].mxu0
    %v1445 = vadd.f32 0.0, %v1444
    %v1446 = vpop.f32.mrb[0].mxu0
    %1447 = vmatprep.mubr.f32.mxu0 %v1306
    %1448 = vmatmul.mubr.f32.gmra.mrb[0].mxu0 %v1305
    %v1449 = vpop.f32.mrb[0].mxu0
    %v1450 = vadd.f32 0.0, %v1449
    %v1451 = vpop.f32.mrb[0].mxu0
    %1452 = vmatprep.mubr.f32.mxu0 %v1310
    %1453 = vmatmul.mubr.f32.gmra.mrb[0].mxu0 %v1309
    %v1454 = vpop.f32.mrb[0].mxu0
    %v1455 = vadd.f32 0.0, %v1454
    %v1456 = vpop.f32.mrb[0].mxu0
    %1457 = vdwg.mxu0
    %1458 = vmatprep.subr.mxu0 0.0
    %1459 = vmatpush1.msra.mxu0 %v861
    %1460 = vmatprep.subr.mxu0 0.0
    %1461 = vmatpush1.msra.mxu0 %v862
    %1462 = vmatprep.subr.mxu0 0.0
    %1463 = vmatpush1.msra.mxu0 %v863
    %1464 = vmatprep.subr.mxu0 0.0
    %1465 = vmatpush1.msra.mxu0 %v864
    %1466 = vmatprep.subr.mxu0 0.0
    %1467 = vmatpush1.msra.mxu0 %v865
    %1468 = vmatprep.subr.mxu0 0.0
    %1469 = vmatpush1.msra.mxu0 %v866
    %1470 = vmatprep.subr.mxu0 0.0
    %1471 = vmatpush1.msra.mxu0 %v867
    %1472 = vmatprep.subr.mxu0 0.0
    %1473 = vmatpush1.msra.mxu0 %v868
    %1474 = vmatprep.subr.mxu0 0.0
    %1475 = vmatpush1.msra.mxu0 %v869
    %1476 = vmatprep.subr.mxu0 0.0
    %1477 = vmatpush1.msra.mxu0 %v870
    %1478 = vmatprep.subr.mxu0 0.0
    %1479 = vmatpush1.msra.mxu0 %v871
    %1480 = vmatprep.subr.mxu0 0.0
    %1481 = vmatpush1.msra.mxu0 %v872
    %1482 = vmatprep.subr.mxu0 0.0
    %1483 = vmatpush1.msra.mxu0 %v873
    %1484 = vmatprep.subr.mxu0 0.0
    %1485 = vmatpush1.msra.mxu0 %v874
    %1486 = vmatprep.subr.mxu0 0.0
    %1487 = vmatpush1.msra.mxu0 %v875
    %1488 = vmatprep.subr.mxu0 0.0
    %1489 = vmatpush1.msra.mxu0 %v876
    %1490 = vmatprep.subr.mxu0 0.0
    %1491 = vmatpush1.msra.mxu0 %v877
    %1492 = vmatprep.subr.mxu0 0.0
    %1493 = vmatpush1.msra.mxu0 %v878
    %1494 = vmatprep.subr.mxu0 0.0
    %1495 = vmatpush1.msra.mxu0 %v879
    %1496 = vmatprep.subr.mxu0 0.0
    %1497 = vmatpush1.msra.mxu0 %v880
    %1498 = vmatprep.subr.mxu0 0.0
    %1499 = vmatpush1.msra.mxu0 %v881
    %1500 = vmatprep.subr.mxu0 0.0
    %1501 = vmatpush1.msra.mxu0 %v882
    %1502 = vmatprep.subr.mxu0 0.0
    %1503 = vmatpush1.msra.mxu0 %v883
    %1504 = vmatprep.subr.mxu0 0.0
    %1505 = vmatpush1.msra.mxu0 %v884
    %1506 = vmatprep.subr.mxu0 0.0
    %1507 = vmatpush1.msra.mxu0 %v885
    %1508 = vmatprep.subr.mxu0 0.0
    %1509 = vmatpush1.msra.mxu0 %v886
    %1510 = vmatprep.subr.mxu0 0.0
    %1511 = vmatpush1.msra.mxu0 %v887
    %1512 = vmatprep.subr.mxu0 0.0
    %1513 = vmatpush1.msra.mxu0 %v888
    %1514 = vmatprep.subr.mxu0 0.0
    %1515 = vmatpush1.msra.mxu0 %v889
    %1516 = vmatprep.subr.mxu0 0.0
    %1517 = vmatpush1.msra.mxu0 %v890
    %1518 = vmatprep.subr.mxu0 0.0
    %1519 = vmatpush1.msra.mxu0 %v891
    %1520 = vmatprep.subr.mxu0 0.0
    %1521 = vmatpush1.msra.mxu0 %v892
    %1522 = vmatprep.mubr.f32.mxu0 %v1252
    %1523 = vmatmul.mubr.f32.gmra.mrb[0].mxu0 %v1251
    %v1524 = vpop.f32.mrb[0].mxu0
    %v1525 = vadd.f32 %v1380, %v1524
    %v1526 = vpop.f32.mrb[0].mxu0
    %1527 = vmatprep.mubr.f32.mxu0 %v1256
    %1528 = vmatmul.mubr.f32.gmra.mrb[0].mxu0 %v1255
    %v1529 = vpop.f32.mrb[0].mxu0
    %v1530 = vadd.f32 %v1385, %v1529
    %v1531 = vpop.f32.mrb[0].mxu0
    %1532 = vmatprep.mubr.f32.mxu0 %v1260
    %1533 = vmatmul.mubr.f32.gmra.mrb[0].mxu0 %v1259
    %v1534 = vpop.f32.mrb[0].mxu0
    %v1535 = vadd.f32 %v1390, %v1534
    %v1536 = vpop.f32.mrb[0].mxu0
    %1537 = vmatprep.mubr.f32.mxu0 %v1264
    %1538 = vmatmul.mubr.f32.gmra.mrb[0].mxu0 %v1263
    %v1539 = vpop.f32.mrb[0].mxu0
    %v1540 = vadd.f32 %v1395, %v1539
    %v1541 = vpop.f32.mrb[0].mxu0
    %1542 = vmatprep.mubr.f32.mxu0 %v1268
    %1543 = vmatmul.mubr.f32.gmra.mrb[0].mxu0 %v1267
    %v1544 = vpop.f32.mrb[0].mxu0
    %v1545 = vadd.f32 %v1400, %v1544
    %v1546 = vpop.f32.mrb[0].mxu0
    %1547 = vmatprep.mubr.f32.mxu0 %v1272
    %1548 = vmatmul.mubr.f32.gmra.mrb[0].mxu0 %v1271
    %v1549 = vpop.f32.mrb[0].mxu0
    %v1550 = vadd.f32 %v1405, %v1549
    %v1551 = vpop.f32.mrb[0].mxu0
    %1552 = vmatprep.mubr.f32.mxu0 %v1276
    %1553 = vmatmul.mubr.f32.gmra.mrb[0].mxu0 %v1275
    %v1554 = vpop.f32.mrb[0].mxu0
    %v1555 = vadd.f32 %v1410, %v1554
    %v1556 = vpop.f32.mrb[0].mxu0
    %1557 = vmatprep.mubr.f32.mxu0 %v1280
    %1558 = vmatmul.mubr.f32.gmra.mrb[0].mxu0 %v1279
    %v1559 = vpop.f32.mrb[0].mxu0
    %v1560 = vadd.f32 %v1415, %v1559
    %v1561 = vpop.f32.mrb[0].mxu0
    %1562 = vmatprep.mubr.f32.mxu0 %v1284
    %1563 = vmatmul.mubr.f32.gmra.mrb[0].mxu0 %v1283
    %v1564 = vpop.f32.mrb[0].mxu0
    %v1565 = vadd.f32 %v1420, %v1564
    %v1566 = vpop.f32.mrb[0].mxu0
    %1567 = vmatprep.mubr.f32.mxu0 %v1288
    %1568 = vmatmul.mubr.f32.gmra.mrb[0].mxu0 %v1287
    %v1569 = vpop.f32.mrb[0].mxu0
    %v1570 = vadd.f32 %v1425, %v1569
    %v1571 = vpop.f32.mrb[0].mxu0
    %1572 = vmatprep.mubr.f32.mxu0 %v1292
    %1573 = vmatmul.mubr.f32.gmra.mrb[0].mxu0 %v1291
    %v1574 = vpop.f32.mrb[0].mxu0
    %v1575 = vadd.f32 %v1430, %v1574
    %v1576 = vpop.f32.mrb[0].mxu0
    %1577 = vmatprep.mubr.f32.mxu0 %v1296
    %1578 = vmatmul.mubr.f32.gmra.mrb[0].mxu0 %v1295
    %v1579 = vpop.f32.mrb[0].mxu0
    %v1580 = vadd.f32 %v1435, %v1579
    %v1581 = vpop.f32.mrb[0].mxu0
    %1582 = vmatprep.mubr.f32.mxu0 %v1300
    %1583 = vmatmul.mubr.f32.gmra.mrb[0].mxu0 %v1299
    %v1584 = vpop.f32.mrb[0].mxu0
    %v1585 = vadd.f32 %v1440, %v1584
    %v1586 = vpop.f32.mrb[0].mxu0
    %1587 = vmatprep.mubr.f32.mxu0 %v1304
    %1588 = vmatmul.mubr.f32.gmra.mrb[0].mxu0 %v1303
    %v1589 = vpop.f32.mrb[0].mxu0
    %v1590 = vadd.f32 %v1445, %v1589
    %v1591 = vpop.f32.mrb[0].mxu0
    %1592 = vmatprep.mubr.f32.mxu0 %v1308
    %1593 = vmatmul.mubr.f32.gmra.mrb[0].mxu0 %v1307
    %v1594 = vpop.f32.mrb[0].mxu0
    %v1595 = vadd.f32 %v1450, %v1594
    %v1596 = vpop.f32.mrb[0].mxu0
    %1597 = vmatprep.mubr.f32.mxu0 %v1312
    %1598 = vmatmul.mubr.f32.gmra.mrb[0].mxu0 %v1311
    %v1599 = vpop.f32.mrb[0].mxu0
    %v1600 = vadd.f32 %v1455, %v1599
    %v1601 = vpop.f32.mrb[0].mxu0
    %1602 = vdwg.mxu0
    %s1603 = scalar_lea.vmem [#allocation7], 8
    %v1604 = vld [vmem:[%s1603] sm:$0xff]
    %vm1605 = vcmask 64512
    %v1607 = vsel %vm1605, %v1525, 0
    %v1610 = vsel %vm1605, %v1530, 0
    %v1613 = vsel %vm1605, %v1535, 0
    %v1616 = vsel %vm1605, %v1540, 0
    %v1619 = vsel %vm1605, %v1545, 0
    %v1622 = vsel %vm1605, %v1550, 0
    %v1625 = vsel %vm1605, %v1555, 0
    %v1628 = vsel %vm1605, %v1560, 0
    %v1631 = vsel %vm1605, %v1565, 0
    %v1634 = vsel %vm1605, %v1570, 0
    %v1637 = vsel %vm1605, %v1575, 0
    %v1640 = vsel %vm1605, %v1580, 0
    %v1643 = vsel %vm1605, %v1585, 0
    %v1646 = vsel %vm1605, %v1590, 0
    %v1649 = vsel %vm1605, %v1595, 0
    %v1652 = vsel %vm1605, %v1600, 0
    %1654 = vmatprep.subr.mxu0 0.0
    %1655 = vmatpush1.msra.mxu0 %v1604
    %1656 = vmatprep.subr.mxu0 0.0
    %1657 = vmatpush1.msra.mxu0 0.0
    %1658 = vmatprep.subr.mxu0 0.0
    %1659 = vmatpush1.msra.mxu0 0.0
    %1660 = vmatprep.subr.mxu0 0.0
    %1661 = vmatpush1.msra.mxu0 0.0
    %1662 = vmatprep.subr.mxu0 0.0
    %1663 = vmatpush1.msra.mxu0 0.0
    %1664 = vmatprep.subr.mxu0 0.0
    %1665 = vmatpush1.msra.mxu0 0.0
    %1666 = vmatprep.subr.mxu0 0.0
    %1667 = vmatpush1.msra.mxu0 0.0
    %1668 = vmatprep.subr.mxu0 0.0
    %1669 = vmatpush1.msra.mxu0 0.0
    %1670 = vmatprep.subr.mxu0 0.0
    %1671 = vmatpush1.msra.mxu0 0.0
    %1672 = vmatprep.subr.mxu0 0.0
    %1673 = vmatpush1.msra.mxu0 0.0
    %1674 = vmatprep.subr.mxu0 0.0
    %1675 = vmatpush1.msra.mxu0 0.0
    %1676 = vmatprep.subr.mxu0 0.0
    %1677 = vmatpush1.msra.mxu0 0.0
    %1678 = vmatprep.subr.mxu0 0.0
    %1679 = vmatpush1.msra.mxu0 0.0
    %1680 = vmatprep.subr.mxu0 0.0
    %1681 = vmatpush1.msra.mxu0 0.0
    %1682 = vmatprep.subr.mxu0 0.0
    %1683 = vmatpush1.msra.mxu0 0.0
    %1684 = vmatprep.subr.mxu0 0.0
    %1685 = vmatpush1.msra.mxu0 0.0
    %1686 = vmatprep.subr.mxu0 0.0
    %1687 = vmatpush1.msra.mxu0 0.0
    %1688 = vmatprep.subr.mxu0 0.0
    %1689 = vmatpush1.msra.mxu0 0.0
    %1690 = vmatprep.subr.mxu0 0.0
    %1691 = vmatpush1.msra.mxu0 0.0
    %1692 = vmatprep.subr.mxu0 0.0
    %1693 = vmatpush1.msra.mxu0 0.0
    %1694 = vmatprep.subr.mxu0 0.0
    %1695 = vmatpush1.msra.mxu0 0.0
    %1696 = vmatprep.subr.mxu0 0.0
    %1697 = vmatpush1.msra.mxu0 0.0
    %1698 = vmatprep.subr.mxu0 0.0
    %1699 = vmatpush1.msra.mxu0 0.0
    %1700 = vmatprep.subr.mxu0 0.0
    %1701 = vmatpush1.msra.mxu0 0.0
    %1702 = vmatprep.subr.mxu0 0.0
    %1703 = vmatpush1.msra.mxu0 0.0
    %1704 = vmatprep.subr.mxu0 0.0
    %1705 = vmatpush1.msra.mxu0 0.0
    %1706 = vmatprep.subr.mxu0 0.0
    %1707 = vmatpush1.msra.mxu0 0.0
    %1708 = vmatprep.subr.mxu0 0.0
    %1709 = vmatpush1.msra.mxu0 0.0
    %1710 = vmatprep.subr.mxu0 0.0
    %1711 = vmatpush1.msra.mxu0 0.0
    %1712 = vmatprep.subr.mxu0 0.0
    %1713 = vmatpush1.msra.mxu0 0.0
    %1714 = vmatprep.subr.mxu0 0.0
    %1715 = vmatpush1.msra.mxu0 0.0
    %1716 = vmatprep.subr.mxu0 0.0
    %1717 = vmatpush1.msra.mxu0 0.0
    %1718 = vmatprep.mubr.f32.mxu0 0.0
    %1719 = vmatmul.mubr.f32.gmra.mrb[0].mxu0 %v1607
    %v1720 = vpop.f32.mrb[0].mxu0
    %v1721 = vadd.f32 0.0, %v1720
    %v1722 = vpop.f32.mrb[0].mxu0
    %1723 = vmatprep.mubr.f32.mxu0 0.0
    %1724 = vmatmul.mubr.f32.gmra.mrb[0].mxu0 %v1610
    %v1725 = vpop.f32.mrb[0].mxu0
    %v1726 = vadd.f32 0.0, %v1725
    %v1727 = vpop.f32.mrb[0].mxu0
    %1728 = vmatprep.mubr.f32.mxu0 0.0
    %1729 = vmatmul.mubr.f32.gmra.mrb[0].mxu0 %v1613
    %v1730 = vpop.f32.mrb[0].mxu0
    %v1731 = vadd.f32 0.0, %v1730
    %v1732 = vpop.f32.mrb[0].mxu0
    %1733 = vmatprep.mubr.f32.mxu0 0.0
    %1734 = vmatmul.mubr.f32.gmra.mrb[0].mxu0 %v1616
    %v1735 = vpop.f32.mrb[0].mxu0
    %v1736 = vadd.f32 0.0, %v1735
    %v1737 = vpop.f32.mrb[0].mxu0
    %1738 = vmatprep.mubr.f32.mxu0 0.0
    %1739 = vmatmul.mubr.f32.gmra.mrb[0].mxu0 %v1619
    %v1740 = vpop.f32.mrb[0].mxu0
    %v1741 = vadd.f32 0.0, %v1740
    %v1742 = vpop.f32.mrb[0].mxu0
    %1743 = vmatprep.mubr.f32.mxu0 0.0
    %1744 = vmatmul.mubr.f32.gmra.mrb[0].mxu0 %v1622
    %v1745 = vpop.f32.mrb[0].mxu0
    %v1746 = vadd.f32 0.0, %v1745
    %v1747 = vpop.f32.mrb[0].mxu0
    %1748 = vmatprep.mubr.f32.mxu0 0.0
    %1749 = vmatmul.mubr.f32.gmra.mrb[0].mxu0 %v1625
    %v1750 = vpop.f32.mrb[0].mxu0
    %v1751 = vadd.f32 0.0, %v1750
    %v1752 = vpop.f32.mrb[0].mxu0
    %1753 = vmatprep.mubr.f32.mxu0 0.0
    %1754 = vmatmul.mubr.f32.gmra.mrb[0].mxu0 %v1628
    %v1755 = vpop.f32.mrb[0].mxu0
    %v1756 = vadd.f32 0.0, %v1755
    %v1757 = vpop.f32.mrb[0].mxu0
    %1758 = vmatprep.mubr.f32.mxu0 0.0
    %1759 = vmatmul.mubr.f32.gmra.mrb[0].mxu0 %v1631
    %v1760 = vpop.f32.mrb[0].mxu0
    %v1761 = vadd.f32 0.0, %v1760
    %v1762 = vpop.f32.mrb[0].mxu0
    %1763 = vmatprep.mubr.f32.mxu0 0.0
    %1764 = vmatmul.mubr.f32.gmra.mrb[0].mxu0 %v1634
    %v1765 = vpop.f32.mrb[0].mxu0
    %v1766 = vadd.f32 0.0, %v1765
    %v1767 = vpop.f32.mrb[0].mxu0
    %1768 = vmatprep.mubr.f32.mxu0 0.0
    %1769 = vmatmul.mubr.f32.gmra.mrb[0].mxu0 %v1637
    %v1770 = vpop.f32.mrb[0].mxu0
    %v1771 = vadd.f32 0.0, %v1770
    %v1772 = vpop.f32.mrb[0].mxu0
    %1773 = vmatprep.mubr.f32.mxu0 0.0
    %1774 = vmatmul.mubr.f32.gmra.mrb[0].mxu0 %v1640
    %v1775 = vpop.f32.mrb[0].mxu0
    %v1776 = vadd.f32 0.0, %v1775
    %v1777 = vpop.f32.mrb[0].mxu0
    %1778 = vmatprep.mubr.f32.mxu0 0.0
    %1779 = vmatmul.mubr.f32.gmra.mrb[0].mxu0 %v1643
    %v1780 = vpop.f32.mrb[0].mxu0
    %v1781 = vadd.f32 0.0, %v1780
    %v1782 = vpop.f32.mrb[0].mxu0
    %1783 = vmatprep.mubr.f32.mxu0 0.0
    %1784 = vmatmul.mubr.f32.gmra.mrb[0].mxu0 %v1646
    %v1785 = vpop.f32.mrb[0].mxu0
    %v1786 = vadd.f32 0.0, %v1785
    %v1787 = vpop.f32.mrb[0].mxu0
    %1788 = vmatprep.mubr.f32.mxu0 0.0
    %1789 = vmatmul.mubr.f32.gmra.mrb[0].mxu0 %v1649
    %v1790 = vpop.f32.mrb[0].mxu0
    %v1791 = vadd.f32 0.0, %v1790
    %v1792 = vpop.f32.mrb[0].mxu0
    %1793 = vmatprep.mubr.f32.mxu0 0.0
    %1794 = vmatmul.mubr.f32.gmra.mrb[0].mxu0 %v1652
    %v1795 = vpop.f32.mrb[0].mxu0
    %v1796 = vadd.f32 0.0, %v1795
    %v1797 = vpop.f32.mrb[0].mxu0
    %1798 = vdwg.mxu0
    %v1800 = vsel %vm1605, %v1169, 0
    %v1803 = vsel %vm1605, %v1174, 0
    %v1806 = vsel %vm1605, %v1179, 0
    %v1809 = vsel %vm1605, %v1184, 0
    %v1812 = vsel %vm1605, %v1189, 0
    %v1815 = vsel %vm1605, %v1194, 0
    %v1818 = vsel %vm1605, %v1199, 0
    %v1821 = vsel %vm1605, %v1204, 0
    %v1824 = vsel %vm1605, %v1209, 0
    %v1827 = vsel %vm1605, %v1214, 0
    %v1830 = vsel %vm1605, %v1219, 0
    %v1833 = vsel %vm1605, %v1224, 0
    %v1836 = vsel %vm1605, %v1229, 0
    %v1839 = vsel %vm1605, %v1234, 0
    %v1842 = vsel %vm1605, %v1239, 0
    %v1845 = vsel %vm1605, %v1244, 0
    %1847 = vmatprep.subr.mxu0 0.0
    %1848 = vmatpush1.msra.mxu0 %v1247
    %1849 = vmatprep.subr.mxu0 0.0
    %1850 = vmatpush1.msra.mxu0 0.0
    %1851 = vmatprep.subr.mxu0 0.0
    %1852 = vmatpush1.msra.mxu0 0.0
    %1853 = vmatprep.subr.mxu0 0.0
    %1854 = vmatpush1.msra.mxu0 0.0
    %1855 = vmatprep.subr.mxu0 0.0
    %1856 = vmatpush1.msra.mxu0 0.0
    %1857 = vmatprep.subr.mxu0 0.0
    %1858 = vmatpush1.msra.mxu0 0.0
    %1859 = vmatprep.subr.mxu0 0.0
    %1860 = vmatpush1.msra.mxu0 0.0
    %1861 = vmatprep.subr.mxu0 0.0
    %1862 = vmatpush1.msra.mxu0 0.0
    %1863 = vmatprep.subr.mxu0 0.0
    %1864 = vmatpush1.msra.mxu0 0.0
    %1865 = vmatprep.subr.mxu0 0.0
    %1866 = vmatpush1.msra.mxu0 0.0
    %1867 = vmatprep.subr.mxu0 0.0
    %1868 = vmatpush1.msra.mxu0 0.0
    %1869 = vmatprep.subr.mxu0 0.0
    %1870 = vmatpush1.msra.mxu0 0.0
    %1871 = vmatprep.subr.mxu0 0.0
    %1872 = vmatpush1.msra.mxu0 0.0
    %1873 = vmatprep.subr.mxu0 0.0
    %1874 = vmatpush1.msra.mxu0 0.0
    %1875 = vmatprep.subr.mxu0 0.0
    %1876 = vmatpush1.msra.mxu0 0.0
    %1877 = vmatprep.subr.mxu0 0.0
    %1878 = vmatpush1.msra.mxu0 0.0
    %1879 = vmatprep.subr.mxu0 0.0
    %1880 = vmatpush1.msra.mxu0 0.0
    %1881 = vmatprep.subr.mxu0 0.0
    %1882 = vmatpush1.msra.mxu0 0.0
    %1883 = vmatprep.subr.mxu0 0.0
    %1884 = vmatpush1.msra.mxu0 0.0
    %1885 = vmatprep.subr.mxu0 0.0
    %1886 = vmatpush1.msra.mxu0 0.0
    %1887 = vmatprep.subr.mxu0 0.0
    %1888 = vmatpush1.msra.mxu0 0.0
    %1889 = vmatprep.subr.mxu0 0.0
    %1890 = vmatpush1.msra.mxu0 0.0
    %1891 = vmatprep.subr.mxu0 0.0
    %1892 = vmatpush1.msra.mxu0 0.0
    %1893 = vmatprep.subr.mxu0 0.0
    %1894 = vmatpush1.msra.mxu0 0.0
    %1895 = vmatprep.subr.mxu0 0.0
    %1896 = vmatpush1.msra.mxu0 0.0
    %1897 = vmatprep.subr.mxu0 0.0
    %1898 = vmatpush1.msra.mxu0 0.0
    %1899 = vmatprep.subr.mxu0 0.0
    %1900 = vmatpush1.msra.mxu0 0.0
    %1901 = vmatprep.subr.mxu0 0.0
    %1902 = vmatpush1.msra.mxu0 0.0
    %1903 = vmatprep.subr.mxu0 0.0
    %1904 = vmatpush1.msra.mxu0 0.0
    %1905 = vmatprep.subr.mxu0 0.0
    %1906 = vmatpush1.msra.mxu0 0.0
    %1907 = vmatprep.subr.mxu0 0.0
    %1908 = vmatpush1.msra.mxu0 0.0
    %1909 = vmatprep.subr.mxu0 0.0
    %1910 = vmatpush1.msra.mxu0 0.0
    %1911 = vmatprep.mubr.f32.mxu0 0.0
    %1912 = vmatmul.mubr.f32.gmra.mrb[0].mxu0 %v1800
    %v1913 = vpop.f32.mrb[0].mxu0
    %v1914 = vadd.f32 %v1721, %v1913
    %v1915 = vpop.f32.mrb[0].mxu0
    %1916 = vmatprep.mubr.f32.mxu0 0.0
    %1917 = vmatmul.mubr.f32.gmra.mrb[0].mxu0 %v1803
    %v1918 = vpop.f32.mrb[0].mxu0
    %v1919 = vadd.f32 %v1726, %v1918
    %v1920 = vpop.f32.mrb[0].mxu0
    %1921 = vmatprep.mubr.f32.mxu0 0.0
    %1922 = vmatmul.mubr.f32.gmra.mrb[0].mxu0 %v1806
    %v1923 = vpop.f32.mrb[0].mxu0
    %v1924 = vadd.f32 %v1731, %v1923
    %v1925 = vpop.f32.mrb[0].mxu0
    %1926 = vmatprep.mubr.f32.mxu0 0.0
    %1927 = vmatmul.mubr.f32.gmra.mrb[0].mxu0 %v1809
    %v1928 = vpop.f32.mrb[0].mxu0
    %v1929 = vadd.f32 %v1736, %v1928
    %v1930 = vpop.f32.mrb[0].mxu0
    %1931 = vmatprep.mubr.f32.mxu0 0.0
    %1932 = vmatmul.mubr.f32.gmra.mrb[0].mxu0 %v1812
    %v1933 = vpop.f32.mrb[0].mxu0
    %v1934 = vadd.f32 %v1741, %v1933
    %v1935 = vpop.f32.mrb[0].mxu0
    %1936 = vmatprep.mubr.f32.mxu0 0.0
    %1937 = vmatmul.mubr.f32.gmra.mrb[0].mxu0 %v1815
    %v1938 = vpop.f32.mrb[0].mxu0
    %v1939 = vadd.f32 %v1746, %v1938
    %v1940 = vpop.f32.mrb[0].mxu0
    %1941 = vmatprep.mubr.f32.mxu0 0.0
    %1942 = vmatmul.mubr.f32.gmra.mrb[0].mxu0 %v1818
    %v1943 = vpop.f32.mrb[0].mxu0
    %v1944 = vadd.f32 %v1751, %v1943
    %v1945 = vpop.f32.mrb[0].mxu0
    %1946 = vmatprep.mubr.f32.mxu0 0.0
    %1947 = vmatmul.mubr.f32.gmra.mrb[0].mxu0 %v1821
    %v1948 = vpop.f32.mrb[0].mxu0
    %v1949 = vadd.f32 %v1756, %v1948
    %v1950 = vpop.f32.mrb[0].mxu0
    %1951 = vmatprep.mubr.f32.mxu0 0.0
    %1952 = vmatmul.mubr.f32.gmra.mrb[0].mxu0 %v1824
    %v1953 = vpop.f32.mrb[0].mxu0
    %v1954 = vadd.f32 %v1761, %v1953
    %v1955 = vpop.f32.mrb[0].mxu0
    %1956 = vmatprep.mubr.f32.mxu0 0.0
    %1957 = vmatmul.mubr.f32.gmra.mrb[0].mxu0 %v1827
    %v1958 = vpop.f32.mrb[0].mxu0
    %v1959 = vadd.f32 %v1766, %v1958
    %v1960 = vpop.f32.mrb[0].mxu0
    %1961 = vmatprep.mubr.f32.mxu0 0.0
    %1962 = vmatmul.mubr.f32.gmra.mrb[0].mxu0 %v1830
    %v1963 = vpop.f32.mrb[0].mxu0
    %v1964 = vadd.f32 %v1771, %v1963
    %v1965 = vpop.f32.mrb[0].mxu0
    %1966 = vmatprep.mubr.f32.mxu0 0.0
    %1967 = vmatmul.mubr.f32.gmra.mrb[0].mxu0 %v1833
    %v1968 = vpop.f32.mrb[0].mxu0
    %v1969 = vadd.f32 %v1776, %v1968
    %v1970 = vpop.f32.mrb[0].mxu0
    %1971 = vmatprep.mubr.f32.mxu0 0.0
    %1972 = vmatmul.mubr.f32.gmra.mrb[0].mxu0 %v1836
    %v1973 = vpop.f32.mrb[0].mxu0
    %v1974 = vadd.f32 %v1781, %v1973
    %v1975 = vpop.f32.mrb[0].mxu0
    %1976 = vmatprep.mubr.f32.mxu0 0.0
    %1977 = vmatmul.mubr.f32.gmra.mrb[0].mxu0 %v1839
    %v1978 = vpop.f32.mrb[0].mxu0
    %v1979 = vadd.f32 %v1786, %v1978
    %v1980 = vpop.f32.mrb[0].mxu0
    %1981 = vmatprep.mubr.f32.mxu0 0.0
    %1982 = vmatmul.mubr.f32.gmra.mrb[0].mxu0 %v1842
    %v1983 = vpop.f32.mrb[0].mxu0
    %v1984 = vadd.f32 %v1791, %v1983
    %v1985 = vpop.f32.mrb[0].mxu0
    %1986 = vmatprep.mubr.f32.mxu0 0.0
    %1987 = vmatmul.mubr.f32.gmra.mrb[0].mxu0 %v1845
    %v1988 = vpop.f32.mrb[0].mxu0
    %v1989 = vadd.f32 %v1796, %v1988
    %v1990 = vpop.f32.mrb[0].mxu0
    %1991 = vdwg.mxu0
    %s1992 = scalar_lea.vmem [#allocation5], 1024
    %v1993 = vld [vmem:[%s1992] sm:$0xff]
    %v1994 = vld [vmem:[%s1992 + $0x8] sm:$0xff]
    %v1995 = vld [vmem:[%s1992 + $0x10] sm:$0xff]
    %v1996 = vld [vmem:[%s1992 + $0x18] sm:$0xff]
    %v1997 = vld [vmem:[%s1992 + $0x20] sm:$0xff]
    %v1998 = vld [vmem:[%s1992 + $0x28] sm:$0xff]
    %v1999 = vld [vmem:[%s1992 + $0x30] sm:$0xff]
    %v2000 = vld [vmem:[%s1992 + $0x38] sm:$0xff]
    %v2001 = vld [vmem:[%s1992 + $0x40] sm:$0xff]
    %v2002 = vld [vmem:[%s1992 + $0x48] sm:$0xff]
    %v2003 = vld [vmem:[%s1992 + $0x50] sm:$0xff]
    %v2004 = vld [vmem:[%s1992 + $0x58] sm:$0xff]
    %v2005 = vld [vmem:[%s1992 + $0x60] sm:$0xff]
    %v2006 = vld [vmem:[%s1992 + $0x68] sm:$0xff]
    %v2007 = vld [vmem:[%s1992 + $0x70] sm:$0xff]
    %v2008 = vld [vmem:[%s1992 + $0x78] sm:$0xff]
    %v2009 = vld [vmem:[%s1992 + $0x80] sm:$0xff]
    %v2010 = vld [vmem:[%s1992 + $0x88] sm:$0xff]
    %v2011 = vld [vmem:[%s1992 + $0x90] sm:$0xff]
    %v2012 = vld [vmem:[%s1992 + $0x98] sm:$0xff]
    %v2013 = vld [vmem:[%s1992 + $0xa0] sm:$0xff]
    %v2014 = vld [vmem:[%s1992 + $0xa8] sm:$0xff]
    %v2015 = vld [vmem:[%s1992 + $0xb0] sm:$0xff]
    %v2016 = vld [vmem:[%s1992 + $0xb8] sm:$0xff]
    %v2017 = vld [vmem:[%s1992 + $0xc0] sm:$0xff]
    %v2018 = vld [vmem:[%s1992 + $0xc8] sm:$0xff]
    %v2019 = vld [vmem:[%s1992 + $0xd0] sm:$0xff]
    %v2020 = vld [vmem:[%s1992 + $0xd8] sm:$0xff]
    %v2021 = vld [vmem:[%s1992 + $0xe0] sm:$0xff]
    %v2022 = vld [vmem:[%s1992 + $0xe8] sm:$0xff]
    %v2023 = vld [vmem:[%s1992 + $0xf0] sm:$0xff]
    %v2024 = vld [vmem:[%s1992 + $0xf8] sm:$0xff]
    %v2025 = vld [vmem:[%s1992 + $0x100] sm:$0xff]
    %v2026 = vld [vmem:[%s1992 + $0x108] sm:$0xff]
    %v2027 = vld [vmem:[%s1992 + $0x110] sm:$0xff]
    %v2028 = vld [vmem:[%s1992 + $0x118] sm:$0xff]
    %v2029 = vld [vmem:[%s1992 + $0x120] sm:$0xff]
    %v2030 = vld [vmem:[%s1992 + $0x128] sm:$0xff]
    %v2031 = vld [vmem:[%s1992 + $0x130] sm:$0xff]
    %v2032 = vld [vmem:[%s1992 + $0x138] sm:$0xff]
    %v2033 = vld [vmem:[%s1992 + $0x140] sm:$0xff]
    %v2034 = vld [vmem:[%s1992 + $0x148] sm:$0xff]
    %v2035 = vld [vmem:[%s1992 + $0x150] sm:$0xff]
    %v2036 = vld [vmem:[%s1992 + $0x158] sm:$0xff]
    %v2037 = vld [vmem:[%s1992 + $0x160] sm:$0xff]
    %v2038 = vld [vmem:[%s1992 + $0x168] sm:$0xff]
    %v2039 = vld [vmem:[%s1992 + $0x170] sm:$0xff]
    %v2040 = vld [vmem:[%s1992 + $0x178] sm:$0xff]
    %v2041 = vld [vmem:[%s1992 + $0x180] sm:$0xff]
    %v2042 = vld [vmem:[%s1992 + $0x188] sm:$0xff]
    %v2043 = vld [vmem:[%s1992 + $0x190] sm:$0xff]
    %v2044 = vld [vmem:[%s1992 + $0x198] sm:$0xff]
    %v2045 = vld [vmem:[%s1992 + $0x1a0] sm:$0xff]
    %v2046 = vld [vmem:[%s1992 + $0x1a8] sm:$0xff]
    %v2047 = vld [vmem:[%s1992 + $0x1b0] sm:$0xff]
    %v2048 = vld [vmem:[%s1992 + $0x1b8] sm:$0xff]
    %v2049 = vld [vmem:[%s1992 + $0x1c0] sm:$0xff]
    %v2050 = vld [vmem:[%s1992 + $0x1c8] sm:$0xff]
    %v2051 = vld [vmem:[%s1992 + $0x1d0] sm:$0xff]
    %v2052 = vld [vmem:[%s1992 + $0x1d8] sm:$0xff]
    %v2053 = vld [vmem:[%s1992 + $0x1e0] sm:$0xff]
    %v2054 = vld [vmem:[%s1992 + $0x1e8] sm:$0xff]
    %v2055 = vld [vmem:[%s1992 + $0x1f0] sm:$0xff]
    %v2056 = vld [vmem:[%s1992 + $0x1f8] sm:$0xff]
    %2057 = vmatprep.subr.mxu0 0.0
    %2058 = vmatpush1.msra.mxu0 %v829
    %2059 = vmatprep.subr.mxu0 0.0
    %2060 = vmatpush1.msra.mxu0 %v830
    %2061 = vmatprep.subr.mxu0 0.0
    %2062 = vmatpush1.msra.mxu0 %v831
    %2063 = vmatprep.subr.mxu0 0.0
    %2064 = vmatpush1.msra.mxu0 %v832
    %2065 = vmatprep.subr.mxu0 0.0
    %2066 = vmatpush1.msra.mxu0 %v833
    %2067 = vmatprep.subr.mxu0 0.0
    %2068 = vmatpush1.msra.mxu0 %v834
    %2069 = vmatprep.subr.mxu0 0.0
    %2070 = vmatpush1.msra.mxu0 %v835
    %2071 = vmatprep.subr.mxu0 0.0
    %2072 = vmatpush1.msra.mxu0 %v836
    %2073 = vmatprep.subr.mxu0 0.0
    %2074 = vmatpush1.msra.mxu0 %v837
    %2075 = vmatprep.subr.mxu0 0.0
    %2076 = vmatpush1.msra.mxu0 %v838
    %2077 = vmatprep.subr.mxu0 0.0
    %2078 = vmatpush1.msra.mxu0 %v839
    %2079 = vmatprep.subr.mxu0 0.0
    %2080 = vmatpush1.msra.mxu0 %v840
    %2081 = vmatprep.subr.mxu0 0.0
    %2082 = vmatpush1.msra.mxu0 %v841
    %2083 = vmatprep.subr.mxu0 0.0
    %2084 = vmatpush1.msra.mxu0 %v842
    %2085 = vmatprep.subr.mxu0 0.0
    %2086 = vmatpush1.msra.mxu0 %v843
    %2087 = vmatprep.subr.mxu0 0.0
    %2088 = vmatpush1.msra.mxu0 %v844
    %2089 = vmatprep.subr.mxu0 0.0
    %2090 = vmatpush1.msra.mxu0 %v845
    %2091 = vmatprep.subr.mxu0 0.0
    %2092 = vmatpush1.msra.mxu0 %v846
    %2093 = vmatprep.subr.mxu0 0.0
    %2094 = vmatpush1.msra.mxu0 %v847
    %2095 = vmatprep.subr.mxu0 0.0
    %2096 = vmatpush1.msra.mxu0 %v848
    %2097 = vmatprep.subr.mxu0 0.0
    %2098 = vmatpush1.msra.mxu0 %v849
    %2099 = vmatprep.subr.mxu0 0.0
    %2100 = vmatpush1.msra.mxu0 %v850
    %2101 = vmatprep.subr.mxu0 0.0
    %2102 = vmatpush1.msra.mxu0 %v851
    %2103 = vmatprep.subr.mxu0 0.0
    %2104 = vmatpush1.msra.mxu0 %v852
    %2105 = vmatprep.subr.mxu0 0.0
    %2106 = vmatpush1.msra.mxu0 %v853
    %2107 = vmatprep.subr.mxu0 0.0
    %2108 = vmatpush1.msra.mxu0 %v854
    %2109 = vmatprep.subr.mxu0 0.0
    %2110 = vmatpush1.msra.mxu0 %v855
    %2111 = vmatprep.subr.mxu0 0.0
    %2112 = vmatpush1.msra.mxu0 %v856
    %2113 = vmatprep.subr.mxu0 0.0
    %2114 = vmatpush1.msra.mxu0 %v857
    %2115 = vmatprep.subr.mxu0 0.0
    %2116 = vmatpush1.msra.mxu0 %v858
    %2117 = vmatprep.subr.mxu0 0.0
    %2118 = vmatpush1.msra.mxu0 %v859
    %2119 = vmatprep.subr.mxu0 0.0
    %2120 = vmatpush1.msra.mxu0 %v860
    %2121 = vmatprep.mubr.f32.mxu0 %v1994
    %2122 = vmatmul.mubr.f32.gmra.mrb[0].mxu0 %v1993
    %v2123 = vpop.f32.mrb[0].mxu0
    %v2124 = vadd.f32 0.0, %v2123
    %v2125 = vpop.f32.mrb[0].mxu0
    %2126 = vmatprep.mubr.f32.mxu0 %v1998
    %2127 = vmatmul.mubr.f32.gmra.mrb[0].mxu0 %v1997
    %v2128 = vpop.f32.mrb[0].mxu0
    %v2129 = vadd.f32 0.0, %v2128
    %v2130 = vpop.f32.mrb[0].mxu0
    %2131 = vmatprep.mubr.f32.mxu0 %v2002
    %2132 = vmatmul.mubr.f32.gmra.mrb[0].mxu0 %v2001
    %v2133 = vpop.f32.mrb[0].mxu0
    %v2134 = vadd.f32 0.0, %v2133
    %v2135 = vpop.f32.mrb[0].mxu0
    %2136 = vmatprep.mubr.f32.mxu0 %v2006
    %2137 = vmatmul.mubr.f32.gmra.mrb[0].mxu0 %v2005
    %v2138 = vpop.f32.mrb[0].mxu0
    %v2139 = vadd.f32 0.0, %v2138
    %v2140 = vpop.f32.mrb[0].mxu0
    %2141 = vmatprep.mubr.f32.mxu0 %v2010
    %2142 = vmatmul.mubr.f32.gmra.mrb[0].mxu0 %v2009
    %v2143 = vpop.f32.mrb[0].mxu0
    %v2144 = vadd.f32 0.0, %v2143
    %v2145 = vpop.f32.mrb[0].mxu0
    %2146 = vmatprep.mubr.f32.mxu0 %v2014
    %2147 = vmatmul.mubr.f32.gmra.mrb[0].mxu0 %v2013
    %v2148 = vpop.f32.mrb[0].mxu0
    %v2149 = vadd.f32 0.0, %v2148
    %v2150 = vpop.f32.mrb[0].mxu0
    %2151 = vmatprep.mubr.f32.mxu0 %v2018
    %2152 = vmatmul.mubr.f32.gmra.mrb[0].mxu0 %v2017
    %v2153 = vpop.f32.mrb[0].mxu0
    %v2154 = vadd.f32 0.0, %v2153
    %v2155 = vpop.f32.mrb[0].mxu0
    %2156 = vmatprep.mubr.f32.mxu0 %v2022
    %2157 = vmatmul.mubr.f32.gmra.mrb[0].mxu0 %v2021
    %v2158 = vpop.f32.mrb[0].mxu0
    %v2159 = vadd.f32 0.0, %v2158
    %v2160 = vpop.f32.mrb[0].mxu0
    %2161 = vmatprep.mubr.f32.mxu0 %v2026
    %2162 = vmatmul.mubr.f32.gmra.mrb[0].mxu0 %v2025
    %v2163 = vpop.f32.mrb[0].mxu0
    %v2164 = vadd.f32 0.0, %v2163
    %v2165 = vpop.f32.mrb[0].mxu0
    %2166 = vmatprep.mubr.f32.mxu0 %v2030
    %2167 = vmatmul.mubr.f32.gmra.mrb[0].mxu0 %v2029
    %v2168 = vpop.f32.mrb[0].mxu0
    %v2169 = vadd.f32 0.0, %v2168
    %v2170 = vpop.f32.mrb[0].mxu0
    %2171 = vmatprep.mubr.f32.mxu0 %v2034
    %2172 = vmatmul.mubr.f32.gmra.mrb[0].mxu0 %v2033
    %v2173 = vpop.f32.mrb[0].mxu0
    %v2174 = vadd.f32 0.0, %v2173
    %v2175 = vpop.f32.mrb[0].mxu0
    %2176 = vmatprep.mubr.f32.mxu0 %v2038
    %2177 = vmatmul.mubr.f32.gmra.mrb[0].mxu0 %v2037
    %v2178 = vpop.f32.mrb[0].mxu0
    %v2179 = vadd.f32 0.0, %v2178
    %v2180 = vpop.f32.mrb[0].mxu0
    %2181 = vmatprep.mubr.f32.mxu0 %v2042
    %2182 = vmatmul.mubr.f32.gmra.mrb[0].mxu0 %v2041
    %v2183 = vpop.f32.mrb[0].mxu0
    %v2184 = vadd.f32 0.0, %v2183
    %v2185 = vpop.f32.mrb[0].mxu0
    %2186 = vmatprep.mubr.f32.mxu0 %v2046
    %2187 = vmatmul.mubr.f32.gmra.mrb[0].mxu0 %v2045
    %v2188 = vpop.f32.mrb[0].mxu0
    %v2189 = vadd.f32 0.0, %v2188
    %v2190 = vpop.f32.mrb[0].mxu0
    %2191 = vmatprep.mubr.f32.mxu0 %v2050
    %2192 = vmatmul.mubr.f32.gmra.mrb[0].mxu0 %v2049
    %v2193 = vpop.f32.mrb[0].mxu0
    %v2194 = vadd.f32 0.0, %v2193
    %v2195 = vpop.f32.mrb[0].mxu0
    %2196 = vmatprep.mubr.f32.mxu0 %v2054
    %2197 = vmatmul.mubr.f32.gmra.mrb[0].mxu0 %v2053
    %v2198 = vpop.f32.mrb[0].mxu0
    %v2199 = vadd.f32 0.0, %v2198
    %v2200 = vpop.f32.mrb[0].mxu0
    %2201 = vdwg.mxu0
    %2202 = vmatprep.subr.mxu0 0.0
    %2203 = vmatpush1.msra.mxu0 %v861
    %2204 = vmatprep.subr.mxu0 0.0
    %2205 = vmatpush1.msra.mxu0 %v862
    %2206 = vmatprep.subr.mxu0 0.0
    %2207 = vmatpush1.msra.mxu0 %v863
    %2208 = vmatprep.subr.mxu0 0.0
    %2209 = vmatpush1.msra.mxu0 %v864
    %2210 = vmatprep.subr.mxu0 0.0
    %2211 = vmatpush1.msra.mxu0 %v865
    %2212 = vmatprep.subr.mxu0 0.0
    %2213 = vmatpush1.msra.mxu0 %v866
    %2214 = vmatprep.subr.mxu0 0.0
    %2215 = vmatpush1.msra.mxu0 %v867
    %2216 = vmatprep.subr.mxu0 0.0
    %2217 = vmatpush1.msra.mxu0 %v868
    %2218 = vmatprep.subr.mxu0 0.0
    %2219 = vmatpush1.msra.mxu0 %v869
    %2220 = vmatprep.subr.mxu0 0.0
    %2221 = vmatpush1.msra.mxu0 %v870
    %2222 = vmatprep.subr.mxu0 0.0
    %2223 = vmatpush1.msra.mxu0 %v871
    %2224 = vmatprep.subr.mxu0 0.0
    %2225 = vmatpush1.msra.mxu0 %v872
    %2226 = vmatprep.subr.mxu0 0.0
    %2227 = vmatpush1.msra.mxu0 %v873
    %2228 = vmatprep.subr.mxu0 0.0
    %2229 = vmatpush1.msra.mxu0 %v874
    %2230 = vmatprep.subr.mxu0 0.0
    %2231 = vmatpush1.msra.mxu0 %v875
    %2232 = vmatprep.subr.mxu0 0.0
    %2233 = vmatpush1.msra.mxu0 %v876
    %2234 = vmatprep.subr.mxu0 0.0
    %2235 = vmatpush1.msra.mxu0 %v877
    %2236 = vmatprep.subr.mxu0 0.0
    %2237 = vmatpush1.msra.mxu0 %v878
    %2238 = vmatprep.subr.mxu0 0.0
    %2239 = vmatpush1.msra.mxu0 %v879
    %2240 = vmatprep.subr.mxu0 0.0
    %2241 = vmatpush1.msra.mxu0 %v880
    %2242 = vmatprep.subr.mxu0 0.0
    %2243 = vmatpush1.msra.mxu0 %v881
    %2244 = vmatprep.subr.mxu0 0.0
    %2245 = vmatpush1.msra.mxu0 %v882
    %2246 = vmatprep.subr.mxu0 0.0
    %2247 = vmatpush1.msra.mxu0 %v883
    %2248 = vmatprep.subr.mxu0 0.0
    %2249 = vmatpush1.msra.mxu0 %v884
    %2250 = vmatprep.subr.mxu0 0.0
    %2251 = vmatpush1.msra.mxu0 %v885
    %2252 = vmatprep.subr.mxu0 0.0
    %2253 = vmatpush1.msra.mxu0 %v886
    %2254 = vmatprep.subr.mxu0 0.0
    %2255 = vmatpush1.msra.mxu0 %v887
    %2256 = vmatprep.subr.mxu0 0.0
    %2257 = vmatpush1.msra.mxu0 %v888
    %2258 = vmatprep.subr.mxu0 0.0
    %2259 = vmatpush1.msra.mxu0 %v889
    %2260 = vmatprep.subr.mxu0 0.0
    %2261 = vmatpush1.msra.mxu0 %v890
    %2262 = vmatprep.subr.mxu0 0.0
    %2263 = vmatpush1.msra.mxu0 %v891
    %2264 = vmatprep.subr.mxu0 0.0
    %2265 = vmatpush1.msra.mxu0 %v892
    %2266 = vmatprep.mubr.f32.mxu0 %v1996
    %2267 = vmatmul.mubr.f32.gmra.mrb[0].mxu0 %v1995
    %v2268 = vpop.f32.mrb[0].mxu0
    %v2269 = vadd.f32 %v2124, %v2268
    %v2270 = vpop.f32.mrb[0].mxu0
    %2271 = vmatprep.mubr.f32.mxu0 %v2000
    %2272 = vmatmul.mubr.f32.gmra.mrb[0].mxu0 %v1999
    %v2273 = vpop.f32.mrb[0].mxu0
    %v2274 = vadd.f32 %v2129, %v2273
    %v2275 = vpop.f32.mrb[0].mxu0
    %2276 = vmatprep.mubr.f32.mxu0 %v2004
    %2277 = vmatmul.mubr.f32.gmra.mrb[0].mxu0 %v2003
    %v2278 = vpop.f32.mrb[0].mxu0
    %v2279 = vadd.f32 %v2134, %v2278
    %v2280 = vpop.f32.mrb[0].mxu0
    %2281 = vmatprep.mubr.f32.mxu0 %v2008
    %2282 = vmatmul.mubr.f32.gmra.mrb[0].mxu0 %v2007
    %v2283 = vpop.f32.mrb[0].mxu0
    %v2284 = vadd.f32 %v2139, %v2283
    %v2285 = vpop.f32.mrb[0].mxu0
    %2286 = vmatprep.mubr.f32.mxu0 %v2012
    %2287 = vmatmul.mubr.f32.gmra.mrb[0].mxu0 %v2011
    %v2288 = vpop.f32.mrb[0].mxu0
    %v2289 = vadd.f32 %v2144, %v2288
    %v2290 = vpop.f32.mrb[0].mxu0
    %2291 = vmatprep.mubr.f32.mxu0 %v2016
    %2292 = vmatmul.mubr.f32.gmra.mrb[0].mxu0 %v2015
    %v2293 = vpop.f32.mrb[0].mxu0
    %v2294 = vadd.f32 %v2149, %v2293
    %v2295 = vpop.f32.mrb[0].mxu0
    %2296 = vmatprep.mubr.f32.mxu0 %v2020
    %2297 = vmatmul.mubr.f32.gmra.mrb[0].mxu0 %v2019
    %v2298 = vpop.f32.mrb[0].mxu0
    %v2299 = vadd.f32 %v2154, %v2298
    %v2300 = vpop.f32.mrb[0].mxu0
    %2301 = vmatprep.mubr.f32.mxu0 %v2024
    %2302 = vmatmul.mubr.f32.gmra.mrb[0].mxu0 %v2023
    %v2303 = vpop.f32.mrb[0].mxu0
    %v2304 = vadd.f32 %v2159, %v2303
    %v2305 = vpop.f32.mrb[0].mxu0
    %2306 = vmatprep.mubr.f32.mxu0 %v2028
    %2307 = vmatmul.mubr.f32.gmra.mrb[0].mxu0 %v2027
    %v2308 = vpop.f32.mrb[0].mxu0
    %v2309 = vadd.f32 %v2164, %v2308
    %v2310 = vpop.f32.mrb[0].mxu0
    %2311 = vmatprep.mubr.f32.mxu0 %v2032
    %2312 = vmatmul.mubr.f32.gmra.mrb[0].mxu0 %v2031
    %v2313 = vpop.f32.mrb[0].mxu0
    %v2314 = vadd.f32 %v2169, %v2313
    %v2315 = vpop.f32.mrb[0].mxu0
    %2316 = vmatprep.mubr.f32.mxu0 %v2036
    %2317 = vmatmul.mubr.f32.gmra.mrb[0].mxu0 %v2035
    %v2318 = vpop.f32.mrb[0].mxu0
    %v2319 = vadd.f32 %v2174, %v2318
    %v2320 = vpop.f32.mrb[0].mxu0
    %2321 = vmatprep.mubr.f32.mxu0 %v2040
    %2322 = vmatmul.mubr.f32.gmra.mrb[0].mxu0 %v2039
    %v2323 = vpop.f32.mrb[0].mxu0
    %v2324 = vadd.f32 %v2179, %v2323
    %v2325 = vpop.f32.mrb[0].mxu0
    %2326 = vmatprep.mubr.f32.mxu0 %v2044
    %2327 = vmatmul.mubr.f32.gmra.mrb[0].mxu0 %v2043
    %v2328 = vpop.f32.mrb[0].mxu0
    %v2329 = vadd.f32 %v2184, %v2328
    %v2330 = vpop.f32.mrb[0].mxu0
    %2331 = vmatprep.mubr.f32.mxu0 %v2048
    %2332 = vmatmul.mubr.f32.gmra.mrb[0].mxu0 %v2047
    %v2333 = vpop.f32.mrb[0].mxu0
    %v2334 = vadd.f32 %v2189, %v2333
    %v2335 = vpop.f32.mrb[0].mxu0
    %2336 = vmatprep.mubr.f32.mxu0 %v2052
    %2337 = vmatmul.mubr.f32.gmra.mrb[0].mxu0 %v2051
    %v2338 = vpop.f32.mrb[0].mxu0
    %v2339 = vadd.f32 %v2194, %v2338
    %v2340 = vpop.f32.mrb[0].mxu0
    %2341 = vmatprep.mubr.f32.mxu0 %v2056
    %2342 = vmatmul.mubr.f32.gmra.mrb[0].mxu0 %v2055
    %v2343 = vpop.f32.mrb[0].mxu0
    %v2344 = vadd.f32 %v2199, %v2343
    %v2345 = vpop.f32.mrb[0].mxu0
    %2346 = vdwg.mxu0
    %s2347 = scalar_lea.vmem [#allocation7], 16
    %v2348 = vld [vmem:[%s2347] sm:$0xff]
    %v2350 = vsel %vm1605, %v2269, 0
    %v2353 = vsel %vm1605, %v2274, 0
    %v2356 = vsel %vm1605, %v2279, 0
    %v2359 = vsel %vm1605, %v2284, 0
    %v2362 = vsel %vm1605, %v2289, 0
    %v2365 = vsel %vm1605, %v2294, 0
    %v2368 = vsel %vm1605, %v2299, 0
    %v2371 = vsel %vm1605, %v2304, 0
    %v2374 = vsel %vm1605, %v2309, 0
    %v2377 = vsel %vm1605, %v2314, 0
    %v2380 = vsel %vm1605, %v2319, 0
    %v2383 = vsel %vm1605, %v2324, 0
    %v2386 = vsel %vm1605, %v2329, 0
    %v2389 = vsel %vm1605, %v2334, 0
    %v2392 = vsel %vm1605, %v2339, 0
    %v2395 = vsel %vm1605, %v2344, 0
    %2397 = vmatprep.subr.mxu0 0.0
    %2398 = vmatpush1.msra.mxu0 %v2348
    %2399 = vmatprep.subr.mxu0 0.0
    %2400 = vmatpush1.msra.mxu0 0.0
    %2401 = vmatprep.subr.mxu0 0.0
    %2402 = vmatpush1.msra.mxu0 0.0
    %2403 = vmatprep.subr.mxu0 0.0
    %2404 = vmatpush1.msra.mxu0 0.0
    %2405 = vmatprep.subr.mxu0 0.0
    %2406 = vmatpush1.msra.mxu0 0.0
    %2407 = vmatprep.subr.mxu0 0.0
    %2408 = vmatpush1.msra.mxu0 0.0
    %2409 = vmatprep.subr.mxu0 0.0
    %2410 = vmatpush1.msra.mxu0 0.0
    %2411 = vmatprep.subr.mxu0 0.0
    %2412 = vmatpush1.msra.mxu0 0.0
    %2413 = vmatprep.subr.mxu0 0.0
    %2414 = vmatpush1.msra.mxu0 0.0
    %2415 = vmatprep.subr.mxu0 0.0
    %2416 = vmatpush1.msra.mxu0 0.0
    %2417 = vmatprep.subr.mxu0 0.0
    %2418 = vmatpush1.msra.mxu0 0.0
    %2419 = vmatprep.subr.mxu0 0.0
    %2420 = vmatpush1.msra.mxu0 0.0
    %2421 = vmatprep.subr.mxu0 0.0
    %2422 = vmatpush1.msra.mxu0 0.0
    %2423 = vmatprep.subr.mxu0 0.0
    %2424 = vmatpush1.msra.mxu0 0.0
    %2425 = vmatprep.subr.mxu0 0.0
    %2426 = vmatpush1.msra.mxu0 0.0
    %2427 = vmatprep.subr.mxu0 0.0
    %2428 = vmatpush1.msra.mxu0 0.0
    %2429 = vmatprep.subr.mxu0 0.0
    %2430 = vmatpush1.msra.mxu0 0.0
    %2431 = vmatprep.subr.mxu0 0.0
    %2432 = vmatpush1.msra.mxu0 0.0
    %2433 = vmatprep.subr.mxu0 0.0
    %2434 = vmatpush1.msra.mxu0 0.0
    %2435 = vmatprep.subr.mxu0 0.0
    %2436 = vmatpush1.msra.mxu0 0.0
    %2437 = vmatprep.subr.mxu0 0.0
    %2438 = vmatpush1.msra.mxu0 0.0
    %2439 = vmatprep.subr.mxu0 0.0
    %2440 = vmatpush1.msra.mxu0 0.0
    %2441 = vmatprep.subr.mxu0 0.0
    %2442 = vmatpush1.msra.mxu0 0.0
    %2443 = vmatprep.subr.mxu0 0.0
    %2444 = vmatpush1.msra.mxu0 0.0
    %2445 = vmatprep.subr.mxu0 0.0
    %2446 = vmatpush1.msra.mxu0 0.0
    %2447 = vmatprep.subr.mxu0 0.0
    %2448 = vmatpush1.msra.mxu0 0.0
    %2449 = vmatprep.subr.mxu0 0.0
    %2450 = vmatpush1.msra.mxu0 0.0
    %2451 = vmatprep.subr.mxu0 0.0
    %2452 = vmatpush1.msra.mxu0 0.0
    %2453 = vmatprep.subr.mxu0 0.0
    %2454 = vmatpush1.msra.mxu0 0.0
    %2455 = vmatprep.subr.mxu0 0.0
    %2456 = vmatpush1.msra.mxu0 0.0
    %2457 = vmatprep.subr.mxu0 0.0
    %2458 = vmatpush1.msra.mxu0 0.0
    %2459 = vmatprep.subr.mxu0 0.0
    %2460 = vmatpush1.msra.mxu0 0.0
    %2461 = vmatprep.mubr.f32.mxu0 0.0
    %2462 = vmatmul.mubr.f32.gmra.mrb[0].mxu0 %v2350
    %v2463 = vpop.f32.mrb[0].mxu0
    %v2464 = vadd.f32 0.0, %v2463
    %v2465 = vpop.f32.mrb[0].mxu0
    %2466 = vmatprep.mubr.f32.mxu0 0.0
    %2467 = vmatmul.mubr.f32.gmra.mrb[0].mxu0 %v2353
    %v2468 = vpop.f32.mrb[0].mxu0
    %v2469 = vadd.f32 0.0, %v2468
    %v2470 = vpop.f32.mrb[0].mxu0
    %2471 = vmatprep.mubr.f32.mxu0 0.0
    %2472 = vmatmul.mubr.f32.gmra.mrb[0].mxu0 %v2356
    %v2473 = vpop.f32.mrb[0].mxu0
    %v2474 = vadd.f32 0.0, %v2473
    %v2475 = vpop.f32.mrb[0].mxu0
    %2476 = vmatprep.mubr.f32.mxu0 0.0
    %2477 = vmatmul.mubr.f32.gmra.mrb[0].mxu0 %v2359
    %v2478 = vpop.f32.mrb[0].mxu0
    %v2479 = vadd.f32 0.0, %v2478
    %v2480 = vpop.f32.mrb[0].mxu0
    %2481 = vmatprep.mubr.f32.mxu0 0.0
    %2482 = vmatmul.mubr.f32.gmra.mrb[0].mxu0 %v2362
    %v2483 = vpop.f32.mrb[0].mxu0
    %v2484 = vadd.f32 0.0, %v2483
    %v2485 = vpop.f32.mrb[0].mxu0
    %2486 = vmatprep.mubr.f32.mxu0 0.0
    %2487 = vmatmul.mubr.f32.gmra.mrb[0].mxu0 %v2365
    %v2488 = vpop.f32.mrb[0].mxu0
    %v2489 = vadd.f32 0.0, %v2488
    %v2490 = vpop.f32.mrb[0].mxu0
    %2491 = vmatprep.mubr.f32.mxu0 0.0
    %2492 = vmatmul.mubr.f32.gmra.mrb[0].mxu0 %v2368
    %v2493 = vpop.f32.mrb[0].mxu0
    %v2494 = vadd.f32 0.0, %v2493
    %v2495 = vpop.f32.mrb[0].mxu0
    %2496 = vmatprep.mubr.f32.mxu0 0.0
    %2497 = vmatmul.mubr.f32.gmra.mrb[0].mxu0 %v2371
    %v2498 = vpop.f32.mrb[0].mxu0
    %v2499 = vadd.f32 0.0, %v2498
    %v2500 = vpop.f32.mrb[0].mxu0
    %2501 = vmatprep.mubr.f32.mxu0 0.0
    %2502 = vmatmul.mubr.f32.gmra.mrb[0].mxu0 %v2374
    %v2503 = vpop.f32.mrb[0].mxu0
    %v2504 = vadd.f32 0.0, %v2503
    %v2505 = vpop.f32.mrb[0].mxu0
    %2506 = vmatprep.mubr.f32.mxu0 0.0
    %2507 = vmatmul.mubr.f32.gmra.mrb[0].mxu0 %v2377
    %v2508 = vpop.f32.mrb[0].mxu0
    %v2509 = vadd.f32 0.0, %v2508
    %v2510 = vpop.f32.mrb[0].mxu0
    %2511 = vmatprep.mubr.f32.mxu0 0.0
    %2512 = vmatmul.mubr.f32.gmra.mrb[0].mxu0 %v2380
    %v2513 = vpop.f32.mrb[0].mxu0
    %v2514 = vadd.f32 0.0, %v2513
    %v2515 = vpop.f32.mrb[0].mxu0
    %2516 = vmatprep.mubr.f32.mxu0 0.0
    %2517 = vmatmul.mubr.f32.gmra.mrb[0].mxu0 %v2383
    %v2518 = vpop.f32.mrb[0].mxu0
    %v2519 = vadd.f32 0.0, %v2518
    %v2520 = vpop.f32.mrb[0].mxu0
    %2521 = vmatprep.mubr.f32.mxu0 0.0
    %2522 = vmatmul.mubr.f32.gmra.mrb[0].mxu0 %v2386
    %v2523 = vpop.f32.mrb[0].mxu0
    %v2524 = vadd.f32 0.0, %v2523
    %v2525 = vpop.f32.mrb[0].mxu0
    %2526 = vmatprep.mubr.f32.mxu0 0.0
    %2527 = vmatmul.mubr.f32.gmra.mrb[0].mxu0 %v2389
    %v2528 = vpop.f32.mrb[0].mxu0
    %v2529 = vadd.f32 0.0, %v2528
    %v2530 = vpop.f32.mrb[0].mxu0
    %2531 = vmatprep.mubr.f32.mxu0 0.0
    %2532 = vmatmul.mubr.f32.gmra.mrb[0].mxu0 %v2392
    %v2533 = vpop.f32.mrb[0].mxu0
    %v2534 = vadd.f32 0.0, %v2533
    %v2535 = vpop.f32.mrb[0].mxu0
    %2536 = vmatprep.mubr.f32.mxu0 0.0
    %2537 = vmatmul.mubr.f32.gmra.mrb[0].mxu0 %v2395
    %v2538 = vpop.f32.mrb[0].mxu0
    %v2539 = vadd.f32 0.0, %v2538
    %v2540 = vpop.f32.mrb[0].mxu0
    %2541 = vdwg.mxu0
    %v2542 = vadd.f32 %v1914, %v2464
    %v2543 = vadd.f32 %v1919, %v2469
    %v2544 = vadd.f32 %v1924, %v2474
    %v2545 = vadd.f32 %v1929, %v2479
    %v2546 = vadd.f32 %v1934, %v2484
    %v2547 = vadd.f32 %v1939, %v2489
    %v2548 = vadd.f32 %v1944, %v2494
    %v2549 = vadd.f32 %v1949, %v2499
    %v2550 = vadd.f32 %v1954, %v2504
    %v2551 = vadd.f32 %v1959, %v2509
    %v2552 = vadd.f32 %v1964, %v2514
    %v2553 = vadd.f32 %v1969, %v2519
    %v2554 = vadd.f32 %v1974, %v2524
    %v2555 = vadd.f32 %v1979, %v2529
    %v2556 = vadd.f32 %v1984, %v2534
    %v2557 = vadd.f32 %v1989, %v2539
    %s2558 = scalar_lea.vmem [#allocation5], 1536
    %v2559 = vld [vmem:[%s2558] sm:$0xff]
    %v2560 = vld [vmem:[%s2558 + $0x8] sm:$0xff]
    %v2561 = vld [vmem:[%s2558 + $0x10] sm:$0xff]
    %v2562 = vld [vmem:[%s2558 + $0x18] sm:$0xff]
    %v2563 = vld [vmem:[%s2558 + $0x20] sm:$0xff]
    %v2564 = vld [vmem:[%s2558 + $0x28] sm:$0xff]
    %v2565 = vld [vmem:[%s2558 + $0x30] sm:$0xff]
    %v2566 = vld [vmem:[%s2558 + $0x38] sm:$0xff]
    %v2567 = vld [vmem:[%s2558 + $0x40] sm:$0xff]
    %v2568 = vld [vmem:[%s2558 + $0x48] sm:$0xff]
    %v2569 = vld [vmem:[%s2558 + $0x50] sm:$0xff]
    %v2570 = vld [vmem:[%s2558 + $0x58] sm:$0xff]
    %v2571 = vld [vmem:[%s2558 + $0x60] sm:$0xff]
    %v2572 = vld [vmem:[%s2558 + $0x68] sm:$0xff]
    %v2573 = vld [vmem:[%s2558 + $0x70] sm:$0xff]
    %v2574 = vld [vmem:[%s2558 + $0x78] sm:$0xff]
    %v2575 = vld [vmem:[%s2558 + $0x80] sm:$0xff]
    %v2576 = vld [vmem:[%s2558 + $0x88] sm:$0xff]
    %v2577 = vld [vmem:[%s2558 + $0x90] sm:$0xff]
    %v2578 = vld [vmem:[%s2558 + $0x98] sm:$0xff]
    %v2579 = vld [vmem:[%s2558 + $0xa0] sm:$0xff]
    %v2580 = vld [vmem:[%s2558 + $0xa8] sm:$0xff]
    %v2581 = vld [vmem:[%s2558 + $0xb0] sm:$0xff]
    %v2582 = vld [vmem:[%s2558 + $0xb8] sm:$0xff]
    %v2583 = vld [vmem:[%s2558 + $0xc0] sm:$0xff]
    %v2584 = vld [vmem:[%s2558 + $0xc8] sm:$0xff]
    %v2585 = vld [vmem:[%s2558 + $0xd0] sm:$0xff]
    %v2586 = vld [vmem:[%s2558 + $0xd8] sm:$0xff]
    %v2587 = vld [vmem:[%s2558 + $0xe0] sm:$0xff]
    %v2588 = vld [vmem:[%s2558 + $0xe8] sm:$0xff]
    %v2589 = vld [vmem:[%s2558 + $0xf0] sm:$0xff]
    %v2590 = vld [vmem:[%s2558 + $0xf8] sm:$0xff]
    %v2591 = vld [vmem:[%s2558 + $0x100] sm:$0xff]
    %v2592 = vld [vmem:[%s2558 + $0x108] sm:$0xff]
    %v2593 = vld [vmem:[%s2558 + $0x110] sm:$0xff]
    %v2594 = vld [vmem:[%s2558 + $0x118] sm:$0xff]
    %v2595 = vld [vmem:[%s2558 + $0x120] sm:$0xff]
    %v2596 = vld [vmem:[%s2558 + $0x128] sm:$0xff]
    %v2597 = vld [vmem:[%s2558 + $0x130] sm:$0xff]
    %v2598 = vld [vmem:[%s2558 + $0x138] sm:$0xff]
    %v2599 = vld [vmem:[%s2558 + $0x140] sm:$0xff]
    %v2600 = vld [vmem:[%s2558 + $0x148] sm:$0xff]
    %v2601 = vld [vmem:[%s2558 + $0x150] sm:$0xff]
    %v2602 = vld [vmem:[%s2558 + $0x158] sm:$0xff]
    %v2603 = vld [vmem:[%s2558 + $0x160] sm:$0xff]
    %v2604 = vld [vmem:[%s2558 + $0x168] sm:$0xff]
    %v2605 = vld [vmem:[%s2558 + $0x170] sm:$0xff]
    %v2606 = vld [vmem:[%s2558 + $0x178] sm:$0xff]
    %v2607 = vld [vmem:[%s2558 + $0x180] sm:$0xff]
    %v2608 = vld [vmem:[%s2558 + $0x188] sm:$0xff]
    %v2609 = vld [vmem:[%s2558 + $0x190] sm:$0xff]
    %v2610 = vld [vmem:[%s2558 + $0x198] sm:$0xff]
    %v2611 = vld [vmem:[%s2558 + $0x1a0] sm:$0xff]
    %v2612 = vld [vmem:[%s2558 + $0x1a8] sm:$0xff]
    %v2613 = vld [vmem:[%s2558 + $0x1b0] sm:$0xff]
    %v2614 = vld [vmem:[%s2558 + $0x1b8] sm:$0xff]
    %v2615 = vld [vmem:[%s2558 + $0x1c0] sm:$0xff]
    %v2616 = vld [vmem:[%s2558 + $0x1c8] sm:$0xff]
    %v2617 = vld [vmem:[%s2558 + $0x1d0] sm:$0xff]
    %v2618 = vld [vmem:[%s2558 + $0x1d8] sm:$0xff]
    %v2619 = vld [vmem:[%s2558 + $0x1e0] sm:$0xff]
    %v2620 = vld [vmem:[%s2558 + $0x1e8] sm:$0xff]
    %v2621 = vld [vmem:[%s2558 + $0x1f0] sm:$0xff]
    %v2622 = vld [vmem:[%s2558 + $0x1f8] sm:$0xff]
    %2623 = vmatprep.subr.mxu0 0.0
    %2624 = vmatpush1.msra.mxu0 %v829
    %2625 = vmatprep.subr.mxu0 0.0
    %2626 = vmatpush1.msra.mxu0 %v830
    %2627 = vmatprep.subr.mxu0 0.0
    %2628 = vmatpush1.msra.mxu0 %v831
    %2629 = vmatprep.subr.mxu0 0.0
    %2630 = vmatpush1.msra.mxu0 %v832
    %2631 = vmatprep.subr.mxu0 0.0
    %2632 = vmatpush1.msra.mxu0 %v833
    %2633 = vmatprep.subr.mxu0 0.0
    %2634 = vmatpush1.msra.mxu0 %v834
    %2635 = vmatprep.subr.mxu0 0.0
    %2636 = vmatpush1.msra.mxu0 %v835
    %2637 = vmatprep.subr.mxu0 0.0
    %2638 = vmatpush1.msra.mxu0 %v836
    %2639 = vmatprep.subr.mxu0 0.0
    %2640 = vmatpush1.msra.mxu0 %v837
    %2641 = vmatprep.subr.mxu0 0.0
    %2642 = vmatpush1.msra.mxu0 %v838
    %2643 = vmatprep.subr.mxu0 0.0
    %2644 = vmatpush1.msra.mxu0 %v839
    %2645 = vmatprep.subr.mxu0 0.0
    %2646 = vmatpush1.msra.mxu0 %v840
    %2647 = vmatprep.subr.mxu0 0.0
    %2648 = vmatpush1.msra.mxu0 %v841
    %2649 = vmatprep.subr.mxu0 0.0
    %2650 = vmatpush1.msra.mxu0 %v842
    %2651 = vmatprep.subr.mxu0 0.0
    %2652 = vmatpush1.msra.mxu0 %v843
    %2653 = vmatprep.subr.mxu0 0.0
    %2654 = vmatpush1.msra.mxu0 %v844
    %2655 = vmatprep.subr.mxu0 0.0
    %2656 = vmatpush1.msra.mxu0 %v845
    %2657 = vmatprep.subr.mxu0 0.0
    %2658 = vmatpush1.msra.mxu0 %v846
    %2659 = vmatprep.subr.mxu0 0.0
    %2660 = vmatpush1.msra.mxu0 %v847
    %2661 = vmatprep.subr.mxu0 0.0
    %2662 = vmatpush1.msra.mxu0 %v848
    %2663 = vmatprep.subr.mxu0 0.0
    %2664 = vmatpush1.msra.mxu0 %v849
    %2665 = vmatprep.subr.mxu0 0.0
    %2666 = vmatpush1.msra.mxu0 %v850
    %2667 = vmatprep.subr.mxu0 0.0
    %2668 = vmatpush1.msra.mxu0 %v851
    %2669 = vmatprep.subr.mxu0 0.0
    %2670 = vmatpush1.msra.mxu0 %v852
    %2671 = vmatprep.subr.mxu0 0.0
    %2672 = vmatpush1.msra.mxu0 %v853
    %2673 = vmatprep.subr.mxu0 0.0
    %2674 = vmatpush1.msra.mxu0 %v854
    %2675 = vmatprep.subr.mxu0 0.0
    %2676 = vmatpush1.msra.mxu0 %v855
    %2677 = vmatprep.subr.mxu0 0.0
    %2678 = vmatpush1.msra.mxu0 %v856
    %2679 = vmatprep.subr.mxu0 0.0
    %2680 = vmatpush1.msra.mxu0 %v857
    %2681 = vmatprep.subr.mxu0 0.0
    %2682 = vmatpush1.msra.mxu0 %v858
    %2683 = vmatprep.subr.mxu0 0.0
    %2684 = vmatpush1.msra.mxu0 %v859
    %2685 = vmatprep.subr.mxu0 0.0
    %2686 = vmatpush1.msra.mxu0 %v860
    %2687 = vmatprep.mubr.f32.mxu0 %v2560
    %2688 = vmatmul.mubr.f32.gmra.mrb[0].mxu0 %v2559
    %v2689 = vpop.f32.mrb[0].mxu0
    %v2690 = vadd.f32 0.0, %v2689
    %v2691 = vpop.f32.mrb[0].mxu0
    %2692 = vmatprep.mubr.f32.mxu0 %v2564
    %2693 = vmatmul.mubr.f32.gmra.mrb[0].mxu0 %v2563
    %v2694 = vpop.f32.mrb[0].mxu0
    %v2695 = vadd.f32 0.0, %v2694
    %v2696 = vpop.f32.mrb[0].mxu0
    %2697 = vmatprep.mubr.f32.mxu0 %v2568
    %2698 = vmatmul.mubr.f32.gmra.mrb[0].mxu0 %v2567
    %v2699 = vpop.f32.mrb[0].mxu0
    %v2700 = vadd.f32 0.0, %v2699
    %v2701 = vpop.f32.mrb[0].mxu0
    %2702 = vmatprep.mubr.f32.mxu0 %v2572
    %2703 = vmatmul.mubr.f32.gmra.mrb[0].mxu0 %v2571
    %v2704 = vpop.f32.mrb[0].mxu0
    %v2705 = vadd.f32 0.0, %v2704
    %v2706 = vpop.f32.mrb[0].mxu0
    %2707 = vmatprep.mubr.f32.mxu0 %v2576
    %2708 = vmatmul.mubr.f32.gmra.mrb[0].mxu0 %v2575
    %v2709 = vpop.f32.mrb[0].mxu0
    %v2710 = vadd.f32 0.0, %v2709
    %v2711 = vpop.f32.mrb[0].mxu0
    %2712 = vmatprep.mubr.f32.mxu0 %v2580
    %2713 = vmatmul.mubr.f32.gmra.mrb[0].mxu0 %v2579
    %v2714 = vpop.f32.mrb[0].mxu0
    %v2715 = vadd.f32 0.0, %v2714
    %v2716 = vpop.f32.mrb[0].mxu0
    %2717 = vmatprep.mubr.f32.mxu0 %v2584
    %2718 = vmatmul.mubr.f32.gmra.mrb[0].mxu0 %v2583
    %v2719 = vpop.f32.mrb[0].mxu0
    %v2720 = vadd.f32 0.0, %v2719
    %v2721 = vpop.f32.mrb[0].mxu0
    %2722 = vmatprep.mubr.f32.mxu0 %v2588
    %2723 = vmatmul.mubr.f32.gmra.mrb[0].mxu0 %v2587
    %v2724 = vpop.f32.mrb[0].mxu0
    %v2725 = vadd.f32 0.0, %v2724
    %v2726 = vpop.f32.mrb[0].mxu0
    %2727 = vmatprep.mubr.f32.mxu0 %v2592
    %2728 = vmatmul.mubr.f32.gmra.mrb[0].mxu0 %v2591
    %v2729 = vpop.f32.mrb[0].mxu0
    %v2730 = vadd.f32 0.0, %v2729
    %v2731 = vpop.f32.mrb[0].mxu0
    %2732 = vmatprep.mubr.f32.mxu0 %v2596
    %2733 = vmatmul.mubr.f32.gmra.mrb[0].mxu0 %v2595
    %v2734 = vpop.f32.mrb[0].mxu0
    %v2735 = vadd.f32 0.0, %v2734
    %v2736 = vpop.f32.mrb[0].mxu0
    %2737 = vmatprep.mubr.f32.mxu0 %v2600
    %2738 = vmatmul.mubr.f32.gmra.mrb[0].mxu0 %v2599
    %v2739 = vpop.f32.mrb[0].mxu0
    %v2740 = vadd.f32 0.0, %v2739
    %v2741 = vpop.f32.mrb[0].mxu0
    %2742 = vmatprep.mubr.f32.mxu0 %v2604
    %2743 = vmatmul.mubr.f32.gmra.mrb[0].mxu0 %v2603
    %v2744 = vpop.f32.mrb[0].mxu0
    %v2745 = vadd.f32 0.0, %v2744
    %v2746 = vpop.f32.mrb[0].mxu0
    %2747 = vmatprep.mubr.f32.mxu0 %v2608
    %2748 = vmatmul.mubr.f32.gmra.mrb[0].mxu0 %v2607
    %v2749 = vpop.f32.mrb[0].mxu0
    %v2750 = vadd.f32 0.0, %v2749
    %v2751 = vpop.f32.mrb[0].mxu0
    %2752 = vmatprep.mubr.f32.mxu0 %v2612
    %2753 = vmatmul.mubr.f32.gmra.mrb[0].mxu0 %v2611
    %v2754 = vpop.f32.mrb[0].mxu0
    %v2755 = vadd.f32 0.0, %v2754
    %v2756 = vpop.f32.mrb[0].mxu0
    %2757 = vmatprep.mubr.f32.mxu0 %v2616
    %2758 = vmatmul.mubr.f32.gmra.mrb[0].mxu0 %v2615
    %v2759 = vpop.f32.mrb[0].mxu0
    %v2760 = vadd.f32 0.0, %v2759
    %v2761 = vpop.f32.mrb[0].mxu0
    %2762 = vmatprep.mubr.f32.mxu0 %v2620
    %2763 = vmatmul.mubr.f32.gmra.mrb[0].mxu0 %v2619
    %v2764 = vpop.f32.mrb[0].mxu0
    %v2765 = vadd.f32 0.0, %v2764
    %v2766 = vpop.f32.mrb[0].mxu0
    %2767 = vdwg.mxu0
    %2768 = vmatprep.subr.mxu0 0.0
    %2769 = vmatpush1.msra.mxu0 %v861
    %2770 = vmatprep.subr.mxu0 0.0
    %2771 = vmatpush1.msra.mxu0 %v862
    %2772 = vmatprep.subr.mxu0 0.0
    %2773 = vmatpush1.msra.mxu0 %v863
    %2774 = vmatprep.subr.mxu0 0.0
    %2775 = vmatpush1.msra.mxu0 %v864
    %2776 = vmatprep.subr.mxu0 0.0
    %2777 = vmatpush1.msra.mxu0 %v865
    %2778 = vmatprep.subr.mxu0 0.0
    %2779 = vmatpush1.msra.mxu0 %v866
    %2780 = vmatprep.subr.mxu0 0.0
    %2781 = vmatpush1.msra.mxu0 %v867
    %2782 = vmatprep.subr.mxu0 0.0
    %2783 = vmatpush1.msra.mxu0 %v868
    %2784 = vmatprep.subr.mxu0 0.0
    %2785 = vmatpush1.msra.mxu0 %v869
    %2786 = vmatprep.subr.mxu0 0.0
    %2787 = vmatpush1.msra.mxu0 %v870
    %2788 = vmatprep.subr.mxu0 0.0
    %2789 = vmatpush1.msra.mxu0 %v871
    %2790 = vmatprep.subr.mxu0 0.0
    %2791 = vmatpush1.msra.mxu0 %v872
    %2792 = vmatprep.subr.mxu0 0.0
    %2793 = vmatpush1.msra.mxu0 %v873
    %2794 = vmatprep.subr.mxu0 0.0
    %2795 = vmatpush1.msra.mxu0 %v874
    %2796 = vmatprep.subr.mxu0 0.0
    %2797 = vmatpush1.msra.mxu0 %v875
    %2798 = vmatprep.subr.mxu0 0.0
    %2799 = vmatpush1.msra.mxu0 %v876
    %2800 = vmatprep.subr.mxu0 0.0
    %2801 = vmatpush1.msra.mxu0 %v877
    %2802 = vmatprep.subr.mxu0 0.0
    %2803 = vmatpush1.msra.mxu0 %v878
    %2804 = vmatprep.subr.mxu0 0.0
    %2805 = vmatpush1.msra.mxu0 %v879
    %2806 = vmatprep.subr.mxu0 0.0
    %2807 = vmatpush1.msra.mxu0 %v880
    %2808 = vmatprep.subr.mxu0 0.0
    %2809 = vmatpush1.msra.mxu0 %v881
    %2810 = vmatprep.subr.mxu0 0.0
    %2811 = vmatpush1.msra.mxu0 %v882
    %2812 = vmatprep.subr.mxu0 0.0
    %2813 = vmatpush1.msra.mxu0 %v883
    %2814 = vmatprep.subr.mxu0 0.0
    %2815 = vmatpush1.msra.mxu0 %v884
    %2816 = vmatprep.subr.mxu0 0.0
    %2817 = vmatpush1.msra.mxu0 %v885
    %2818 = vmatprep.subr.mxu0 0.0
    %2819 = vmatpush1.msra.mxu0 %v886
    %2820 = vmatprep.subr.mxu0 0.0
    %2821 = vmatpush1.msra.mxu0 %v887
    %2822 = vmatprep.subr.mxu0 0.0
    %2823 = vmatpush1.msra.mxu0 %v888
    %2824 = vmatprep.subr.mxu0 0.0
    %2825 = vmatpush1.msra.mxu0 %v889
    %2826 = vmatprep.subr.mxu0 0.0
    %2827 = vmatpush1.msra.mxu0 %v890
    %2828 = vmatprep.subr.mxu0 0.0
    %2829 = vmatpush1.msra.mxu0 %v891
    %2830 = vmatprep.subr.mxu0 0.0
    %2831 = vmatpush1.msra.mxu0 %v892
    %2832 = vmatprep.mubr.f32.mxu0 %v2562
    %2833 = vmatmul.mubr.f32.gmra.mrb[0].mxu0 %v2561
    %v2834 = vpop.f32.mrb[0].mxu0
    %v2835 = vadd.f32 %v2690, %v2834
    %v2836 = vpop.f32.mrb[0].mxu0
    %2837 = vmatprep.mubr.f32.mxu0 %v2566
    %2838 = vmatmul.mubr.f32.gmra.mrb[0].mxu0 %v2565
    %v2839 = vpop.f32.mrb[0].mxu0
    %v2840 = vadd.f32 %v2695, %v2839
    %v2841 = vpop.f32.mrb[0].mxu0
    %2842 = vmatprep.mubr.f32.mxu0 %v2570
    %2843 = vmatmul.mubr.f32.gmra.mrb[0].mxu0 %v2569
    %v2844 = vpop.f32.mrb[0].mxu0
    %v2845 = vadd.f32 %v2700, %v2844
    %v2846 = vpop.f32.mrb[0].mxu0
    %2847 = vmatprep.mubr.f32.mxu0 %v2574
    %2848 = vmatmul.mubr.f32.gmra.mrb[0].mxu0 %v2573
    %v2849 = vpop.f32.mrb[0].mxu0
    %v2850 = vadd.f32 %v2705, %v2849
    %v2851 = vpop.f32.mrb[0].mxu0
    %2852 = vmatprep.mubr.f32.mxu0 %v2578
    %2853 = vmatmul.mubr.f32.gmra.mrb[0].mxu0 %v2577
    %v2854 = vpop.f32.mrb[0].mxu0
    %v2855 = vadd.f32 %v2710, %v2854
    %v2856 = vpop.f32.mrb[0].mxu0
    %2857 = vmatprep.mubr.f32.mxu0 %v2582
    %2858 = vmatmul.mubr.f32.gmra.mrb[0].mxu0 %v2581
    %v2859 = vpop.f32.mrb[0].mxu0
    %v2860 = vadd.f32 %v2715, %v2859
    %v2861 = vpop.f32.mrb[0].mxu0
    %2862 = vmatprep.mubr.f32.mxu0 %v2586
    %2863 = vmatmul.mubr.f32.gmra.mrb[0].mxu0 %v2585
    %v2864 = vpop.f32.mrb[0].mxu0
    %v2865 = vadd.f32 %v2720, %v2864
    %v2866 = vpop.f32.mrb[0].mxu0
    %2867 = vmatprep.mubr.f32.mxu0 %v2590
    %2868 = vmatmul.mubr.f32.gmra.mrb[0].mxu0 %v2589
    %v2869 = vpop.f32.mrb[0].mxu0
    %v2870 = vadd.f32 %v2725, %v2869
    %v2871 = vpop.f32.mrb[0].mxu0
    %2872 = vmatprep.mubr.f32.mxu0 %v2594
    %2873 = vmatmul.mubr.f32.gmra.mrb[0].mxu0 %v2593
    %v2874 = vpop.f32.mrb[0].mxu0
    %v2875 = vadd.f32 %v2730, %v2874
    %v2876 = vpop.f32.mrb[0].mxu0
    %2877 = vmatprep.mubr.f32.mxu0 %v2598
    %2878 = vmatmul.mubr.f32.gmra.mrb[0].mxu0 %v2597
    %v2879 = vpop.f32.mrb[0].mxu0
    %v2880 = vadd.f32 %v2735, %v2879
    %v2881 = vpop.f32.mrb[0].mxu0
    %2882 = vmatprep.mubr.f32.mxu0 %v2602
    %2883 = vmatmul.mubr.f32.gmra.mrb[0].mxu0 %v2601
    %v2884 = vpop.f32.mrb[0].mxu0
    %v2885 = vadd.f32 %v2740, %v2884
    %v2886 = vpop.f32.mrb[0].mxu0
    %2887 = vmatprep.mubr.f32.mxu0 %v2606
    %2888 = vmatmul.mubr.f32.gmra.mrb[0].mxu0 %v2605
    %v2889 = vpop.f32.mrb[0].mxu0
    %v2890 = vadd.f32 %v2745, %v2889
    %v2891 = vpop.f32.mrb[0].mxu0
    %2892 = vmatprep.mubr.f32.mxu0 %v2610
    %2893 = vmatmul.mubr.f32.gmra.mrb[0].mxu0 %v2609
    %v2894 = vpop.f32.mrb[0].mxu0
    %v2895 = vadd.f32 %v2750, %v2894
    %v2896 = vpop.f32.mrb[0].mxu0
    %2897 = vmatprep.mubr.f32.mxu0 %v2614
    %2898 = vmatmul.mubr.f32.gmra.mrb[0].mxu0 %v2613
    %v2899 = vpop.f32.mrb[0].mxu0
    %v2900 = vadd.f32 %v2755, %v2899
    %v2901 = vpop.f32.mrb[0].mxu0
    %2902 = vmatprep.mubr.f32.mxu0 %v2618
    %2903 = vmatmul.mubr.f32.gmra.mrb[0].mxu0 %v2617
    %v2904 = vpop.f32.mrb[0].mxu0
    %v2905 = vadd.f32 %v2760, %v2904
    %v2906 = vpop.f32.mrb[0].mxu0
    %2907 = vmatprep.mubr.f32.mxu0 %v2622
    %2908 = vmatmul.mubr.f32.gmra.mrb[0].mxu0 %v2621
    %v2909 = vpop.f32.mrb[0].mxu0
    %v2910 = vadd.f32 %v2765, %v2909
    %v2911 = vpop.f32.mrb[0].mxu0
    %2912 = vdwg.mxu0
    %s2913 = scalar_lea.vmem [#allocation7], 24
    %v2914 = vld [vmem:[%s2913] sm:$0xff]
    %v2916 = vsel %vm1605, %v2835, 0
    %v2919 = vsel %vm1605, %v2840, 0
    %v2922 = vsel %vm1605, %v2845, 0
    %v2925 = vsel %vm1605, %v2850, 0
    %v2928 = vsel %vm1605, %v2855, 0
    %v2931 = vsel %vm1605, %v2860, 0
    %v2934 = vsel %vm1605, %v2865, 0
    %v2937 = vsel %vm1605, %v2870, 0
    %v2940 = vsel %vm1605, %v2875, 0
    %v2943 = vsel %vm1605, %v2880, 0
    %v2946 = vsel %vm1605, %v2885, 0
    %v2949 = vsel %vm1605, %v2890, 0
    %v2952 = vsel %vm1605, %v2895, 0
    %v2955 = vsel %vm1605, %v2900, 0
    %v2958 = vsel %vm1605, %v2905, 0
    %v2961 = vsel %vm1605, %v2910, 0
    %2963 = vmatprep.subr.mxu0 0.0
    %2964 = vmatpush1.msra.mxu0 %v2914
    %2965 = vmatprep.subr.mxu0 0.0
    %2966 = vmatpush1.msra.mxu0 0.0
    %2967 = vmatprep.subr.mxu0 0.0
    %2968 = vmatpush1.msra.mxu0 0.0
    %2969 = vmatprep.subr.mxu0 0.0
    %2970 = vmatpush1.msra.mxu0 0.0
    %2971 = vmatprep.subr.mxu0 0.0
    %2972 = vmatpush1.msra.mxu0 0.0
    %2973 = vmatprep.subr.mxu0 0.0
    %2974 = vmatpush1.msra.mxu0 0.0
    %2975 = vmatprep.subr.mxu0 0.0
    %2976 = vmatpush1.msra.mxu0 0.0
    %2977 = vmatprep.subr.mxu0 0.0
    %2978 = vmatpush1.msra.mxu0 0.0
    %2979 = vmatprep.subr.mxu0 0.0
    %2980 = vmatpush1.msra.mxu0 0.0
    %2981 = vmatprep.subr.mxu0 0.0
    %2982 = vmatpush1.msra.mxu0 0.0
    %2983 = vmatprep.subr.mxu0 0.0
    %2984 = vmatpush1.msra.mxu0 0.0
    %2985 = vmatprep.subr.mxu0 0.0
    %2986 = vmatpush1.msra.mxu0 0.0
    %2987 = vmatprep.subr.mxu0 0.0
    %2988 = vmatpush1.msra.mxu0 0.0
    %2989 = vmatprep.subr.mxu0 0.0
    %2990 = vmatpush1.msra.mxu0 0.0
    %2991 = vmatprep.subr.mxu0 0.0
    %2992 = vmatpush1.msra.mxu0 0.0
    %2993 = vmatprep.subr.mxu0 0.0
    %2994 = vmatpush1.msra.mxu0 0.0
    %2995 = vmatprep.subr.mxu0 0.0
    %2996 = vmatpush1.msra.mxu0 0.0
    %2997 = vmatprep.subr.mxu0 0.0
    %2998 = vmatpush1.msra.mxu0 0.0
    %2999 = vmatprep.subr.mxu0 0.0
    %3000 = vmatpush1.msra.mxu0 0.0
    %3001 = vmatprep.subr.mxu0 0.0
    %3002 = vmatpush1.msra.mxu0 0.0
    %3003 = vmatprep.subr.mxu0 0.0
    %3004 = vmatpush1.msra.mxu0 0.0
    %3005 = vmatprep.subr.mxu0 0.0
    %3006 = vmatpush1.msra.mxu0 0.0
    %3007 = vmatprep.subr.mxu0 0.0
    %3008 = vmatpush1.msra.mxu0 0.0
    %3009 = vmatprep.subr.mxu0 0.0
    %3010 = vmatpush1.msra.mxu0 0.0
    %3011 = vmatprep.subr.mxu0 0.0
    %3012 = vmatpush1.msra.mxu0 0.0
    %3013 = vmatprep.subr.mxu0 0.0
    %3014 = vmatpush1.msra.mxu0 0.0
    %3015 = vmatprep.subr.mxu0 0.0
    %3016 = vmatpush1.msra.mxu0 0.0
    %3017 = vmatprep.subr.mxu0 0.0
    %3018 = vmatpush1.msra.mxu0 0.0
    %3019 = vmatprep.subr.mxu0 0.0
    %3020 = vmatpush1.msra.mxu0 0.0
    %3021 = vmatprep.subr.mxu0 0.0
    %3022 = vmatpush1.msra.mxu0 0.0
    %3023 = vmatprep.subr.mxu0 0.0
    %3024 = vmatpush1.msra.mxu0 0.0
    %3025 = vmatprep.subr.mxu0 0.0
    %3026 = vmatpush1.msra.mxu0 0.0
    %3027 = vmatprep.mubr.f32.mxu0 0.0
    %3028 = vmatmul.mubr.f32.gmra.mrb[0].mxu0 %v2916
    %v3029 = vpop.f32.mrb[0].mxu0
    %v3030 = vadd.f32 0.0, %v3029
    %v3031 = vpop.f32.mrb[0].mxu0
    %3032 = vmatprep.mubr.f32.mxu0 0.0
    %3033 = vmatmul.mubr.f32.gmra.mrb[0].mxu0 %v2919
    %v3034 = vpop.f32.mrb[0].mxu0
    %v3035 = vadd.f32 0.0, %v3034
    %v3036 = vpop.f32.mrb[0].mxu0
    %3037 = vmatprep.mubr.f32.mxu0 0.0
    %3038 = vmatmul.mubr.f32.gmra.mrb[0].mxu0 %v2922
    %v3039 = vpop.f32.mrb[0].mxu0
    %v3040 = vadd.f32 0.0, %v3039
    %v3041 = vpop.f32.mrb[0].mxu0
    %3042 = vmatprep.mubr.f32.mxu0 0.0
    %3043 = vmatmul.mubr.f32.gmra.mrb[0].mxu0 %v2925
    %v3044 = vpop.f32.mrb[0].mxu0
    %v3045 = vadd.f32 0.0, %v3044
    %v3046 = vpop.f32.mrb[0].mxu0
    %3047 = vmatprep.mubr.f32.mxu0 0.0
    %3048 = vmatmul.mubr.f32.gmra.mrb[0].mxu0 %v2928
    %v3049 = vpop.f32.mrb[0].mxu0
    %v3050 = vadd.f32 0.0, %v3049
    %v3051 = vpop.f32.mrb[0].mxu0
    %3052 = vmatprep.mubr.f32.mxu0 0.0
    %3053 = vmatmul.mubr.f32.gmra.mrb[0].mxu0 %v2931
    %v3054 = vpop.f32.mrb[0].mxu0
    %v3055 = vadd.f32 0.0, %v3054
    %v3056 = vpop.f32.mrb[0].mxu0
    %3057 = vmatprep.mubr.f32.mxu0 0.0
    %3058 = vmatmul.mubr.f32.gmra.mrb[0].mxu0 %v2934
    %v3059 = vpop.f32.mrb[0].mxu0
    %v3060 = vadd.f32 0.0, %v3059
    %v3061 = vpop.f32.mrb[0].mxu0
    %3062 = vmatprep.mubr.f32.mxu0 0.0
    %3063 = vmatmul.mubr.f32.gmra.mrb[0].mxu0 %v2937
    %v3064 = vpop.f32.mrb[0].mxu0
    %v3065 = vadd.f32 0.0, %v3064
    %v3066 = vpop.f32.mrb[0].mxu0
    %3067 = vmatprep.mubr.f32.mxu0 0.0
    %3068 = vmatmul.mubr.f32.gmra.mrb[0].mxu0 %v2940
    %v3069 = vpop.f32.mrb[0].mxu0
    %v3070 = vadd.f32 0.0, %v3069
    %v3071 = vpop.f32.mrb[0].mxu0
    %3072 = vmatprep.mubr.f32.mxu0 0.0
    %3073 = vmatmul.mubr.f32.gmra.mrb[0].mxu0 %v2943
    %v3074 = vpop.f32.mrb[0].mxu0
    %v3075 = vadd.f32 0.0, %v3074
    %v3076 = vpop.f32.mrb[0].mxu0
    %3077 = vmatprep.mubr.f32.mxu0 0.0
    %3078 = vmatmul.mubr.f32.gmra.mrb[0].mxu0 %v2946
    %v3079 = vpop.f32.mrb[0].mxu0
    %v3080 = vadd.f32 0.0, %v3079
    %v3081 = vpop.f32.mrb[0].mxu0
    %3082 = vmatprep.mubr.f32.mxu0 0.0
    %3083 = vmatmul.mubr.f32.gmra.mrb[0].mxu0 %v2949
    %v3084 = vpop.f32.mrb[0].mxu0
    %v3085 = vadd.f32 0.0, %v3084
    %v3086 = vpop.f32.mrb[0].mxu0
    %3087 = vmatprep.mubr.f32.mxu0 0.0
    %3088 = vmatmul.mubr.f32.gmra.mrb[0].mxu0 %v2952
    %v3089 = vpop.f32.mrb[0].mxu0
    %v3090 = vadd.f32 0.0, %v3089
    %v3091 = vpop.f32.mrb[0].mxu0
    %3092 = vmatprep.mubr.f32.mxu0 0.0
    %3093 = vmatmul.mubr.f32.gmra.mrb[0].mxu0 %v2955
    %v3094 = vpop.f32.mrb[0].mxu0
    %v3095 = vadd.f32 0.0, %v3094
    %v3096 = vpop.f32.mrb[0].mxu0
    %3097 = vmatprep.mubr.f32.mxu0 0.0
    %3098 = vmatmul.mubr.f32.gmra.mrb[0].mxu0 %v2958
    %v3099 = vpop.f32.mrb[0].mxu0
    %v3100 = vadd.f32 0.0, %v3099
    %v3101 = vpop.f32.mrb[0].mxu0
    %3102 = vmatprep.mubr.f32.mxu0 0.0
    %3103 = vmatmul.mubr.f32.gmra.mrb[0].mxu0 %v2961
    %v3104 = vpop.f32.mrb[0].mxu0
    %v3105 = vadd.f32 0.0, %v3104
    %v3106 = vpop.f32.mrb[0].mxu0
    %3107 = vdwg.mxu0
    %v3108 = vadd.f32 %v2542, %v3030
    %v3109 = vadd.f32 %v2543, %v3035
    %v3110 = vadd.f32 %v2544, %v3040
    %v3111 = vadd.f32 %v2545, %v3045
    %v3112 = vadd.f32 %v2546, %v3050
    %v3113 = vadd.f32 %v2547, %v3055
    %v3114 = vadd.f32 %v2548, %v3060
    %v3115 = vadd.f32 %v2549, %v3065
    %v3116 = vadd.f32 %v2550, %v3070
    %v3117 = vadd.f32 %v2551, %v3075
    %v3118 = vadd.f32 %v2552, %v3080
    %v3119 = vadd.f32 %v2553, %v3085
    %v3120 = vadd.f32 %v2554, %v3090
    %v3121 = vadd.f32 %v2555, %v3095
    %v3122 = vadd.f32 %v2556, %v3100
    %v3123 = vadd.f32 %v2557, %v3105
    %s3124 = scalar_lea.vmem [#allocation5], 2048
    %v3125 = vld [vmem:[%s3124] sm:$0xff]
    %v3126 = vld [vmem:[%s3124 + $0x8] sm:$0xff]
    %v3127 = vld [vmem:[%s3124 + $0x10] sm:$0xff]
    %v3128 = vld [vmem:[%s3124 + $0x18] sm:$0xff]
    %v3129 = vld [vmem:[%s3124 + $0x20] sm:$0xff]
    %v3130 = vld [vmem:[%s3124 + $0x28] sm:$0xff]
    %v3131 = vld [vmem:[%s3124 + $0x30] sm:$0xff]
    %v3132 = vld [vmem:[%s3124 + $0x38] sm:$0xff]
    %v3133 = vld [vmem:[%s3124 + $0x40] sm:$0xff]
    %v3134 = vld [vmem:[%s3124 + $0x48] sm:$0xff]
    %v3135 = vld [vmem:[%s3124 + $0x50] sm:$0xff]
    %v3136 = vld [vmem:[%s3124 + $0x58] sm:$0xff]
    %v3137 = vld [vmem:[%s3124 + $0x60] sm:$0xff]
    %v3138 = vld [vmem:[%s3124 + $0x68] sm:$0xff]
    %v3139 = vld [vmem:[%s3124 + $0x70] sm:$0xff]
    %v3140 = vld [vmem:[%s3124 + $0x78] sm:$0xff]
    %v3141 = vld [vmem:[%s3124 + $0x80] sm:$0xff]
    %v3142 = vld [vmem:[%s3124 + $0x88] sm:$0xff]
    %v3143 = vld [vmem:[%s3124 + $0x90] sm:$0xff]
    %v3144 = vld [vmem:[%s3124 + $0x98] sm:$0xff]
    %v3145 = vld [vmem:[%s3124 + $0xa0] sm:$0xff]
    %v3146 = vld [vmem:[%s3124 + $0xa8] sm:$0xff]
    %v3147 = vld [vmem:[%s3124 + $0xb0] sm:$0xff]
    %v3148 = vld [vmem:[%s3124 + $0xb8] sm:$0xff]
    %v3149 = vld [vmem:[%s3124 + $0xc0] sm:$0xff]
    %v3150 = vld [vmem:[%s3124 + $0xc8] sm:$0xff]
    %v3151 = vld [vmem:[%s3124 + $0xd0] sm:$0xff]
    %v3152 = vld [vmem:[%s3124 + $0xd8] sm:$0xff]
    %v3153 = vld [vmem:[%s3124 + $0xe0] sm:$0xff]
    %v3154 = vld [vmem:[%s3124 + $0xe8] sm:$0xff]
    %v3155 = vld [vmem:[%s3124 + $0xf0] sm:$0xff]
    %v3156 = vld [vmem:[%s3124 + $0xf8] sm:$0xff]
    %v3157 = vld [vmem:[%s3124 + $0x100] sm:$0xff]
    %v3158 = vld [vmem:[%s3124 + $0x108] sm:$0xff]
    %v3159 = vld [vmem:[%s3124 + $0x110] sm:$0xff]
    %v3160 = vld [vmem:[%s3124 + $0x118] sm:$0xff]
    %v3161 = vld [vmem:[%s3124 + $0x120] sm:$0xff]
    %v3162 = vld [vmem:[%s3124 + $0x128] sm:$0xff]
    %v3163 = vld [vmem:[%s3124 + $0x130] sm:$0xff]
    %v3164 = vld [vmem:[%s3124 + $0x138] sm:$0xff]
    %v3165 = vld [vmem:[%s3124 + $0x140] sm:$0xff]
    %v3166 = vld [vmem:[%s3124 + $0x148] sm:$0xff]
    %v3167 = vld [vmem:[%s3124 + $0x150] sm:$0xff]
    %v3168 = vld [vmem:[%s3124 + $0x158] sm:$0xff]
    %v3169 = vld [vmem:[%s3124 + $0x160] sm:$0xff]
    %v3170 = vld [vmem:[%s3124 + $0x168] sm:$0xff]
    %v3171 = vld [vmem:[%s3124 + $0x170] sm:$0xff]
    %v3172 = vld [vmem:[%s3124 + $0x178] sm:$0xff]
    %v3173 = vld [vmem:[%s3124 + $0x180] sm:$0xff]
    %v3174 = vld [vmem:[%s3124 + $0x188] sm:$0xff]
    %v3175 = vld [vmem:[%s3124 + $0x190] sm:$0xff]
    %v3176 = vld [vmem:[%s3124 + $0x198] sm:$0xff]
    %v3177 = vld [vmem:[%s3124 + $0x1a0] sm:$0xff]
    %v3178 = vld [vmem:[%s3124 + $0x1a8] sm:$0xff]
    %v3179 = vld [vmem:[%s3124 + $0x1b0] sm:$0xff]
    %v3180 = vld [vmem:[%s3124 + $0x1b8] sm:$0xff]
    %v3181 = vld [vmem:[%s3124 + $0x1c0] sm:$0xff]
    %v3182 = vld [vmem:[%s3124 + $0x1c8] sm:$0xff]
    %v3183 = vld [vmem:[%s3124 + $0x1d0] sm:$0xff]
    %v3184 = vld [vmem:[%s3124 + $0x1d8] sm:$0xff]
    %v3185 = vld [vmem:[%s3124 + $0x1e0] sm:$0xff]
    %v3186 = vld [vmem:[%s3124 + $0x1e8] sm:$0xff]
    %v3187 = vld [vmem:[%s3124 + $0x1f0] sm:$0xff]
    %v3188 = vld [vmem:[%s3124 + $0x1f8] sm:$0xff]
    %3189 = vmatprep.subr.mxu0 0.0
    %3190 = vmatpush1.msra.mxu0 %v829
    %3191 = vmatprep.subr.mxu0 0.0
    %3192 = vmatpush1.msra.mxu0 %v830
    %3193 = vmatprep.subr.mxu0 0.0
    %3194 = vmatpush1.msra.mxu0 %v831
    %3195 = vmatprep.subr.mxu0 0.0
    %3196 = vmatpush1.msra.mxu0 %v832
    %3197 = vmatprep.subr.mxu0 0.0
    %3198 = vmatpush1.msra.mxu0 %v833
    %3199 = vmatprep.subr.mxu0 0.0
    %3200 = vmatpush1.msra.mxu0 %v834
    %3201 = vmatprep.subr.mxu0 0.0
    %3202 = vmatpush1.msra.mxu0 %v835
    %3203 = vmatprep.subr.mxu0 0.0
    %3204 = vmatpush1.msra.mxu0 %v836
    %3205 = vmatprep.subr.mxu0 0.0
    %3206 = vmatpush1.msra.mxu0 %v837
    %3207 = vmatprep.subr.mxu0 0.0
    %3208 = vmatpush1.msra.mxu0 %v838
    %3209 = vmatprep.subr.mxu0 0.0
    %3210 = vmatpush1.msra.mxu0 %v839
    %3211 = vmatprep.subr.mxu0 0.0
    %3212 = vmatpush1.msra.mxu0 %v840
    %3213 = vmatprep.subr.mxu0 0.0
    %3214 = vmatpush1.msra.mxu0 %v841
    %3215 = vmatprep.subr.mxu0 0.0
    %3216 = vmatpush1.msra.mxu0 %v842
    %3217 = vmatprep.subr.mxu0 0.0
    %3218 = vmatpush1.msra.mxu0 %v843
    %3219 = vmatprep.subr.mxu0 0.0
    %3220 = vmatpush1.msra.mxu0 %v844
    %3221 = vmatprep.subr.mxu0 0.0
    %3222 = vmatpush1.msra.mxu0 %v845
    %3223 = vmatprep.subr.mxu0 0.0
    %3224 = vmatpush1.msra.mxu0 %v846
    %3225 = vmatprep.subr.mxu0 0.0
    %3226 = vmatpush1.msra.mxu0 %v847
    %3227 = vmatprep.subr.mxu0 0.0
    %3228 = vmatpush1.msra.mxu0 %v848
    %3229 = vmatprep.subr.mxu0 0.0
    %3230 = vmatpush1.msra.mxu0 %v849
    %3231 = vmatprep.subr.mxu0 0.0
    %3232 = vmatpush1.msra.mxu0 %v850
    %3233 = vmatprep.subr.mxu0 0.0
    %3234 = vmatpush1.msra.mxu0 %v851
    %3235 = vmatprep.subr.mxu0 0.0
    %3236 = vmatpush1.msra.mxu0 %v852
    %3237 = vmatprep.subr.mxu0 0.0
    %3238 = vmatpush1.msra.mxu0 %v853
    %3239 = vmatprep.subr.mxu0 0.0
    %3240 = vmatpush1.msra.mxu0 %v854
    %3241 = vmatprep.subr.mxu0 0.0
    %3242 = vmatpush1.msra.mxu0 %v855
    %3243 = vmatprep.subr.mxu0 0.0
    %3244 = vmatpush1.msra.mxu0 %v856
    %3245 = vmatprep.subr.mxu0 0.0
    %3246 = vmatpush1.msra.mxu0 %v857
    %3247 = vmatprep.subr.mxu0 0.0
    %3248 = vmatpush1.msra.mxu0 %v858
    %3249 = vmatprep.subr.mxu0 0.0
    %3250 = vmatpush1.msra.mxu0 %v859
    %3251 = vmatprep.subr.mxu0 0.0
    %3252 = vmatpush1.msra.mxu0 %v860
    %3253 = vmatprep.mubr.f32.mxu0 %v3126
    %3254 = vmatmul.mubr.f32.gmra.mrb[0].mxu0 %v3125
    %v3255 = vpop.f32.mrb[0].mxu0
    %v3256 = vadd.f32 0.0, %v3255
    %v3257 = vpop.f32.mrb[0].mxu0
    %3258 = vmatprep.mubr.f32.mxu0 %v3130
    %3259 = vmatmul.mubr.f32.gmra.mrb[0].mxu0 %v3129
    %v3260 = vpop.f32.mrb[0].mxu0
    %v3261 = vadd.f32 0.0, %v3260
    %v3262 = vpop.f32.mrb[0].mxu0
    %3263 = vmatprep.mubr.f32.mxu0 %v3134
    %3264 = vmatmul.mubr.f32.gmra.mrb[0].mxu0 %v3133
    %v3265 = vpop.f32.mrb[0].mxu0
    %v3266 = vadd.f32 0.0, %v3265
    %v3267 = vpop.f32.mrb[0].mxu0
    %3268 = vmatprep.mubr.f32.mxu0 %v3138
    %3269 = vmatmul.mubr.f32.gmra.mrb[0].mxu0 %v3137
    %v3270 = vpop.f32.mrb[0].mxu0
    %v3271 = vadd.f32 0.0, %v3270
    %v3272 = vpop.f32.mrb[0].mxu0
    %3273 = vmatprep.mubr.f32.mxu0 %v3142
    %3274 = vmatmul.mubr.f32.gmra.mrb[0].mxu0 %v3141
    %v3275 = vpop.f32.mrb[0].mxu0
    %v3276 = vadd.f32 0.0, %v3275
    %v3277 = vpop.f32.mrb[0].mxu0
    %3278 = vmatprep.mubr.f32.mxu0 %v3146
    %3279 = vmatmul.mubr.f32.gmra.mrb[0].mxu0 %v3145
    %v3280 = vpop.f32.mrb[0].mxu0
    %v3281 = vadd.f32 0.0, %v3280
    %v3282 = vpop.f32.mrb[0].mxu0
    %3283 = vmatprep.mubr.f32.mxu0 %v3150
    %3284 = vmatmul.mubr.f32.gmra.mrb[0].mxu0 %v3149
    %v3285 = vpop.f32.mrb[0].mxu0
    %v3286 = vadd.f32 0.0, %v3285
    %v3287 = vpop.f32.mrb[0].mxu0
    %3288 = vmatprep.mubr.f32.mxu0 %v3154
    %3289 = vmatmul.mubr.f32.gmra.mrb[0].mxu0 %v3153
    %v3290 = vpop.f32.mrb[0].mxu0
    %v3291 = vadd.f32 0.0, %v3290
    %v3292 = vpop.f32.mrb[0].mxu0
    %3293 = vmatprep.mubr.f32.mxu0 %v3158
    %3294 = vmatmul.mubr.f32.gmra.mrb[0].mxu0 %v3157
    %v3295 = vpop.f32.mrb[0].mxu0
    %v3296 = vadd.f32 0.0, %v3295
    %v3297 = vpop.f32.mrb[0].mxu0
    %3298 = vmatprep.mubr.f32.mxu0 %v3162
    %3299 = vmatmul.mubr.f32.gmra.mrb[0].mxu0 %v3161
    %v3300 = vpop.f32.mrb[0].mxu0
    %v3301 = vadd.f32 0.0, %v3300
    %v3302 = vpop.f32.mrb[0].mxu0
    %3303 = vmatprep.mubr.f32.mxu0 %v3166
    %3304 = vmatmul.mubr.f32.gmra.mrb[0].mxu0 %v3165
    %v3305 = vpop.f32.mrb[0].mxu0
    %v3306 = vadd.f32 0.0, %v3305
    %v3307 = vpop.f32.mrb[0].mxu0
    %3308 = vmatprep.mubr.f32.mxu0 %v3170
    %3309 = vmatmul.mubr.f32.gmra.mrb[0].mxu0 %v3169
    %v3310 = vpop.f32.mrb[0].mxu0
    %v3311 = vadd.f32 0.0, %v3310
    %v3312 = vpop.f32.mrb[0].mxu0
    %3313 = vmatprep.mubr.f32.mxu0 %v3174
    %3314 = vmatmul.mubr.f32.gmra.mrb[0].mxu0 %v3173
    %v3315 = vpop.f32.mrb[0].mxu0
    %v3316 = vadd.f32 0.0, %v3315
    %v3317 = vpop.f32.mrb[0].mxu0
    %3318 = vmatprep.mubr.f32.mxu0 %v3178
    %3319 = vmatmul.mubr.f32.gmra.mrb[0].mxu0 %v3177
    %v3320 = vpop.f32.mrb[0].mxu0
    %v3321 = vadd.f32 0.0, %v3320
    %v3322 = vpop.f32.mrb[0].mxu0
    %3323 = vmatprep.mubr.f32.mxu0 %v3182
    %3324 = vmatmul.mubr.f32.gmra.mrb[0].mxu0 %v3181
    %v3325 = vpop.f32.mrb[0].mxu0
    %v3326 = vadd.f32 0.0, %v3325
    %v3327 = vpop.f32.mrb[0].mxu0
    %3328 = vmatprep.mubr.f32.mxu0 %v3186
    %3329 = vmatmul.mubr.f32.gmra.mrb[0].mxu0 %v3185
    %v3330 = vpop.f32.mrb[0].mxu0
    %v3331 = vadd.f32 0.0, %v3330
    %v3332 = vpop.f32.mrb[0].mxu0
    %3333 = vdwg.mxu0
    %3334 = vmatprep.subr.mxu0 0.0
    %3335 = vmatpush1.msra.mxu0 %v861
    %3336 = vmatprep.subr.mxu0 0.0
    %3337 = vmatpush1.msra.mxu0 %v862
    %3338 = vmatprep.subr.mxu0 0.0
    %3339 = vmatpush1.msra.mxu0 %v863
    %3340 = vmatprep.subr.mxu0 0.0
    %3341 = vmatpush1.msra.mxu0 %v864
    %3342 = vmatprep.subr.mxu0 0.0
    %3343 = vmatpush1.msra.mxu0 %v865
    %3344 = vmatprep.subr.mxu0 0.0
    %3345 = vmatpush1.msra.mxu0 %v866
    %3346 = vmatprep.subr.mxu0 0.0
    %3347 = vmatpush1.msra.mxu0 %v867
    %3348 = vmatprep.subr.mxu0 0.0
    %3349 = vmatpush1.msra.mxu0 %v868
    %3350 = vmatprep.subr.mxu0 0.0
    %3351 = vmatpush1.msra.mxu0 %v869
    %3352 = vmatprep.subr.mxu0 0.0
    %3353 = vmatpush1.msra.mxu0 %v870
    %3354 = vmatprep.subr.mxu0 0.0
    %3355 = vmatpush1.msra.mxu0 %v871
    %3356 = vmatprep.subr.mxu0 0.0
    %3357 = vmatpush1.msra.mxu0 %v872
    %3358 = vmatprep.subr.mxu0 0.0
    %3359 = vmatpush1.msra.mxu0 %v873
    %3360 = vmatprep.subr.mxu0 0.0
    %3361 = vmatpush1.msra.mxu0 %v874
    %3362 = vmatprep.subr.mxu0 0.0
    %3363 = vmatpush1.msra.mxu0 %v875
    %3364 = vmatprep.subr.mxu0 0.0
    %3365 = vmatpush1.msra.mxu0 %v876
    %3366 = vmatprep.subr.mxu0 0.0
    %3367 = vmatpush1.msra.mxu0 %v877
    %3368 = vmatprep.subr.mxu0 0.0
    %3369 = vmatpush1.msra.mxu0 %v878
    %3370 = vmatprep.subr.mxu0 0.0
    %3371 = vmatpush1.msra.mxu0 %v879
    %3372 = vmatprep.subr.mxu0 0.0
    %3373 = vmatpush1.msra.mxu0 %v880
    %3374 = vmatprep.subr.mxu0 0.0
    %3375 = vmatpush1.msra.mxu0 %v881
    %3376 = vmatprep.subr.mxu0 0.0
    %3377 = vmatpush1.msra.mxu0 %v882
    %3378 = vmatprep.subr.mxu0 0.0
    %3379 = vmatpush1.msra.mxu0 %v883
    %3380 = vmatprep.subr.mxu0 0.0
    %3381 = vmatpush1.msra.mxu0 %v884
    %3382 = vmatprep.subr.mxu0 0.0
    %3383 = vmatpush1.msra.mxu0 %v885
    %3384 = vmatprep.subr.mxu0 0.0
    %3385 = vmatpush1.msra.mxu0 %v886
    %3386 = vmatprep.subr.mxu0 0.0
    %3387 = vmatpush1.msra.mxu0 %v887
    %3388 = vmatprep.subr.mxu0 0.0
    %3389 = vmatpush1.msra.mxu0 %v888
    %3390 = vmatprep.subr.mxu0 0.0
    %3391 = vmatpush1.msra.mxu0 %v889
    %3392 = vmatprep.subr.mxu0 0.0
    %3393 = vmatpush1.msra.mxu0 %v890
    %3394 = vmatprep.subr.mxu0 0.0
    %3395 = vmatpush1.msra.mxu0 %v891
    %3396 = vmatprep.subr.mxu0 0.0
    %3397 = vmatpush1.msra.mxu0 %v892
    %3398 = vmatprep.mubr.f32.mxu0 %v3128
    %3399 = vmatmul.mubr.f32.gmra.mrb[0].mxu0 %v3127
    %v3400 = vpop.f32.mrb[0].mxu0
    %v3401 = vadd.f32 %v3256, %v3400
    %v3402 = vpop.f32.mrb[0].mxu0
    %3403 = vmatprep.mubr.f32.mxu0 %v3132
    %3404 = vmatmul.mubr.f32.gmra.mrb[0].mxu0 %v3131
    %v3405 = vpop.f32.mrb[0].mxu0
    %v3406 = vadd.f32 %v3261, %v3405
    %v3407 = vpop.f32.mrb[0].mxu0
    %3408 = vmatprep.mubr.f32.mxu0 %v3136
    %3409 = vmatmul.mubr.f32.gmra.mrb[0].mxu0 %v3135
    %v3410 = vpop.f32.mrb[0].mxu0
    %v3411 = vadd.f32 %v3266, %v3410
    %v3412 = vpop.f32.mrb[0].mxu0
    %3413 = vmatprep.mubr.f32.mxu0 %v3140
    %3414 = vmatmul.mubr.f32.gmra.mrb[0].mxu0 %v3139
    %v3415 = vpop.f32.mrb[0].mxu0
    %v3416 = vadd.f32 %v3271, %v3415
    %v3417 = vpop.f32.mrb[0].mxu0
    %3418 = vmatprep.mubr.f32.mxu0 %v3144
    %3419 = vmatmul.mubr.f32.gmra.mrb[0].mxu0 %v3143
    %v3420 = vpop.f32.mrb[0].mxu0
    %v3421 = vadd.f32 %v3276, %v3420
    %v3422 = vpop.f32.mrb[0].mxu0
    %3423 = vmatprep.mubr.f32.mxu0 %v3148
    %3424 = vmatmul.mubr.f32.gmra.mrb[0].mxu0 %v3147
    %v3425 = vpop.f32.mrb[0].mxu0
    %v3426 = vadd.f32 %v3281, %v3425
    %v3427 = vpop.f32.mrb[0].mxu0
    %3428 = vmatprep.mubr.f32.mxu0 %v3152
    %3429 = vmatmul.mubr.f32.gmra.mrb[0].mxu0 %v3151
    %v3430 = vpop.f32.mrb[0].mxu0
    %v3431 = vadd.f32 %v3286, %v3430
    %v3432 = vpop.f32.mrb[0].mxu0
    %3433 = vmatprep.mubr.f32.mxu0 %v3156
    %3434 = vmatmul.mubr.f32.gmra.mrb[0].mxu0 %v3155
    %v3435 = vpop.f32.mrb[0].mxu0
    %v3436 = vadd.f32 %v3291, %v3435
    %v3437 = vpop.f32.mrb[0].mxu0
    %3438 = vmatprep.mubr.f32.mxu0 %v3160
    %3439 = vmatmul.mubr.f32.gmra.mrb[0].mxu0 %v3159
    %v3440 = vpop.f32.mrb[0].mxu0
    %v3441 = vadd.f32 %v3296, %v3440
    %v3442 = vpop.f32.mrb[0].mxu0
    %3443 = vmatprep.mubr.f32.mxu0 %v3164
    %3444 = vmatmul.mubr.f32.gmra.mrb[0].mxu0 %v3163
    %v3445 = vpop.f32.mrb[0].mxu0
    %v3446 = vadd.f32 %v3301, %v3445
    %v3447 = vpop.f32.mrb[0].mxu0
    %3448 = vmatprep.mubr.f32.mxu0 %v3168
    %3449 = vmatmul.mubr.f32.gmra.mrb[0].mxu0 %v3167
    %v3450 = vpop.f32.mrb[0].mxu0
    %v3451 = vadd.f32 %v3306, %v3450
    %v3452 = vpop.f32.mrb[0].mxu0
    %3453 = vmatprep.mubr.f32.mxu0 %v3172
    %3454 = vmatmul.mubr.f32.gmra.mrb[0].mxu0 %v3171
    %v3455 = vpop.f32.mrb[0].mxu0
    %v3456 = vadd.f32 %v3311, %v3455
    %v3457 = vpop.f32.mrb[0].mxu0
    %3458 = vmatprep.mubr.f32.mxu0 %v3176
    %3459 = vmatmul.mubr.f32.gmra.mrb[0].mxu0 %v3175
    %v3460 = vpop.f32.mrb[0].mxu0
    %v3461 = vadd.f32 %v3316, %v3460
    %v3462 = vpop.f32.mrb[0].mxu0
    %3463 = vmatprep.mubr.f32.mxu0 %v3180
    %3464 = vmatmul.mubr.f32.gmra.mrb[0].mxu0 %v3179
    %v3465 = vpop.f32.mrb[0].mxu0
    %v3466 = vadd.f32 %v3321, %v3465
    %v3467 = vpop.f32.mrb[0].mxu0
    %3468 = vmatprep.mubr.f32.mxu0 %v3184
    %3469 = vmatmul.mubr.f32.gmra.mrb[0].mxu0 %v3183
    %v3470 = vpop.f32.mrb[0].mxu0
    %v3471 = vadd.f32 %v3326, %v3470
    %v3472 = vpop.f32.mrb[0].mxu0
    %3473 = vmatprep.mubr.f32.mxu0 %v3188
    %3474 = vmatmul.mubr.f32.gmra.mrb[0].mxu0 %v3187
    %v3475 = vpop.f32.mrb[0].mxu0
    %v3476 = vadd.f32 %v3331, %v3475
    %v3477 = vpop.f32.mrb[0].mxu0
    %3478 = vdwg.mxu0
    %s3479 = scalar_lea.vmem [#allocation7], 32
    %v3480 = vld [vmem:[%s3479] sm:$0xff]
    %v3482 = vsel %vm1605, %v3401, 0
    %v3485 = vsel %vm1605, %v3406, 0
    %v3488 = vsel %vm1605, %v3411, 0
    %v3491 = vsel %vm1605, %v3416, 0
    %v3494 = vsel %vm1605, %v3421, 0
    %v3497 = vsel %vm1605, %v3426, 0
    %v3500 = vsel %vm1605, %v3431, 0
    %v3503 = vsel %vm1605, %v3436, 0
    %v3506 = vsel %vm1605, %v3441, 0
    %v3509 = vsel %vm1605, %v3446, 0
    %v3512 = vsel %vm1605, %v3451, 0
    %v3515 = vsel %vm1605, %v3456, 0
    %v3518 = vsel %vm1605, %v3461, 0
    %v3521 = vsel %vm1605, %v3466, 0
    %v3524 = vsel %vm1605, %v3471, 0
    %v3527 = vsel %vm1605, %v3476, 0
    %3529 = vmatprep.subr.mxu0 0.0
    %3530 = vmatpush1.msra.mxu0 %v3480
    %3531 = vmatprep.subr.mxu0 0.0
    %3532 = vmatpush1.msra.mxu0 0.0
    %3533 = vmatprep.subr.mxu0 0.0
    %3534 = vmatpush1.msra.mxu0 0.0
    %3535 = vmatprep.subr.mxu0 0.0
    %3536 = vmatpush1.msra.mxu0 0.0
    %3537 = vmatprep.subr.mxu0 0.0
    %3538 = vmatpush1.msra.mxu0 0.0
    %3539 = vmatprep.subr.mxu0 0.0
    %3540 = vmatpush1.msra.mxu0 0.0
    %3541 = vmatprep.subr.mxu0 0.0
    %3542 = vmatpush1.msra.mxu0 0.0
    %3543 = vmatprep.subr.mxu0 0.0
    %3544 = vmatpush1.msra.mxu0 0.0
    %3545 = vmatprep.subr.mxu0 0.0
    %3546 = vmatpush1.msra.mxu0 0.0
    %3547 = vmatprep.subr.mxu0 0.0
    %3548 = vmatpush1.msra.mxu0 0.0
    %3549 = vmatprep.subr.mxu0 0.0
    %3550 = vmatpush1.msra.mxu0 0.0
    %3551 = vmatprep.subr.mxu0 0.0
    %3552 = vmatpush1.msra.mxu0 0.0
    %3553 = vmatprep.subr.mxu0 0.0
    %3554 = vmatpush1.msra.mxu0 0.0
    %3555 = vmatprep.subr.mxu0 0.0
    %3556 = vmatpush1.msra.mxu0 0.0
    %3557 = vmatprep.subr.mxu0 0.0
    %3558 = vmatpush1.msra.mxu0 0.0
    %3559 = vmatprep.subr.mxu0 0.0
    %3560 = vmatpush1.msra.mxu0 0.0
    %3561 = vmatprep.subr.mxu0 0.0
    %3562 = vmatpush1.msra.mxu0 0.0
    %3563 = vmatprep.subr.mxu0 0.0
    %3564 = vmatpush1.msra.mxu0 0.0
    %3565 = vmatprep.subr.mxu0 0.0
    %3566 = vmatpush1.msra.mxu0 0.0
    %3567 = vmatprep.subr.mxu0 0.0
    %3568 = vmatpush1.msra.mxu0 0.0
    %3569 = vmatprep.subr.mxu0 0.0
    %3570 = vmatpush1.msra.mxu0 0.0
    %3571 = vmatprep.subr.mxu0 0.0
    %3572 = vmatpush1.msra.mxu0 0.0
    %3573 = vmatprep.subr.mxu0 0.0
    %3574 = vmatpush1.msra.mxu0 0.0
    %3575 = vmatprep.subr.mxu0 0.0
    %3576 = vmatpush1.msra.mxu0 0.0
    %3577 = vmatprep.subr.mxu0 0.0
    %3578 = vmatpush1.msra.mxu0 0.0
    %3579 = vmatprep.subr.mxu0 0.0
    %3580 = vmatpush1.msra.mxu0 0.0
    %3581 = vmatprep.subr.mxu0 0.0
    %3582 = vmatpush1.msra.mxu0 0.0
    %3583 = vmatprep.subr.mxu0 0.0
    %3584 = vmatpush1.msra.mxu0 0.0
    %3585 = vmatprep.subr.mxu0 0.0
    %3586 = vmatpush1.msra.mxu0 0.0
    %3587 = vmatprep.subr.mxu0 0.0
    %3588 = vmatpush1.msra.mxu0 0.0
    %3589 = vmatprep.subr.mxu0 0.0
    %3590 = vmatpush1.msra.mxu0 0.0
    %3591 = vmatprep.subr.mxu0 0.0
    %3592 = vmatpush1.msra.mxu0 0.0
    %3593 = vmatprep.mubr.f32.mxu0 0.0
    %3594 = vmatmul.mubr.f32.gmra.mrb[0].mxu0 %v3482
    %v3595 = vpop.f32.mrb[0].mxu0
    %v3596 = vadd.f32 0.0, %v3595
    %v3597 = vpop.f32.mrb[0].mxu0
    %3598 = vmatprep.mubr.f32.mxu0 0.0
    %3599 = vmatmul.mubr.f32.gmra.mrb[0].mxu0 %v3485
    %v3600 = vpop.f32.mrb[0].mxu0
    %v3601 = vadd.f32 0.0, %v3600
    %v3602 = vpop.f32.mrb[0].mxu0
    %3603 = vmatprep.mubr.f32.mxu0 0.0
    %3604 = vmatmul.mubr.f32.gmra.mrb[0].mxu0 %v3488
    %v3605 = vpop.f32.mrb[0].mxu0
    %v3606 = vadd.f32 0.0, %v3605
    %v3607 = vpop.f32.mrb[0].mxu0
    %3608 = vmatprep.mubr.f32.mxu0 0.0
    %3609 = vmatmul.mubr.f32.gmra.mrb[0].mxu0 %v3491
    %v3610 = vpop.f32.mrb[0].mxu0
    %v3611 = vadd.f32 0.0, %v3610
    %v3612 = vpop.f32.mrb[0].mxu0
    %3613 = vmatprep.mubr.f32.mxu0 0.0
    %3614 = vmatmul.mubr.f32.gmra.mrb[0].mxu0 %v3494
    %v3615 = vpop.f32.mrb[0].mxu0
    %v3616 = vadd.f32 0.0, %v3615
    %v3617 = vpop.f32.mrb[0].mxu0
    %3618 = vmatprep.mubr.f32.mxu0 0.0
    %3619 = vmatmul.mubr.f32.gmra.mrb[0].mxu0 %v3497
    %v3620 = vpop.f32.mrb[0].mxu0
    %v3621 = vadd.f32 0.0, %v3620
    %v3622 = vpop.f32.mrb[0].mxu0
    %3623 = vmatprep.mubr.f32.mxu0 0.0
    %3624 = vmatmul.mubr.f32.gmra.mrb[0].mxu0 %v3500
    %v3625 = vpop.f32.mrb[0].mxu0
    %v3626 = vadd.f32 0.0, %v3625
    %v3627 = vpop.f32.mrb[0].mxu0
    %3628 = vmatprep.mubr.f32.mxu0 0.0
    %3629 = vmatmul.mubr.f32.gmra.mrb[0].mxu0 %v3503
    %v3630 = vpop.f32.mrb[0].mxu0
    %v3631 = vadd.f32 0.0, %v3630
    %v3632 = vpop.f32.mrb[0].mxu0
    %3633 = vmatprep.mubr.f32.mxu0 0.0
    %3634 = vmatmul.mubr.f32.gmra.mrb[0].mxu0 %v3506
    %v3635 = vpop.f32.mrb[0].mxu0
    %v3636 = vadd.f32 0.0, %v3635
    %v3637 = vpop.f32.mrb[0].mxu0
    %3638 = vmatprep.mubr.f32.mxu0 0.0
    %3639 = vmatmul.mubr.f32.gmra.mrb[0].mxu0 %v3509
    %v3640 = vpop.f32.mrb[0].mxu0
    %v3641 = vadd.f32 0.0, %v3640
    %v3642 = vpop.f32.mrb[0].mxu0
    %3643 = vmatprep.mubr.f32.mxu0 0.0
    %3644 = vmatmul.mubr.f32.gmra.mrb[0].mxu0 %v3512
    %v3645 = vpop.f32.mrb[0].mxu0
    %v3646 = vadd.f32 0.0, %v3645
    %v3647 = vpop.f32.mrb[0].mxu0
    %3648 = vmatprep.mubr.f32.mxu0 0.0
    %3649 = vmatmul.mubr.f32.gmra.mrb[0].mxu0 %v3515
    %v3650 = vpop.f32.mrb[0].mxu0
    %v3651 = vadd.f32 0.0, %v3650
    %v3652 = vpop.f32.mrb[0].mxu0
    %3653 = vmatprep.mubr.f32.mxu0 0.0
    %3654 = vmatmul.mubr.f32.gmra.mrb[0].mxu0 %v3518
    %v3655 = vpop.f32.mrb[0].mxu0
    %v3656 = vadd.f32 0.0, %v3655
    %v3657 = vpop.f32.mrb[0].mxu0
    %3658 = vmatprep.mubr.f32.mxu0 0.0
    %3659 = vmatmul.mubr.f32.gmra.mrb[0].mxu0 %v3521
    %v3660 = vpop.f32.mrb[0].mxu0
    %v3661 = vadd.f32 0.0, %v3660
    %v3662 = vpop.f32.mrb[0].mxu0
    %3663 = vmatprep.mubr.f32.mxu0 0.0
    %3664 = vmatmul.mubr.f32.gmra.mrb[0].mxu0 %v3524
    %v3665 = vpop.f32.mrb[0].mxu0
    %v3666 = vadd.f32 0.0, %v3665
    %v3667 = vpop.f32.mrb[0].mxu0
    %3668 = vmatprep.mubr.f32.mxu0 0.0
    %3669 = vmatmul.mubr.f32.gmra.mrb[0].mxu0 %v3527
    %v3670 = vpop.f32.mrb[0].mxu0
    %v3671 = vadd.f32 0.0, %v3670
    %v3672 = vpop.f32.mrb[0].mxu0
    %3673 = vdwg.mxu0
    %v3674 = vadd.f32 %v3108, %v3596
    %v3675 = vadd.f32 %v3109, %v3601
    %v3676 = vadd.f32 %v3110, %v3606
    %v3677 = vadd.f32 %v3111, %v3611
    %v3678 = vadd.f32 %v3112, %v3616
    %v3679 = vadd.f32 %v3113, %v3621
    %v3680 = vadd.f32 %v3114, %v3626
    %v3681 = vadd.f32 %v3115, %v3631
    %v3682 = vadd.f32 %v3116, %v3636
    %v3683 = vadd.f32 %v3117, %v3641
    %v3684 = vadd.f32 %v3118, %v3646
    %v3685 = vadd.f32 %v3119, %v3651
    %v3686 = vadd.f32 %v3120, %v3656
    %v3687 = vadd.f32 %v3121, %v3661
    %v3688 = vadd.f32 %v3122, %v3666
    %v3689 = vadd.f32 %v3123, %v3671
    %s3690 = scalar_lea.vmem [#allocation5], 2560
    %v3691 = vld [vmem:[%s3690] sm:$0xff]
    %v3692 = vld [vmem:[%s3690 + $0x8] sm:$0xff]
    %v3693 = vld [vmem:[%s3690 + $0x10] sm:$0xff]
    %v3694 = vld [vmem:[%s3690 + $0x18] sm:$0xff]
    %v3695 = vld [vmem:[%s3690 + $0x20] sm:$0xff]
    %v3696 = vld [vmem:[%s3690 + $0x28] sm:$0xff]
    %v3697 = vld [vmem:[%s3690 + $0x30] sm:$0xff]
    %v3698 = vld [vmem:[%s3690 + $0x38] sm:$0xff]
    %v3699 = vld [vmem:[%s3690 + $0x40] sm:$0xff]
    %v3700 = vld [vmem:[%s3690 + $0x48] sm:$0xff]
    %v3701 = vld [vmem:[%s3690 + $0x50] sm:$0xff]
    %v3702 = vld [vmem:[%s3690 + $0x58] sm:$0xff]
    %v3703 = vld [vmem:[%s3690 + $0x60] sm:$0xff]
    %v3704 = vld [vmem:[%s3690 + $0x68] sm:$0xff]
    %v3705 = vld [vmem:[%s3690 + $0x70] sm:$0xff]
    %v3706 = vld [vmem:[%s3690 + $0x78] sm:$0xff]
    %v3707 = vld [vmem:[%s3690 + $0x80] sm:$0xff]
    %v3708 = vld [vmem:[%s3690 + $0x88] sm:$0xff]
    %v3709 = vld [vmem:[%s3690 + $0x90] sm:$0xff]
    %v3710 = vld [vmem:[%s3690 + $0x98] sm:$0xff]
    %v3711 = vld [vmem:[%s3690 + $0xa0] sm:$0xff]
    %v3712 = vld [vmem:[%s3690 + $0xa8] sm:$0xff]
    %v3713 = vld [vmem:[%s3690 + $0xb0] sm:$0xff]
    %v3714 = vld [vmem:[%s3690 + $0xb8] sm:$0xff]
    %v3715 = vld [vmem:[%s3690 + $0xc0] sm:$0xff]
    %v3716 = vld [vmem:[%s3690 + $0xc8] sm:$0xff]
    %v3717 = vld [vmem:[%s3690 + $0xd0] sm:$0xff]
    %v3718 = vld [vmem:[%s3690 + $0xd8] sm:$0xff]
    %v3719 = vld [vmem:[%s3690 + $0xe0] sm:$0xff]
    %v3720 = vld [vmem:[%s3690 + $0xe8] sm:$0xff]
    %v3721 = vld [vmem:[%s3690 + $0xf0] sm:$0xff]
    %v3722 = vld [vmem:[%s3690 + $0xf8] sm:$0xff]
    %v3723 = vld [vmem:[%s3690 + $0x100] sm:$0xff]
    %v3724 = vld [vmem:[%s3690 + $0x108] sm:$0xff]
    %v3725 = vld [vmem:[%s3690 + $0x110] sm:$0xff]
    %v3726 = vld [vmem:[%s3690 + $0x118] sm:$0xff]
    %v3727 = vld [vmem:[%s3690 + $0x120] sm:$0xff]
    %v3728 = vld [vmem:[%s3690 + $0x128] sm:$0xff]
    %v3729 = vld [vmem:[%s3690 + $0x130] sm:$0xff]
    %v3730 = vld [vmem:[%s3690 + $0x138] sm:$0xff]
    %v3731 = vld [vmem:[%s3690 + $0x140] sm:$0xff]
    %v3732 = vld [vmem:[%s3690 + $0x148] sm:$0xff]
    %v3733 = vld [vmem:[%s3690 + $0x150] sm:$0xff]
    %v3734 = vld [vmem:[%s3690 + $0x158] sm:$0xff]
    %v3735 = vld [vmem:[%s3690 + $0x160] sm:$0xff]
    %v3736 = vld [vmem:[%s3690 + $0x168] sm:$0xff]
    %v3737 = vld [vmem:[%s3690 + $0x170] sm:$0xff]
    %v3738 = vld [vmem:[%s3690 + $0x178] sm:$0xff]
    %v3739 = vld [vmem:[%s3690 + $0x180] sm:$0xff]
    %v3740 = vld [vmem:[%s3690 + $0x188] sm:$0xff]
    %v3741 = vld [vmem:[%s3690 + $0x190] sm:$0xff]
    %v3742 = vld [vmem:[%s3690 + $0x198] sm:$0xff]
    %v3743 = vld [vmem:[%s3690 + $0x1a0] sm:$0xff]
    %v3744 = vld [vmem:[%s3690 + $0x1a8] sm:$0xff]
    %v3745 = vld [vmem:[%s3690 + $0x1b0] sm:$0xff]
    %v3746 = vld [vmem:[%s3690 + $0x1b8] sm:$0xff]
    %v3747 = vld [vmem:[%s3690 + $0x1c0] sm:$0xff]
    %v3748 = vld [vmem:[%s3690 + $0x1c8] sm:$0xff]
    %v3749 = vld [vmem:[%s3690 + $0x1d0] sm:$0xff]
    %v3750 = vld [vmem:[%s3690 + $0x1d8] sm:$0xff]
    %v3751 = vld [vmem:[%s3690 + $0x1e0] sm:$0xff]
    %v3752 = vld [vmem:[%s3690 + $0x1e8] sm:$0xff]
    %v3753 = vld [vmem:[%s3690 + $0x1f0] sm:$0xff]
    %v3754 = vld [vmem:[%s3690 + $0x1f8] sm:$0xff]
    %3755 = vmatprep.subr.mxu0 0.0
    %3756 = vmatpush1.msra.mxu0 %v829
    %3757 = vmatprep.subr.mxu0 0.0
    %3758 = vmatpush1.msra.mxu0 %v830
    %3759 = vmatprep.subr.mxu0 0.0
    %3760 = vmatpush1.msra.mxu0 %v831
    %3761 = vmatprep.subr.mxu0 0.0
    %3762 = vmatpush1.msra.mxu0 %v832
    %3763 = vmatprep.subr.mxu0 0.0
    %3764 = vmatpush1.msra.mxu0 %v833
    %3765 = vmatprep.subr.mxu0 0.0
    %3766 = vmatpush1.msra.mxu0 %v834
    %3767 = vmatprep.subr.mxu0 0.0
    %3768 = vmatpush1.msra.mxu0 %v835
    %3769 = vmatprep.subr.mxu0 0.0
    %3770 = vmatpush1.msra.mxu0 %v836
    %3771 = vmatprep.subr.mxu0 0.0
    %3772 = vmatpush1.msra.mxu0 %v837
    %3773 = vmatprep.subr.mxu0 0.0
    %3774 = vmatpush1.msra.mxu0 %v838
    %3775 = vmatprep.subr.mxu0 0.0
    %3776 = vmatpush1.msra.mxu0 %v839
    %3777 = vmatprep.subr.mxu0 0.0
    %3778 = vmatpush1.msra.mxu0 %v840
    %3779 = vmatprep.subr.mxu0 0.0
    %3780 = vmatpush1.msra.mxu0 %v841
    %3781 = vmatprep.subr.mxu0 0.0
    %3782 = vmatpush1.msra.mxu0 %v842
    %3783 = vmatprep.subr.mxu0 0.0
    %3784 = vmatpush1.msra.mxu0 %v843
    %3785 = vmatprep.subr.mxu0 0.0
    %3786 = vmatpush1.msra.mxu0 %v844
    %3787 = vmatprep.subr.mxu0 0.0
    %3788 = vmatpush1.msra.mxu0 %v845
    %3789 = vmatprep.subr.mxu0 0.0
    %3790 = vmatpush1.msra.mxu0 %v846
    %3791 = vmatprep.subr.mxu0 0.0
    %3792 = vmatpush1.msra.mxu0 %v847
    %3793 = vmatprep.subr.mxu0 0.0
    %3794 = vmatpush1.msra.mxu0 %v848
    %3795 = vmatprep.subr.mxu0 0.0
    %3796 = vmatpush1.msra.mxu0 %v849
    %3797 = vmatprep.subr.mxu0 0.0
    %3798 = vmatpush1.msra.mxu0 %v850
    %3799 = vmatprep.subr.mxu0 0.0
    %3800 = vmatpush1.msra.mxu0 %v851
    %3801 = vmatprep.subr.mxu0 0.0
    %3802 = vmatpush1.msra.mxu0 %v852
    %3803 = vmatprep.subr.mxu0 0.0
    %3804 = vmatpush1.msra.mxu0 %v853
    %3805 = vmatprep.subr.mxu0 0.0
    %3806 = vmatpush1.msra.mxu0 %v854
    %3807 = vmatprep.subr.mxu0 0.0
    %3808 = vmatpush1.msra.mxu0 %v855
    %3809 = vmatprep.subr.mxu0 0.0
    %3810 = vmatpush1.msra.mxu0 %v856
    %3811 = vmatprep.subr.mxu0 0.0
    %3812 = vmatpush1.msra.mxu0 %v857
    %3813 = vmatprep.subr.mxu0 0.0
    %3814 = vmatpush1.msra.mxu0 %v858
    %3815 = vmatprep.subr.mxu0 0.0
    %3816 = vmatpush1.msra.mxu0 %v859
    %3817 = vmatprep.subr.mxu0 0.0
    %3818 = vmatpush1.msra.mxu0 %v860
    %3819 = vmatprep.mubr.f32.mxu0 %v3692
    %3820 = vmatmul.mubr.f32.gmra.mrb[0].mxu0 %v3691
    %v3821 = vpop.f32.mrb[0].mxu0
    %v3822 = vadd.f32 0.0, %v3821
    %v3823 = vpop.f32.mrb[0].mxu0
    %3824 = vmatprep.mubr.f32.mxu0 %v3696
    %3825 = vmatmul.mubr.f32.gmra.mrb[0].mxu0 %v3695
    %v3826 = vpop.f32.mrb[0].mxu0
    %v3827 = vadd.f32 0.0, %v3826
    %v3828 = vpop.f32.mrb[0].mxu0
    %3829 = vmatprep.mubr.f32.mxu0 %v3700
    %3830 = vmatmul.mubr.f32.gmra.mrb[0].mxu0 %v3699
    %v3831 = vpop.f32.mrb[0].mxu0
    %v3832 = vadd.f32 0.0, %v3831
    %v3833 = vpop.f32.mrb[0].mxu0
    %3834 = vmatprep.mubr.f32.mxu0 %v3704
    %3835 = vmatmul.mubr.f32.gmra.mrb[0].mxu0 %v3703
    %v3836 = vpop.f32.mrb[0].mxu0
    %v3837 = vadd.f32 0.0, %v3836
    %v3838 = vpop.f32.mrb[0].mxu0
    %3839 = vmatprep.mubr.f32.mxu0 %v3708
    %3840 = vmatmul.mubr.f32.gmra.mrb[0].mxu0 %v3707
    %v3841 = vpop.f32.mrb[0].mxu0
    %v3842 = vadd.f32 0.0, %v3841
    %v3843 = vpop.f32.mrb[0].mxu0
    %3844 = vmatprep.mubr.f32.mxu0 %v3712
    %3845 = vmatmul.mubr.f32.gmra.mrb[0].mxu0 %v3711
    %v3846 = vpop.f32.mrb[0].mxu0
    %v3847 = vadd.f32 0.0, %v3846
    %v3848 = vpop.f32.mrb[0].mxu0
    %3849 = vmatprep.mubr.f32.mxu0 %v3716
    %3850 = vmatmul.mubr.f32.gmra.mrb[0].mxu0 %v3715
    %v3851 = vpop.f32.mrb[0].mxu0
    %v3852 = vadd.f32 0.0, %v3851
    %v3853 = vpop.f32.mrb[0].mxu0
    %3854 = vmatprep.mubr.f32.mxu0 %v3720
    %3855 = vmatmul.mubr.f32.gmra.mrb[0].mxu0 %v3719
    %v3856 = vpop.f32.mrb[0].mxu0
    %v3857 = vadd.f32 0.0, %v3856
    %v3858 = vpop.f32.mrb[0].mxu0
    %3859 = vmatprep.mubr.f32.mxu0 %v3724
    %3860 = vmatmul.mubr.f32.gmra.mrb[0].mxu0 %v3723
    %v3861 = vpop.f32.mrb[0].mxu0
    %v3862 = vadd.f32 0.0, %v3861
    %v3863 = vpop.f32.mrb[0].mxu0
    %3864 = vmatprep.mubr.f32.mxu0 %v3728
    %3865 = vmatmul.mubr.f32.gmra.mrb[0].mxu0 %v3727
    %v3866 = vpop.f32.mrb[0].mxu0
    %v3867 = vadd.f32 0.0, %v3866
    %v3868 = vpop.f32.mrb[0].mxu0
    %3869 = vmatprep.mubr.f32.mxu0 %v3732
    %3870 = vmatmul.mubr.f32.gmra.mrb[0].mxu0 %v3731
    %v3871 = vpop.f32.mrb[0].mxu0
    %v3872 = vadd.f32 0.0, %v3871
    %v3873 = vpop.f32.mrb[0].mxu0
    %3874 = vmatprep.mubr.f32.mxu0 %v3736
    %3875 = vmatmul.mubr.f32.gmra.mrb[0].mxu0 %v3735
    %v3876 = vpop.f32.mrb[0].mxu0
    %v3877 = vadd.f32 0.0, %v3876
    %v3878 = vpop.f32.mrb[0].mxu0
    %3879 = vmatprep.mubr.f32.mxu0 %v3740
    %3880 = vmatmul.mubr.f32.gmra.mrb[0].mxu0 %v3739
    %v3881 = vpop.f32.mrb[0].mxu0
    %v3882 = vadd.f32 0.0, %v3881
    %v3883 = vpop.f32.mrb[0].mxu0
    %3884 = vmatprep.mubr.f32.mxu0 %v3744
    %3885 = vmatmul.mubr.f32.gmra.mrb[0].mxu0 %v3743
    %v3886 = vpop.f32.mrb[0].mxu0
    %v3887 = vadd.f32 0.0, %v3886
    %v3888 = vpop.f32.mrb[0].mxu0
    %3889 = vmatprep.mubr.f32.mxu0 %v3748
    %3890 = vmatmul.mubr.f32.gmra.mrb[0].mxu0 %v3747
    %v3891 = vpop.f32.mrb[0].mxu0
    %v3892 = vadd.f32 0.0, %v3891
    %v3893 = vpop.f32.mrb[0].mxu0
    %3894 = vmatprep.mubr.f32.mxu0 %v3752
    %3895 = vmatmul.mubr.f32.gmra.mrb[0].mxu0 %v3751
    %v3896 = vpop.f32.mrb[0].mxu0
    %v3897 = vadd.f32 0.0, %v3896
    %v3898 = vpop.f32.mrb[0].mxu0
    %3899 = vdwg.mxu0
    %3900 = vmatprep.subr.mxu0 0.0
    %3901 = vmatpush1.msra.mxu0 %v861
    %3902 = vmatprep.subr.mxu0 0.0
    %3903 = vmatpush1.msra.mxu0 %v862
    %3904 = vmatprep.subr.mxu0 0.0
    %3905 = vmatpush1.msra.mxu0 %v863
    %3906 = vmatprep.subr.mxu0 0.0
    %3907 = vmatpush1.msra.mxu0 %v864
    %3908 = vmatprep.subr.mxu0 0.0
    %3909 = vmatpush1.msra.mxu0 %v865
    %3910 = vmatprep.subr.mxu0 0.0
    %3911 = vmatpush1.msra.mxu0 %v866
    %3912 = vmatprep.subr.mxu0 0.0
    %3913 = vmatpush1.msra.mxu0 %v867
    %3914 = vmatprep.subr.mxu0 0.0
    %3915 = vmatpush1.msra.mxu0 %v868
    %3916 = vmatprep.subr.mxu0 0.0
    %3917 = vmatpush1.msra.mxu0 %v869
    %3918 = vmatprep.subr.mxu0 0.0
    %3919 = vmatpush1.msra.mxu0 %v870
    %3920 = vmatprep.subr.mxu0 0.0
    %3921 = vmatpush1.msra.mxu0 %v871
    %3922 = vmatprep.subr.mxu0 0.0
    %3923 = vmatpush1.msra.mxu0 %v872
    %3924 = vmatprep.subr.mxu0 0.0
    %3925 = vmatpush1.msra.mxu0 %v873
    %3926 = vmatprep.subr.mxu0 0.0
    %3927 = vmatpush1.msra.mxu0 %v874
    %3928 = vmatprep.subr.mxu0 0.0
    %3929 = vmatpush1.msra.mxu0 %v875
    %3930 = vmatprep.subr.mxu0 0.0
    %3931 = vmatpush1.msra.mxu0 %v876
    %3932 = vmatprep.subr.mxu0 0.0
    %3933 = vmatpush1.msra.mxu0 %v877
    %3934 = vmatprep.subr.mxu0 0.0
    %3935 = vmatpush1.msra.mxu0 %v878
    %3936 = vmatprep.subr.mxu0 0.0
    %3937 = vmatpush1.msra.mxu0 %v879
    %3938 = vmatprep.subr.mxu0 0.0
    %3939 = vmatpush1.msra.mxu0 %v880
    %3940 = vmatprep.subr.mxu0 0.0
    %3941 = vmatpush1.msra.mxu0 %v881
    %3942 = vmatprep.subr.mxu0 0.0
    %3943 = vmatpush1.msra.mxu0 %v882
    %3944 = vmatprep.subr.mxu0 0.0
    %3945 = vmatpush1.msra.mxu0 %v883
    %3946 = vmatprep.subr.mxu0 0.0
    %3947 = vmatpush1.msra.mxu0 %v884
    %3948 = vmatprep.subr.mxu0 0.0
    %3949 = vmatpush1.msra.mxu0 %v885
    %3950 = vmatprep.subr.mxu0 0.0
    %3951 = vmatpush1.msra.mxu0 %v886
    %3952 = vmatprep.subr.mxu0 0.0
    %3953 = vmatpush1.msra.mxu0 %v887
    %3954 = vmatprep.subr.mxu0 0.0
    %3955 = vmatpush1.msra.mxu0 %v888
    %3956 = vmatprep.subr.mxu0 0.0
    %3957 = vmatpush1.msra.mxu0 %v889
    %3958 = vmatprep.subr.mxu0 0.0
    %3959 = vmatpush1.msra.mxu0 %v890
    %3960 = vmatprep.subr.mxu0 0.0
    %3961 = vmatpush1.msra.mxu0 %v891
    %3962 = vmatprep.subr.mxu0 0.0
    %3963 = vmatpush1.msra.mxu0 %v892
    %3964 = vmatprep.mubr.f32.mxu0 %v3694
    %3965 = vmatmul.mubr.f32.gmra.mrb[0].mxu0 %v3693
    %v3966 = vpop.f32.mrb[0].mxu0
    %v3967 = vadd.f32 %v3822, %v3966
    %v3968 = vpop.f32.mrb[0].mxu0
    %3969 = vmatprep.mubr.f32.mxu0 %v3698
    %3970 = vmatmul.mubr.f32.gmra.mrb[0].mxu0 %v3697
    %v3971 = vpop.f32.mrb[0].mxu0
    %v3972 = vadd.f32 %v3827, %v3971
    %v3973 = vpop.f32.mrb[0].mxu0
    %3974 = vmatprep.mubr.f32.mxu0 %v3702
    %3975 = vmatmul.mubr.f32.gmra.mrb[0].mxu0 %v3701
    %v3976 = vpop.f32.mrb[0].mxu0
    %v3977 = vadd.f32 %v3832, %v3976
    %v3978 = vpop.f32.mrb[0].mxu0
    %3979 = vmatprep.mubr.f32.mxu0 %v3706
    %3980 = vmatmul.mubr.f32.gmra.mrb[0].mxu0 %v3705
    %v3981 = vpop.f32.mrb[0].mxu0
    %v3982 = vadd.f32 %v3837, %v3981
    %v3983 = vpop.f32.mrb[0].mxu0
    %3984 = vmatprep.mubr.f32.mxu0 %v3710
    %3985 = vmatmul.mubr.f32.gmra.mrb[0].mxu0 %v3709
    %v3986 = vpop.f32.mrb[0].mxu0
    %v3987 = vadd.f32 %v3842, %v3986
    %v3988 = vpop.f32.mrb[0].mxu0
    %3989 = vmatprep.mubr.f32.mxu0 %v3714
    %3990 = vmatmul.mubr.f32.gmra.mrb[0].mxu0 %v3713
    %v3991 = vpop.f32.mrb[0].mxu0
    %v3992 = vadd.f32 %v3847, %v3991
    %v3993 = vpop.f32.mrb[0].mxu0
    %3994 = vmatprep.mubr.f32.mxu0 %v3718
    %3995 = vmatmul.mubr.f32.gmra.mrb[0].mxu0 %v3717
    %v3996 = vpop.f32.mrb[0].mxu0
    %v3997 = vadd.f32 %v3852, %v3996
    %v3998 = vpop.f32.mrb[0].mxu0
    %3999 = vmatprep.mubr.f32.mxu0 %v3722
    %4000 = vmatmul.mubr.f32.gmra.mrb[0].mxu0 %v3721
    %v4001 = vpop.f32.mrb[0].mxu0
    %v4002 = vadd.f32 %v3857, %v4001
    %v4003 = vpop.f32.mrb[0].mxu0
    %4004 = vmatprep.mubr.f32.mxu0 %v3726
    %4005 = vmatmul.mubr.f32.gmra.mrb[0].mxu0 %v3725
    %v4006 = vpop.f32.mrb[0].mxu0
    %v4007 = vadd.f32 %v3862, %v4006
    %v4008 = vpop.f32.mrb[0].mxu0
    %4009 = vmatprep.mubr.f32.mxu0 %v3730
    %4010 = vmatmul.mubr.f32.gmra.mrb[0].mxu0 %v3729
    %v4011 = vpop.f32.mrb[0].mxu0
    %v4012 = vadd.f32 %v3867, %v4011
    %v4013 = vpop.f32.mrb[0].mxu0
    %4014 = vmatprep.mubr.f32.mxu0 %v3734
    %4015 = vmatmul.mubr.f32.gmra.mrb[0].mxu0 %v3733
    %v4016 = vpop.f32.mrb[0].mxu0
    %v4017 = vadd.f32 %v3872, %v4016
    %v4018 = vpop.f32.mrb[0].mxu0
    %4019 = vmatprep.mubr.f32.mxu0 %v3738
    %4020 = vmatmul.mubr.f32.gmra.mrb[0].mxu0 %v3737
    %v4021 = vpop.f32.mrb[0].mxu0
    %v4022 = vadd.f32 %v3877, %v4021
    %v4023 = vpop.f32.mrb[0].mxu0
    %4024 = vmatprep.mubr.f32.mxu0 %v3742
    %4025 = vmatmul.mubr.f32.gmra.mrb[0].mxu0 %v3741
    %v4026 = vpop.f32.mrb[0].mxu0
    %v4027 = vadd.f32 %v3882, %v4026
    %v4028 = vpop.f32.mrb[0].mxu0
    %4029 = vmatprep.mubr.f32.mxu0 %v3746
    %4030 = vmatmul.mubr.f32.gmra.mrb[0].mxu0 %v3745
    %v4031 = vpop.f32.mrb[0].mxu0
    %v4032 = vadd.f32 %v3887, %v4031
    %v4033 = vpop.f32.mrb[0].mxu0
    %4034 = vmatprep.mubr.f32.mxu0 %v3750
    %4035 = vmatmul.mubr.f32.gmra.mrb[0].mxu0 %v3749
    %v4036 = vpop.f32.mrb[0].mxu0
    %v4037 = vadd.f32 %v3892, %v4036
    %v4038 = vpop.f32.mrb[0].mxu0
    %4039 = vmatprep.mubr.f32.mxu0 %v3754
    %4040 = vmatmul.mubr.f32.gmra.mrb[0].mxu0 %v3753
    %v4041 = vpop.f32.mrb[0].mxu0
    %v4042 = vadd.f32 %v3897, %v4041
    %v4043 = vpop.f32.mrb[0].mxu0
    %4044 = vdwg.mxu0
    %s4045 = scalar_lea.vmem [#allocation7], 40
    %v4046 = vld [vmem:[%s4045] sm:$0xff]
    %v4048 = vsel %vm1605, %v3967, 0
    %v4051 = vsel %vm1605, %v3972, 0
    %v4054 = vsel %vm1605, %v3977, 0
    %v4057 = vsel %vm1605, %v3982, 0
    %v4060 = vsel %vm1605, %v3987, 0
    %v4063 = vsel %vm1605, %v3992, 0
    %v4066 = vsel %vm1605, %v3997, 0
    %v4069 = vsel %vm1605, %v4002, 0
    %v4072 = vsel %vm1605, %v4007, 0
    %v4075 = vsel %vm1605, %v4012, 0
    %v4078 = vsel %vm1605, %v4017, 0
    %v4081 = vsel %vm1605, %v4022, 0
    %v4084 = vsel %vm1605, %v4027, 0
    %v4087 = vsel %vm1605, %v4032, 0
    %v4090 = vsel %vm1605, %v4037, 0
    %v4093 = vsel %vm1605, %v4042, 0
    %4095 = vmatprep.subr.mxu0 0.0
    %4096 = vmatpush1.msra.mxu0 %v4046
    %4097 = vmatprep.subr.mxu0 0.0
    %4098 = vmatpush1.msra.mxu0 0.0
    %4099 = vmatprep.subr.mxu0 0.0
    %4100 = vmatpush1.msra.mxu0 0.0
    %4101 = vmatprep.subr.mxu0 0.0
    %4102 = vmatpush1.msra.mxu0 0.0
    %4103 = vmatprep.subr.mxu0 0.0
    %4104 = vmatpush1.msra.mxu0 0.0
    %4105 = vmatprep.subr.mxu0 0.0
    %4106 = vmatpush1.msra.mxu0 0.0
    %4107 = vmatprep.subr.mxu0 0.0
    %4108 = vmatpush1.msra.mxu0 0.0
    %4109 = vmatprep.subr.mxu0 0.0
    %4110 = vmatpush1.msra.mxu0 0.0
    %4111 = vmatprep.subr.mxu0 0.0
    %4112 = vmatpush1.msra.mxu0 0.0
    %4113 = vmatprep.subr.mxu0 0.0
    %4114 = vmatpush1.msra.mxu0 0.0
    %4115 = vmatprep.subr.mxu0 0.0
    %4116 = vmatpush1.msra.mxu0 0.0
    %4117 = vmatprep.subr.mxu0 0.0
    %4118 = vmatpush1.msra.mxu0 0.0
    %4119 = vmatprep.subr.mxu0 0.0
    %4120 = vmatpush1.msra.mxu0 0.0
    %4121 = vmatprep.subr.mxu0 0.0
    %4122 = vmatpush1.msra.mxu0 0.0
    %4123 = vmatprep.subr.mxu0 0.0
    %4124 = vmatpush1.msra.mxu0 0.0
    %4125 = vmatprep.subr.mxu0 0.0
    %4126 = vmatpush1.msra.mxu0 0.0
    %4127 = vmatprep.subr.mxu0 0.0
    %4128 = vmatpush1.msra.mxu0 0.0
    %4129 = vmatprep.subr.mxu0 0.0
    %4130 = vmatpush1.msra.mxu0 0.0
    %4131 = vmatprep.subr.mxu0 0.0
    %4132 = vmatpush1.msra.mxu0 0.0
    %4133 = vmatprep.subr.mxu0 0.0
    %4134 = vmatpush1.msra.mxu0 0.0
    %4135 = vmatprep.subr.mxu0 0.0
    %4136 = vmatpush1.msra.mxu0 0.0
    %4137 = vmatprep.subr.mxu0 0.0
    %4138 = vmatpush1.msra.mxu0 0.0
    %4139 = vmatprep.subr.mxu0 0.0
    %4140 = vmatpush1.msra.mxu0 0.0
    %4141 = vmatprep.subr.mxu0 0.0
    %4142 = vmatpush1.msra.mxu0 0.0
    %4143 = vmatprep.subr.mxu0 0.0
    %4144 = vmatpush1.msra.mxu0 0.0
    %4145 = vmatprep.subr.mxu0 0.0
    %4146 = vmatpush1.msra.mxu0 0.0
    %4147 = vmatprep.subr.mxu0 0.0
    %4148 = vmatpush1.msra.mxu0 0.0
    %4149 = vmatprep.subr.mxu0 0.0
    %4150 = vmatpush1.msra.mxu0 0.0
    %4151 = vmatprep.subr.mxu0 0.0
    %4152 = vmatpush1.msra.mxu0 0.0
    %4153 = vmatprep.subr.mxu0 0.0
    %4154 = vmatpush1.msra.mxu0 0.0
    %4155 = vmatprep.subr.mxu0 0.0
    %4156 = vmatpush1.msra.mxu0 0.0
    %4157 = vmatprep.subr.mxu0 0.0
    %4158 = vmatpush1.msra.mxu0 0.0
    %4159 = vmatprep.mubr.f32.mxu0 0.0
    %4160 = vmatmul.mubr.f32.gmra.mrb[0].mxu0 %v4048
    %v4161 = vpop.f32.mrb[0].mxu0
    %v4162 = vadd.f32 0.0, %v4161
    %v4163 = vpop.f32.mrb[0].mxu0
    %4164 = vmatprep.mubr.f32.mxu0 0.0
    %4165 = vmatmul.mubr.f32.gmra.mrb[0].mxu0 %v4051
    %v4166 = vpop.f32.mrb[0].mxu0
    %v4167 = vadd.f32 0.0, %v4166
    %v4168 = vpop.f32.mrb[0].mxu0
    %4169 = vmatprep.mubr.f32.mxu0 0.0
    %4170 = vmatmul.mubr.f32.gmra.mrb[0].mxu0 %v4054
    %v4171 = vpop.f32.mrb[0].mxu0
    %v4172 = vadd.f32 0.0, %v4171
    %v4173 = vpop.f32.mrb[0].mxu0
    %4174 = vmatprep.mubr.f32.mxu0 0.0
    %4175 = vmatmul.mubr.f32.gmra.mrb[0].mxu0 %v4057
    %v4176 = vpop.f32.mrb[0].mxu0
    %v4177 = vadd.f32 0.0, %v4176
    %v4178 = vpop.f32.mrb[0].mxu0
    %4179 = vmatprep.mubr.f32.mxu0 0.0
    %4180 = vmatmul.mubr.f32.gmra.mrb[0].mxu0 %v4060
    %v4181 = vpop.f32.mrb[0].mxu0
    %v4182 = vadd.f32 0.0, %v4181
    %v4183 = vpop.f32.mrb[0].mxu0
    %4184 = vmatprep.mubr.f32.mxu0 0.0
    %4185 = vmatmul.mubr.f32.gmra.mrb[0].mxu0 %v4063
    %v4186 = vpop.f32.mrb[0].mxu0
    %v4187 = vadd.f32 0.0, %v4186
    %v4188 = vpop.f32.mrb[0].mxu0
    %4189 = vmatprep.mubr.f32.mxu0 0.0
    %4190 = vmatmul.mubr.f32.gmra.mrb[0].mxu0 %v4066
    %v4191 = vpop.f32.mrb[0].mxu0
    %v4192 = vadd.f32 0.0, %v4191
    %v4193 = vpop.f32.mrb[0].mxu0
    %4194 = vmatprep.mubr.f32.mxu0 0.0
    %4195 = vmatmul.mubr.f32.gmra.mrb[0].mxu0 %v4069
    %v4196 = vpop.f32.mrb[0].mxu0
    %v4197 = vadd.f32 0.0, %v4196
    %v4198 = vpop.f32.mrb[0].mxu0
    %4199 = vmatprep.mubr.f32.mxu0 0.0
    %4200 = vmatmul.mubr.f32.gmra.mrb[0].mxu0 %v4072
    %v4201 = vpop.f32.mrb[0].mxu0
    %v4202 = vadd.f32 0.0, %v4201
    %v4203 = vpop.f32.mrb[0].mxu0
    %4204 = vmatprep.mubr.f32.mxu0 0.0
    %4205 = vmatmul.mubr.f32.gmra.mrb[0].mxu0 %v4075
    %v4206 = vpop.f32.mrb[0].mxu0
    %v4207 = vadd.f32 0.0, %v4206
    %v4208 = vpop.f32.mrb[0].mxu0
    %4209 = vmatprep.mubr.f32.mxu0 0.0
    %4210 = vmatmul.mubr.f32.gmra.mrb[0].mxu0 %v4078
    %v4211 = vpop.f32.mrb[0].mxu0
    %v4212 = vadd.f32 0.0, %v4211
    %v4213 = vpop.f32.mrb[0].mxu0
    %4214 = vmatprep.mubr.f32.mxu0 0.0
    %4215 = vmatmul.mubr.f32.gmra.mrb[0].mxu0 %v4081
    %v4216 = vpop.f32.mrb[0].mxu0
    %v4217 = vadd.f32 0.0, %v4216
    %v4218 = vpop.f32.mrb[0].mxu0
    %4219 = vmatprep.mubr.f32.mxu0 0.0
    %4220 = vmatmul.mubr.f32.gmra.mrb[0].mxu0 %v4084
    %v4221 = vpop.f32.mrb[0].mxu0
    %v4222 = vadd.f32 0.0, %v4221
    %v4223 = vpop.f32.mrb[0].mxu0
    %4224 = vmatprep.mubr.f32.mxu0 0.0
    %4225 = vmatmul.mubr.f32.gmra.mrb[0].mxu0 %v4087
    %v4226 = vpop.f32.mrb[0].mxu0
    %v4227 = vadd.f32 0.0, %v4226
    %v4228 = vpop.f32.mrb[0].mxu0
    %4229 = vmatprep.mubr.f32.mxu0 0.0
    %4230 = vmatmul.mubr.f32.gmra.mrb[0].mxu0 %v4090
    %v4231 = vpop.f32.mrb[0].mxu0
    %v4232 = vadd.f32 0.0, %v4231
    %v4233 = vpop.f32.mrb[0].mxu0
    %4234 = vmatprep.mubr.f32.mxu0 0.0
    %4235 = vmatmul.mubr.f32.gmra.mrb[0].mxu0 %v4093
    %v4236 = vpop.f32.mrb[0].mxu0
    %v4237 = vadd.f32 0.0, %v4236
    %v4238 = vpop.f32.mrb[0].mxu0
    %4239 = vdwg.mxu0
    %v4240 = vadd.f32 %v3674, %v4162
    %v4241 = vadd.f32 %v3675, %v4167
    %v4242 = vadd.f32 %v3676, %v4172
    %v4243 = vadd.f32 %v3677, %v4177
    %v4244 = vadd.f32 %v3678, %v4182
    %v4245 = vadd.f32 %v3679, %v4187
    %v4246 = vadd.f32 %v3680, %v4192
    %v4247 = vadd.f32 %v3681, %v4197
    %v4248 = vadd.f32 %v3682, %v4202
    %v4249 = vadd.f32 %v3683, %v4207
    %v4250 = vadd.f32 %v3684, %v4212
    %v4251 = vadd.f32 %v3685, %v4217
    %v4252 = vadd.f32 %v3686, %v4222
    %v4253 = vadd.f32 %v3687, %v4227
    %v4254 = vadd.f32 %v3688, %v4232
    %v4255 = vadd.f32 %v3689, %v4237
    %s4256 = scalar_lea.vmem [#allocation5], 3072
    %v4257 = vld [vmem:[%s4256] sm:$0xff]
    %v4258 = vld [vmem:[%s4256 + $0x8] sm:$0xff]
    %v4259 = vld [vmem:[%s4256 + $0x10] sm:$0xff]
    %v4260 = vld [vmem:[%s4256 + $0x18] sm:$0xff]
    %v4261 = vld [vmem:[%s4256 + $0x20] sm:$0xff]
    %v4262 = vld [vmem:[%s4256 + $0x28] sm:$0xff]
    %v4263 = vld [vmem:[%s4256 + $0x30] sm:$0xff]
    %v4264 = vld [vmem:[%s4256 + $0x38] sm:$0xff]
    %v4265 = vld [vmem:[%s4256 + $0x40] sm:$0xff]
    %v4266 = vld [vmem:[%s4256 + $0x48] sm:$0xff]
    %v4267 = vld [vmem:[%s4256 + $0x50] sm:$0xff]
    %v4268 = vld [vmem:[%s4256 + $0x58] sm:$0xff]
    %v4269 = vld [vmem:[%s4256 + $0x60] sm:$0xff]
    %v4270 = vld [vmem:[%s4256 + $0x68] sm:$0xff]
    %v4271 = vld [vmem:[%s4256 + $0x70] sm:$0xff]
    %v4272 = vld [vmem:[%s4256 + $0x78] sm:$0xff]
    %v4273 = vld [vmem:[%s4256 + $0x80] sm:$0xff]
    %v4274 = vld [vmem:[%s4256 + $0x88] sm:$0xff]
    %v4275 = vld [vmem:[%s4256 + $0x90] sm:$0xff]
    %v4276 = vld [vmem:[%s4256 + $0x98] sm:$0xff]
    %v4277 = vld [vmem:[%s4256 + $0xa0] sm:$0xff]
    %v4278 = vld [vmem:[%s4256 + $0xa8] sm:$0xff]
    %v4279 = vld [vmem:[%s4256 + $0xb0] sm:$0xff]
    %v4280 = vld [vmem:[%s4256 + $0xb8] sm:$0xff]
    %v4281 = vld [vmem:[%s4256 + $0xc0] sm:$0xff]
    %v4282 = vld [vmem:[%s4256 + $0xc8] sm:$0xff]
    %v4283 = vld [vmem:[%s4256 + $0xd0] sm:$0xff]
    %v4284 = vld [vmem:[%s4256 + $0xd8] sm:$0xff]
    %v4285 = vld [vmem:[%s4256 + $0xe0] sm:$0xff]
    %v4286 = vld [vmem:[%s4256 + $0xe8] sm:$0xff]
    %v4287 = vld [vmem:[%s4256 + $0xf0] sm:$0xff]
    %v4288 = vld [vmem:[%s4256 + $0xf8] sm:$0xff]
    %v4289 = vld [vmem:[%s4256 + $0x100] sm:$0xff]
    %v4290 = vld [vmem:[%s4256 + $0x108] sm:$0xff]
    %v4291 = vld [vmem:[%s4256 + $0x110] sm:$0xff]
    %v4292 = vld [vmem:[%s4256 + $0x118] sm:$0xff]
    %v4293 = vld [vmem:[%s4256 + $0x120] sm:$0xff]
    %v4294 = vld [vmem:[%s4256 + $0x128] sm:$0xff]
    %v4295 = vld [vmem:[%s4256 + $0x130] sm:$0xff]
    %v4296 = vld [vmem:[%s4256 + $0x138] sm:$0xff]
    %v4297 = vld [vmem:[%s4256 + $0x140] sm:$0xff]
    %v4298 = vld [vmem:[%s4256 + $0x148] sm:$0xff]
    %v4299 = vld [vmem:[%s4256 + $0x150] sm:$0xff]
    %v4300 = vld [vmem:[%s4256 + $0x158] sm:$0xff]
    %v4301 = vld [vmem:[%s4256 + $0x160] sm:$0xff]
    %v4302 = vld [vmem:[%s4256 + $0x168] sm:$0xff]
    %v4303 = vld [vmem:[%s4256 + $0x170] sm:$0xff]
    %v4304 = vld [vmem:[%s4256 + $0x178] sm:$0xff]
    %v4305 = vld [vmem:[%s4256 + $0x180] sm:$0xff]
    %v4306 = vld [vmem:[%s4256 + $0x188] sm:$0xff]
    %v4307 = vld [vmem:[%s4256 + $0x190] sm:$0xff]
    %v4308 = vld [vmem:[%s4256 + $0x198] sm:$0xff]
    %v4309 = vld [vmem:[%s4256 + $0x1a0] sm:$0xff]
    %v4310 = vld [vmem:[%s4256 + $0x1a8] sm:$0xff]
    %v4311 = vld [vmem:[%s4256 + $0x1b0] sm:$0xff]
    %v4312 = vld [vmem:[%s4256 + $0x1b8] sm:$0xff]
    %v4313 = vld [vmem:[%s4256 + $0x1c0] sm:$0xff]
    %v4314 = vld [vmem:[%s4256 + $0x1c8] sm:$0xff]
    %v4315 = vld [vmem:[%s4256 + $0x1d0] sm:$0xff]
    %v4316 = vld [vmem:[%s4256 + $0x1d8] sm:$0xff]
    %v4317 = vld [vmem:[%s4256 + $0x1e0] sm:$0xff]
    %v4318 = vld [vmem:[%s4256 + $0x1e8] sm:$0xff]
    %v4319 = vld [vmem:[%s4256 + $0x1f0] sm:$0xff]
    %v4320 = vld [vmem:[%s4256 + $0x1f8] sm:$0xff]
    %4321 = vmatprep.subr.mxu0 0.0
    %4322 = vmatpush1.msra.mxu0 %v829
    %4323 = vmatprep.subr.mxu0 0.0
    %4324 = vmatpush1.msra.mxu0 %v830
    %4325 = vmatprep.subr.mxu0 0.0
    %4326 = vmatpush1.msra.mxu0 %v831
    %4327 = vmatprep.subr.mxu0 0.0
    %4328 = vmatpush1.msra.mxu0 %v832
    %4329 = vmatprep.subr.mxu0 0.0
    %4330 = vmatpush1.msra.mxu0 %v833
    %4331 = vmatprep.subr.mxu0 0.0
    %4332 = vmatpush1.msra.mxu0 %v834
    %4333 = vmatprep.subr.mxu0 0.0
    %4334 = vmatpush1.msra.mxu0 %v835
    %4335 = vmatprep.subr.mxu0 0.0
    %4336 = vmatpush1.msra.mxu0 %v836
    %4337 = vmatprep.subr.mxu0 0.0
    %4338 = vmatpush1.msra.mxu0 %v837
    %4339 = vmatprep.subr.mxu0 0.0
    %4340 = vmatpush1.msra.mxu0 %v838
    %4341 = vmatprep.subr.mxu0 0.0
    %4342 = vmatpush1.msra.mxu0 %v839
    %4343 = vmatprep.subr.mxu0 0.0
    %4344 = vmatpush1.msra.mxu0 %v840
    %4345 = vmatprep.subr.mxu0 0.0
    %4346 = vmatpush1.msra.mxu0 %v841
    %4347 = vmatprep.subr.mxu0 0.0
    %4348 = vmatpush1.msra.mxu0 %v842
    %4349 = vmatprep.subr.mxu0 0.0
    %4350 = vmatpush1.msra.mxu0 %v843
    %4351 = vmatprep.subr.mxu0 0.0
    %4352 = vmatpush1.msra.mxu0 %v844
    %4353 = vmatprep.subr.mxu0 0.0
    %4354 = vmatpush1.msra.mxu0 %v845
    %4355 = vmatprep.subr.mxu0 0.0
    %4356 = vmatpush1.msra.mxu0 %v846
    %4357 = vmatprep.subr.mxu0 0.0
    %4358 = vmatpush1.msra.mxu0 %v847
    %4359 = vmatprep.subr.mxu0 0.0
    %4360 = vmatpush1.msra.mxu0 %v848
    %4361 = vmatprep.subr.mxu0 0.0
    %4362 = vmatpush1.msra.mxu0 %v849
    %4363 = vmatprep.subr.mxu0 0.0
    %4364 = vmatpush1.msra.mxu0 %v850
    %4365 = vmatprep.subr.mxu0 0.0
    %4366 = vmatpush1.msra.mxu0 %v851
    %4367 = vmatprep.subr.mxu0 0.0
    %4368 = vmatpush1.msra.mxu0 %v852
    %4369 = vmatprep.subr.mxu0 0.0
    %4370 = vmatpush1.msra.mxu0 %v853
    %4371 = vmatprep.subr.mxu0 0.0
    %4372 = vmatpush1.msra.mxu0 %v854
    %4373 = vmatprep.subr.mxu0 0.0
    %4374 = vmatpush1.msra.mxu0 %v855
    %4375 = vmatprep.subr.mxu0 0.0
    %4376 = vmatpush1.msra.mxu0 %v856
    %4377 = vmatprep.subr.mxu0 0.0
    %4378 = vmatpush1.msra.mxu0 %v857
    %4379 = vmatprep.subr.mxu0 0.0
    %4380 = vmatpush1.msra.mxu0 %v858
    %4381 = vmatprep.subr.mxu0 0.0
    %4382 = vmatpush1.msra.mxu0 %v859
    %4383 = vmatprep.subr.mxu0 0.0
    %4384 = vmatpush1.msra.mxu0 %v860
    %4385 = vmatprep.mubr.f32.mxu0 %v4258
    %4386 = vmatmul.mubr.f32.gmra.mrb[0].mxu0 %v4257
    %v4387 = vpop.f32.mrb[0].mxu0
    %v4388 = vadd.f32 0.0, %v4387
    %v4389 = vpop.f32.mrb[0].mxu0
    %4390 = vmatprep.mubr.f32.mxu0 %v4262
    %4391 = vmatmul.mubr.f32.gmra.mrb[0].mxu0 %v4261
    %v4392 = vpop.f32.mrb[0].mxu0
    %v4393 = vadd.f32 0.0, %v4392
    %v4394 = vpop.f32.mrb[0].mxu0
    %4395 = vmatprep.mubr.f32.mxu0 %v4266
    %4396 = vmatmul.mubr.f32.gmra.mrb[0].mxu0 %v4265
    %v4397 = vpop.f32.mrb[0].mxu0
    %v4398 = vadd.f32 0.0, %v4397
    %v4399 = vpop.f32.mrb[0].mxu0
    %4400 = vmatprep.mubr.f32.mxu0 %v4270
    %4401 = vmatmul.mubr.f32.gmra.mrb[0].mxu0 %v4269
    %v4402 = vpop.f32.mrb[0].mxu0
    %v4403 = vadd.f32 0.0, %v4402
    %v4404 = vpop.f32.mrb[0].mxu0
    %4405 = vmatprep.mubr.f32.mxu0 %v4274
    %4406 = vmatmul.mubr.f32.gmra.mrb[0].mxu0 %v4273
    %v4407 = vpop.f32.mrb[0].mxu0
    %v4408 = vadd.f32 0.0, %v4407
    %v4409 = vpop.f32.mrb[0].mxu0
    %4410 = vmatprep.mubr.f32.mxu0 %v4278
    %4411 = vmatmul.mubr.f32.gmra.mrb[0].mxu0 %v4277
    %v4412 = vpop.f32.mrb[0].mxu0
    %v4413 = vadd.f32 0.0, %v4412
    %v4414 = vpop.f32.mrb[0].mxu0
    %4415 = vmatprep.mubr.f32.mxu0 %v4282
    %4416 = vmatmul.mubr.f32.gmra.mrb[0].mxu0 %v4281
    %v4417 = vpop.f32.mrb[0].mxu0
    %v4418 = vadd.f32 0.0, %v4417
    %v4419 = vpop.f32.mrb[0].mxu0
    %4420 = vmatprep.mubr.f32.mxu0 %v4286
    %4421 = vmatmul.mubr.f32.gmra.mrb[0].mxu0 %v4285
    %v4422 = vpop.f32.mrb[0].mxu0
    %v4423 = vadd.f32 0.0, %v4422
    %v4424 = vpop.f32.mrb[0].mxu0
    %4425 = vmatprep.mubr.f32.mxu0 %v4290
    %4426 = vmatmul.mubr.f32.gmra.mrb[0].mxu0 %v4289
    %v4427 = vpop.f32.mrb[0].mxu0
    %v4428 = vadd.f32 0.0, %v4427
    %v4429 = vpop.f32.mrb[0].mxu0
    %4430 = vmatprep.mubr.f32.mxu0 %v4294
    %4431 = vmatmul.mubr.f32.gmra.mrb[0].mxu0 %v4293
    %v4432 = vpop.f32.mrb[0].mxu0
    %v4433 = vadd.f32 0.0, %v4432
    %v4434 = vpop.f32.mrb[0].mxu0
    %4435 = vmatprep.mubr.f32.mxu0 %v4298
    %4436 = vmatmul.mubr.f32.gmra.mrb[0].mxu0 %v4297
    %v4437 = vpop.f32.mrb[0].mxu0
    %v4438 = vadd.f32 0.0, %v4437
    %v4439 = vpop.f32.mrb[0].mxu0
    %4440 = vmatprep.mubr.f32.mxu0 %v4302
    %4441 = vmatmul.mubr.f32.gmra.mrb[0].mxu0 %v4301
    %v4442 = vpop.f32.mrb[0].mxu0
    %v4443 = vadd.f32 0.0, %v4442
    %v4444 = vpop.f32.mrb[0].mxu0
    %4445 = vmatprep.mubr.f32.mxu0 %v4306
    %4446 = vmatmul.mubr.f32.gmra.mrb[0].mxu0 %v4305
    %v4447 = vpop.f32.mrb[0].mxu0
    %v4448 = vadd.f32 0.0, %v4447
    %v4449 = vpop.f32.mrb[0].mxu0
    %4450 = vmatprep.mubr.f32.mxu0 %v4310
    %4451 = vmatmul.mubr.f32.gmra.mrb[0].mxu0 %v4309
    %v4452 = vpop.f32.mrb[0].mxu0
    %v4453 = vadd.f32 0.0, %v4452
    %v4454 = vpop.f32.mrb[0].mxu0
    %4455 = vmatprep.mubr.f32.mxu0 %v4314
    %4456 = vmatmul.mubr.f32.gmra.mrb[0].mxu0 %v4313
    %v4457 = vpop.f32.mrb[0].mxu0
    %v4458 = vadd.f32 0.0, %v4457
    %v4459 = vpop.f32.mrb[0].mxu0
    %4460 = vmatprep.mubr.f32.mxu0 %v4318
    %4461 = vmatmul.mubr.f32.gmra.mrb[0].mxu0 %v4317
    %v4462 = vpop.f32.mrb[0].mxu0
    %v4463 = vadd.f32 0.0, %v4462
    %v4464 = vpop.f32.mrb[0].mxu0
    %4465 = vdwg.mxu0
    %4466 = vmatprep.subr.mxu0 0.0
    %4467 = vmatpush1.msra.mxu0 %v861
    %4468 = vmatprep.subr.mxu0 0.0
    %4469 = vmatpush1.msra.mxu0 %v862
    %4470 = vmatprep.subr.mxu0 0.0
    %4471 = vmatpush1.msra.mxu0 %v863
    %4472 = vmatprep.subr.mxu0 0.0
    %4473 = vmatpush1.msra.mxu0 %v864
    %4474 = vmatprep.subr.mxu0 0.0
    %4475 = vmatpush1.msra.mxu0 %v865
    %4476 = vmatprep.subr.mxu0 0.0
    %4477 = vmatpush1.msra.mxu0 %v866
    %4478 = vmatprep.subr.mxu0 0.0
    %4479 = vmatpush1.msra.mxu0 %v867
    %4480 = vmatprep.subr.mxu0 0.0
    %4481 = vmatpush1.msra.mxu0 %v868
    %4482 = vmatprep.subr.mxu0 0.0
    %4483 = vmatpush1.msra.mxu0 %v869
    %4484 = vmatprep.subr.mxu0 0.0
    %4485 = vmatpush1.msra.mxu0 %v870
    %4486 = vmatprep.subr.mxu0 0.0
    %4487 = vmatpush1.msra.mxu0 %v871
    %4488 = vmatprep.subr.mxu0 0.0
    %4489 = vmatpush1.msra.mxu0 %v872
    %4490 = vmatprep.subr.mxu0 0.0
    %4491 = vmatpush1.msra.mxu0 %v873
    %4492 = vmatprep.subr.mxu0 0.0
    %4493 = vmatpush1.msra.mxu0 %v874
    %4494 = vmatprep.subr.mxu0 0.0
    %4495 = vmatpush1.msra.mxu0 %v875
    %4496 = vmatprep.subr.mxu0 0.0
    %4497 = vmatpush1.msra.mxu0 %v876
    %4498 = vmatprep.subr.mxu0 0.0
    %4499 = vmatpush1.msra.mxu0 %v877
    %4500 = vmatprep.subr.mxu0 0.0
    %4501 = vmatpush1.msra.mxu0 %v878
    %4502 = vmatprep.subr.mxu0 0.0
    %4503 = vmatpush1.msra.mxu0 %v879
    %4504 = vmatprep.subr.mxu0 0.0
    %4505 = vmatpush1.msra.mxu0 %v880
    %4506 = vmatprep.subr.mxu0 0.0
    %4507 = vmatpush1.msra.mxu0 %v881
    %4508 = vmatprep.subr.mxu0 0.0
    %4509 = vmatpush1.msra.mxu0 %v882
    %4510 = vmatprep.subr.mxu0 0.0
    %4511 = vmatpush1.msra.mxu0 %v883
    %4512 = vmatprep.subr.mxu0 0.0
    %4513 = vmatpush1.msra.mxu0 %v884
    %4514 = vmatprep.subr.mxu0 0.0
    %4515 = vmatpush1.msra.mxu0 %v885
    %4516 = vmatprep.subr.mxu0 0.0
    %4517 = vmatpush1.msra.mxu0 %v886
    %4518 = vmatprep.subr.mxu0 0.0
    %4519 = vmatpush1.msra.mxu0 %v887
    %4520 = vmatprep.subr.mxu0 0.0
    %4521 = vmatpush1.msra.mxu0 %v888
    %4522 = vmatprep.subr.mxu0 0.0
    %4523 = vmatpush1.msra.mxu0 %v889
    %4524 = vmatprep.subr.mxu0 0.0
    %4525 = vmatpush1.msra.mxu0 %v890
    %4526 = vmatprep.subr.mxu0 0.0
    %4527 = vmatpush1.msra.mxu0 %v891
    %4528 = vmatprep.subr.mxu0 0.0
    %4529 = vmatpush1.msra.mxu0 %v892
    %4530 = vmatprep.mubr.f32.mxu0 %v4260
    %4531 = vmatmul.mubr.f32.gmra.mrb[0].mxu0 %v4259
    %v4532 = vpop.f32.mrb[0].mxu0
    %v4533 = vadd.f32 %v4388, %v4532
    %v4534 = vpop.f32.mrb[0].mxu0
    %4535 = vmatprep.mubr.f32.mxu0 %v4264
    %4536 = vmatmul.mubr.f32.gmra.mrb[0].mxu0 %v4263
    %v4537 = vpop.f32.mrb[0].mxu0
    %v4538 = vadd.f32 %v4393, %v4537
    %v4539 = vpop.f32.mrb[0].mxu0
    %4540 = vmatprep.mubr.f32.mxu0 %v4268
    %4541 = vmatmul.mubr.f32.gmra.mrb[0].mxu0 %v4267
    %v4542 = vpop.f32.mrb[0].mxu0
    %v4543 = vadd.f32 %v4398, %v4542
    %v4544 = vpop.f32.mrb[0].mxu0
    %4545 = vmatprep.mubr.f32.mxu0 %v4272
    %4546 = vmatmul.mubr.f32.gmra.mrb[0].mxu0 %v4271
    %v4547 = vpop.f32.mrb[0].mxu0
    %v4548 = vadd.f32 %v4403, %v4547
    %v4549 = vpop.f32.mrb[0].mxu0
    %4550 = vmatprep.mubr.f32.mxu0 %v4276
    %4551 = vmatmul.mubr.f32.gmra.mrb[0].mxu0 %v4275
    %v4552 = vpop.f32.mrb[0].mxu0
    %v4553 = vadd.f32 %v4408, %v4552
    %v4554 = vpop.f32.mrb[0].mxu0
    %4555 = vmatprep.mubr.f32.mxu0 %v4280
    %4556 = vmatmul.mubr.f32.gmra.mrb[0].mxu0 %v4279
    %v4557 = vpop.f32.mrb[0].mxu0
    %v4558 = vadd.f32 %v4413, %v4557
    %v4559 = vpop.f32.mrb[0].mxu0
    %4560 = vmatprep.mubr.f32.mxu0 %v4284
    %4561 = vmatmul.mubr.f32.gmra.mrb[0].mxu0 %v4283
    %v4562 = vpop.f32.mrb[0].mxu0
    %v4563 = vadd.f32 %v4418, %v4562
    %v4564 = vpop.f32.mrb[0].mxu0
    %4565 = vmatprep.mubr.f32.mxu0 %v4288
    %4566 = vmatmul.mubr.f32.gmra.mrb[0].mxu0 %v4287
    %v4567 = vpop.f32.mrb[0].mxu0
    %v4568 = vadd.f32 %v4423, %v4567
    %v4569 = vpop.f32.mrb[0].mxu0
    %4570 = vmatprep.mubr.f32.mxu0 %v4292
    %4571 = vmatmul.mubr.f32.gmra.mrb[0].mxu0 %v4291
    %v4572 = vpop.f32.mrb[0].mxu0
    %v4573 = vadd.f32 %v4428, %v4572
    %v4574 = vpop.f32.mrb[0].mxu0
    %4575 = vmatprep.mubr.f32.mxu0 %v4296
    %4576 = vmatmul.mubr.f32.gmra.mrb[0].mxu0 %v4295
    %v4577 = vpop.f32.mrb[0].mxu0
    %v4578 = vadd.f32 %v4433, %v4577
    %v4579 = vpop.f32.mrb[0].mxu0
    %4580 = vmatprep.mubr.f32.mxu0 %v4300
    %4581 = vmatmul.mubr.f32.gmra.mrb[0].mxu0 %v4299
    %v4582 = vpop.f32.mrb[0].mxu0
    %v4583 = vadd.f32 %v4438, %v4582
    %v4584 = vpop.f32.mrb[0].mxu0
    %4585 = vmatprep.mubr.f32.mxu0 %v4304
    %4586 = vmatmul.mubr.f32.gmra.mrb[0].mxu0 %v4303
    %v4587 = vpop.f32.mrb[0].mxu0
    %v4588 = vadd.f32 %v4443, %v4587
    %v4589 = vpop.f32.mrb[0].mxu0
    %4590 = vmatprep.mubr.f32.mxu0 %v4308
    %4591 = vmatmul.mubr.f32.gmra.mrb[0].mxu0 %v4307
    %v4592 = vpop.f32.mrb[0].mxu0
    %v4593 = vadd.f32 %v4448, %v4592
    %v4594 = vpop.f32.mrb[0].mxu0
    %4595 = vmatprep.mubr.f32.mxu0 %v4312
    %4596 = vmatmul.mubr.f32.gmra.mrb[0].mxu0 %v4311
    %v4597 = vpop.f32.mrb[0].mxu0
    %v4598 = vadd.f32 %v4453, %v4597
    %v4599 = vpop.f32.mrb[0].mxu0
    %4600 = vmatprep.mubr.f32.mxu0 %v4316
    %4601 = vmatmul.mubr.f32.gmra.mrb[0].mxu0 %v4315
    %v4602 = vpop.f32.mrb[0].mxu0
    %v4603 = vadd.f32 %v4458, %v4602
    %v4604 = vpop.f32.mrb[0].mxu0
    %4605 = vmatprep.mubr.f32.mxu0 %v4320
    %4606 = vmatmul.mubr.f32.gmra.mrb[0].mxu0 %v4319
    %v4607 = vpop.f32.mrb[0].mxu0
    %v4608 = vadd.f32 %v4463, %v4607
    %v4609 = vpop.f32.mrb[0].mxu0
    %4610 = vdwg.mxu0
    %s4611 = scalar_lea.vmem [#allocation7], 48
    %v4612 = vld [vmem:[%s4611] sm:$0xff]
    %v4614 = vsel %vm1605, %v4533, 0
    %v4617 = vsel %vm1605, %v4538, 0
    %v4620 = vsel %vm1605, %v4543, 0
    %v4623 = vsel %vm1605, %v4548, 0
    %v4626 = vsel %vm1605, %v4553, 0
    %v4629 = vsel %vm1605, %v4558, 0
    %v4632 = vsel %vm1605, %v4563, 0
    %v4635 = vsel %vm1605, %v4568, 0
    %v4638 = vsel %vm1605, %v4573, 0
    %v4641 = vsel %vm1605, %v4578, 0
    %v4644 = vsel %vm1605, %v4583, 0
    %v4647 = vsel %vm1605, %v4588, 0
    %v4650 = vsel %vm1605, %v4593, 0
    %v4653 = vsel %vm1605, %v4598, 0
    %v4656 = vsel %vm1605, %v4603, 0
    %v4659 = vsel %vm1605, %v4608, 0
    %4661 = vmatprep.subr.mxu0 0.0
    %4662 = vmatpush1.msra.mxu0 %v4612
    %4663 = vmatprep.subr.mxu0 0.0
    %4664 = vmatpush1.msra.mxu0 0.0
    %4665 = vmatprep.subr.mxu0 0.0
    %4666 = vmatpush1.msra.mxu0 0.0
    %4667 = vmatprep.subr.mxu0 0.0
    %4668 = vmatpush1.msra.mxu0 0.0
    %4669 = vmatprep.subr.mxu0 0.0
    %4670 = vmatpush1.msra.mxu0 0.0
    %4671 = vmatprep.subr.mxu0 0.0
    %4672 = vmatpush1.msra.mxu0 0.0
    %4673 = vmatprep.subr.mxu0 0.0
    %4674 = vmatpush1.msra.mxu0 0.0
    %4675 = vmatprep.subr.mxu0 0.0
    %4676 = vmatpush1.msra.mxu0 0.0
    %4677 = vmatprep.subr.mxu0 0.0
    %4678 = vmatpush1.msra.mxu0 0.0
    %4679 = vmatprep.subr.mxu0 0.0
    %4680 = vmatpush1.msra.mxu0 0.0
    %4681 = vmatprep.subr.mxu0 0.0
    %4682 = vmatpush1.msra.mxu0 0.0
    %4683 = vmatprep.subr.mxu0 0.0
    %4684 = vmatpush1.msra.mxu0 0.0
    %4685 = vmatprep.subr.mxu0 0.0
    %4686 = vmatpush1.msra.mxu0 0.0
    %4687 = vmatprep.subr.mxu0 0.0
    %4688 = vmatpush1.msra.mxu0 0.0
    %4689 = vmatprep.subr.mxu0 0.0
    %4690 = vmatpush1.msra.mxu0 0.0
    %4691 = vmatprep.subr.mxu0 0.0
    %4692 = vmatpush1.msra.mxu0 0.0
    %4693 = vmatprep.subr.mxu0 0.0
    %4694 = vmatpush1.msra.mxu0 0.0
    %4695 = vmatprep.subr.mxu0 0.0
    %4696 = vmatpush1.msra.mxu0 0.0
    %4697 = vmatprep.subr.mxu0 0.0
    %4698 = vmatpush1.msra.mxu0 0.0
    %4699 = vmatprep.subr.mxu0 0.0
    %4700 = vmatpush1.msra.mxu0 0.0
    %4701 = vmatprep.subr.mxu0 0.0
    %4702 = vmatpush1.msra.mxu0 0.0
    %4703 = vmatprep.subr.mxu0 0.0
    %4704 = vmatpush1.msra.mxu0 0.0
    %4705 = vmatprep.subr.mxu0 0.0
    %4706 = vmatpush1.msra.mxu0 0.0
    %4707 = vmatprep.subr.mxu0 0.0
    %4708 = vmatpush1.msra.mxu0 0.0
    %4709 = vmatprep.subr.mxu0 0.0
    %4710 = vmatpush1.msra.mxu0 0.0
    %4711 = vmatprep.subr.mxu0 0.0
    %4712 = vmatpush1.msra.mxu0 0.0
    %4713 = vmatprep.subr.mxu0 0.0
    %4714 = vmatpush1.msra.mxu0 0.0
    %4715 = vmatprep.subr.mxu0 0.0
    %4716 = vmatpush1.msra.mxu0 0.0
    %4717 = vmatprep.subr.mxu0 0.0
    %4718 = vmatpush1.msra.mxu0 0.0
    %4719 = vmatprep.subr.mxu0 0.0
    %4720 = vmatpush1.msra.mxu0 0.0
    %4721 = vmatprep.subr.mxu0 0.0
    %4722 = vmatpush1.msra.mxu0 0.0
    %4723 = vmatprep.subr.mxu0 0.0
    %4724 = vmatpush1.msra.mxu0 0.0
    %4725 = vmatprep.mubr.f32.mxu0 0.0
    %4726 = vmatmul.mubr.f32.gmra.mrb[0].mxu0 %v4614
    %v4727 = vpop.f32.mrb[0].mxu0
    %v4728 = vadd.f32 0.0, %v4727
    %v4729 = vpop.f32.mrb[0].mxu0
    %4730 = vmatprep.mubr.f32.mxu0 0.0
    %4731 = vmatmul.mubr.f32.gmra.mrb[0].mxu0 %v4617
    %v4732 = vpop.f32.mrb[0].mxu0
    %v4733 = vadd.f32 0.0, %v4732
    %v4734 = vpop.f32.mrb[0].mxu0
    %4735 = vmatprep.mubr.f32.mxu0 0.0
    %4736 = vmatmul.mubr.f32.gmra.mrb[0].mxu0 %v4620
    %v4737 = vpop.f32.mrb[0].mxu0
    %v4738 = vadd.f32 0.0, %v4737
    %v4739 = vpop.f32.mrb[0].mxu0
    %4740 = vmatprep.mubr.f32.mxu0 0.0
    %4741 = vmatmul.mubr.f32.gmra.mrb[0].mxu0 %v4623
    %v4742 = vpop.f32.mrb[0].mxu0
    %v4743 = vadd.f32 0.0, %v4742
    %v4744 = vpop.f32.mrb[0].mxu0
    %4745 = vmatprep.mubr.f32.mxu0 0.0
    %4746 = vmatmul.mubr.f32.gmra.mrb[0].mxu0 %v4626
    %v4747 = vpop.f32.mrb[0].mxu0
    %v4748 = vadd.f32 0.0, %v4747
    %v4749 = vpop.f32.mrb[0].mxu0
    %4750 = vmatprep.mubr.f32.mxu0 0.0
    %4751 = vmatmul.mubr.f32.gmra.mrb[0].mxu0 %v4629
    %v4752 = vpop.f32.mrb[0].mxu0
    %v4753 = vadd.f32 0.0, %v4752
    %v4754 = vpop.f32.mrb[0].mxu0
    %4755 = vmatprep.mubr.f32.mxu0 0.0
    %4756 = vmatmul.mubr.f32.gmra.mrb[0].mxu0 %v4632
    %v4757 = vpop.f32.mrb[0].mxu0
    %v4758 = vadd.f32 0.0, %v4757
    %v4759 = vpop.f32.mrb[0].mxu0
    %4760 = vmatprep.mubr.f32.mxu0 0.0
    %4761 = vmatmul.mubr.f32.gmra.mrb[0].mxu0 %v4635
    %v4762 = vpop.f32.mrb[0].mxu0
    %v4763 = vadd.f32 0.0, %v4762
    %v4764 = vpop.f32.mrb[0].mxu0
    %4765 = vmatprep.mubr.f32.mxu0 0.0
    %4766 = vmatmul.mubr.f32.gmra.mrb[0].mxu0 %v4638
    %v4767 = vpop.f32.mrb[0].mxu0
    %v4768 = vadd.f32 0.0, %v4767
    %v4769 = vpop.f32.mrb[0].mxu0
    %4770 = vmatprep.mubr.f32.mxu0 0.0
    %4771 = vmatmul.mubr.f32.gmra.mrb[0].mxu0 %v4641
    %v4772 = vpop.f32.mrb[0].mxu0
    %v4773 = vadd.f32 0.0, %v4772
    %v4774 = vpop.f32.mrb[0].mxu0
    %4775 = vmatprep.mubr.f32.mxu0 0.0
    %4776 = vmatmul.mubr.f32.gmra.mrb[0].mxu0 %v4644
    %v4777 = vpop.f32.mrb[0].mxu0
    %v4778 = vadd.f32 0.0, %v4777
    %v4779 = vpop.f32.mrb[0].mxu0
    %4780 = vmatprep.mubr.f32.mxu0 0.0
    %4781 = vmatmul.mubr.f32.gmra.mrb[0].mxu0 %v4647
    %v4782 = vpop.f32.mrb[0].mxu0
    %v4783 = vadd.f32 0.0, %v4782
    %v4784 = vpop.f32.mrb[0].mxu0
    %4785 = vmatprep.mubr.f32.mxu0 0.0
    %4786 = vmatmul.mubr.f32.gmra.mrb[0].mxu0 %v4650
    %v4787 = vpop.f32.mrb[0].mxu0
    %v4788 = vadd.f32 0.0, %v4787
    %v4789 = vpop.f32.mrb[0].mxu0
    %4790 = vmatprep.mubr.f32.mxu0 0.0
    %4791 = vmatmul.mubr.f32.gmra.mrb[0].mxu0 %v4653
    %v4792 = vpop.f32.mrb[0].mxu0
    %v4793 = vadd.f32 0.0, %v4792
    %v4794 = vpop.f32.mrb[0].mxu0
    %4795 = vmatprep.mubr.f32.mxu0 0.0
    %4796 = vmatmul.mubr.f32.gmra.mrb[0].mxu0 %v4656
    %v4797 = vpop.f32.mrb[0].mxu0
    %v4798 = vadd.f32 0.0, %v4797
    %v4799 = vpop.f32.mrb[0].mxu0
    %4800 = vmatprep.mubr.f32.mxu0 0.0
    %4801 = vmatmul.mubr.f32.gmra.mrb[0].mxu0 %v4659
    %v4802 = vpop.f32.mrb[0].mxu0
    %v4803 = vadd.f32 0.0, %v4802
    %v4804 = vpop.f32.mrb[0].mxu0
    %4805 = vdwg.mxu0
    %v4806 = vadd.f32 %v4240, %v4728
    %v4807 = vadd.f32 %v4241, %v4733
    %v4808 = vadd.f32 %v4242, %v4738
    %v4809 = vadd.f32 %v4243, %v4743
    %v4810 = vadd.f32 %v4244, %v4748
    %v4811 = vadd.f32 %v4245, %v4753
    %v4812 = vadd.f32 %v4246, %v4758
    %v4813 = vadd.f32 %v4247, %v4763
    %v4814 = vadd.f32 %v4248, %v4768
    %v4815 = vadd.f32 %v4249, %v4773
    %v4816 = vadd.f32 %v4250, %v4778
    %v4817 = vadd.f32 %v4251, %v4783
    %v4818 = vadd.f32 %v4252, %v4788
    %v4819 = vadd.f32 %v4253, %v4793
    %v4820 = vadd.f32 %v4254, %v4798
    %v4821 = vadd.f32 %v4255, %v4803
    %s4822 = scalar_lea.vmem [#allocation5], 3584
    %v4823 = vld [vmem:[%s4822] sm:$0xff]
    %v4824 = vld [vmem:[%s4822 + $0x8] sm:$0xff]
    %v4825 = vld [vmem:[%s4822 + $0x10] sm:$0xff]
    %v4826 = vld [vmem:[%s4822 + $0x18] sm:$0xff]
    %v4827 = vld [vmem:[%s4822 + $0x20] sm:$0xff]
    %v4828 = vld [vmem:[%s4822 + $0x28] sm:$0xff]
    %v4829 = vld [vmem:[%s4822 + $0x30] sm:$0xff]
    %v4830 = vld [vmem:[%s4822 + $0x38] sm:$0xff]
    %v4831 = vld [vmem:[%s4822 + $0x40] sm:$0xff]
    %v4832 = vld [vmem:[%s4822 + $0x48] sm:$0xff]
    %v4833 = vld [vmem:[%s4822 + $0x50] sm:$0xff]
    %v4834 = vld [vmem:[%s4822 + $0x58] sm:$0xff]
    %v4835 = vld [vmem:[%s4822 + $0x60] sm:$0xff]
    %v4836 = vld [vmem:[%s4822 + $0x68] sm:$0xff]
    %v4837 = vld [vmem:[%s4822 + $0x70] sm:$0xff]
    %v4838 = vld [vmem:[%s4822 + $0x78] sm:$0xff]
    %v4839 = vld [vmem:[%s4822 + $0x80] sm:$0xff]
    %v4840 = vld [vmem:[%s4822 + $0x88] sm:$0xff]
    %v4841 = vld [vmem:[%s4822 + $0x90] sm:$0xff]
    %v4842 = vld [vmem:[%s4822 + $0x98] sm:$0xff]
    %v4843 = vld [vmem:[%s4822 + $0xa0] sm:$0xff]
    %v4844 = vld [vmem:[%s4822 + $0xa8] sm:$0xff]
    %v4845 = vld [vmem:[%s4822 + $0xb0] sm:$0xff]
    %v4846 = vld [vmem:[%s4822 + $0xb8] sm:$0xff]
    %v4847 = vld [vmem:[%s4822 + $0xc0] sm:$0xff]
    %v4848 = vld [vmem:[%s4822 + $0xc8] sm:$0xff]
    %v4849 = vld [vmem:[%s4822 + $0xd0] sm:$0xff]
    %v4850 = vld [vmem:[%s4822 + $0xd8] sm:$0xff]
    %v4851 = vld [vmem:[%s4822 + $0xe0] sm:$0xff]
    %v4852 = vld [vmem:[%s4822 + $0xe8] sm:$0xff]
    %v4853 = vld [vmem:[%s4822 + $0xf0] sm:$0xff]
    %v4854 = vld [vmem:[%s4822 + $0xf8] sm:$0xff]
    %v4855 = vld [vmem:[%s4822 + $0x100] sm:$0xff]
    %v4856 = vld [vmem:[%s4822 + $0x108] sm:$0xff]
    %v4857 = vld [vmem:[%s4822 + $0x110] sm:$0xff]
    %v4858 = vld [vmem:[%s4822 + $0x118] sm:$0xff]
    %v4859 = vld [vmem:[%s4822 + $0x120] sm:$0xff]
    %v4860 = vld [vmem:[%s4822 + $0x128] sm:$0xff]
    %v4861 = vld [vmem:[%s4822 + $0x130] sm:$0xff]
    %v4862 = vld [vmem:[%s4822 + $0x138] sm:$0xff]
    %v4863 = vld [vmem:[%s4822 + $0x140] sm:$0xff]
    %v4864 = vld [vmem:[%s4822 + $0x148] sm:$0xff]
    %v4865 = vld [vmem:[%s4822 + $0x150] sm:$0xff]
    %v4866 = vld [vmem:[%s4822 + $0x158] sm:$0xff]
    %v4867 = vld [vmem:[%s4822 + $0x160] sm:$0xff]
    %v4868 = vld [vmem:[%s4822 + $0x168] sm:$0xff]
    %v4869 = vld [vmem:[%s4822 + $0x170] sm:$0xff]
    %v4870 = vld [vmem:[%s4822 + $0x178] sm:$0xff]
    %v4871 = vld [vmem:[%s4822 + $0x180] sm:$0xff]
    %v4872 = vld [vmem:[%s4822 + $0x188] sm:$0xff]
    %v4873 = vld [vmem:[%s4822 + $0x190] sm:$0xff]
    %v4874 = vld [vmem:[%s4822 + $0x198] sm:$0xff]
    %v4875 = vld [vmem:[%s4822 + $0x1a0] sm:$0xff]
    %v4876 = vld [vmem:[%s4822 + $0x1a8] sm:$0xff]
    %v4877 = vld [vmem:[%s4822 + $0x1b0] sm:$0xff]
    %v4878 = vld [vmem:[%s4822 + $0x1b8] sm:$0xff]
    %v4879 = vld [vmem:[%s4822 + $0x1c0] sm:$0xff]
    %v4880 = vld [vmem:[%s4822 + $0x1c8] sm:$0xff]
    %v4881 = vld [vmem:[%s4822 + $0x1d0] sm:$0xff]
    %v4882 = vld [vmem:[%s4822 + $0x1d8] sm:$0xff]
    %v4883 = vld [vmem:[%s4822 + $0x1e0] sm:$0xff]
    %v4884 = vld [vmem:[%s4822 + $0x1e8] sm:$0xff]
    %v4885 = vld [vmem:[%s4822 + $0x1f0] sm:$0xff]
    %v4886 = vld [vmem:[%s4822 + $0x1f8] sm:$0xff]
    %4887 = vmatprep.subr.mxu0 0.0
    %4888 = vmatpush1.msra.mxu0 %v829
    %4889 = vmatprep.subr.mxu0 0.0
    %4890 = vmatpush1.msra.mxu0 %v830
    %4891 = vmatprep.subr.mxu0 0.0
    %4892 = vmatpush1.msra.mxu0 %v831
    %4893 = vmatprep.subr.mxu0 0.0
    %4894 = vmatpush1.msra.mxu0 %v832
    %4895 = vmatprep.subr.mxu0 0.0
    %4896 = vmatpush1.msra.mxu0 %v833
    %4897 = vmatprep.subr.mxu0 0.0
    %4898 = vmatpush1.msra.mxu0 %v834
    %4899 = vmatprep.subr.mxu0 0.0
    %4900 = vmatpush1.msra.mxu0 %v835
    %4901 = vmatprep.subr.mxu0 0.0
    %4902 = vmatpush1.msra.mxu0 %v836
    %4903 = vmatprep.subr.mxu0 0.0
    %4904 = vmatpush1.msra.mxu0 %v837
    %4905 = vmatprep.subr.mxu0 0.0
    %4906 = vmatpush1.msra.mxu0 %v838
    %4907 = vmatprep.subr.mxu0 0.0
    %4908 = vmatpush1.msra.mxu0 %v839
    %4909 = vmatprep.subr.mxu0 0.0
    %4910 = vmatpush1.msra.mxu0 %v840
    %4911 = vmatprep.subr.mxu0 0.0
    %4912 = vmatpush1.msra.mxu0 %v841
    %4913 = vmatprep.subr.mxu0 0.0
    %4914 = vmatpush1.msra.mxu0 %v842
    %4915 = vmatprep.subr.mxu0 0.0
    %4916 = vmatpush1.msra.mxu0 %v843
    %4917 = vmatprep.subr.mxu0 0.0
    %4918 = vmatpush1.msra.mxu0 %v844
    %4919 = vmatprep.subr.mxu0 0.0
    %4920 = vmatpush1.msra.mxu0 %v845
    %4921 = vmatprep.subr.mxu0 0.0
    %4922 = vmatpush1.msra.mxu0 %v846
    %4923 = vmatprep.subr.mxu0 0.0
    %4924 = vmatpush1.msra.mxu0 %v847
    %4925 = vmatprep.subr.mxu0 0.0
    %4926 = vmatpush1.msra.mxu0 %v848
    %4927 = vmatprep.subr.mxu0 0.0
    %4928 = vmatpush1.msra.mxu0 %v849
    %4929 = vmatprep.subr.mxu0 0.0
    %4930 = vmatpush1.msra.mxu0 %v850
    %4931 = vmatprep.subr.mxu0 0.0
    %4932 = vmatpush1.msra.mxu0 %v851
    %4933 = vmatprep.subr.mxu0 0.0
    %4934 = vmatpush1.msra.mxu0 %v852
    %4935 = vmatprep.subr.mxu0 0.0
    %4936 = vmatpush1.msra.mxu0 %v853
    %4937 = vmatprep.subr.mxu0 0.0
    %4938 = vmatpush1.msra.mxu0 %v854
    %4939 = vmatprep.subr.mxu0 0.0
    %4940 = vmatpush1.msra.mxu0 %v855
    %4941 = vmatprep.subr.mxu0 0.0
    %4942 = vmatpush1.msra.mxu0 %v856
    %4943 = vmatprep.subr.mxu0 0.0
    %4944 = vmatpush1.msra.mxu0 %v857
    %4945 = vmatprep.subr.mxu0 0.0
    %4946 = vmatpush1.msra.mxu0 %v858
    %4947 = vmatprep.subr.mxu0 0.0
    %4948 = vmatpush1.msra.mxu0 %v859
    %4949 = vmatprep.subr.mxu0 0.0
    %4950 = vmatpush1.msra.mxu0 %v860
    %4951 = vmatprep.mubr.f32.mxu0 %v4824
    %4952 = vmatmul.mubr.f32.gmra.mrb[0].mxu0 %v4823
    %v4953 = vpop.f32.mrb[0].mxu0
    %v4954 = vadd.f32 0.0, %v4953
    %v4955 = vpop.f32.mrb[0].mxu0
    %4956 = vmatprep.mubr.f32.mxu0 %v4828
    %4957 = vmatmul.mubr.f32.gmra.mrb[0].mxu0 %v4827
    %v4958 = vpop.f32.mrb[0].mxu0
    %v4959 = vadd.f32 0.0, %v4958
    %v4960 = vpop.f32.mrb[0].mxu0
    %4961 = vmatprep.mubr.f32.mxu0 %v4832
    %4962 = vmatmul.mubr.f32.gmra.mrb[0].mxu0 %v4831
    %v4963 = vpop.f32.mrb[0].mxu0
    %v4964 = vadd.f32 0.0, %v4963
    %v4965 = vpop.f32.mrb[0].mxu0
    %4966 = vmatprep.mubr.f32.mxu0 %v4836
    %4967 = vmatmul.mubr.f32.gmra.mrb[0].mxu0 %v4835
    %v4968 = vpop.f32.mrb[0].mxu0
    %v4969 = vadd.f32 0.0, %v4968
    %v4970 = vpop.f32.mrb[0].mxu0
    %4971 = vmatprep.mubr.f32.mxu0 %v4840
    %4972 = vmatmul.mubr.f32.gmra.mrb[0].mxu0 %v4839
    %v4973 = vpop.f32.mrb[0].mxu0
    %v4974 = vadd.f32 0.0, %v4973
    %v4975 = vpop.f32.mrb[0].mxu0
    %4976 = vmatprep.mubr.f32.mxu0 %v4844
    %4977 = vmatmul.mubr.f32.gmra.mrb[0].mxu0 %v4843
    %v4978 = vpop.f32.mrb[0].mxu0
    %v4979 = vadd.f32 0.0, %v4978
    %v4980 = vpop.f32.mrb[0].mxu0
    %4981 = vmatprep.mubr.f32.mxu0 %v4848
    %4982 = vmatmul.mubr.f32.gmra.mrb[0].mxu0 %v4847
    %v4983 = vpop.f32.mrb[0].mxu0
    %v4984 = vadd.f32 0.0, %v4983
    %v4985 = vpop.f32.mrb[0].mxu0
    %4986 = vmatprep.mubr.f32.mxu0 %v4852
    %4987 = vmatmul.mubr.f32.gmra.mrb[0].mxu0 %v4851
    %v4988 = vpop.f32.mrb[0].mxu0
    %v4989 = vadd.f32 0.0, %v4988
    %v4990 = vpop.f32.mrb[0].mxu0
    %4991 = vmatprep.mubr.f32.mxu0 %v4856
    %4992 = vmatmul.mubr.f32.gmra.mrb[0].mxu0 %v4855
    %v4993 = vpop.f32.mrb[0].mxu0
    %v4994 = vadd.f32 0.0, %v4993
    %v4995 = vpop.f32.mrb[0].mxu0
    %4996 = vmatprep.mubr.f32.mxu0 %v4860
    %4997 = vmatmul.mubr.f32.gmra.mrb[0].mxu0 %v4859
    %v4998 = vpop.f32.mrb[0].mxu0
    %v4999 = vadd.f32 0.0, %v4998
    %v5000 = vpop.f32.mrb[0].mxu0
    %5001 = vmatprep.mubr.f32.mxu0 %v4864
    %5002 = vmatmul.mubr.f32.gmra.mrb[0].mxu0 %v4863
    %v5003 = vpop.f32.mrb[0].mxu0
    %v5004 = vadd.f32 0.0, %v5003
    %v5005 = vpop.f32.mrb[0].mxu0
    %5006 = vmatprep.mubr.f32.mxu0 %v4868
    %5007 = vmatmul.mubr.f32.gmra.mrb[0].mxu0 %v4867
    %v5008 = vpop.f32.mrb[0].mxu0
    %v5009 = vadd.f32 0.0, %v5008
    %v5010 = vpop.f32.mrb[0].mxu0
    %5011 = vmatprep.mubr.f32.mxu0 %v4872
    %5012 = vmatmul.mubr.f32.gmra.mrb[0].mxu0 %v4871
    %v5013 = vpop.f32.mrb[0].mxu0
    %v5014 = vadd.f32 0.0, %v5013
    %v5015 = vpop.f32.mrb[0].mxu0
    %5016 = vmatprep.mubr.f32.mxu0 %v4876
    %5017 = vmatmul.mubr.f32.gmra.mrb[0].mxu0 %v4875
    %v5018 = vpop.f32.mrb[0].mxu0
    %v5019 = vadd.f32 0.0, %v5018
    %v5020 = vpop.f32.mrb[0].mxu0
    %5021 = vmatprep.mubr.f32.mxu0 %v4880
    %5022 = vmatmul.mubr.f32.gmra.mrb[0].mxu0 %v4879
    %v5023 = vpop.f32.mrb[0].mxu0
    %v5024 = vadd.f32 0.0, %v5023
    %v5025 = vpop.f32.mrb[0].mxu0
    %5026 = vmatprep.mubr.f32.mxu0 %v4884
    %5027 = vmatmul.mubr.f32.gmra.mrb[0].mxu0 %v4883
    %v5028 = vpop.f32.mrb[0].mxu0
    %v5029 = vadd.f32 0.0, %v5028
    %v5030 = vpop.f32.mrb[0].mxu0
    %5031 = vdwg.mxu0
    %5032 = vmatprep.subr.mxu0 0.0
    %5033 = vmatpush1.msra.mxu0 %v861
    %5034 = vmatprep.subr.mxu0 0.0
    %5035 = vmatpush1.msra.mxu0 %v862
    %5036 = vmatprep.subr.mxu0 0.0
    %5037 = vmatpush1.msra.mxu0 %v863
    %5038 = vmatprep.subr.mxu0 0.0
    %5039 = vmatpush1.msra.mxu0 %v864
    %5040 = vmatprep.subr.mxu0 0.0
    %5041 = vmatpush1.msra.mxu0 %v865
    %5042 = vmatprep.subr.mxu0 0.0
    %5043 = vmatpush1.msra.mxu0 %v866
    %5044 = vmatprep.subr.mxu0 0.0
    %5045 = vmatpush1.msra.mxu0 %v867
    %5046 = vmatprep.subr.mxu0 0.0
    %5047 = vmatpush1.msra.mxu0 %v868
    %5048 = vmatprep.subr.mxu0 0.0
    %5049 = vmatpush1.msra.mxu0 %v869
    %5050 = vmatprep.subr.mxu0 0.0
    %5051 = vmatpush1.msra.mxu0 %v870
    %5052 = vmatprep.subr.mxu0 0.0
    %5053 = vmatpush1.msra.mxu0 %v871
    %5054 = vmatprep.subr.mxu0 0.0
    %5055 = vmatpush1.msra.mxu0 %v872
    %5056 = vmatprep.subr.mxu0 0.0
    %5057 = vmatpush1.msra.mxu0 %v873
    %5058 = vmatprep.subr.mxu0 0.0
    %5059 = vmatpush1.msra.mxu0 %v874
    %5060 = vmatprep.subr.mxu0 0.0
    %5061 = vmatpush1.msra.mxu0 %v875
    %5062 = vmatprep.subr.mxu0 0.0
    %5063 = vmatpush1.msra.mxu0 %v876
    %5064 = vmatprep.subr.mxu0 0.0
    %5065 = vmatpush1.msra.mxu0 %v877
    %5066 = vmatprep.subr.mxu0 0.0
    %5067 = vmatpush1.msra.mxu0 %v878
    %5068 = vmatprep.subr.mxu0 0.0
    %5069 = vmatpush1.msra.mxu0 %v879
    %5070 = vmatprep.subr.mxu0 0.0
    %5071 = vmatpush1.msra.mxu0 %v880
    %5072 = vmatprep.subr.mxu0 0.0
    %5073 = vmatpush1.msra.mxu0 %v881
    %5074 = vmatprep.subr.mxu0 0.0
    %5075 = vmatpush1.msra.mxu0 %v882
    %5076 = vmatprep.subr.mxu0 0.0
    %5077 = vmatpush1.msra.mxu0 %v883
    %5078 = vmatprep.subr.mxu0 0.0
    %5079 = vmatpush1.msra.mxu0 %v884
    %5080 = vmatprep.subr.mxu0 0.0
    %5081 = vmatpush1.msra.mxu0 %v885
    %5082 = vmatprep.subr.mxu0 0.0
    %5083 = vmatpush1.msra.mxu0 %v886
    %5084 = vmatprep.subr.mxu0 0.0
    %5085 = vmatpush1.msra.mxu0 %v887
    %5086 = vmatprep.subr.mxu0 0.0
    %5087 = vmatpush1.msra.mxu0 %v888
    %5088 = vmatprep.subr.mxu0 0.0
    %5089 = vmatpush1.msra.mxu0 %v889
    %5090 = vmatprep.subr.mxu0 0.0
    %5091 = vmatpush1.msra.mxu0 %v890
    %5092 = vmatprep.subr.mxu0 0.0
    %5093 = vmatpush1.msra.mxu0 %v891
    %5094 = vmatprep.subr.mxu0 0.0
    %5095 = vmatpush1.msra.mxu0 %v892
    %5096 = vmatprep.mubr.f32.mxu0 %v4826
    %5097 = vmatmul.mubr.f32.gmra.mrb[0].mxu0 %v4825
    %v5098 = vpop.f32.mrb[0].mxu0
    %v5099 = vadd.f32 %v4954, %v5098
    %v5100 = vpop.f32.mrb[0].mxu0
    %5101 = vmatprep.mubr.f32.mxu0 %v4830
    %5102 = vmatmul.mubr.f32.gmra.mrb[0].mxu0 %v4829
    %v5103 = vpop.f32.mrb[0].mxu0
    %v5104 = vadd.f32 %v4959, %v5103
    %v5105 = vpop.f32.mrb[0].mxu0
    %5106 = vmatprep.mubr.f32.mxu0 %v4834
    %5107 = vmatmul.mubr.f32.gmra.mrb[0].mxu0 %v4833
    %v5108 = vpop.f32.mrb[0].mxu0
    %v5109 = vadd.f32 %v4964, %v5108
    %v5110 = vpop.f32.mrb[0].mxu0
    %5111 = vmatprep.mubr.f32.mxu0 %v4838
    %5112 = vmatmul.mubr.f32.gmra.mrb[0].mxu0 %v4837
    %v5113 = vpop.f32.mrb[0].mxu0
    %v5114 = vadd.f32 %v4969, %v5113
    %v5115 = vpop.f32.mrb[0].mxu0
    %5116 = vmatprep.mubr.f32.mxu0 %v4842
    %5117 = vmatmul.mubr.f32.gmra.mrb[0].mxu0 %v4841
    %v5118 = vpop.f32.mrb[0].mxu0
    %v5119 = vadd.f32 %v4974, %v5118
    %v5120 = vpop.f32.mrb[0].mxu0
    %5121 = vmatprep.mubr.f32.mxu0 %v4846
    %5122 = vmatmul.mubr.f32.gmra.mrb[0].mxu0 %v4845
    %v5123 = vpop.f32.mrb[0].mxu0
    %v5124 = vadd.f32 %v4979, %v5123
    %v5125 = vpop.f32.mrb[0].mxu0
    %5126 = vmatprep.mubr.f32.mxu0 %v4850
    %5127 = vmatmul.mubr.f32.gmra.mrb[0].mxu0 %v4849
    %v5128 = vpop.f32.mrb[0].mxu0
    %v5129 = vadd.f32 %v4984, %v5128
    %v5130 = vpop.f32.mrb[0].mxu0
    %5131 = vmatprep.mubr.f32.mxu0 %v4854
    %5132 = vmatmul.mubr.f32.gmra.mrb[0].mxu0 %v4853
    %v5133 = vpop.f32.mrb[0].mxu0
    %v5134 = vadd.f32 %v4989, %v5133
    %v5135 = vpop.f32.mrb[0].mxu0
    %5136 = vmatprep.mubr.f32.mxu0 %v4858
    %5137 = vmatmul.mubr.f32.gmra.mrb[0].mxu0 %v4857
    %v5138 = vpop.f32.mrb[0].mxu0
    %v5139 = vadd.f32 %v4994, %v5138
    %v5140 = vpop.f32.mrb[0].mxu0
    %5141 = vmatprep.mubr.f32.mxu0 %v4862
    %5142 = vmatmul.mubr.f32.gmra.mrb[0].mxu0 %v4861
    %v5143 = vpop.f32.mrb[0].mxu0
    %v5144 = vadd.f32 %v4999, %v5143
    %v5145 = vpop.f32.mrb[0].mxu0
    %5146 = vmatprep.mubr.f32.mxu0 %v4866
    %5147 = vmatmul.mubr.f32.gmra.mrb[0].mxu0 %v4865
    %v5148 = vpop.f32.mrb[0].mxu0
    %v5149 = vadd.f32 %v5004, %v5148
    %v5150 = vpop.f32.mrb[0].mxu0
    %5151 = vmatprep.mubr.f32.mxu0 %v4870
    %5152 = vmatmul.mubr.f32.gmra.mrb[0].mxu0 %v4869
    %v5153 = vpop.f32.mrb[0].mxu0
    %v5154 = vadd.f32 %v5009, %v5153
    %v5155 = vpop.f32.mrb[0].mxu0
    %5156 = vmatprep.mubr.f32.mxu0 %v4874
    %5157 = vmatmul.mubr.f32.gmra.mrb[0].mxu0 %v4873
    %v5158 = vpop.f32.mrb[0].mxu0
    %v5159 = vadd.f32 %v5014, %v5158
    %v5160 = vpop.f32.mrb[0].mxu0
    %5161 = vmatprep.mubr.f32.mxu0 %v4878
    %5162 = vmatmul.mubr.f32.gmra.mrb[0].mxu0 %v4877
    %v5163 = vpop.f32.mrb[0].mxu0
    %v5164 = vadd.f32 %v5019, %v5163
    %v5165 = vpop.f32.mrb[0].mxu0
    %5166 = vmatprep.mubr.f32.mxu0 %v4882
    %5167 = vmatmul.mubr.f32.gmra.mrb[0].mxu0 %v4881
    %v5168 = vpop.f32.mrb[0].mxu0
    %v5169 = vadd.f32 %v5024, %v5168
    %v5170 = vpop.f32.mrb[0].mxu0
    %5171 = vmatprep.mubr.f32.mxu0 %v4886
    %5172 = vmatmul.mubr.f32.gmra.mrb[0].mxu0 %v4885
    %v5173 = vpop.f32.mrb[0].mxu0
    %v5174 = vadd.f32 %v5029, %v5173
    %v5175 = vpop.f32.mrb[0].mxu0
    %5176 = vdwg.mxu0
    %s5177 = scalar_lea.vmem [#allocation7], 56
    %v5178 = vld [vmem:[%s5177] sm:$0xff]
    %v5180 = vsel %vm1605, %v5099, 0
    %v5183 = vsel %vm1605, %v5104, 0
    %v5186 = vsel %vm1605, %v5109, 0
    %v5189 = vsel %vm1605, %v5114, 0
    %v5192 = vsel %vm1605, %v5119, 0
    %v5195 = vsel %vm1605, %v5124, 0
    %v5198 = vsel %vm1605, %v5129, 0
    %v5201 = vsel %vm1605, %v5134, 0
    %v5204 = vsel %vm1605, %v5139, 0
    %v5207 = vsel %vm1605, %v5144, 0
    %v5210 = vsel %vm1605, %v5149, 0
    %v5213 = vsel %vm1605, %v5154, 0
    %v5216 = vsel %vm1605, %v5159, 0
    %v5219 = vsel %vm1605, %v5164, 0
    %v5222 = vsel %vm1605, %v5169, 0
    %v5225 = vsel %vm1605, %v5174, 0
    %5227 = vmatprep.subr.mxu0 0.0
    %5228 = vmatpush1.msra.mxu0 %v5178
    %5229 = vmatprep.subr.mxu0 0.0
    %5230 = vmatpush1.msra.mxu0 0.0
    %5231 = vmatprep.subr.mxu0 0.0
    %5232 = vmatpush1.msra.mxu0 0.0
    %5233 = vmatprep.subr.mxu0 0.0
    %5234 = vmatpush1.msra.mxu0 0.0
    %5235 = vmatprep.subr.mxu0 0.0
    %5236 = vmatpush1.msra.mxu0 0.0
    %5237 = vmatprep.subr.mxu0 0.0
    %5238 = vmatpush1.msra.mxu0 0.0
    %5239 = vmatprep.subr.mxu0 0.0
    %5240 = vmatpush1.msra.mxu0 0.0
    %5241 = vmatprep.subr.mxu0 0.0
    %5242 = vmatpush1.msra.mxu0 0.0
    %5243 = vmatprep.subr.mxu0 0.0
    %5244 = vmatpush1.msra.mxu0 0.0
    %5245 = vmatprep.subr.mxu0 0.0
    %5246 = vmatpush1.msra.mxu0 0.0
    %5247 = vmatprep.subr.mxu0 0.0
    %5248 = vmatpush1.msra.mxu0 0.0
    %5249 = vmatprep.subr.mxu0 0.0
    %5250 = vmatpush1.msra.mxu0 0.0
    %5251 = vmatprep.subr.mxu0 0.0
    %5252 = vmatpush1.msra.mxu0 0.0
    %5253 = vmatprep.subr.mxu0 0.0
    %5254 = vmatpush1.msra.mxu0 0.0
    %5255 = vmatprep.subr.mxu0 0.0
    %5256 = vmatpush1.msra.mxu0 0.0
    %5257 = vmatprep.subr.mxu0 0.0
    %5258 = vmatpush1.msra.mxu0 0.0
    %5259 = vmatprep.subr.mxu0 0.0
    %5260 = vmatpush1.msra.mxu0 0.0
    %5261 = vmatprep.subr.mxu0 0.0
    %5262 = vmatpush1.msra.mxu0 0.0
    %5263 = vmatprep.subr.mxu0 0.0
    %5264 = vmatpush1.msra.mxu0 0.0
    %5265 = vmatprep.subr.mxu0 0.0
    %5266 = vmatpush1.msra.mxu0 0.0
    %5267 = vmatprep.subr.mxu0 0.0
    %5268 = vmatpush1.msra.mxu0 0.0
    %5269 = vmatprep.subr.mxu0 0.0
    %5270 = vmatpush1.msra.mxu0 0.0
    %5271 = vmatprep.subr.mxu0 0.0
    %5272 = vmatpush1.msra.mxu0 0.0
    %5273 = vmatprep.subr.mxu0 0.0
    %5274 = vmatpush1.msra.mxu0 0.0
    %5275 = vmatprep.subr.mxu0 0.0
    %5276 = vmatpush1.msra.mxu0 0.0
    %5277 = vmatprep.subr.mxu0 0.0
    %5278 = vmatpush1.msra.mxu0 0.0
    %5279 = vmatprep.subr.mxu0 0.0
    %5280 = vmatpush1.msra.mxu0 0.0
    %5281 = vmatprep.subr.mxu0 0.0
    %5282 = vmatpush1.msra.mxu0 0.0
    %5283 = vmatprep.subr.mxu0 0.0
    %5284 = vmatpush1.msra.mxu0 0.0
    %5285 = vmatprep.subr.mxu0 0.0
    %5286 = vmatpush1.msra.mxu0 0.0
    %5287 = vmatprep.subr.mxu0 0.0
    %5288 = vmatpush1.msra.mxu0 0.0
    %5289 = vmatprep.subr.mxu0 0.0
    %5290 = vmatpush1.msra.mxu0 0.0
    %5291 = vmatprep.mubr.f32.mxu0 0.0
    %5292 = vmatmul.mubr.f32.gmra.mrb[0].mxu0 %v5180
    %v5293 = vpop.f32.mrb[0].mxu0
    %v5294 = vadd.f32 0.0, %v5293
    %v5295 = vpop.f32.mrb[0].mxu0
    %5296 = vmatprep.mubr.f32.mxu0 0.0
    %5297 = vmatmul.mubr.f32.gmra.mrb[0].mxu0 %v5183
    %v5298 = vpop.f32.mrb[0].mxu0
    %v5299 = vadd.f32 0.0, %v5298
    %v5300 = vpop.f32.mrb[0].mxu0
    %5301 = vmatprep.mubr.f32.mxu0 0.0
    %5302 = vmatmul.mubr.f32.gmra.mrb[0].mxu0 %v5186
    %v5303 = vpop.f32.mrb[0].mxu0
    %v5304 = vadd.f32 0.0, %v5303
    %v5305 = vpop.f32.mrb[0].mxu0
    %5306 = vmatprep.mubr.f32.mxu0 0.0
    %5307 = vmatmul.mubr.f32.gmra.mrb[0].mxu0 %v5189
    %v5308 = vpop.f32.mrb[0].mxu0
    %v5309 = vadd.f32 0.0, %v5308
    %v5310 = vpop.f32.mrb[0].mxu0
    %5311 = vmatprep.mubr.f32.mxu0 0.0
    %5312 = vmatmul.mubr.f32.gmra.mrb[0].mxu0 %v5192
    %v5313 = vpop.f32.mrb[0].mxu0
    %v5314 = vadd.f32 0.0, %v5313
    %v5315 = vpop.f32.mrb[0].mxu0
    %5316 = vmatprep.mubr.f32.mxu0 0.0
    %5317 = vmatmul.mubr.f32.gmra.mrb[0].mxu0 %v5195
    %v5318 = vpop.f32.mrb[0].mxu0
    %v5319 = vadd.f32 0.0, %v5318
    %v5320 = vpop.f32.mrb[0].mxu0
    %5321 = vmatprep.mubr.f32.mxu0 0.0
    %5322 = vmatmul.mubr.f32.gmra.mrb[0].mxu0 %v5198
    %v5323 = vpop.f32.mrb[0].mxu0
    %v5324 = vadd.f32 0.0, %v5323
    %v5325 = vpop.f32.mrb[0].mxu0
    %5326 = vmatprep.mubr.f32.mxu0 0.0
    %5327 = vmatmul.mubr.f32.gmra.mrb[0].mxu0 %v5201
    %v5328 = vpop.f32.mrb[0].mxu0
    %v5329 = vadd.f32 0.0, %v5328
    %v5330 = vpop.f32.mrb[0].mxu0
    %5331 = vmatprep.mubr.f32.mxu0 0.0
    %5332 = vmatmul.mubr.f32.gmra.mrb[0].mxu0 %v5204
    %v5333 = vpop.f32.mrb[0].mxu0
    %v5334 = vadd.f32 0.0, %v5333
    %v5335 = vpop.f32.mrb[0].mxu0
    %5336 = vmatprep.mubr.f32.mxu0 0.0
    %5337 = vmatmul.mubr.f32.gmra.mrb[0].mxu0 %v5207
    %v5338 = vpop.f32.mrb[0].mxu0
    %v5339 = vadd.f32 0.0, %v5338
    %v5340 = vpop.f32.mrb[0].mxu0
    %5341 = vmatprep.mubr.f32.mxu0 0.0
    %5342 = vmatmul.mubr.f32.gmra.mrb[0].mxu0 %v5210
    %v5343 = vpop.f32.mrb[0].mxu0
    %v5344 = vadd.f32 0.0, %v5343
    %v5345 = vpop.f32.mrb[0].mxu0
    %5346 = vmatprep.mubr.f32.mxu0 0.0
    %5347 = vmatmul.mubr.f32.gmra.mrb[0].mxu0 %v5213
    %v5348 = vpop.f32.mrb[0].mxu0
    %v5349 = vadd.f32 0.0, %v5348
    %v5350 = vpop.f32.mrb[0].mxu0
    %5351 = vmatprep.mubr.f32.mxu0 0.0
    %5352 = vmatmul.mubr.f32.gmra.mrb[0].mxu0 %v5216
    %v5353 = vpop.f32.mrb[0].mxu0
    %v5354 = vadd.f32 0.0, %v5353
    %v5355 = vpop.f32.mrb[0].mxu0
    %5356 = vmatprep.mubr.f32.mxu0 0.0
    %5357 = vmatmul.mubr.f32.gmra.mrb[0].mxu0 %v5219
    %v5358 = vpop.f32.mrb[0].mxu0
    %v5359 = vadd.f32 0.0, %v5358
    %v5360 = vpop.f32.mrb[0].mxu0
    %5361 = vmatprep.mubr.f32.mxu0 0.0
    %5362 = vmatmul.mubr.f32.gmra.mrb[0].mxu0 %v5222
    %v5363 = vpop.f32.mrb[0].mxu0
    %v5364 = vadd.f32 0.0, %v5363
    %v5365 = vpop.f32.mrb[0].mxu0
    %5366 = vmatprep.mubr.f32.mxu0 0.0
    %5367 = vmatmul.mubr.f32.gmra.mrb[0].mxu0 %v5225
    %v5368 = vpop.f32.mrb[0].mxu0
    %v5369 = vadd.f32 0.0, %v5368
    %v5370 = vpop.f32.mrb[0].mxu0
    %5371 = vdwg.mxu0
    %v5372 = vadd.f32 %v4806, %v5294
    %v5373 = vadd.f32 %v4807, %v5299
    %v5374 = vadd.f32 %v4808, %v5304
    %v5375 = vadd.f32 %v4809, %v5309
    %v5376 = vadd.f32 %v4810, %v5314
    %v5377 = vadd.f32 %v4811, %v5319
    %v5378 = vadd.f32 %v4812, %v5324
    %v5379 = vadd.f32 %v4813, %v5329
    %v5380 = vadd.f32 %v4814, %v5334
    %v5381 = vadd.f32 %v4815, %v5339
    %v5382 = vadd.f32 %v4816, %v5344
    %v5383 = vadd.f32 %v4817, %v5349
    %v5384 = vadd.f32 %v4818, %v5354
    %v5385 = vadd.f32 %v4819, %v5359
    %v5386 = vadd.f32 %v4820, %v5364
    %v5387 = vadd.f32 %v4821, %v5369
    %s5388 = scalar_lea.vmem [#allocation5], 4096
    %v5389 = vld [vmem:[%s5388] sm:$0xff]
    %v5390 = vld [vmem:[%s5388 + $0x8] sm:$0xff]
    %v5391 = vld [vmem:[%s5388 + $0x10] sm:$0xff]
    %v5392 = vld [vmem:[%s5388 + $0x18] sm:$0xff]
    %v5393 = vld [vmem:[%s5388 + $0x20] sm:$0xff]
    %v5394 = vld [vmem:[%s5388 + $0x28] sm:$0xff]
    %v5395 = vld [vmem:[%s5388 + $0x30] sm:$0xff]
    %v5396 = vld [vmem:[%s5388 + $0x38] sm:$0xff]
    %v5397 = vld [vmem:[%s5388 + $0x40] sm:$0xff]
    %v5398 = vld [vmem:[%s5388 + $0x48] sm:$0xff]
    %v5399 = vld [vmem:[%s5388 + $0x50] sm:$0xff]
    %v5400 = vld [vmem:[%s5388 + $0x58] sm:$0xff]
    %v5401 = vld [vmem:[%s5388 + $0x60] sm:$0xff]
    %v5402 = vld [vmem:[%s5388 + $0x68] sm:$0xff]
    %v5403 = vld [vmem:[%s5388 + $0x70] sm:$0xff]
    %v5404 = vld [vmem:[%s5388 + $0x78] sm:$0xff]
    %v5405 = vld [vmem:[%s5388 + $0x80] sm:$0xff]
    %v5406 = vld [vmem:[%s5388 + $0x88] sm:$0xff]
    %v5407 = vld [vmem:[%s5388 + $0x90] sm:$0xff]
    %v5408 = vld [vmem:[%s5388 + $0x98] sm:$0xff]
    %v5409 = vld [vmem:[%s5388 + $0xa0] sm:$0xff]
    %v5410 = vld [vmem:[%s5388 + $0xa8] sm:$0xff]
    %v5411 = vld [vmem:[%s5388 + $0xb0] sm:$0xff]
    %v5412 = vld [vmem:[%s5388 + $0xb8] sm:$0xff]
    %v5413 = vld [vmem:[%s5388 + $0xc0] sm:$0xff]
    %v5414 = vld [vmem:[%s5388 + $0xc8] sm:$0xff]
    %v5415 = vld [vmem:[%s5388 + $0xd0] sm:$0xff]
    %v5416 = vld [vmem:[%s5388 + $0xd8] sm:$0xff]
    %v5417 = vld [vmem:[%s5388 + $0xe0] sm:$0xff]
    %v5418 = vld [vmem:[%s5388 + $0xe8] sm:$0xff]
    %v5419 = vld [vmem:[%s5388 + $0xf0] sm:$0xff]
    %v5420 = vld [vmem:[%s5388 + $0xf8] sm:$0xff]
    %v5421 = vld [vmem:[%s5388 + $0x100] sm:$0xff]
    %v5422 = vld [vmem:[%s5388 + $0x108] sm:$0xff]
    %v5423 = vld [vmem:[%s5388 + $0x110] sm:$0xff]
    %v5424 = vld [vmem:[%s5388 + $0x118] sm:$0xff]
    %v5425 = vld [vmem:[%s5388 + $0x120] sm:$0xff]
    %v5426 = vld [vmem:[%s5388 + $0x128] sm:$0xff]
    %v5427 = vld [vmem:[%s5388 + $0x130] sm:$0xff]
    %v5428 = vld [vmem:[%s5388 + $0x138] sm:$0xff]
    %v5429 = vld [vmem:[%s5388 + $0x140] sm:$0xff]
    %v5430 = vld [vmem:[%s5388 + $0x148] sm:$0xff]
    %v5431 = vld [vmem:[%s5388 + $0x150] sm:$0xff]
    %v5432 = vld [vmem:[%s5388 + $0x158] sm:$0xff]
    %v5433 = vld [vmem:[%s5388 + $0x160] sm:$0xff]
    %v5434 = vld [vmem:[%s5388 + $0x168] sm:$0xff]
    %v5435 = vld [vmem:[%s5388 + $0x170] sm:$0xff]
    %v5436 = vld [vmem:[%s5388 + $0x178] sm:$0xff]
    %v5437 = vld [vmem:[%s5388 + $0x180] sm:$0xff]
    %v5438 = vld [vmem:[%s5388 + $0x188] sm:$0xff]
    %v5439 = vld [vmem:[%s5388 + $0x190] sm:$0xff]
    %v5440 = vld [vmem:[%s5388 + $0x198] sm:$0xff]
    %v5441 = vld [vmem:[%s5388 + $0x1a0] sm:$0xff]
    %v5442 = vld [vmem:[%s5388 + $0x1a8] sm:$0xff]
    %v5443 = vld [vmem:[%s5388 + $0x1b0] sm:$0xff]
    %v5444 = vld [vmem:[%s5388 + $0x1b8] sm:$0xff]
    %v5445 = vld [vmem:[%s5388 + $0x1c0] sm:$0xff]
    %v5446 = vld [vmem:[%s5388 + $0x1c8] sm:$0xff]
    %v5447 = vld [vmem:[%s5388 + $0x1d0] sm:$0xff]
    %v5448 = vld [vmem:[%s5388 + $0x1d8] sm:$0xff]
    %v5449 = vld [vmem:[%s5388 + $0x1e0] sm:$0xff]
    %v5450 = vld [vmem:[%s5388 + $0x1e8] sm:$0xff]
    %v5451 = vld [vmem:[%s5388 + $0x1f0] sm:$0xff]
    %v5452 = vld [vmem:[%s5388 + $0x1f8] sm:$0xff]
    %5453 = vmatprep.subr.mxu0 0.0
    %5454 = vmatpush1.msra.mxu0 %v829
    %5455 = vmatprep.subr.mxu0 0.0
    %5456 = vmatpush1.msra.mxu0 %v830
    %5457 = vmatprep.subr.mxu0 0.0
    %5458 = vmatpush1.msra.mxu0 %v831
    %5459 = vmatprep.subr.mxu0 0.0
    %5460 = vmatpush1.msra.mxu0 %v832
    %5461 = vmatprep.subr.mxu0 0.0
    %5462 = vmatpush1.msra.mxu0 %v833
    %5463 = vmatprep.subr.mxu0 0.0
    %5464 = vmatpush1.msra.mxu0 %v834
    %5465 = vmatprep.subr.mxu0 0.0
    %5466 = vmatpush1.msra.mxu0 %v835
    %5467 = vmatprep.subr.mxu0 0.0
    %5468 = vmatpush1.msra.mxu0 %v836
    %5469 = vmatprep.subr.mxu0 0.0
    %5470 = vmatpush1.msra.mxu0 %v837
    %5471 = vmatprep.subr.mxu0 0.0
    %5472 = vmatpush1.msra.mxu0 %v838
    %5473 = vmatprep.subr.mxu0 0.0
    %5474 = vmatpush1.msra.mxu0 %v839
    %5475 = vmatprep.subr.mxu0 0.0
    %5476 = vmatpush1.msra.mxu0 %v840
    %5477 = vmatprep.subr.mxu0 0.0
    %5478 = vmatpush1.msra.mxu0 %v841
    %5479 = vmatprep.subr.mxu0 0.0
    %5480 = vmatpush1.msra.mxu0 %v842
    %5481 = vmatprep.subr.mxu0 0.0
    %5482 = vmatpush1.msra.mxu0 %v843
    %5483 = vmatprep.subr.mxu0 0.0
    %5484 = vmatpush1.msra.mxu0 %v844
    %5485 = vmatprep.subr.mxu0 0.0
    %5486 = vmatpush1.msra.mxu0 %v845
    %5487 = vmatprep.subr.mxu0 0.0
    %5488 = vmatpush1.msra.mxu0 %v846
    %5489 = vmatprep.subr.mxu0 0.0
    %5490 = vmatpush1.msra.mxu0 %v847
    %5491 = vmatprep.subr.mxu0 0.0
    %5492 = vmatpush1.msra.mxu0 %v848
    %5493 = vmatprep.subr.mxu0 0.0
    %5494 = vmatpush1.msra.mxu0 %v849
    %5495 = vmatprep.subr.mxu0 0.0
    %5496 = vmatpush1.msra.mxu0 %v850
    %5497 = vmatprep.subr.mxu0 0.0
    %5498 = vmatpush1.msra.mxu0 %v851
    %5499 = vmatprep.subr.mxu0 0.0
    %5500 = vmatpush1.msra.mxu0 %v852
    %5501 = vmatprep.subr.mxu0 0.0
    %5502 = vmatpush1.msra.mxu0 %v853
    %5503 = vmatprep.subr.mxu0 0.0
    %5504 = vmatpush1.msra.mxu0 %v854
    %5505 = vmatprep.subr.mxu0 0.0
    %5506 = vmatpush1.msra.mxu0 %v855
    %5507 = vmatprep.subr.mxu0 0.0
    %5508 = vmatpush1.msra.mxu0 %v856
    %5509 = vmatprep.subr.mxu0 0.0
    %5510 = vmatpush1.msra.mxu0 %v857
    %5511 = vmatprep.subr.mxu0 0.0
    %5512 = vmatpush1.msra.mxu0 %v858
    %5513 = vmatprep.subr.mxu0 0.0
    %5514 = vmatpush1.msra.mxu0 %v859
    %5515 = vmatprep.subr.mxu0 0.0
    %5516 = vmatpush1.msra.mxu0 %v860
    %5517 = vmatprep.mubr.f32.mxu0 %v5390
    %5518 = vmatmul.mubr.f32.gmra.mrb[0].mxu0 %v5389
    %v5519 = vpop.f32.mrb[0].mxu0
    %v5520 = vadd.f32 0.0, %v5519
    %v5521 = vpop.f32.mrb[0].mxu0
    %5522 = vmatprep.mubr.f32.mxu0 %v5394
    %5523 = vmatmul.mubr.f32.gmra.mrb[0].mxu0 %v5393
    %v5524 = vpop.f32.mrb[0].mxu0
    %v5525 = vadd.f32 0.0, %v5524
    %v5526 = vpop.f32.mrb[0].mxu0
    %5527 = vmatprep.mubr.f32.mxu0 %v5398
    %5528 = vmatmul.mubr.f32.gmra.mrb[0].mxu0 %v5397
    %v5529 = vpop.f32.mrb[0].mxu0
    %v5530 = vadd.f32 0.0, %v5529
    %v5531 = vpop.f32.mrb[0].mxu0
    %5532 = vmatprep.mubr.f32.mxu0 %v5402
    %5533 = vmatmul.mubr.f32.gmra.mrb[0].mxu0 %v5401
    %v5534 = vpop.f32.mrb[0].mxu0
    %v5535 = vadd.f32 0.0, %v5534
    %v5536 = vpop.f32.mrb[0].mxu0
    %5537 = vmatprep.mubr.f32.mxu0 %v5406
    %5538 = vmatmul.mubr.f32.gmra.mrb[0].mxu0 %v5405
    %v5539 = vpop.f32.mrb[0].mxu0
    %v5540 = vadd.f32 0.0, %v5539
    %v5541 = vpop.f32.mrb[0].mxu0
    %5542 = vmatprep.mubr.f32.mxu0 %v5410
    %5543 = vmatmul.mubr.f32.gmra.mrb[0].mxu0 %v5409
    %v5544 = vpop.f32.mrb[0].mxu0
    %v5545 = vadd.f32 0.0, %v5544
    %v5546 = vpop.f32.mrb[0].mxu0
    %5547 = vmatprep.mubr.f32.mxu0 %v5414
    %5548 = vmatmul.mubr.f32.gmra.mrb[0].mxu0 %v5413
    %v5549 = vpop.f32.mrb[0].mxu0
    %v5550 = vadd.f32 0.0, %v5549
    %v5551 = vpop.f32.mrb[0].mxu0
    %5552 = vmatprep.mubr.f32.mxu0 %v5418
    %5553 = vmatmul.mubr.f32.gmra.mrb[0].mxu0 %v5417
    %v5554 = vpop.f32.mrb[0].mxu0
    %v5555 = vadd.f32 0.0, %v5554
    %v5556 = vpop.f32.mrb[0].mxu0
    %5557 = vmatprep.mubr.f32.mxu0 %v5422
    %5558 = vmatmul.mubr.f32.gmra.mrb[0].mxu0 %v5421
    %v5559 = vpop.f32.mrb[0].mxu0
    %v5560 = vadd.f32 0.0, %v5559
    %v5561 = vpop.f32.mrb[0].mxu0
    %5562 = vmatprep.mubr.f32.mxu0 %v5426
    %5563 = vmatmul.mubr.f32.gmra.mrb[0].mxu0 %v5425
    %v5564 = vpop.f32.mrb[0].mxu0
    %v5565 = vadd.f32 0.0, %v5564
    %v5566 = vpop.f32.mrb[0].mxu0
    %5567 = vmatprep.mubr.f32.mxu0 %v5430
    %5568 = vmatmul.mubr.f32.gmra.mrb[0].mxu0 %v5429
    %v5569 = vpop.f32.mrb[0].mxu0
    %v5570 = vadd.f32 0.0, %v5569
    %v5571 = vpop.f32.mrb[0].mxu0
    %5572 = vmatprep.mubr.f32.mxu0 %v5434
    %5573 = vmatmul.mubr.f32.gmra.mrb[0].mxu0 %v5433
    %v5574 = vpop.f32.mrb[0].mxu0
    %v5575 = vadd.f32 0.0, %v5574
    %v5576 = vpop.f32.mrb[0].mxu0
    %5577 = vmatprep.mubr.f32.mxu0 %v5438
    %5578 = vmatmul.mubr.f32.gmra.mrb[0].mxu0 %v5437
    %v5579 = vpop.f32.mrb[0].mxu0
    %v5580 = vadd.f32 0.0, %v5579
    %v5581 = vpop.f32.mrb[0].mxu0
    %5582 = vmatprep.mubr.f32.mxu0 %v5442
    %5583 = vmatmul.mubr.f32.gmra.mrb[0].mxu0 %v5441
    %v5584 = vpop.f32.mrb[0].mxu0
    %v5585 = vadd.f32 0.0, %v5584
    %v5586 = vpop.f32.mrb[0].mxu0
    %5587 = vmatprep.mubr.f32.mxu0 %v5446
    %5588 = vmatmul.mubr.f32.gmra.mrb[0].mxu0 %v5445
    %v5589 = vpop.f32.mrb[0].mxu0
    %v5590 = vadd.f32 0.0, %v5589
    %v5591 = vpop.f32.mrb[0].mxu0
    %5592 = vmatprep.mubr.f32.mxu0 %v5450
    %5593 = vmatmul.mubr.f32.gmra.mrb[0].mxu0 %v5449
    %v5594 = vpop.f32.mrb[0].mxu0
    %v5595 = vadd.f32 0.0, %v5594
    %v5596 = vpop.f32.mrb[0].mxu0
    %5597 = vdwg.mxu0
    %5598 = vmatprep.subr.mxu0 0.0
    %5599 = vmatpush1.msra.mxu0 %v861
    %5600 = vmatprep.subr.mxu0 0.0
    %5601 = vmatpush1.msra.mxu0 %v862
    %5602 = vmatprep.subr.mxu0 0.0
    %5603 = vmatpush1.msra.mxu0 %v863
    %5604 = vmatprep.subr.mxu0 0.0
    %5605 = vmatpush1.msra.mxu0 %v864
    %5606 = vmatprep.subr.mxu0 0.0
    %5607 = vmatpush1.msra.mxu0 %v865
    %5608 = vmatprep.subr.mxu0 0.0
    %5609 = vmatpush1.msra.mxu0 %v866
    %5610 = vmatprep.subr.mxu0 0.0
    %5611 = vmatpush1.msra.mxu0 %v867
    %5612 = vmatprep.subr.mxu0 0.0
    %5613 = vmatpush1.msra.mxu0 %v868
    %5614 = vmatprep.subr.mxu0 0.0
    %5615 = vmatpush1.msra.mxu0 %v869
    %5616 = vmatprep.subr.mxu0 0.0
    %5617 = vmatpush1.msra.mxu0 %v870
    %5618 = vmatprep.subr.mxu0 0.0
    %5619 = vmatpush1.msra.mxu0 %v871
    %5620 = vmatprep.subr.mxu0 0.0
    %5621 = vmatpush1.msra.mxu0 %v872
    %5622 = vmatprep.subr.mxu0 0.0
    %5623 = vmatpush1.msra.mxu0 %v873
    %5624 = vmatprep.subr.mxu0 0.0
    %5625 = vmatpush1.msra.mxu0 %v874
    %5626 = vmatprep.subr.mxu0 0.0
    %5627 = vmatpush1.msra.mxu0 %v875
    %5628 = vmatprep.subr.mxu0 0.0
    %5629 = vmatpush1.msra.mxu0 %v876
    %5630 = vmatprep.subr.mxu0 0.0
    %5631 = vmatpush1.msra.mxu0 %v877
    %5632 = vmatprep.subr.mxu0 0.0
    %5633 = vmatpush1.msra.mxu0 %v878
    %5634 = vmatprep.subr.mxu0 0.0
    %5635 = vmatpush1.msra.mxu0 %v879
    %5636 = vmatprep.subr.mxu0 0.0
    %5637 = vmatpush1.msra.mxu0 %v880
    %5638 = vmatprep.subr.mxu0 0.0
    %5639 = vmatpush1.msra.mxu0 %v881
    %5640 = vmatprep.subr.mxu0 0.0
    %5641 = vmatpush1.msra.mxu0 %v882
    %5642 = vmatprep.subr.mxu0 0.0
    %5643 = vmatpush1.msra.mxu0 %v883
    %5644 = vmatprep.subr.mxu0 0.0
    %5645 = vmatpush1.msra.mxu0 %v884
    %5646 = vmatprep.subr.mxu0 0.0
    %5647 = vmatpush1.msra.mxu0 %v885
    %5648 = vmatprep.subr.mxu0 0.0
    %5649 = vmatpush1.msra.mxu0 %v886
    %5650 = vmatprep.subr.mxu0 0.0
    %5651 = vmatpush1.msra.mxu0 %v887
    %5652 = vmatprep.subr.mxu0 0.0
    %5653 = vmatpush1.msra.mxu0 %v888
    %5654 = vmatprep.subr.mxu0 0.0
    %5655 = vmatpush1.msra.mxu0 %v889
    %5656 = vmatprep.subr.mxu0 0.0
    %5657 = vmatpush1.msra.mxu0 %v890
    %5658 = vmatprep.subr.mxu0 0.0
    %5659 = vmatpush1.msra.mxu0 %v891
    %5660 = vmatprep.subr.mxu0 0.0
    %5661 = vmatpush1.msra.mxu0 %v892
    %5662 = vmatprep.mubr.f32.mxu0 %v5392
    %5663 = vmatmul.mubr.f32.gmra.mrb[0].mxu0 %v5391
    %v5664 = vpop.f32.mrb[0].mxu0
    %v5665 = vadd.f32 %v5520, %v5664
    %v5666 = vpop.f32.mrb[0].mxu0
    %5667 = vmatprep.mubr.f32.mxu0 %v5396
    %5668 = vmatmul.mubr.f32.gmra.mrb[0].mxu0 %v5395
    %v5669 = vpop.f32.mrb[0].mxu0
    %v5670 = vadd.f32 %v5525, %v5669
    %v5671 = vpop.f32.mrb[0].mxu0
    %5672 = vmatprep.mubr.f32.mxu0 %v5400
    %5673 = vmatmul.mubr.f32.gmra.mrb[0].mxu0 %v5399
    %v5674 = vpop.f32.mrb[0].mxu0
    %v5675 = vadd.f32 %v5530, %v5674
    %v5676 = vpop.f32.mrb[0].mxu0
    %5677 = vmatprep.mubr.f32.mxu0 %v5404
    %5678 = vmatmul.mubr.f32.gmra.mrb[0].mxu0 %v5403
    %v5679 = vpop.f32.mrb[0].mxu0
    %v5680 = vadd.f32 %v5535, %v5679
    %v5681 = vpop.f32.mrb[0].mxu0
    %5682 = vmatprep.mubr.f32.mxu0 %v5408
    %5683 = vmatmul.mubr.f32.gmra.mrb[0].mxu0 %v5407
    %v5684 = vpop.f32.mrb[0].mxu0
    %v5685 = vadd.f32 %v5540, %v5684
    %v5686 = vpop.f32.mrb[0].mxu0
    %5687 = vmatprep.mubr.f32.mxu0 %v5412
    %5688 = vmatmul.mubr.f32.gmra.mrb[0].mxu0 %v5411
    %v5689 = vpop.f32.mrb[0].mxu0
    %v5690 = vadd.f32 %v5545, %v5689
    %v5691 = vpop.f32.mrb[0].mxu0
    %5692 = vmatprep.mubr.f32.mxu0 %v5416
    %5693 = vmatmul.mubr.f32.gmra.mrb[0].mxu0 %v5415
    %v5694 = vpop.f32.mrb[0].mxu0
    %v5695 = vadd.f32 %v5550, %v5694
    %v5696 = vpop.f32.mrb[0].mxu0
    %5697 = vmatprep.mubr.f32.mxu0 %v5420
    %5698 = vmatmul.mubr.f32.gmra.mrb[0].mxu0 %v5419
    %v5699 = vpop.f32.mrb[0].mxu0
    %v5700 = vadd.f32 %v5555, %v5699
    %v5701 = vpop.f32.mrb[0].mxu0
    %5702 = vmatprep.mubr.f32.mxu0 %v5424
    %5703 = vmatmul.mubr.f32.gmra.mrb[0].mxu0 %v5423
    %v5704 = vpop.f32.mrb[0].mxu0
    %v5705 = vadd.f32 %v5560, %v5704
    %v5706 = vpop.f32.mrb[0].mxu0
    %5707 = vmatprep.mubr.f32.mxu0 %v5428
    %5708 = vmatmul.mubr.f32.gmra.mrb[0].mxu0 %v5427
    %v5709 = vpop.f32.mrb[0].mxu0
    %v5710 = vadd.f32 %v5565, %v5709
    %v5711 = vpop.f32.mrb[0].mxu0
    %5712 = vmatprep.mubr.f32.mxu0 %v5432
    %5713 = vmatmul.mubr.f32.gmra.mrb[0].mxu0 %v5431
    %v5714 = vpop.f32.mrb[0].mxu0
    %v5715 = vadd.f32 %v5570, %v5714
    %v5716 = vpop.f32.mrb[0].mxu0
    %5717 = vmatprep.mubr.f32.mxu0 %v5436
    %5718 = vmatmul.mubr.f32.gmra.mrb[0].mxu0 %v5435
    %v5719 = vpop.f32.mrb[0].mxu0
    %v5720 = vadd.f32 %v5575, %v5719
    %v5721 = vpop.f32.mrb[0].mxu0
    %5722 = vmatprep.mubr.f32.mxu0 %v5440
    %5723 = vmatmul.mubr.f32.gmra.mrb[0].mxu0 %v5439
    %v5724 = vpop.f32.mrb[0].mxu0
    %v5725 = vadd.f32 %v5580, %v5724
    %v5726 = vpop.f32.mrb[0].mxu0
    %5727 = vmatprep.mubr.f32.mxu0 %v5444
    %5728 = vmatmul.mubr.f32.gmra.mrb[0].mxu0 %v5443
    %v5729 = vpop.f32.mrb[0].mxu0
    %v5730 = vadd.f32 %v5585, %v5729
    %v5731 = vpop.f32.mrb[0].mxu0
    %5732 = vmatprep.mubr.f32.mxu0 %v5448
    %5733 = vmatmul.mubr.f32.gmra.mrb[0].mxu0 %v5447
    %v5734 = vpop.f32.mrb[0].mxu0
    %v5735 = vadd.f32 %v5590, %v5734
    %v5736 = vpop.f32.mrb[0].mxu0
    %5737 = vmatprep.mubr.f32.mxu0 %v5452
    %5738 = vmatmul.mubr.f32.gmra.mrb[0].mxu0 %v5451
    %v5739 = vpop.f32.mrb[0].mxu0
    %v5740 = vadd.f32 %v5595, %v5739
    %v5741 = vpop.f32.mrb[0].mxu0
    %5742 = vdwg.mxu0
    %s5743 = scalar_lea.vmem [#allocation7], 64
    %v5744 = vld [vmem:[%s5743] sm:$0xff]
    %v5746 = vsel %vm1605, %v5665, 0
    %v5749 = vsel %vm1605, %v5670, 0
    %v5752 = vsel %vm1605, %v5675, 0
    %v5755 = vsel %vm1605, %v5680, 0
    %v5758 = vsel %vm1605, %v5685, 0
    %v5761 = vsel %vm1605, %v5690, 0
    %v5764 = vsel %vm1605, %v5695, 0
    %v5767 = vsel %vm1605, %v5700, 0
    %v5770 = vsel %vm1605, %v5705, 0
    %v5773 = vsel %vm1605, %v5710, 0
    %v5776 = vsel %vm1605, %v5715, 0
    %v5779 = vsel %vm1605, %v5720, 0
    %v5782 = vsel %vm1605, %v5725, 0
    %v5785 = vsel %vm1605, %v5730, 0
    %v5788 = vsel %vm1605, %v5735, 0
    %v5791 = vsel %vm1605, %v5740, 0
    %5793 = vmatprep.subr.mxu0 0.0
    %5794 = vmatpush1.msra.mxu0 %v5744
    %5795 = vmatprep.subr.mxu0 0.0
    %5796 = vmatpush1.msra.mxu0 0.0
    %5797 = vmatprep.subr.mxu0 0.0
    %5798 = vmatpush1.msra.mxu0 0.0
    %5799 = vmatprep.subr.mxu0 0.0
    %5800 = vmatpush1.msra.mxu0 0.0
    %5801 = vmatprep.subr.mxu0 0.0
    %5802 = vmatpush1.msra.mxu0 0.0
    %5803 = vmatprep.subr.mxu0 0.0
    %5804 = vmatpush1.msra.mxu0 0.0
    %5805 = vmatprep.subr.mxu0 0.0
    %5806 = vmatpush1.msra.mxu0 0.0
    %5807 = vmatprep.subr.mxu0 0.0
    %5808 = vmatpush1.msra.mxu0 0.0
    %5809 = vmatprep.subr.mxu0 0.0
    %5810 = vmatpush1.msra.mxu0 0.0
    %5811 = vmatprep.subr.mxu0 0.0
    %5812 = vmatpush1.msra.mxu0 0.0
    %5813 = vmatprep.subr.mxu0 0.0
    %5814 = vmatpush1.msra.mxu0 0.0
    %5815 = vmatprep.subr.mxu0 0.0
    %5816 = vmatpush1.msra.mxu0 0.0
    %5817 = vmatprep.subr.mxu0 0.0
    %5818 = vmatpush1.msra.mxu0 0.0
    %5819 = vmatprep.subr.mxu0 0.0
    %5820 = vmatpush1.msra.mxu0 0.0
    %5821 = vmatprep.subr.mxu0 0.0
    %5822 = vmatpush1.msra.mxu0 0.0
    %5823 = vmatprep.subr.mxu0 0.0
    %5824 = vmatpush1.msra.mxu0 0.0
    %5825 = vmatprep.subr.mxu0 0.0
    %5826 = vmatpush1.msra.mxu0 0.0
    %5827 = vmatprep.subr.mxu0 0.0
    %5828 = vmatpush1.msra.mxu0 0.0
    %5829 = vmatprep.subr.mxu0 0.0
    %5830 = vmatpush1.msra.mxu0 0.0
    %5831 = vmatprep.subr.mxu0 0.0
    %5832 = vmatpush1.msra.mxu0 0.0
    %5833 = vmatprep.subr.mxu0 0.0
    %5834 = vmatpush1.msra.mxu0 0.0
    %5835 = vmatprep.subr.mxu0 0.0
    %5836 = vmatpush1.msra.mxu0 0.0
    %5837 = vmatprep.subr.mxu0 0.0
    %5838 = vmatpush1.msra.mxu0 0.0
    %5839 = vmatprep.subr.mxu0 0.0
    %5840 = vmatpush1.msra.mxu0 0.0
    %5841 = vmatprep.subr.mxu0 0.0
    %5842 = vmatpush1.msra.mxu0 0.0
    %5843 = vmatprep.subr.mxu0 0.0
    %5844 = vmatpush1.msra.mxu0 0.0
    %5845 = vmatprep.subr.mxu0 0.0
    %5846 = vmatpush1.msra.mxu0 0.0
    %5847 = vmatprep.subr.mxu0 0.0
    %5848 = vmatpush1.msra.mxu0 0.0
    %5849 = vmatprep.subr.mxu0 0.0
    %5850 = vmatpush1.msra.mxu0 0.0
    %5851 = vmatprep.subr.mxu0 0.0
    %5852 = vmatpush1.msra.mxu0 0.0
    %5853 = vmatprep.subr.mxu0 0.0
    %5854 = vmatpush1.msra.mxu0 0.0
    %5855 = vmatprep.subr.mxu0 0.0
    %5856 = vmatpush1.msra.mxu0 0.0
    %5857 = vmatprep.mubr.f32.mxu0 0.0
    %5858 = vmatmul.mubr.f32.gmra.mrb[0].mxu0 %v5746
    %v5859 = vpop.f32.mrb[0].mxu0
    %v5860 = vadd.f32 0.0, %v5859
    %v5861 = vpop.f32.mrb[0].mxu0
    %5862 = vmatprep.mubr.f32.mxu0 0.0
    %5863 = vmatmul.mubr.f32.gmra.mrb[0].mxu0 %v5749
    %v5864 = vpop.f32.mrb[0].mxu0
    %v5865 = vadd.f32 0.0, %v5864
    %v5866 = vpop.f32.mrb[0].mxu0
    %5867 = vmatprep.mubr.f32.mxu0 0.0
    %5868 = vmatmul.mubr.f32.gmra.mrb[0].mxu0 %v5752
    %v5869 = vpop.f32.mrb[0].mxu0
    %v5870 = vadd.f32 0.0, %v5869
    %v5871 = vpop.f32.mrb[0].mxu0
    %5872 = vmatprep.mubr.f32.mxu0 0.0
    %5873 = vmatmul.mubr.f32.gmra.mrb[0].mxu0 %v5755
    %v5874 = vpop.f32.mrb[0].mxu0
    %v5875 = vadd.f32 0.0, %v5874
    %v5876 = vpop.f32.mrb[0].mxu0
    %5877 = vmatprep.mubr.f32.mxu0 0.0
    %5878 = vmatmul.mubr.f32.gmra.mrb[0].mxu0 %v5758
    %v5879 = vpop.f32.mrb[0].mxu0
    %v5880 = vadd.f32 0.0, %v5879
    %v5881 = vpop.f32.mrb[0].mxu0
    %5882 = vmatprep.mubr.f32.mxu0 0.0
    %5883 = vmatmul.mubr.f32.gmra.mrb[0].mxu0 %v5761
    %v5884 = vpop.f32.mrb[0].mxu0
    %v5885 = vadd.f32 0.0, %v5884
    %v5886 = vpop.f32.mrb[0].mxu0
    %5887 = vmatprep.mubr.f32.mxu0 0.0
    %5888 = vmatmul.mubr.f32.gmra.mrb[0].mxu0 %v5764
    %v5889 = vpop.f32.mrb[0].mxu0
    %v5890 = vadd.f32 0.0, %v5889
    %v5891 = vpop.f32.mrb[0].mxu0
    %5892 = vmatprep.mubr.f32.mxu0 0.0
    %5893 = vmatmul.mubr.f32.gmra.mrb[0].mxu0 %v5767
    %v5894 = vpop.f32.mrb[0].mxu0
    %v5895 = vadd.f32 0.0, %v5894
    %v5896 = vpop.f32.mrb[0].mxu0
    %5897 = vmatprep.mubr.f32.mxu0 0.0
    %5898 = vmatmul.mubr.f32.gmra.mrb[0].mxu0 %v5770
    %v5899 = vpop.f32.mrb[0].mxu0
    %v5900 = vadd.f32 0.0, %v5899
    %v5901 = vpop.f32.mrb[0].mxu0
    %5902 = vmatprep.mubr.f32.mxu0 0.0
    %5903 = vmatmul.mubr.f32.gmra.mrb[0].mxu0 %v5773
    %v5904 = vpop.f32.mrb[0].mxu0
    %v5905 = vadd.f32 0.0, %v5904
    %v5906 = vpop.f32.mrb[0].mxu0
    %5907 = vmatprep.mubr.f32.mxu0 0.0
    %5908 = vmatmul.mubr.f32.gmra.mrb[0].mxu0 %v5776
    %v5909 = vpop.f32.mrb[0].mxu0
    %v5910 = vadd.f32 0.0, %v5909
    %v5911 = vpop.f32.mrb[0].mxu0
    %5912 = vmatprep.mubr.f32.mxu0 0.0
    %5913 = vmatmul.mubr.f32.gmra.mrb[0].mxu0 %v5779
    %v5914 = vpop.f32.mrb[0].mxu0
    %v5915 = vadd.f32 0.0, %v5914
    %v5916 = vpop.f32.mrb[0].mxu0
    %5917 = vmatprep.mubr.f32.mxu0 0.0
    %5918 = vmatmul.mubr.f32.gmra.mrb[0].mxu0 %v5782
    %v5919 = vpop.f32.mrb[0].mxu0
    %v5920 = vadd.f32 0.0, %v5919
    %v5921 = vpop.f32.mrb[0].mxu0
    %5922 = vmatprep.mubr.f32.mxu0 0.0
    %5923 = vmatmul.mubr.f32.gmra.mrb[0].mxu0 %v5785
    %v5924 = vpop.f32.mrb[0].mxu0
    %v5925 = vadd.f32 0.0, %v5924
    %v5926 = vpop.f32.mrb[0].mxu0
    %5927 = vmatprep.mubr.f32.mxu0 0.0
    %5928 = vmatmul.mubr.f32.gmra.mrb[0].mxu0 %v5788
    %v5929 = vpop.f32.mrb[0].mxu0
    %v5930 = vadd.f32 0.0, %v5929
    %v5931 = vpop.f32.mrb[0].mxu0
    %5932 = vmatprep.mubr.f32.mxu0 0.0
    %5933 = vmatmul.mubr.f32.gmra.mrb[0].mxu0 %v5791
    %v5934 = vpop.f32.mrb[0].mxu0
    %v5935 = vadd.f32 0.0, %v5934
    %v5936 = vpop.f32.mrb[0].mxu0
    %5937 = vdwg.mxu0
    %v5938 = vadd.f32 %v5372, %v5860
    %v5939 = vadd.f32 %v5373, %v5865
    %v5940 = vadd.f32 %v5374, %v5870
    %v5941 = vadd.f32 %v5375, %v5875
    %v5942 = vadd.f32 %v5376, %v5880
    %v5943 = vadd.f32 %v5377, %v5885
    %v5944 = vadd.f32 %v5378, %v5890
    %v5945 = vadd.f32 %v5379, %v5895
    %v5946 = vadd.f32 %v5380, %v5900
    %v5947 = vadd.f32 %v5381, %v5905
    %v5948 = vadd.f32 %v5382, %v5910
    %v5949 = vadd.f32 %v5383, %v5915
    %v5950 = vadd.f32 %v5384, %v5920
    %v5951 = vadd.f32 %v5385, %v5925
    %v5952 = vadd.f32 %v5386, %v5930
    %v5953 = vadd.f32 %v5387, %v5935
    %v5954 = vld [vmem:[#allocation8] sm:$0x1]
    %v5956 = vlaneseq
    %v5957 = vshrl.u32 %v5956, 7
    %v5958 = vsub.s32 0, %v5957
    %v5959 = vrot.slane %v5954, %v5958
    %v5961 = vadd.f32 %v5938, %v5959
    %v5962 = vadd.f32 %v5939, %v5959
    %v5963 = vadd.f32 %v5940, %v5959
    %v5964 = vadd.f32 %v5941, %v5959
    %v5965 = vadd.f32 %v5942, %v5959
    %v5966 = vadd.f32 %v5943, %v5959
    %v5967 = vadd.f32 %v5944, %v5959
    %v5968 = vadd.f32 %v5945, %v5959
    %v5969 = vadd.f32 %v5946, %v5959
    %v5970 = vadd.f32 %v5947, %v5959
    %v5971 = vadd.f32 %v5948, %v5959
    %v5972 = vadd.f32 %v5949, %v5959
    %v5973 = vadd.f32 %v5950, %v5959
    %v5974 = vadd.f32 %v5951, %v5959
    %v5975 = vadd.f32 %v5952, %v5959
    %v5976 = vadd.f32 %v5953, %v5959
    %v5977 = vmax.f32 %v5961, 0.0
    %v5978 = vmax.f32 %v5962, 0.0
    %v5979 = vmax.f32 %v5963, 0.0
    %v5980 = vmax.f32 %v5964, 0.0
    %v5981 = vmax.f32 %v5965, 0.0
    %v5982 = vmax.f32 %v5966, 0.0
    %v5983 = vmax.f32 %v5967, 0.0
    %v5984 = vmax.f32 %v5968, 0.0
    %v5985 = vmax.f32 %v5969, 0.0
    %v5986 = vmax.f32 %v5970, 0.0
    %v5987 = vmax.f32 %v5971, 0.0
    %v5988 = vmax.f32 %v5972, 0.0
    %v5989 = vmax.f32 %v5973, 0.0
    %v5990 = vmax.f32 %v5974, 0.0
    %v5991 = vmax.f32 %v5975, 0.0
    %v5992 = vmax.f32 %v5976, 0.0
    %v5993 = vld [vmem:[#allocation10] sm:$0xff]
    %v5994 = vld [vmem:[#allocation10 + $0x8] sm:$0xff]
    %v5995 = vld [vmem:[#allocation10 + $0x10] sm:$0xff]
    %v5996 = vld [vmem:[#allocation10 + $0x18] sm:$0xff]
    %5997 = vmatprep.subr.mxu0 0.0
    %5998 = vmatpush1.msra.mxu0 %v5977
    %5999 = vmatprep.subr.mxu0 0.0
    %6000 = vmatpush1.msra.mxu0 %v5978
    %6001 = vmatprep.subr.mxu0 0.0
    %6002 = vmatpush1.msra.mxu0 %v5979
    %6003 = vmatprep.subr.mxu0 0.0
    %6004 = vmatpush1.msra.mxu0 %v5980
    %6005 = vmatprep.subr.mxu0 0.0
    %6006 = vmatpush1.msra.mxu0 %v5981
    %6007 = vmatprep.subr.mxu0 0.0
    %6008 = vmatpush1.msra.mxu0 %v5982
    %6009 = vmatprep.subr.mxu0 0.0
    %6010 = vmatpush1.msra.mxu0 %v5983
    %6011 = vmatprep.subr.mxu0 0.0
    %6012 = vmatpush1.msra.mxu0 %v5984
    %6013 = vmatprep.subr.mxu0 0.0
    %6014 = vmatpush1.msra.mxu0 %v5985
    %6015 = vmatprep.subr.mxu0 0.0
    %6016 = vmatpush1.msra.mxu0 %v5986
    %6017 = vmatprep.subr.mxu0 0.0
    %6018 = vmatpush1.msra.mxu0 %v5987
    %6019 = vmatprep.subr.mxu0 0.0
    %6020 = vmatpush1.msra.mxu0 %v5988
    %6021 = vmatprep.subr.mxu0 0.0
    %6022 = vmatpush1.msra.mxu0 %v5989
    %6023 = vmatprep.subr.mxu0 0.0
    %6024 = vmatpush1.msra.mxu0 %v5990
    %6025 = vmatprep.subr.mxu0 0.0
    %6026 = vmatpush1.msra.mxu0 %v5991
    %6027 = vmatprep.subr.mxu0 0.0
    %6028 = vmatpush1.msra.mxu0 %v5992
    %6029 = vmatprep.subr.mxu0 0.0
    %6030 = vmatpush1.msra.mxu0 0.0
    %6031 = vmatprep.subr.mxu0 0.0
    %6032 = vmatpush1.msra.mxu0 0.0
    %6033 = vmatprep.subr.mxu0 0.0
    %6034 = vmatpush1.msra.mxu0 0.0
    %6035 = vmatprep.subr.mxu0 0.0
    %6036 = vmatpush1.msra.mxu0 0.0
    %6037 = vmatprep.subr.mxu0 0.0
    %6038 = vmatpush1.msra.mxu0 0.0
    %6039 = vmatprep.subr.mxu0 0.0
    %6040 = vmatpush1.msra.mxu0 0.0
    %6041 = vmatprep.subr.mxu0 0.0
    %6042 = vmatpush1.msra.mxu0 0.0
    %6043 = vmatprep.subr.mxu0 0.0
    %6044 = vmatpush1.msra.mxu0 0.0
    %6045 = vmatprep.subr.mxu0 0.0
    %6046 = vmatpush1.msra.mxu0 0.0
    %6047 = vmatprep.subr.mxu0 0.0
    %6048 = vmatpush1.msra.mxu0 0.0
    %6049 = vmatprep.subr.mxu0 0.0
    %6050 = vmatpush1.msra.mxu0 0.0
    %6051 = vmatprep.subr.mxu0 0.0
    %6052 = vmatpush1.msra.mxu0 0.0
    %6053 = vmatprep.subr.mxu0 0.0
    %6054 = vmatpush1.msra.mxu0 0.0
    %6055 = vmatprep.subr.mxu0 0.0
    %6056 = vmatpush1.msra.mxu0 0.0
    %6057 = vmatprep.subr.mxu0 0.0
    %6058 = vmatpush1.msra.mxu0 0.0
    %6059 = vmatprep.subr.mxu0 0.0
    %6060 = vmatpush1.msra.mxu0 0.0
    %6061 = vmatprep.mubr.f32.mxu0 0.0
    %6062 = vmatmul.mubr.f32.gmra.mrb[0].mxu0 %v5993
    %v6063 = vpop.f32.mrb[0].mxu0
    %v6064 = vadd.f32 0.0, %v6063
    %v6065 = vpop.f32.mrb[0].mxu0
    %6066 = vmatprep.mubr.f32.mxu0 0.0
    %6067 = vmatmul.mubr.f32.gmra.mrb[0].mxu0 %v5994
    %v6068 = vpop.f32.mrb[0].mxu0
    %v6069 = vadd.f32 0.0, %v6068
    %v6070 = vpop.f32.mrb[0].mxu0
    %6071 = vmatprep.mubr.f32.mxu0 0.0
    %6072 = vmatmul.mubr.f32.gmra.mrb[0].mxu0 %v5995
    %v6073 = vpop.f32.mrb[0].mxu0
    %v6074 = vadd.f32 0.0, %v6073
    %v6075 = vpop.f32.mrb[0].mxu0
    %6076 = vmatprep.mubr.f32.mxu0 0.0
    %6077 = vmatmul.mubr.f32.gmra.mrb[0].mxu0 %v5996
    %v6078 = vpop.f32.mrb[0].mxu0
    %v6079 = vadd.f32 0.0, %v6078
    %v6080 = vpop.f32.mrb[0].mxu0
    %6081 = vdwg.mxu0
    %v6082 = vld [vmem:[#allocation11] sm:$0xff]
    %v6083 = vld [vmem:[#allocation11 + $0x8] sm:$0xff]
    %s6084 = scalar_lea.vmem [#allocation10], 32
    %v6085 = vld [vmem:[%s6084] sm:$0xff]
    %v6086 = vld [vmem:[%s6084 + $0x8] sm:$0xff]
    %v6087 = vld [vmem:[%s6084 + $0x10] sm:$0xff]
    %v6088 = vld [vmem:[%s6084 + $0x18] sm:$0xff]
    %6089 = vmatprep.subr.mxu0 0.0
    %6090 = vmatpush1.msra.mxu0 %v5977
    %6091 = vmatprep.subr.mxu0 0.0
    %6092 = vmatpush1.msra.mxu0 %v5978
    %6093 = vmatprep.subr.mxu0 0.0
    %6094 = vmatpush1.msra.mxu0 %v5979
    %6095 = vmatprep.subr.mxu0 0.0
    %6096 = vmatpush1.msra.mxu0 %v5980
    %6097 = vmatprep.subr.mxu0 0.0
    %6098 = vmatpush1.msra.mxu0 %v5981
    %6099 = vmatprep.subr.mxu0 0.0
    %6100 = vmatpush1.msra.mxu0 %v5982
    %6101 = vmatprep.subr.mxu0 0.0
    %6102 = vmatpush1.msra.mxu0 %v5983
    %6103 = vmatprep.subr.mxu0 0.0
    %6104 = vmatpush1.msra.mxu0 %v5984
    %6105 = vmatprep.subr.mxu0 0.0
    %6106 = vmatpush1.msra.mxu0 %v5985
    %6107 = vmatprep.subr.mxu0 0.0
    %6108 = vmatpush1.msra.mxu0 %v5986
    %6109 = vmatprep.subr.mxu0 0.0
    %6110 = vmatpush1.msra.mxu0 %v5987
    %6111 = vmatprep.subr.mxu0 0.0
    %6112 = vmatpush1.msra.mxu0 %v5988
    %6113 = vmatprep.subr.mxu0 0.0
    %6114 = vmatpush1.msra.mxu0 %v5989
    %6115 = vmatprep.subr.mxu0 0.0
    %6116 = vmatpush1.msra.mxu0 %v5990
    %6117 = vmatprep.subr.mxu0 0.0
    %6118 = vmatpush1.msra.mxu0 %v5991
    %6119 = vmatprep.subr.mxu0 0.0
    %6120 = vmatpush1.msra.mxu0 %v5992
    %6121 = vmatprep.subr.mxu0 0.0
    %6122 = vmatpush1.msra.mxu0 0.0
    %6123 = vmatprep.subr.mxu0 0.0
    %6124 = vmatpush1.msra.mxu0 0.0
    %6125 = vmatprep.subr.mxu0 0.0
    %6126 = vmatpush1.msra.mxu0 0.0
    %6127 = vmatprep.subr.mxu0 0.0
    %6128 = vmatpush1.msra.mxu0 0.0
    %6129 = vmatprep.subr.mxu0 0.0
    %6130 = vmatpush1.msra.mxu0 0.0
    %6131 = vmatprep.subr.mxu0 0.0
    %6132 = vmatpush1.msra.mxu0 0.0
    %6133 = vmatprep.subr.mxu0 0.0
    %6134 = vmatpush1.msra.mxu0 0.0
    %6135 = vmatprep.subr.mxu0 0.0
    %6136 = vmatpush1.msra.mxu0 0.0
    %6137 = vmatprep.subr.mxu0 0.0
    %6138 = vmatpush1.msra.mxu0 0.0
    %6139 = vmatprep.subr.mxu0 0.0
    %6140 = vmatpush1.msra.mxu0 0.0
    %6141 = vmatprep.subr.mxu0 0.0
    %6142 = vmatpush1.msra.mxu0 0.0
    %6143 = vmatprep.subr.mxu0 0.0
    %6144 = vmatpush1.msra.mxu0 0.0
    %6145 = vmatprep.subr.mxu0 0.0
    %6146 = vmatpush1.msra.mxu0 0.0
    %6147 = vmatprep.subr.mxu0 0.0
    %6148 = vmatpush1.msra.mxu0 0.0
    %6149 = vmatprep.subr.mxu0 0.0
    %6150 = vmatpush1.msra.mxu0 0.0
    %6151 = vmatprep.subr.mxu0 0.0
    %6152 = vmatpush1.msra.mxu0 0.0
    %6153 = vmatprep.mubr.f32.mxu0 0.0
    %6154 = vmatmul.mubr.f32.gmra.mrb[0].mxu0 %v6085
    %v6155 = vpop.f32.mrb[0].mxu0
    %v6156 = vadd.f32 0.0, %v6155
    %v6157 = vpop.f32.mrb[0].mxu0
    %6158 = vmatprep.mubr.f32.mxu0 0.0
    %6159 = vmatmul.mubr.f32.gmra.mrb[0].mxu0 %v6086
    %v6160 = vpop.f32.mrb[0].mxu0
    %v6161 = vadd.f32 0.0, %v6160
    %v6162 = vpop.f32.mrb[0].mxu0
    %6163 = vmatprep.mubr.f32.mxu0 0.0
    %6164 = vmatmul.mubr.f32.gmra.mrb[0].mxu0 %v6087
    %v6165 = vpop.f32.mrb[0].mxu0
    %v6166 = vadd.f32 0.0, %v6165
    %v6167 = vpop.f32.mrb[0].mxu0
    %6168 = vmatprep.mubr.f32.mxu0 0.0
    %6169 = vmatmul.mubr.f32.gmra.mrb[0].mxu0 %v6088
    %v6170 = vpop.f32.mrb[0].mxu0
    %v6171 = vadd.f32 0.0, %v6170
    %v6172 = vpop.f32.mrb[0].mxu0
    %6173 = vdwg.mxu0
    %s6174 = scalar_lea.vmem [#allocation11], 16
    %v6175 = vld [vmem:[%s6174] sm:$0xff]
    %v6176 = vld [vmem:[%s6174 + $0x8] sm:$0xff]
    %vm6177 = vcmask 130048
    %v6179 = vsel %vm6177, %v6156, 0
    %v6182 = vsel %vm6177, %v6161, 0
    %v6185 = vsel %vm6177, %v6166, 0
    %v6188 = vsel %vm6177, %v6171, 0
    %6190 = vmatprep.subr.mxu0 0.0
    %6191 = vmatpush1.msra.mxu0 %v6175
    %6192 = vmatprep.subr.mxu0 0.0
    %6193 = vmatpush1.msra.mxu0 %v6176
    %6194 = vmatprep.subr.mxu0 0.0
    %6195 = vmatpush1.msra.mxu0 0.0
    %6196 = vmatprep.subr.mxu0 0.0
    %6197 = vmatpush1.msra.mxu0 0.0
    %6198 = vmatprep.subr.mxu0 0.0
    %6199 = vmatpush1.msra.mxu0 0.0
    %6200 = vmatprep.subr.mxu0 0.0
    %6201 = vmatpush1.msra.mxu0 0.0
    %6202 = vmatprep.subr.mxu0 0.0
    %6203 = vmatpush1.msra.mxu0 0.0
    %6204 = vmatprep.subr.mxu0 0.0
    %6205 = vmatpush1.msra.mxu0 0.0
    %6206 = vmatprep.subr.mxu0 0.0
    %6207 = vmatpush1.msra.mxu0 0.0
    %6208 = vmatprep.subr.mxu0 0.0
    %6209 = vmatpush1.msra.mxu0 0.0
    %6210 = vmatprep.subr.mxu0 0.0
    %6211 = vmatpush1.msra.mxu0 0.0
    %6212 = vmatprep.subr.mxu0 0.0
    %6213 = vmatpush1.msra.mxu0 0.0
    %6214 = vmatprep.subr.mxu0 0.0
    %6215 = vmatpush1.msra.mxu0 0.0
    %6216 = vmatprep.subr.mxu0 0.0
    %6217 = vmatpush1.msra.mxu0 0.0
    %6218 = vmatprep.subr.mxu0 0.0
    %6219 = vmatpush1.msra.mxu0 0.0
    %6220 = vmatprep.subr.mxu0 0.0
    %6221 = vmatpush1.msra.mxu0 0.0
    %6222 = vmatprep.subr.mxu0 0.0
    %6223 = vmatpush1.msra.mxu0 0.0
    %6224 = vmatprep.subr.mxu0 0.0
    %6225 = vmatpush1.msra.mxu0 0.0
    %6226 = vmatprep.subr.mxu0 0.0
    %6227 = vmatpush1.msra.mxu0 0.0
    %6228 = vmatprep.subr.mxu0 0.0
    %6229 = vmatpush1.msra.mxu0 0.0
    %6230 = vmatprep.subr.mxu0 0.0
    %6231 = vmatpush1.msra.mxu0 0.0
    %6232 = vmatprep.subr.mxu0 0.0
    %6233 = vmatpush1.msra.mxu0 0.0
    %6234 = vmatprep.subr.mxu0 0.0
    %6235 = vmatpush1.msra.mxu0 0.0
    %6236 = vmatprep.subr.mxu0 0.0
    %6237 = vmatpush1.msra.mxu0 0.0
    %6238 = vmatprep.subr.mxu0 0.0
    %6239 = vmatpush1.msra.mxu0 0.0
    %6240 = vmatprep.subr.mxu0 0.0
    %6241 = vmatpush1.msra.mxu0 0.0
    %6242 = vmatprep.subr.mxu0 0.0
    %6243 = vmatpush1.msra.mxu0 0.0
    %6244 = vmatprep.subr.mxu0 0.0
    %6245 = vmatpush1.msra.mxu0 0.0
    %6246 = vmatprep.subr.mxu0 0.0
    %6247 = vmatpush1.msra.mxu0 0.0
    %6248 = vmatprep.subr.mxu0 0.0
    %6249 = vmatpush1.msra.mxu0 0.0
    %6250 = vmatprep.subr.mxu0 0.0
    %6251 = vmatpush1.msra.mxu0 0.0
    %6252 = vmatprep.subr.mxu0 0.0
    %6253 = vmatpush1.msra.mxu0 0.0
    %6254 = vmatprep.mubr.f32.mxu0 0.0
    %6255 = vmatmul.mubr.f32.gmra.mrb[0].mxu0 %v6179
    %v6256 = vpop.f32.mrb[0].mxu0
    %v6257 = vadd.f32 0.0, %v6256
    %v6258 = vpop.f32.mrb[0].mxu0
    %6259 = vmatprep.mubr.f32.mxu0 0.0
    %6260 = vmatmul.mubr.f32.gmra.mrb[0].mxu0 %v6182
    %v6261 = vpop.f32.mrb[0].mxu0
    %v6262 = vadd.f32 0.0, %v6261
    %v6263 = vpop.f32.mrb[0].mxu0
    %6264 = vmatprep.mubr.f32.mxu0 0.0
    %6265 = vmatmul.mubr.f32.gmra.mrb[0].mxu0 %v6185
    %v6266 = vpop.f32.mrb[0].mxu0
    %v6267 = vadd.f32 0.0, %v6266
    %v6268 = vpop.f32.mrb[0].mxu0
    %6269 = vmatprep.mubr.f32.mxu0 0.0
    %6270 = vmatmul.mubr.f32.gmra.mrb[0].mxu0 %v6188
    %v6271 = vpop.f32.mrb[0].mxu0
    %v6272 = vadd.f32 0.0, %v6271
    %v6273 = vpop.f32.mrb[0].mxu0
    %6274 = vdwg.mxu0
    %v6276 = vsel %vm6177, %v6064, 0
    %v6279 = vsel %vm6177, %v6069, 0
    %v6282 = vsel %vm6177, %v6074, 0
    %v6285 = vsel %vm6177, %v6079, 0
    %6287 = vmatprep.subr.mxu0 0.0
    %6288 = vmatpush1.msra.mxu0 %v6082
    %6289 = vmatprep.subr.mxu0 0.0
    %6290 = vmatpush1.msra.mxu0 %v6083
    %6291 = vmatprep.subr.mxu0 0.0
    %6292 = vmatpush1.msra.mxu0 0.0
    %6293 = vmatprep.subr.mxu0 0.0
    %6294 = vmatpush1.msra.mxu0 0.0
    %6295 = vmatprep.subr.mxu0 0.0
    %6296 = vmatpush1.msra.mxu0 0.0
    %6297 = vmatprep.subr.mxu0 0.0
    %6298 = vmatpush1.msra.mxu0 0.0
    %6299 = vmatprep.subr.mxu0 0.0
    %6300 = vmatpush1.msra.mxu0 0.0
    %6301 = vmatprep.subr.mxu0 0.0
    %6302 = vmatpush1.msra.mxu0 0.0
    %6303 = vmatprep.subr.mxu0 0.0
    %6304 = vmatpush1.msra.mxu0 0.0
    %6305 = vmatprep.subr.mxu0 0.0
    %6306 = vmatpush1.msra.mxu0 0.0
    %6307 = vmatprep.subr.mxu0 0.0
    %6308 = vmatpush1.msra.mxu0 0.0
    %6309 = vmatprep.subr.mxu0 0.0
    %6310 = vmatpush1.msra.mxu0 0.0
    %6311 = vmatprep.subr.mxu0 0.0
    %6312 = vmatpush1.msra.mxu0 0.0
    %6313 = vmatprep.subr.mxu0 0.0
    %6314 = vmatpush1.msra.mxu0 0.0
    %6315 = vmatprep.subr.mxu0 0.0
    %6316 = vmatpush1.msra.mxu0 0.0
    %6317 = vmatprep.subr.mxu0 0.0
    %6318 = vmatpush1.msra.mxu0 0.0
    %6319 = vmatprep.subr.mxu0 0.0
    %6320 = vmatpush1.msra.mxu0 0.0
    %6321 = vmatprep.subr.mxu0 0.0
    %6322 = vmatpush1.msra.mxu0 0.0
    %6323 = vmatprep.subr.mxu0 0.0
    %6324 = vmatpush1.msra.mxu0 0.0
    %6325 = vmatprep.subr.mxu0 0.0
    %6326 = vmatpush1.msra.mxu0 0.0
    %6327 = vmatprep.subr.mxu0 0.0
    %6328 = vmatpush1.msra.mxu0 0.0
    %6329 = vmatprep.subr.mxu0 0.0
    %6330 = vmatpush1.msra.mxu0 0.0
    %6331 = vmatprep.subr.mxu0 0.0
    %6332 = vmatpush1.msra.mxu0 0.0
    %6333 = vmatprep.subr.mxu0 0.0
    %6334 = vmatpush1.msra.mxu0 0.0
    %6335 = vmatprep.subr.mxu0 0.0
    %6336 = vmatpush1.msra.mxu0 0.0
    %6337 = vmatprep.subr.mxu0 0.0
    %6338 = vmatpush1.msra.mxu0 0.0
    %6339 = vmatprep.subr.mxu0 0.0
    %6340 = vmatpush1.msra.mxu0 0.0
    %6341 = vmatprep.subr.mxu0 0.0
    %6342 = vmatpush1.msra.mxu0 0.0
    %6343 = vmatprep.subr.mxu0 0.0
    %6344 = vmatpush1.msra.mxu0 0.0
    %6345 = vmatprep.subr.mxu0 0.0
    %6346 = vmatpush1.msra.mxu0 0.0
    %6347 = vmatprep.subr.mxu0 0.0
    %6348 = vmatpush1.msra.mxu0 0.0
    %6349 = vmatprep.subr.mxu0 0.0
    %6350 = vmatpush1.msra.mxu0 0.0
    %6351 = vmatprep.mubr.f32.mxu0 0.0
    %6352 = vmatmul.mubr.f32.gmra.mrb[0].mxu0 %v6276
    %v6353 = vpop.f32.mrb[0].mxu0
    %v6354 = vadd.f32 %v6257, %v6353
    %v6355 = vpop.f32.mrb[0].mxu0
    %6356 = vmatprep.mubr.f32.mxu0 0.0
    %6357 = vmatmul.mubr.f32.gmra.mrb[0].mxu0 %v6279
    %v6358 = vpop.f32.mrb[0].mxu0
    %v6359 = vadd.f32 %v6262, %v6358
    %v6360 = vpop.f32.mrb[0].mxu0
    %6361 = vmatprep.mubr.f32.mxu0 0.0
    %6362 = vmatmul.mubr.f32.gmra.mrb[0].mxu0 %v6282
    %v6363 = vpop.f32.mrb[0].mxu0
    %v6364 = vadd.f32 %v6267, %v6363
    %v6365 = vpop.f32.mrb[0].mxu0
    %6366 = vmatprep.mubr.f32.mxu0 0.0
    %6367 = vmatmul.mubr.f32.gmra.mrb[0].mxu0 %v6285
    %v6368 = vpop.f32.mrb[0].mxu0
    %v6369 = vadd.f32 %v6272, %v6368
    %v6370 = vpop.f32.mrb[0].mxu0
    %6371 = vdwg.mxu0
    %s6372 = scalar_lea.vmem [#allocation10], 64
    %v6373 = vld [vmem:[%s6372] sm:$0xff]
    %v6374 = vld [vmem:[%s6372 + $0x8] sm:$0xff]
    %v6375 = vld [vmem:[%s6372 + $0x10] sm:$0xff]
    %v6376 = vld [vmem:[%s6372 + $0x18] sm:$0xff]
    %6377 = vmatprep.subr.mxu0 0.0
    %6378 = vmatpush1.msra.mxu0 %v5977
    %6379 = vmatprep.subr.mxu0 0.0
    %6380 = vmatpush1.msra.mxu0 %v5978
    %6381 = vmatprep.subr.mxu0 0.0
    %6382 = vmatpush1.msra.mxu0 %v5979
    %6383 = vmatprep.subr.mxu0 0.0
    %6384 = vmatpush1.msra.mxu0 %v5980
    %6385 = vmatprep.subr.mxu0 0.0
    %6386 = vmatpush1.msra.mxu0 %v5981
    %6387 = vmatprep.subr.mxu0 0.0
    %6388 = vmatpush1.msra.mxu0 %v5982
    %6389 = vmatprep.subr.mxu0 0.0
    %6390 = vmatpush1.msra.mxu0 %v5983
    %6391 = vmatprep.subr.mxu0 0.0
    %6392 = vmatpush1.msra.mxu0 %v5984
    %6393 = vmatprep.subr.mxu0 0.0
    %6394 = vmatpush1.msra.mxu0 %v5985
    %6395 = vmatprep.subr.mxu0 0.0
    %6396 = vmatpush1.msra.mxu0 %v5986
    %6397 = vmatprep.subr.mxu0 0.0
    %6398 = vmatpush1.msra.mxu0 %v5987
    %6399 = vmatprep.subr.mxu0 0.0
    %6400 = vmatpush1.msra.mxu0 %v5988
    %6401 = vmatprep.subr.mxu0 0.0
    %6402 = vmatpush1.msra.mxu0 %v5989
    %6403 = vmatprep.subr.mxu0 0.0
    %6404 = vmatpush1.msra.mxu0 %v5990
    %6405 = vmatprep.subr.mxu0 0.0
    %6406 = vmatpush1.msra.mxu0 %v5991
    %6407 = vmatprep.subr.mxu0 0.0
    %6408 = vmatpush1.msra.mxu0 %v5992
    %6409 = vmatprep.subr.mxu0 0.0
    %6410 = vmatpush1.msra.mxu0 0.0
    %6411 = vmatprep.subr.mxu0 0.0
    %6412 = vmatpush1.msra.mxu0 0.0
    %6413 = vmatprep.subr.mxu0 0.0
    %6414 = vmatpush1.msra.mxu0 0.0
    %6415 = vmatprep.subr.mxu0 0.0
    %6416 = vmatpush1.msra.mxu0 0.0
    %6417 = vmatprep.subr.mxu0 0.0
    %6418 = vmatpush1.msra.mxu0 0.0
    %6419 = vmatprep.subr.mxu0 0.0
    %6420 = vmatpush1.msra.mxu0 0.0
    %6421 = vmatprep.subr.mxu0 0.0
    %6422 = vmatpush1.msra.mxu0 0.0
    %6423 = vmatprep.subr.mxu0 0.0
    %6424 = vmatpush1.msra.mxu0 0.0
    %6425 = vmatprep.subr.mxu0 0.0
    %6426 = vmatpush1.msra.mxu0 0.0
    %6427 = vmatprep.subr.mxu0 0.0
    %6428 = vmatpush1.msra.mxu0 0.0
    %6429 = vmatprep.subr.mxu0 0.0
    %6430 = vmatpush1.msra.mxu0 0.0
    %6431 = vmatprep.subr.mxu0 0.0
    %6432 = vmatpush1.msra.mxu0 0.0
    %6433 = vmatprep.subr.mxu0 0.0
    %6434 = vmatpush1.msra.mxu0 0.0
    %6435 = vmatprep.subr.mxu0 0.0
    %6436 = vmatpush1.msra.mxu0 0.0
    %6437 = vmatprep.subr.mxu0 0.0
    %6438 = vmatpush1.msra.mxu0 0.0
    %6439 = vmatprep.subr.mxu0 0.0
    %6440 = vmatpush1.msra.mxu0 0.0
    %6441 = vmatprep.mubr.f32.mxu0 0.0
    %6442 = vmatmul.mubr.f32.gmra.mrb[0].mxu0 %v6373
    %v6443 = vpop.f32.mrb[0].mxu0
    %v6444 = vadd.f32 0.0, %v6443
    %v6445 = vpop.f32.mrb[0].mxu0
    %6446 = vmatprep.mubr.f32.mxu0 0.0
    %6447 = vmatmul.mubr.f32.gmra.mrb[0].mxu0 %v6374
    %v6448 = vpop.f32.mrb[0].mxu0
    %v6449 = vadd.f32 0.0, %v6448
    %v6450 = vpop.f32.mrb[0].mxu0
    %6451 = vmatprep.mubr.f32.mxu0 0.0
    %6452 = vmatmul.mubr.f32.gmra.mrb[0].mxu0 %v6375
    %v6453 = vpop.f32.mrb[0].mxu0
    %v6454 = vadd.f32 0.0, %v6453
    %v6455 = vpop.f32.mrb[0].mxu0
    %6456 = vmatprep.mubr.f32.mxu0 0.0
    %6457 = vmatmul.mubr.f32.gmra.mrb[0].mxu0 %v6376
    %v6458 = vpop.f32.mrb[0].mxu0
    %v6459 = vadd.f32 0.0, %v6458
    %v6460 = vpop.f32.mrb[0].mxu0
    %6461 = vdwg.mxu0
    %s6462 = scalar_lea.vmem [#allocation11], 32
    %v6463 = vld [vmem:[%s6462] sm:$0xff]
    %v6464 = vld [vmem:[%s6462 + $0x8] sm:$0xff]
    %v6466 = vsel %vm6177, %v6444, 0
    %v6469 = vsel %vm6177, %v6449, 0
    %v6472 = vsel %vm6177, %v6454, 0
    %v6475 = vsel %vm6177, %v6459, 0
    %6477 = vmatprep.subr.mxu0 0.0
    %6478 = vmatpush1.msra.mxu0 %v6463
    %6479 = vmatprep.subr.mxu0 0.0
    %6480 = vmatpush1.msra.mxu0 %v6464
    %6481 = vmatprep.subr.mxu0 0.0
    %6482 = vmatpush1.msra.mxu0 0.0
    %6483 = vmatprep.subr.mxu0 0.0
    %6484 = vmatpush1.msra.mxu0 0.0
    %6485 = vmatprep.subr.mxu0 0.0
    %6486 = vmatpush1.msra.mxu0 0.0
    %6487 = vmatprep.subr.mxu0 0.0
    %6488 = vmatpush1.msra.mxu0 0.0
    %6489 = vmatprep.subr.mxu0 0.0
    %6490 = vmatpush1.msra.mxu0 0.0
    %6491 = vmatprep.subr.mxu0 0.0
    %6492 = vmatpush1.msra.mxu0 0.0
    %6493 = vmatprep.subr.mxu0 0.0
    %6494 = vmatpush1.msra.mxu0 0.0
    %6495 = vmatprep.subr.mxu0 0.0
    %6496 = vmatpush1.msra.mxu0 0.0
    %6497 = vmatprep.subr.mxu0 0.0
    %6498 = vmatpush1.msra.mxu0 0.0
    %6499 = vmatprep.subr.mxu0 0.0
    %6500 = vmatpush1.msra.mxu0 0.0
    %6501 = vmatprep.subr.mxu0 0.0
    %6502 = vmatpush1.msra.mxu0 0.0
    %6503 = vmatprep.subr.mxu0 0.0
    %6504 = vmatpush1.msra.mxu0 0.0
    %6505 = vmatprep.subr.mxu0 0.0
    %6506 = vmatpush1.msra.mxu0 0.0
    %6507 = vmatprep.subr.mxu0 0.0
    %6508 = vmatpush1.msra.mxu0 0.0
    %6509 = vmatprep.subr.mxu0 0.0
    %6510 = vmatpush1.msra.mxu0 0.0
    %6511 = vmatprep.subr.mxu0 0.0
    %6512 = vmatpush1.msra.mxu0 0.0
    %6513 = vmatprep.subr.mxu0 0.0
    %6514 = vmatpush1.msra.mxu0 0.0
    %6515 = vmatprep.subr.mxu0 0.0
    %6516 = vmatpush1.msra.mxu0 0.0
    %6517 = vmatprep.subr.mxu0 0.0
    %6518 = vmatpush1.msra.mxu0 0.0
    %6519 = vmatprep.subr.mxu0 0.0
    %6520 = vmatpush1.msra.mxu0 0.0
    %6521 = vmatprep.subr.mxu0 0.0
    %6522 = vmatpush1.msra.mxu0 0.0
    %6523 = vmatprep.subr.mxu0 0.0
    %6524 = vmatpush1.msra.mxu0 0.0
    %6525 = vmatprep.subr.mxu0 0.0
    %6526 = vmatpush1.msra.mxu0 0.0
    %6527 = vmatprep.subr.mxu0 0.0
    %6528 = vmatpush1.msra.mxu0 0.0
    %6529 = vmatprep.subr.mxu0 0.0
    %6530 = vmatpush1.msra.mxu0 0.0
    %6531 = vmatprep.subr.mxu0 0.0
    %6532 = vmatpush1.msra.mxu0 0.0
    %6533 = vmatprep.subr.mxu0 0.0
    %6534 = vmatpush1.msra.mxu0 0.0
    %6535 = vmatprep.subr.mxu0 0.0
    %6536 = vmatpush1.msra.mxu0 0.0
    %6537 = vmatprep.subr.mxu0 0.0
    %6538 = vmatpush1.msra.mxu0 0.0
    %6539 = vmatprep.subr.mxu0 0.0
    %6540 = vmatpush1.msra.mxu0 0.0
    %6541 = vmatprep.mubr.f32.mxu0 0.0
    %6542 = vmatmul.mubr.f32.gmra.mrb[0].mxu0 %v6466
    %v6543 = vpop.f32.mrb[0].mxu0
    %v6544 = vadd.f32 0.0, %v6543
    %v6545 = vpop.f32.mrb[0].mxu0
    %6546 = vmatprep.mubr.f32.mxu0 0.0
    %6547 = vmatmul.mubr.f32.gmra.mrb[0].mxu0 %v6469
    %v6548 = vpop.f32.mrb[0].mxu0
    %v6549 = vadd.f32 0.0, %v6548
    %v6550 = vpop.f32.mrb[0].mxu0
    %6551 = vmatprep.mubr.f32.mxu0 0.0
    %6552 = vmatmul.mubr.f32.gmra.mrb[0].mxu0 %v6472
    %v6553 = vpop.f32.mrb[0].mxu0
    %v6554 = vadd.f32 0.0, %v6553
    %v6555 = vpop.f32.mrb[0].mxu0
    %6556 = vmatprep.mubr.f32.mxu0 0.0
    %6557 = vmatmul.mubr.f32.gmra.mrb[0].mxu0 %v6475
    %v6558 = vpop.f32.mrb[0].mxu0
    %v6559 = vadd.f32 0.0, %v6558
    %v6560 = vpop.f32.mrb[0].mxu0
    %6561 = vdwg.mxu0
    %v6562 = vadd.f32 %v6354, %v6544
    %v6563 = vadd.f32 %v6359, %v6549
    %v6564 = vadd.f32 %v6364, %v6554
    %v6565 = vadd.f32 %v6369, %v6559
    %s6566 = scalar_lea.vmem [#allocation10], 96
    %v6567 = vld [vmem:[%s6566] sm:$0xff]
    %v6568 = vld [vmem:[%s6566 + $0x8] sm:$0xff]
    %v6569 = vld [vmem:[%s6566 + $0x10] sm:$0xff]
    %v6570 = vld [vmem:[%s6566 + $0x18] sm:$0xff]
    %6571 = vmatprep.subr.mxu0 0.0
    %6572 = vmatpush1.msra.mxu0 %v5977
    %6573 = vmatprep.subr.mxu0 0.0
    %6574 = vmatpush1.msra.mxu0 %v5978
    %6575 = vmatprep.subr.mxu0 0.0
    %6576 = vmatpush1.msra.mxu0 %v5979
    %6577 = vmatprep.subr.mxu0 0.0
    %6578 = vmatpush1.msra.mxu0 %v5980
    %6579 = vmatprep.subr.mxu0 0.0
    %6580 = vmatpush1.msra.mxu0 %v5981
    %6581 = vmatprep.subr.mxu0 0.0
    %6582 = vmatpush1.msra.mxu0 %v5982
    %6583 = vmatprep.subr.mxu0 0.0
    %6584 = vmatpush1.msra.mxu0 %v5983
    %6585 = vmatprep.subr.mxu0 0.0
    %6586 = vmatpush1.msra.mxu0 %v5984
    %6587 = vmatprep.subr.mxu0 0.0
    %6588 = vmatpush1.msra.mxu0 %v5985
    %6589 = vmatprep.subr.mxu0 0.0
    %6590 = vmatpush1.msra.mxu0 %v5986
    %6591 = vmatprep.subr.mxu0 0.0
    %6592 = vmatpush1.msra.mxu0 %v5987
    %6593 = vmatprep.subr.mxu0 0.0
    %6594 = vmatpush1.msra.mxu0 %v5988
    %6595 = vmatprep.subr.mxu0 0.0
    %6596 = vmatpush1.msra.mxu0 %v5989
    %6597 = vmatprep.subr.mxu0 0.0
    %6598 = vmatpush1.msra.mxu0 %v5990
    %6599 = vmatprep.subr.mxu0 0.0
    %6600 = vmatpush1.msra.mxu0 %v5991
    %6601 = vmatprep.subr.mxu0 0.0
    %6602 = vmatpush1.msra.mxu0 %v5992
    %6603 = vmatprep.subr.mxu0 0.0
    %6604 = vmatpush1.msra.mxu0 0.0
    %6605 = vmatprep.subr.mxu0 0.0
    %6606 = vmatpush1.msra.mxu0 0.0
    %6607 = vmatprep.subr.mxu0 0.0
    %6608 = vmatpush1.msra.mxu0 0.0
    %6609 = vmatprep.subr.mxu0 0.0
    %6610 = vmatpush1.msra.mxu0 0.0
    %6611 = vmatprep.subr.mxu0 0.0
    %6612 = vmatpush1.msra.mxu0 0.0
    %6613 = vmatprep.subr.mxu0 0.0
    %6614 = vmatpush1.msra.mxu0 0.0
    %6615 = vmatprep.subr.mxu0 0.0
    %6616 = vmatpush1.msra.mxu0 0.0
    %6617 = vmatprep.subr.mxu0 0.0
    %6618 = vmatpush1.msra.mxu0 0.0
    %6619 = vmatprep.subr.mxu0 0.0
    %6620 = vmatpush1.msra.mxu0 0.0
    %6621 = vmatprep.subr.mxu0 0.0
    %6622 = vmatpush1.msra.mxu0 0.0
    %6623 = vmatprep.subr.mxu0 0.0
    %6624 = vmatpush1.msra.mxu0 0.0
    %6625 = vmatprep.subr.mxu0 0.0
    %6626 = vmatpush1.msra.mxu0 0.0
    %6627 = vmatprep.subr.mxu0 0.0
    %6628 = vmatpush1.msra.mxu0 0.0
    %6629 = vmatprep.subr.mxu0 0.0
    %6630 = vmatpush1.msra.mxu0 0.0
    %6631 = vmatprep.subr.mxu0 0.0
    %6632 = vmatpush1.msra.mxu0 0.0
    %6633 = vmatprep.subr.mxu0 0.0
    %6634 = vmatpush1.msra.mxu0 0.0
    %6635 = vmatprep.mubr.f32.mxu0 0.0
    %6636 = vmatmul.mubr.f32.gmra.mrb[0].mxu0 %v6567
    %v6637 = vpop.f32.mrb[0].mxu0
    %v6638 = vadd.f32 0.0, %v6637
    %v6639 = vpop.f32.mrb[0].mxu0
    %6640 = vmatprep.mubr.f32.mxu0 0.0
    %6641 = vmatmul.mubr.f32.gmra.mrb[0].mxu0 %v6568
    %v6642 = vpop.f32.mrb[0].mxu0
    %v6643 = vadd.f32 0.0, %v6642
    %v6644 = vpop.f32.mrb[0].mxu0
    %6645 = vmatprep.mubr.f32.mxu0 0.0
    %6646 = vmatmul.mubr.f32.gmra.mrb[0].mxu0 %v6569
    %v6647 = vpop.f32.mrb[0].mxu0
    %v6648 = vadd.f32 0.0, %v6647
    %v6649 = vpop.f32.mrb[0].mxu0
    %6650 = vmatprep.mubr.f32.mxu0 0.0
    %6651 = vmatmul.mubr.f32.gmra.mrb[0].mxu0 %v6570
    %v6652 = vpop.f32.mrb[0].mxu0
    %v6653 = vadd.f32 0.0, %v6652
    %v6654 = vpop.f32.mrb[0].mxu0
    %6655 = vdwg.mxu0
    %s6656 = scalar_lea.vmem [#allocation11], 48
    %v6657 = vld [vmem:[%s6656] sm:$0xff]
    %v6658 = vld [vmem:[%s6656 + $0x8] sm:$0xff]
    %v6660 = vsel %vm6177, %v6638, 0
    %v6663 = vsel %vm6177, %v6643, 0
    %v6666 = vsel %vm6177, %v6648, 0
    %v6669 = vsel %vm6177, %v6653, 0
    %6671 = vmatprep.subr.mxu0 0.0
    %6672 = vmatpush1.msra.mxu0 %v6657
    %6673 = vmatprep.subr.mxu0 0.0
    %6674 = vmatpush1.msra.mxu0 %v6658
    %6675 = vmatprep.subr.mxu0 0.0
    %6676 = vmatpush1.msra.mxu0 0.0
    %6677 = vmatprep.subr.mxu0 0.0
    %6678 = vmatpush1.msra.mxu0 0.0
    %6679 = vmatprep.subr.mxu0 0.0
    %6680 = vmatpush1.msra.mxu0 0.0
    %6681 = vmatprep.subr.mxu0 0.0
    %6682 = vmatpush1.msra.mxu0 0.0
    %6683 = vmatprep.subr.mxu0 0.0
    %6684 = vmatpush1.msra.mxu0 0.0
    %6685 = vmatprep.subr.mxu0 0.0
    %6686 = vmatpush1.msra.mxu0 0.0
    %6687 = vmatprep.subr.mxu0 0.0
    %6688 = vmatpush1.msra.mxu0 0.0
    %6689 = vmatprep.subr.mxu0 0.0
    %6690 = vmatpush1.msra.mxu0 0.0
    %6691 = vmatprep.subr.mxu0 0.0
    %6692 = vmatpush1.msra.mxu0 0.0
    %6693 = vmatprep.subr.mxu0 0.0
    %6694 = vmatpush1.msra.mxu0 0.0
    %6695 = vmatprep.subr.mxu0 0.0
    %6696 = vmatpush1.msra.mxu0 0.0
    %6697 = vmatprep.subr.mxu0 0.0
    %6698 = vmatpush1.msra.mxu0 0.0
    %6699 = vmatprep.subr.mxu0 0.0
    %6700 = vmatpush1.msra.mxu0 0.0
    %6701 = vmatprep.subr.mxu0 0.0
    %6702 = vmatpush1.msra.mxu0 0.0
    %6703 = vmatprep.subr.mxu0 0.0
    %6704 = vmatpush1.msra.mxu0 0.0
    %6705 = vmatprep.subr.mxu0 0.0
    %6706 = vmatpush1.msra.mxu0 0.0
    %6707 = vmatprep.subr.mxu0 0.0
    %6708 = vmatpush1.msra.mxu0 0.0
    %6709 = vmatprep.subr.mxu0 0.0
    %6710 = vmatpush1.msra.mxu0 0.0
    %6711 = vmatprep.subr.mxu0 0.0
    %6712 = vmatpush1.msra.mxu0 0.0
    %6713 = vmatprep.subr.mxu0 0.0
    %6714 = vmatpush1.msra.mxu0 0.0
    %6715 = vmatprep.subr.mxu0 0.0
    %6716 = vmatpush1.msra.mxu0 0.0
    %6717 = vmatprep.subr.mxu0 0.0
    %6718 = vmatpush1.msra.mxu0 0.0
    %6719 = vmatprep.subr.mxu0 0.0
    %6720 = vmatpush1.msra.mxu0 0.0
    %6721 = vmatprep.subr.mxu0 0.0
    %6722 = vmatpush1.msra.mxu0 0.0
    %6723 = vmatprep.subr.mxu0 0.0
    %6724 = vmatpush1.msra.mxu0 0.0
    %6725 = vmatprep.subr.mxu0 0.0
    %6726 = vmatpush1.msra.mxu0 0.0
    %6727 = vmatprep.subr.mxu0 0.0
    %6728 = vmatpush1.msra.mxu0 0.0
    %6729 = vmatprep.subr.mxu0 0.0
    %6730 = vmatpush1.msra.mxu0 0.0
    %6731 = vmatprep.subr.mxu0 0.0
    %6732 = vmatpush1.msra.mxu0 0.0
    %6733 = vmatprep.subr.mxu0 0.0
    %6734 = vmatpush1.msra.mxu0 0.0
    %6735 = vmatprep.mubr.f32.mxu0 0.0
    %6736 = vmatmul.mubr.f32.gmra.mrb[0].mxu0 %v6660
    %v6737 = vpop.f32.mrb[0].mxu0
    %v6738 = vadd.f32 0.0, %v6737
    %v6739 = vpop.f32.mrb[0].mxu0
    %6740 = vmatprep.mubr.f32.mxu0 0.0
    %6741 = vmatmul.mubr.f32.gmra.mrb[0].mxu0 %v6663
    %v6742 = vpop.f32.mrb[0].mxu0
    %v6743 = vadd.f32 0.0, %v6742
    %v6744 = vpop.f32.mrb[0].mxu0
    %6745 = vmatprep.mubr.f32.mxu0 0.0
    %6746 = vmatmul.mubr.f32.gmra.mrb[0].mxu0 %v6666
    %v6747 = vpop.f32.mrb[0].mxu0
    %v6748 = vadd.f32 0.0, %v6747
    %v6749 = vpop.f32.mrb[0].mxu0
    %6750 = vmatprep.mubr.f32.mxu0 0.0
    %6751 = vmatmul.mubr.f32.gmra.mrb[0].mxu0 %v6669
    %v6752 = vpop.f32.mrb[0].mxu0
    %v6753 = vadd.f32 0.0, %v6752
    %v6754 = vpop.f32.mrb[0].mxu0
    %6755 = vdwg.mxu0
    %v6756 = vadd.f32 %v6562, %v6738
    %v6757 = vadd.f32 %v6563, %v6743
    %v6758 = vadd.f32 %v6564, %v6748
    %v6759 = vadd.f32 %v6565, %v6753
    %s6760 = scalar_lea.vmem [#allocation10], 128
    %v6761 = vld [vmem:[%s6760] sm:$0xff]
    %v6762 = vld [vmem:[%s6760 + $0x8] sm:$0xff]
    %v6763 = vld [vmem:[%s6760 + $0x10] sm:$0xff]
    %v6764 = vld [vmem:[%s6760 + $0x18] sm:$0xff]
    %6765 = vmatprep.subr.mxu0 0.0
    %6766 = vmatpush1.msra.mxu0 %v5977
    %6767 = vmatprep.subr.mxu0 0.0
    %6768 = vmatpush1.msra.mxu0 %v5978
    %6769 = vmatprep.subr.mxu0 0.0
    %6770 = vmatpush1.msra.mxu0 %v5979
    %6771 = vmatprep.subr.mxu0 0.0
    %6772 = vmatpush1.msra.mxu0 %v5980
    %6773 = vmatprep.subr.mxu0 0.0
    %6774 = vmatpush1.msra.mxu0 %v5981
    %6775 = vmatprep.subr.mxu0 0.0
    %6776 = vmatpush1.msra.mxu0 %v5982
    %6777 = vmatprep.subr.mxu0 0.0
    %6778 = vmatpush1.msra.mxu0 %v5983
    %6779 = vmatprep.subr.mxu0 0.0
    %6780 = vmatpush1.msra.mxu0 %v5984
    %6781 = vmatprep.subr.mxu0 0.0
    %6782 = vmatpush1.msra.mxu0 %v5985
    %6783 = vmatprep.subr.mxu0 0.0
    %6784 = vmatpush1.msra.mxu0 %v5986
    %6785 = vmatprep.subr.mxu0 0.0
    %6786 = vmatpush1.msra.mxu0 %v5987
    %6787 = vmatprep.subr.mxu0 0.0
    %6788 = vmatpush1.msra.mxu0 %v5988
    %6789 = vmatprep.subr.mxu0 0.0
    %6790 = vmatpush1.msra.mxu0 %v5989
    %6791 = vmatprep.subr.mxu0 0.0
    %6792 = vmatpush1.msra.mxu0 %v5990
    %6793 = vmatprep.subr.mxu0 0.0
    %6794 = vmatpush1.msra.mxu0 %v5991
    %6795 = vmatprep.subr.mxu0 0.0
    %6796 = vmatpush1.msra.mxu0 %v5992
    %6797 = vmatprep.subr.mxu0 0.0
    %6798 = vmatpush1.msra.mxu0 0.0
    %6799 = vmatprep.subr.mxu0 0.0
    %6800 = vmatpush1.msra.mxu0 0.0
    %6801 = vmatprep.subr.mxu0 0.0
    %6802 = vmatpush1.msra.mxu0 0.0
    %6803 = vmatprep.subr.mxu0 0.0
    %6804 = vmatpush1.msra.mxu0 0.0
    %6805 = vmatprep.subr.mxu0 0.0
    %6806 = vmatpush1.msra.mxu0 0.0
    %6807 = vmatprep.subr.mxu0 0.0
    %6808 = vmatpush1.msra.mxu0 0.0
    %6809 = vmatprep.subr.mxu0 0.0
    %6810 = vmatpush1.msra.mxu0 0.0
    %6811 = vmatprep.subr.mxu0 0.0
    %6812 = vmatpush1.msra.mxu0 0.0
    %6813 = vmatprep.subr.mxu0 0.0
    %6814 = vmatpush1.msra.mxu0 0.0
    %6815 = vmatprep.subr.mxu0 0.0
    %6816 = vmatpush1.msra.mxu0 0.0
    %6817 = vmatprep.subr.mxu0 0.0
    %6818 = vmatpush1.msra.mxu0 0.0
    %6819 = vmatprep.subr.mxu0 0.0
    %6820 = vmatpush1.msra.mxu0 0.0
    %6821 = vmatprep.subr.mxu0 0.0
    %6822 = vmatpush1.msra.mxu0 0.0
    %6823 = vmatprep.subr.mxu0 0.0
    %6824 = vmatpush1.msra.mxu0 0.0
    %6825 = vmatprep.subr.mxu0 0.0
    %6826 = vmatpush1.msra.mxu0 0.0
    %6827 = vmatprep.subr.mxu0 0.0
    %6828 = vmatpush1.msra.mxu0 0.0
    %6829 = vmatprep.mubr.f32.mxu0 0.0
    %6830 = vmatmul.mubr.f32.gmra.mrb[0].mxu0 %v6761
    %v6831 = vpop.f32.mrb[0].mxu0
    %v6832 = vadd.f32 0.0, %v6831
    %v6833 = vpop.f32.mrb[0].mxu0
    %6834 = vmatprep.mubr.f32.mxu0 0.0
    %6835 = vmatmul.mubr.f32.gmra.mrb[0].mxu0 %v6762
    %v6836 = vpop.f32.mrb[0].mxu0
    %v6837 = vadd.f32 0.0, %v6836
    %v6838 = vpop.f32.mrb[0].mxu0
    %6839 = vmatprep.mubr.f32.mxu0 0.0
    %6840 = vmatmul.mubr.f32.gmra.mrb[0].mxu0 %v6763
    %v6841 = vpop.f32.mrb[0].mxu0
    %v6842 = vadd.f32 0.0, %v6841
    %v6843 = vpop.f32.mrb[0].mxu0
    %6844 = vmatprep.mubr.f32.mxu0 0.0
    %6845 = vmatmul.mubr.f32.gmra.mrb[0].mxu0 %v6764
    %v6846 = vpop.f32.mrb[0].mxu0
    %v6847 = vadd.f32 0.0, %v6846
    %v6848 = vpop.f32.mrb[0].mxu0
    %6849 = vdwg.mxu0
    %s6850 = scalar_lea.vmem [#allocation11], 64
    %v6851 = vld [vmem:[%s6850] sm:$0xff]
    %v6852 = vld [vmem:[%s6850 + $0x8] sm:$0xff]
    %v6854 = vsel %vm6177, %v6832, 0
    %v6857 = vsel %vm6177, %v6837, 0
    %v6860 = vsel %vm6177, %v6842, 0
    %v6863 = vsel %vm6177, %v6847, 0
    %6865 = vmatprep.subr.mxu0 0.0
    %6866 = vmatpush1.msra.mxu0 %v6851
    %6867 = vmatprep.subr.mxu0 0.0
    %6868 = vmatpush1.msra.mxu0 %v6852
    %6869 = vmatprep.subr.mxu0 0.0
    %6870 = vmatpush1.msra.mxu0 0.0
    %6871 = vmatprep.subr.mxu0 0.0
    %6872 = vmatpush1.msra.mxu0 0.0
    %6873 = vmatprep.subr.mxu0 0.0
    %6874 = vmatpush1.msra.mxu0 0.0
    %6875 = vmatprep.subr.mxu0 0.0
    %6876 = vmatpush1.msra.mxu0 0.0
    %6877 = vmatprep.subr.mxu0 0.0
    %6878 = vmatpush1.msra.mxu0 0.0
    %6879 = vmatprep.subr.mxu0 0.0
    %6880 = vmatpush1.msra.mxu0 0.0
    %6881 = vmatprep.subr.mxu0 0.0
    %6882 = vmatpush1.msra.mxu0 0.0
    %6883 = vmatprep.subr.mxu0 0.0
    %6884 = vmatpush1.msra.mxu0 0.0
    %6885 = vmatprep.subr.mxu0 0.0
    %6886 = vmatpush1.msra.mxu0 0.0
    %6887 = vmatprep.subr.mxu0 0.0
    %6888 = vmatpush1.msra.mxu0 0.0
    %6889 = vmatprep.subr.mxu0 0.0
    %6890 = vmatpush1.msra.mxu0 0.0
    %6891 = vmatprep.subr.mxu0 0.0
    %6892 = vmatpush1.msra.mxu0 0.0
    %6893 = vmatprep.subr.mxu0 0.0
    %6894 = vmatpush1.msra.mxu0 0.0
    %6895 = vmatprep.subr.mxu0 0.0
    %6896 = vmatpush1.msra.mxu0 0.0
    %6897 = vmatprep.subr.mxu0 0.0
    %6898 = vmatpush1.msra.mxu0 0.0
    %6899 = vmatprep.subr.mxu0 0.0
    %6900 = vmatpush1.msra.mxu0 0.0
    %6901 = vmatprep.subr.mxu0 0.0
    %6902 = vmatpush1.msra.mxu0 0.0
    %6903 = vmatprep.subr.mxu0 0.0
    %6904 = vmatpush1.msra.mxu0 0.0
    %6905 = vmatprep.subr.mxu0 0.0
    %6906 = vmatpush1.msra.mxu0 0.0
    %6907 = vmatprep.subr.mxu0 0.0
    %6908 = vmatpush1.msra.mxu0 0.0
    %6909 = vmatprep.subr.mxu0 0.0
    %6910 = vmatpush1.msra.mxu0 0.0
    %6911 = vmatprep.subr.mxu0 0.0
    %6912 = vmatpush1.msra.mxu0 0.0
    %6913 = vmatprep.subr.mxu0 0.0
    %6914 = vmatpush1.msra.mxu0 0.0
    %6915 = vmatprep.subr.mxu0 0.0
    %6916 = vmatpush1.msra.mxu0 0.0
    %6917 = vmatprep.subr.mxu0 0.0
    %6918 = vmatpush1.msra.mxu0 0.0
    %6919 = vmatprep.subr.mxu0 0.0
    %6920 = vmatpush1.msra.mxu0 0.0
    %6921 = vmatprep.subr.mxu0 0.0
    %6922 = vmatpush1.msra.mxu0 0.0
    %6923 = vmatprep.subr.mxu0 0.0
    %6924 = vmatpush1.msra.mxu0 0.0
    %6925 = vmatprep.subr.mxu0 0.0
    %6926 = vmatpush1.msra.mxu0 0.0
    %6927 = vmatprep.subr.mxu0 0.0
    %6928 = vmatpush1.msra.mxu0 0.0
    %6929 = vmatprep.mubr.f32.mxu0 0.0
    %6930 = vmatmul.mubr.f32.gmra.mrb[0].mxu0 %v6854
    %v6931 = vpop.f32.mrb[0].mxu0
    %v6932 = vadd.f32 0.0, %v6931
    %v6933 = vpop.f32.mrb[0].mxu0
    %6934 = vmatprep.mubr.f32.mxu0 0.0
    %6935 = vmatmul.mubr.f32.gmra.mrb[0].mxu0 %v6857
    %v6936 = vpop.f32.mrb[0].mxu0
    %v6937 = vadd.f32 0.0, %v6936
    %v6938 = vpop.f32.mrb[0].mxu0
    %6939 = vmatprep.mubr.f32.mxu0 0.0
    %6940 = vmatmul.mubr.f32.gmra.mrb[0].mxu0 %v6860
    %v6941 = vpop.f32.mrb[0].mxu0
    %v6942 = vadd.f32 0.0, %v6941
    %v6943 = vpop.f32.mrb[0].mxu0
    %6944 = vmatprep.mubr.f32.mxu0 0.0
    %6945 = vmatmul.mubr.f32.gmra.mrb[0].mxu0 %v6863
    %v6946 = vpop.f32.mrb[0].mxu0
    %v6947 = vadd.f32 0.0, %v6946
    %v6948 = vpop.f32.mrb[0].mxu0
    %6949 = vdwg.mxu0
    %v6950 = vadd.f32 %v6756, %v6932
    %v6951 = vadd.f32 %v6757, %v6937
    %v6952 = vadd.f32 %v6758, %v6942
    %v6953 = vadd.f32 %v6759, %v6947
    %s6954 = scalar_lea.vmem [#allocation10], 160
    %v6955 = vld [vmem:[%s6954] sm:$0xff]
    %v6956 = vld [vmem:[%s6954 + $0x8] sm:$0xff]
    %v6957 = vld [vmem:[%s6954 + $0x10] sm:$0xff]
    %v6958 = vld [vmem:[%s6954 + $0x18] sm:$0xff]
    %6959 = vmatprep.subr.mxu0 0.0
    %6960 = vmatpush1.msra.mxu0 %v5977
    %6961 = vmatprep.subr.mxu0 0.0
    %6962 = vmatpush1.msra.mxu0 %v5978
    %6963 = vmatprep.subr.mxu0 0.0
    %6964 = vmatpush1.msra.mxu0 %v5979
    %6965 = vmatprep.subr.mxu0 0.0
    %6966 = vmatpush1.msra.mxu0 %v5980
    %6967 = vmatprep.subr.mxu0 0.0
    %6968 = vmatpush1.msra.mxu0 %v5981
    %6969 = vmatprep.subr.mxu0 0.0
    %6970 = vmatpush1.msra.mxu0 %v5982
    %6971 = vmatprep.subr.mxu0 0.0
    %6972 = vmatpush1.msra.mxu0 %v5983
    %6973 = vmatprep.subr.mxu0 0.0
    %6974 = vmatpush1.msra.mxu0 %v5984
    %6975 = vmatprep.subr.mxu0 0.0
    %6976 = vmatpush1.msra.mxu0 %v5985
    %6977 = vmatprep.subr.mxu0 0.0
    %6978 = vmatpush1.msra.mxu0 %v5986
    %6979 = vmatprep.subr.mxu0 0.0
    %6980 = vmatpush1.msra.mxu0 %v5987
    %6981 = vmatprep.subr.mxu0 0.0
    %6982 = vmatpush1.msra.mxu0 %v5988
    %6983 = vmatprep.subr.mxu0 0.0
    %6984 = vmatpush1.msra.mxu0 %v5989
    %6985 = vmatprep.subr.mxu0 0.0
    %6986 = vmatpush1.msra.mxu0 %v5990
    %6987 = vmatprep.subr.mxu0 0.0
    %6988 = vmatpush1.msra.mxu0 %v5991
    %6989 = vmatprep.subr.mxu0 0.0
    %6990 = vmatpush1.msra.mxu0 %v5992
    %6991 = vmatprep.subr.mxu0 0.0
    %6992 = vmatpush1.msra.mxu0 0.0
    %6993 = vmatprep.subr.mxu0 0.0
    %6994 = vmatpush1.msra.mxu0 0.0
    %6995 = vmatprep.subr.mxu0 0.0
    %6996 = vmatpush1.msra.mxu0 0.0
    %6997 = vmatprep.subr.mxu0 0.0
    %6998 = vmatpush1.msra.mxu0 0.0
    %6999 = vmatprep.subr.mxu0 0.0
    %7000 = vmatpush1.msra.mxu0 0.0
    %7001 = vmatprep.subr.mxu0 0.0
    %7002 = vmatpush1.msra.mxu0 0.0
    %7003 = vmatprep.subr.mxu0 0.0
    %7004 = vmatpush1.msra.mxu0 0.0
    %7005 = vmatprep.subr.mxu0 0.0
    %7006 = vmatpush1.msra.mxu0 0.0
    %7007 = vmatprep.subr.mxu0 0.0
    %7008 = vmatpush1.msra.mxu0 0.0
    %7009 = vmatprep.subr.mxu0 0.0
    %7010 = vmatpush1.msra.mxu0 0.0
    %7011 = vmatprep.subr.mxu0 0.0
    %7012 = vmatpush1.msra.mxu0 0.0
    %7013 = vmatprep.subr.mxu0 0.0
    %7014 = vmatpush1.msra.mxu0 0.0
    %7015 = vmatprep.subr.mxu0 0.0
    %7016 = vmatpush1.msra.mxu0 0.0
    %7017 = vmatprep.subr.mxu0 0.0
    %7018 = vmatpush1.msra.mxu0 0.0
    %7019 = vmatprep.subr.mxu0 0.0
    %7020 = vmatpush1.msra.mxu0 0.0
    %7021 = vmatprep.subr.mxu0 0.0
    %7022 = vmatpush1.msra.mxu0 0.0
    %7023 = vmatprep.mubr.f32.mxu0 0.0
    %7024 = vmatmul.mubr.f32.gmra.mrb[0].mxu0 %v6955
    %v7025 = vpop.f32.mrb[0].mxu0
    %v7026 = vadd.f32 0.0, %v7025
    %v7027 = vpop.f32.mrb[0].mxu0
    %7028 = vmatprep.mubr.f32.mxu0 0.0
    %7029 = vmatmul.mubr.f32.gmra.mrb[0].mxu0 %v6956
    %v7030 = vpop.f32.mrb[0].mxu0
    %v7031 = vadd.f32 0.0, %v7030
    %v7032 = vpop.f32.mrb[0].mxu0
    %7033 = vmatprep.mubr.f32.mxu0 0.0
    %7034 = vmatmul.mubr.f32.gmra.mrb[0].mxu0 %v6957
    %v7035 = vpop.f32.mrb[0].mxu0
    %v7036 = vadd.f32 0.0, %v7035
    %v7037 = vpop.f32.mrb[0].mxu0
    %7038 = vmatprep.mubr.f32.mxu0 0.0
    %7039 = vmatmul.mubr.f32.gmra.mrb[0].mxu0 %v6958
    %v7040 = vpop.f32.mrb[0].mxu0
    %v7041 = vadd.f32 0.0, %v7040
    %v7042 = vpop.f32.mrb[0].mxu0
    %7043 = vdwg.mxu0
    %s7044 = scalar_lea.vmem [#allocation11], 80
    %v7045 = vld [vmem:[%s7044] sm:$0xff]
    %v7046 = vld [vmem:[%s7044 + $0x8] sm:$0xff]
    %v7048 = vsel %vm6177, %v7026, 0
    %v7051 = vsel %vm6177, %v7031, 0
    %v7054 = vsel %vm6177, %v7036, 0
    %v7057 = vsel %vm6177, %v7041, 0
    %7059 = vmatprep.subr.mxu0 0.0
    %7060 = vmatpush1.msra.mxu0 %v7045
    %7061 = vmatprep.subr.mxu0 0.0
    %7062 = vmatpush1.msra.mxu0 %v7046
    %7063 = vmatprep.subr.mxu0 0.0
    %7064 = vmatpush1.msra.mxu0 0.0
    %7065 = vmatprep.subr.mxu0 0.0
    %7066 = vmatpush1.msra.mxu0 0.0
    %7067 = vmatprep.subr.mxu0 0.0
    %7068 = vmatpush1.msra.mxu0 0.0
    %7069 = vmatprep.subr.mxu0 0.0
    %7070 = vmatpush1.msra.mxu0 0.0
    %7071 = vmatprep.subr.mxu0 0.0
    %7072 = vmatpush1.msra.mxu0 0.0
    %7073 = vmatprep.subr.mxu0 0.0
    %7074 = vmatpush1.msra.mxu0 0.0
    %7075 = vmatprep.subr.mxu0 0.0
    %7076 = vmatpush1.msra.mxu0 0.0
    %7077 = vmatprep.subr.mxu0 0.0
    %7078 = vmatpush1.msra.mxu0 0.0
    %7079 = vmatprep.subr.mxu0 0.0
    %7080 = vmatpush1.msra.mxu0 0.0
    %7081 = vmatprep.subr.mxu0 0.0
    %7082 = vmatpush1.msra.mxu0 0.0
    %7083 = vmatprep.subr.mxu0 0.0
    %7084 = vmatpush1.msra.mxu0 0.0
    %7085 = vmatprep.subr.mxu0 0.0
    %7086 = vmatpush1.msra.mxu0 0.0
    %7087 = vmatprep.subr.mxu0 0.0
    %7088 = vmatpush1.msra.mxu0 0.0
    %7089 = vmatprep.subr.mxu0 0.0
    %7090 = vmatpush1.msra.mxu0 0.0
    %7091 = vmatprep.subr.mxu0 0.0
    %7092 = vmatpush1.msra.mxu0 0.0
    %7093 = vmatprep.subr.mxu0 0.0
    %7094 = vmatpush1.msra.mxu0 0.0
    %7095 = vmatprep.subr.mxu0 0.0
    %7096 = vmatpush1.msra.mxu0 0.0
    %7097 = vmatprep.subr.mxu0 0.0
    %7098 = vmatpush1.msra.mxu0 0.0
    %7099 = vmatprep.subr.mxu0 0.0
    %7100 = vmatpush1.msra.mxu0 0.0
    %7101 = vmatprep.subr.mxu0 0.0
    %7102 = vmatpush1.msra.mxu0 0.0
    %7103 = vmatprep.subr.mxu0 0.0
    %7104 = vmatpush1.msra.mxu0 0.0
    %7105 = vmatprep.subr.mxu0 0.0
    %7106 = vmatpush1.msra.mxu0 0.0
    %7107 = vmatprep.subr.mxu0 0.0
    %7108 = vmatpush1.msra.mxu0 0.0
    %7109 = vmatprep.subr.mxu0 0.0
    %7110 = vmatpush1.msra.mxu0 0.0
    %7111 = vmatprep.subr.mxu0 0.0
    %7112 = vmatpush1.msra.mxu0 0.0
    %7113 = vmatprep.subr.mxu0 0.0
    %7114 = vmatpush1.msra.mxu0 0.0
    %7115 = vmatprep.subr.mxu0 0.0
    %7116 = vmatpush1.msra.mxu0 0.0
    %7117 = vmatprep.subr.mxu0 0.0
    %7118 = vmatpush1.msra.mxu0 0.0
    %7119 = vmatprep.subr.mxu0 0.0
    %7120 = vmatpush1.msra.mxu0 0.0
    %7121 = vmatprep.subr.mxu0 0.0
    %7122 = vmatpush1.msra.mxu0 0.0
    %7123 = vmatprep.mubr.f32.mxu0 0.0
    %7124 = vmatmul.mubr.f32.gmra.mrb[0].mxu0 %v7048
    %v7125 = vpop.f32.mrb[0].mxu0
    %v7126 = vadd.f32 0.0, %v7125
    %v7127 = vpop.f32.mrb[0].mxu0
    %7128 = vmatprep.mubr.f32.mxu0 0.0
    %7129 = vmatmul.mubr.f32.gmra.mrb[0].mxu0 %v7051
    %v7130 = vpop.f32.mrb[0].mxu0
    %v7131 = vadd.f32 0.0, %v7130
    %v7132 = vpop.f32.mrb[0].mxu0
    %7133 = vmatprep.mubr.f32.mxu0 0.0
    %7134 = vmatmul.mubr.f32.gmra.mrb[0].mxu0 %v7054
    %v7135 = vpop.f32.mrb[0].mxu0
    %v7136 = vadd.f32 0.0, %v7135
    %v7137 = vpop.f32.mrb[0].mxu0
    %7138 = vmatprep.mubr.f32.mxu0 0.0
    %7139 = vmatmul.mubr.f32.gmra.mrb[0].mxu0 %v7057
    %v7140 = vpop.f32.mrb[0].mxu0
    %v7141 = vadd.f32 0.0, %v7140
    %v7142 = vpop.f32.mrb[0].mxu0
    %7143 = vdwg.mxu0
    %v7144 = vadd.f32 %v6950, %v7126
    %v7145 = vadd.f32 %v6951, %v7131
    %v7146 = vadd.f32 %v6952, %v7136
    %v7147 = vadd.f32 %v6953, %v7141
    %s7148 = scalar_lea.vmem [#allocation10], 192
    %v7149 = vld [vmem:[%s7148] sm:$0xff]
    %v7150 = vld [vmem:[%s7148 + $0x8] sm:$0xff]
    %v7151 = vld [vmem:[%s7148 + $0x10] sm:$0xff]
    %v7152 = vld [vmem:[%s7148 + $0x18] sm:$0xff]
    %7153 = vmatprep.subr.mxu0 0.0
    %7154 = vmatpush1.msra.mxu0 %v5977
    %7155 = vmatprep.subr.mxu0 0.0
    %7156 = vmatpush1.msra.mxu0 %v5978
    %7157 = vmatprep.subr.mxu0 0.0
    %7158 = vmatpush1.msra.mxu0 %v5979
    %7159 = vmatprep.subr.mxu0 0.0
    %7160 = vmatpush1.msra.mxu0 %v5980
    %7161 = vmatprep.subr.mxu0 0.0
    %7162 = vmatpush1.msra.mxu0 %v5981
    %7163 = vmatprep.subr.mxu0 0.0
    %7164 = vmatpush1.msra.mxu0 %v5982
    %7165 = vmatprep.subr.mxu0 0.0
    %7166 = vmatpush1.msra.mxu0 %v5983
    %7167 = vmatprep.subr.mxu0 0.0
    %7168 = vmatpush1.msra.mxu0 %v5984
    %7169 = vmatprep.subr.mxu0 0.0
    %7170 = vmatpush1.msra.mxu0 %v5985
    %7171 = vmatprep.subr.mxu0 0.0
    %7172 = vmatpush1.msra.mxu0 %v5986
    %7173 = vmatprep.subr.mxu0 0.0
    %7174 = vmatpush1.msra.mxu0 %v5987
    %7175 = vmatprep.subr.mxu0 0.0
    %7176 = vmatpush1.msra.mxu0 %v5988
    %7177 = vmatprep.subr.mxu0 0.0
    %7178 = vmatpush1.msra.mxu0 %v5989
    %7179 = vmatprep.subr.mxu0 0.0
    %7180 = vmatpush1.msra.mxu0 %v5990
    %7181 = vmatprep.subr.mxu0 0.0
    %7182 = vmatpush1.msra.mxu0 %v5991
    %7183 = vmatprep.subr.mxu0 0.0
    %7184 = vmatpush1.msra.mxu0 %v5992
    %7185 = vmatprep.subr.mxu0 0.0
    %7186 = vmatpush1.msra.mxu0 0.0
    %7187 = vmatprep.subr.mxu0 0.0
    %7188 = vmatpush1.msra.mxu0 0.0
    %7189 = vmatprep.subr.mxu0 0.0
    %7190 = vmatpush1.msra.mxu0 0.0
    %7191 = vmatprep.subr.mxu0 0.0
    %7192 = vmatpush1.msra.mxu0 0.0
    %7193 = vmatprep.subr.mxu0 0.0
    %7194 = vmatpush1.msra.mxu0 0.0
    %7195 = vmatprep.subr.mxu0 0.0
    %7196 = vmatpush1.msra.mxu0 0.0
    %7197 = vmatprep.subr.mxu0 0.0
    %7198 = vmatpush1.msra.mxu0 0.0
    %7199 = vmatprep.subr.mxu0 0.0
    %7200 = vmatpush1.msra.mxu0 0.0
    %7201 = vmatprep.subr.mxu0 0.0
    %7202 = vmatpush1.msra.mxu0 0.0
    %7203 = vmatprep.subr.mxu0 0.0
    %7204 = vmatpush1.msra.mxu0 0.0
    %7205 = vmatprep.subr.mxu0 0.0
    %7206 = vmatpush1.msra.mxu0 0.0
    %7207 = vmatprep.subr.mxu0 0.0
    %7208 = vmatpush1.msra.mxu0 0.0
    %7209 = vmatprep.subr.mxu0 0.0
    %7210 = vmatpush1.msra.mxu0 0.0
    %7211 = vmatprep.subr.mxu0 0.0
    %7212 = vmatpush1.msra.mxu0 0.0
    %7213 = vmatprep.subr.mxu0 0.0
    %7214 = vmatpush1.msra.mxu0 0.0
    %7215 = vmatprep.subr.mxu0 0.0
    %7216 = vmatpush1.msra.mxu0 0.0
    %7217 = vmatprep.mubr.f32.mxu0 0.0
    %7218 = vmatmul.mubr.f32.gmra.mrb[0].mxu0 %v7149
    %v7219 = vpop.f32.mrb[0].mxu0
    %v7220 = vadd.f32 0.0, %v7219
    %v7221 = vpop.f32.mrb[0].mxu0
    %7222 = vmatprep.mubr.f32.mxu0 0.0
    %7223 = vmatmul.mubr.f32.gmra.mrb[0].mxu0 %v7150
    %v7224 = vpop.f32.mrb[0].mxu0
    %v7225 = vadd.f32 0.0, %v7224
    %v7226 = vpop.f32.mrb[0].mxu0
    %7227 = vmatprep.mubr.f32.mxu0 0.0
    %7228 = vmatmul.mubr.f32.gmra.mrb[0].mxu0 %v7151
    %v7229 = vpop.f32.mrb[0].mxu0
    %v7230 = vadd.f32 0.0, %v7229
    %v7231 = vpop.f32.mrb[0].mxu0
    %7232 = vmatprep.mubr.f32.mxu0 0.0
    %7233 = vmatmul.mubr.f32.gmra.mrb[0].mxu0 %v7152
    %v7234 = vpop.f32.mrb[0].mxu0
    %v7235 = vadd.f32 0.0, %v7234
    %v7236 = vpop.f32.mrb[0].mxu0
    %7237 = vdwg.mxu0
    %s7238 = scalar_lea.vmem [#allocation11], 96
    %v7239 = vld [vmem:[%s7238] sm:$0xff]
    %v7240 = vld [vmem:[%s7238 + $0x8] sm:$0xff]
    %v7242 = vsel %vm6177, %v7220, 0
    %v7245 = vsel %vm6177, %v7225, 0
    %v7248 = vsel %vm6177, %v7230, 0
    %v7251 = vsel %vm6177, %v7235, 0
    %7253 = vmatprep.subr.mxu0 0.0
    %7254 = vmatpush1.msra.mxu0 %v7239
    %7255 = vmatprep.subr.mxu0 0.0
    %7256 = vmatpush1.msra.mxu0 %v7240
    %7257 = vmatprep.subr.mxu0 0.0
    %7258 = vmatpush1.msra.mxu0 0.0
    %7259 = vmatprep.subr.mxu0 0.0
    %7260 = vmatpush1.msra.mxu0 0.0
    %7261 = vmatprep.subr.mxu0 0.0
    %7262 = vmatpush1.msra.mxu0 0.0
    %7263 = vmatprep.subr.mxu0 0.0
    %7264 = vmatpush1.msra.mxu0 0.0
    %7265 = vmatprep.subr.mxu0 0.0
    %7266 = vmatpush1.msra.mxu0 0.0
    %7267 = vmatprep.subr.mxu0 0.0
    %7268 = vmatpush1.msra.mxu0 0.0
    %7269 = vmatprep.subr.mxu0 0.0
    %7270 = vmatpush1.msra.mxu0 0.0
    %7271 = vmatprep.subr.mxu0 0.0
    %7272 = vmatpush1.msra.mxu0 0.0
    %7273 = vmatprep.subr.mxu0 0.0
    %7274 = vmatpush1.msra.mxu0 0.0
    %7275 = vmatprep.subr.mxu0 0.0
    %7276 = vmatpush1.msra.mxu0 0.0
    %7277 = vmatprep.subr.mxu0 0.0
    %7278 = vmatpush1.msra.mxu0 0.0
    %7279 = vmatprep.subr.mxu0 0.0
    %7280 = vmatpush1.msra.mxu0 0.0
    %7281 = vmatprep.subr.mxu0 0.0
    %7282 = vmatpush1.msra.mxu0 0.0
    %7283 = vmatprep.subr.mxu0 0.0
    %7284 = vmatpush1.msra.mxu0 0.0
    %7285 = vmatprep.subr.mxu0 0.0
    %7286 = vmatpush1.msra.mxu0 0.0
    %7287 = vmatprep.subr.mxu0 0.0
    %7288 = vmatpush1.msra.mxu0 0.0
    %7289 = vmatprep.subr.mxu0 0.0
    %7290 = vmatpush1.msra.mxu0 0.0
    %7291 = vmatprep.subr.mxu0 0.0
    %7292 = vmatpush1.msra.mxu0 0.0
    %7293 = vmatprep.subr.mxu0 0.0
    %7294 = vmatpush1.msra.mxu0 0.0
    %7295 = vmatprep.subr.mxu0 0.0
    %7296 = vmatpush1.msra.mxu0 0.0
    %7297 = vmatprep.subr.mxu0 0.0
    %7298 = vmatpush1.msra.mxu0 0.0
    %7299 = vmatprep.subr.mxu0 0.0
    %7300 = vmatpush1.msra.mxu0 0.0
    %7301 = vmatprep.subr.mxu0 0.0
    %7302 = vmatpush1.msra.mxu0 0.0
    %7303 = vmatprep.subr.mxu0 0.0
    %7304 = vmatpush1.msra.mxu0 0.0
    %7305 = vmatprep.subr.mxu0 0.0
    %7306 = vmatpush1.msra.mxu0 0.0
    %7307 = vmatprep.subr.mxu0 0.0
    %7308 = vmatpush1.msra.mxu0 0.0
    %7309 = vmatprep.subr.mxu0 0.0
    %7310 = vmatpush1.msra.mxu0 0.0
    %7311 = vmatprep.subr.mxu0 0.0
    %7312 = vmatpush1.msra.mxu0 0.0
    %7313 = vmatprep.subr.mxu0 0.0
    %7314 = vmatpush1.msra.mxu0 0.0
    %7315 = vmatprep.subr.mxu0 0.0
    %7316 = vmatpush1.msra.mxu0 0.0
    %7317 = vmatprep.mubr.f32.mxu0 0.0
    %7318 = vmatmul.mubr.f32.gmra.mrb[0].mxu0 %v7242
    %v7319 = vpop.f32.mrb[0].mxu0
    %v7320 = vadd.f32 0.0, %v7319
    %v7321 = vpop.f32.mrb[0].mxu0
    %7322 = vmatprep.mubr.f32.mxu0 0.0
    %7323 = vmatmul.mubr.f32.gmra.mrb[0].mxu0 %v7245
    %v7324 = vpop.f32.mrb[0].mxu0
    %v7325 = vadd.f32 0.0, %v7324
    %v7326 = vpop.f32.mrb[0].mxu0
    %7327 = vmatprep.mubr.f32.mxu0 0.0
    %7328 = vmatmul.mubr.f32.gmra.mrb[0].mxu0 %v7248
    %v7329 = vpop.f32.mrb[0].mxu0
    %v7330 = vadd.f32 0.0, %v7329
    %v7331 = vpop.f32.mrb[0].mxu0
    %7332 = vmatprep.mubr.f32.mxu0 0.0
    %7333 = vmatmul.mubr.f32.gmra.mrb[0].mxu0 %v7251
    %v7334 = vpop.f32.mrb[0].mxu0
    %v7335 = vadd.f32 0.0, %v7334
    %v7336 = vpop.f32.mrb[0].mxu0
    %7337 = vdwg.mxu0
    %v7338 = vadd.f32 %v7144, %v7320
    %v7339 = vadd.f32 %v7145, %v7325
    %v7340 = vadd.f32 %v7146, %v7330
    %v7341 = vadd.f32 %v7147, %v7335
    %s7342 = scalar_lea.vmem [#allocation10], 224
    %v7343 = vld [vmem:[%s7342] sm:$0xff]
    %v7344 = vld [vmem:[%s7342 + $0x8] sm:$0xff]
    %v7345 = vld [vmem:[%s7342 + $0x10] sm:$0xff]
    %v7346 = vld [vmem:[%s7342 + $0x18] sm:$0xff]
    %7347 = vmatprep.subr.mxu0 0.0
    %7348 = vmatpush1.msra.mxu0 %v5977
    %7349 = vmatprep.subr.mxu0 0.0
    %7350 = vmatpush1.msra.mxu0 %v5978
    %7351 = vmatprep.subr.mxu0 0.0
    %7352 = vmatpush1.msra.mxu0 %v5979
    %7353 = vmatprep.subr.mxu0 0.0
    %7354 = vmatpush1.msra.mxu0 %v5980
    %7355 = vmatprep.subr.mxu0 0.0
    %7356 = vmatpush1.msra.mxu0 %v5981
    %7357 = vmatprep.subr.mxu0 0.0
    %7358 = vmatpush1.msra.mxu0 %v5982
    %7359 = vmatprep.subr.mxu0 0.0
    %7360 = vmatpush1.msra.mxu0 %v5983
    %7361 = vmatprep.subr.mxu0 0.0
    %7362 = vmatpush1.msra.mxu0 %v5984
    %7363 = vmatprep.subr.mxu0 0.0
    %7364 = vmatpush1.msra.mxu0 %v5985
    %7365 = vmatprep.subr.mxu0 0.0
    %7366 = vmatpush1.msra.mxu0 %v5986
    %7367 = vmatprep.subr.mxu0 0.0
    %7368 = vmatpush1.msra.mxu0 %v5987
    %7369 = vmatprep.subr.mxu0 0.0
    %7370 = vmatpush1.msra.mxu0 %v5988
    %7371 = vmatprep.subr.mxu0 0.0
    %7372 = vmatpush1.msra.mxu0 %v5989
    %7373 = vmatprep.subr.mxu0 0.0
    %7374 = vmatpush1.msra.mxu0 %v5990
    %7375 = vmatprep.subr.mxu0 0.0
    %7376 = vmatpush1.msra.mxu0 %v5991
    %7377 = vmatprep.subr.mxu0 0.0
    %7378 = vmatpush1.msra.mxu0 %v5992
    %7379 = vmatprep.subr.mxu0 0.0
    %7380 = vmatpush1.msra.mxu0 0.0
    %7381 = vmatprep.subr.mxu0 0.0
    %7382 = vmatpush1.msra.mxu0 0.0
    %7383 = vmatprep.subr.mxu0 0.0
    %7384 = vmatpush1.msra.mxu0 0.0
    %7385 = vmatprep.subr.mxu0 0.0
    %7386 = vmatpush1.msra.mxu0 0.0
    %7387 = vmatprep.subr.mxu0 0.0
    %7388 = vmatpush1.msra.mxu0 0.0
    %7389 = vmatprep.subr.mxu0 0.0
    %7390 = vmatpush1.msra.mxu0 0.0
    %7391 = vmatprep.subr.mxu0 0.0
    %7392 = vmatpush1.msra.mxu0 0.0
    %7393 = vmatprep.subr.mxu0 0.0
    %7394 = vmatpush1.msra.mxu0 0.0
    %7395 = vmatprep.subr.mxu0 0.0
    %7396 = vmatpush1.msra.mxu0 0.0
    %7397 = vmatprep.subr.mxu0 0.0
    %7398 = vmatpush1.msra.mxu0 0.0
    %7399 = vmatprep.subr.mxu0 0.0
    %7400 = vmatpush1.msra.mxu0 0.0
    %7401 = vmatprep.subr.mxu0 0.0
    %7402 = vmatpush1.msra.mxu0 0.0
    %7403 = vmatprep.subr.mxu0 0.0
    %7404 = vmatpush1.msra.mxu0 0.0
    %7405 = vmatprep.subr.mxu0 0.0
    %7406 = vmatpush1.msra.mxu0 0.0
    %7407 = vmatprep.subr.mxu0 0.0
    %7408 = vmatpush1.msra.mxu0 0.0
    %7409 = vmatprep.subr.mxu0 0.0
    %7410 = vmatpush1.msra.mxu0 0.0
    %7411 = vmatprep.mubr.f32.mxu0 0.0
    %7412 = vmatmul.mubr.f32.gmra.mrb[0].mxu0 %v7343
    %v7413 = vpop.f32.mrb[0].mxu0
    %v7414 = vadd.f32 0.0, %v7413
    %v7415 = vpop.f32.mrb[0].mxu0
    %7416 = vmatprep.mubr.f32.mxu0 0.0
    %7417 = vmatmul.mubr.f32.gmra.mrb[0].mxu0 %v7344
    %v7418 = vpop.f32.mrb[0].mxu0
    %v7419 = vadd.f32 0.0, %v7418
    %v7420 = vpop.f32.mrb[0].mxu0
    %7421 = vmatprep.mubr.f32.mxu0 0.0
    %7422 = vmatmul.mubr.f32.gmra.mrb[0].mxu0 %v7345
    %v7423 = vpop.f32.mrb[0].mxu0
    %v7424 = vadd.f32 0.0, %v7423
    %v7425 = vpop.f32.mrb[0].mxu0
    %7426 = vmatprep.mubr.f32.mxu0 0.0
    %7427 = vmatmul.mubr.f32.gmra.mrb[0].mxu0 %v7346
    %v7428 = vpop.f32.mrb[0].mxu0
    %v7429 = vadd.f32 0.0, %v7428
    %v7430 = vpop.f32.mrb[0].mxu0
    %7431 = vdwg.mxu0
    %s7432 = scalar_lea.vmem [#allocation11], 112
    %v7433 = vld [vmem:[%s7432] sm:$0xff]
    %v7434 = vld [vmem:[%s7432 + $0x8] sm:$0xff]
    %v7436 = vsel %vm6177, %v7414, 0
    %v7439 = vsel %vm6177, %v7419, 0
    %v7442 = vsel %vm6177, %v7424, 0
    %v7445 = vsel %vm6177, %v7429, 0
    %7447 = vmatprep.subr.mxu0 0.0
    %7448 = vmatpush1.msra.mxu0 %v7433
    %7449 = vmatprep.subr.mxu0 0.0
    %7450 = vmatpush1.msra.mxu0 %v7434
    %7451 = vmatprep.subr.mxu0 0.0
    %7452 = vmatpush1.msra.mxu0 0.0
    %7453 = vmatprep.subr.mxu0 0.0
    %7454 = vmatpush1.msra.mxu0 0.0
    %7455 = vmatprep.subr.mxu0 0.0
    %7456 = vmatpush1.msra.mxu0 0.0
    %7457 = vmatprep.subr.mxu0 0.0
    %7458 = vmatpush1.msra.mxu0 0.0
    %7459 = vmatprep.subr.mxu0 0.0
    %7460 = vmatpush1.msra.mxu0 0.0
    %7461 = vmatprep.subr.mxu0 0.0
    %7462 = vmatpush1.msra.mxu0 0.0
    %7463 = vmatprep.subr.mxu0 0.0
    %7464 = vmatpush1.msra.mxu0 0.0
    %7465 = vmatprep.subr.mxu0 0.0
    %7466 = vmatpush1.msra.mxu0 0.0
    %7467 = vmatprep.subr.mxu0 0.0
    %7468 = vmatpush1.msra.mxu0 0.0
    %7469 = vmatprep.subr.mxu0 0.0
    %7470 = vmatpush1.msra.mxu0 0.0
    %7471 = vmatprep.subr.mxu0 0.0
    %7472 = vmatpush1.msra.mxu0 0.0
    %7473 = vmatprep.subr.mxu0 0.0
    %7474 = vmatpush1.msra.mxu0 0.0
    %7475 = vmatprep.subr.mxu0 0.0
    %7476 = vmatpush1.msra.mxu0 0.0
    %7477 = vmatprep.subr.mxu0 0.0
    %7478 = vmatpush1.msra.mxu0 0.0
    %7479 = vmatprep.subr.mxu0 0.0
    %7480 = vmatpush1.msra.mxu0 0.0
    %7481 = vmatprep.subr.mxu0 0.0
    %7482 = vmatpush1.msra.mxu0 0.0
    %7483 = vmatprep.subr.mxu0 0.0
    %7484 = vmatpush1.msra.mxu0 0.0
    %7485 = vmatprep.subr.mxu0 0.0
    %7486 = vmatpush1.msra.mxu0 0.0
    %7487 = vmatprep.subr.mxu0 0.0
    %7488 = vmatpush1.msra.mxu0 0.0
    %7489 = vmatprep.subr.mxu0 0.0
    %7490 = vmatpush1.msra.mxu0 0.0
    %7491 = vmatprep.subr.mxu0 0.0
    %7492 = vmatpush1.msra.mxu0 0.0
    %7493 = vmatprep.subr.mxu0 0.0
    %7494 = vmatpush1.msra.mxu0 0.0
    %7495 = vmatprep.subr.mxu0 0.0
    %7496 = vmatpush1.msra.mxu0 0.0
    %7497 = vmatprep.subr.mxu0 0.0
    %7498 = vmatpush1.msra.mxu0 0.0
    %7499 = vmatprep.subr.mxu0 0.0
    %7500 = vmatpush1.msra.mxu0 0.0
    %7501 = vmatprep.subr.mxu0 0.0
    %7502 = vmatpush1.msra.mxu0 0.0
    %7503 = vmatprep.subr.mxu0 0.0
    %7504 = vmatpush1.msra.mxu0 0.0
    %7505 = vmatprep.subr.mxu0 0.0
    %7506 = vmatpush1.msra.mxu0 0.0
    %7507 = vmatprep.subr.mxu0 0.0
    %7508 = vmatpush1.msra.mxu0 0.0
    %7509 = vmatprep.subr.mxu0 0.0
    %7510 = vmatpush1.msra.mxu0 0.0
    %7511 = vmatprep.mubr.f32.mxu0 0.0
    %7512 = vmatmul.mubr.f32.gmra.mrb[0].mxu0 %v7436
    %v7513 = vpop.f32.mrb[0].mxu0
    %v7514 = vadd.f32 0.0, %v7513
    %v7515 = vpop.f32.mrb[0].mxu0
    %7516 = vmatprep.mubr.f32.mxu0 0.0
    %7517 = vmatmul.mubr.f32.gmra.mrb[0].mxu0 %v7439
    %v7518 = vpop.f32.mrb[0].mxu0
    %v7519 = vadd.f32 0.0, %v7518
    %v7520 = vpop.f32.mrb[0].mxu0
    %7521 = vmatprep.mubr.f32.mxu0 0.0
    %7522 = vmatmul.mubr.f32.gmra.mrb[0].mxu0 %v7442
    %v7523 = vpop.f32.mrb[0].mxu0
    %v7524 = vadd.f32 0.0, %v7523
    %v7525 = vpop.f32.mrb[0].mxu0
    %7526 = vmatprep.mubr.f32.mxu0 0.0
    %7527 = vmatmul.mubr.f32.gmra.mrb[0].mxu0 %v7445
    %v7528 = vpop.f32.mrb[0].mxu0
    %v7529 = vadd.f32 0.0, %v7528
    %v7530 = vpop.f32.mrb[0].mxu0
    %7531 = vdwg.mxu0
    %v7532 = vadd.f32 %v7338, %v7514
    %v7533 = vadd.f32 %v7339, %v7519
    %v7534 = vadd.f32 %v7340, %v7524
    %v7535 = vadd.f32 %v7341, %v7529
    %s7536 = scalar_lea.vmem [#allocation10], 256
    %v7537 = vld [vmem:[%s7536] sm:$0xff]
    %v7538 = vld [vmem:[%s7536 + $0x8] sm:$0xff]
    %v7539 = vld [vmem:[%s7536 + $0x10] sm:$0xff]
    %v7540 = vld [vmem:[%s7536 + $0x18] sm:$0xff]
    %7541 = vmatprep.subr.mxu0 0.0
    %7542 = vmatpush1.msra.mxu0 %v5977
    %7543 = vmatprep.subr.mxu0 0.0
    %7544 = vmatpush1.msra.mxu0 %v5978
    %7545 = vmatprep.subr.mxu0 0.0
    %7546 = vmatpush1.msra.mxu0 %v5979
    %7547 = vmatprep.subr.mxu0 0.0
    %7548 = vmatpush1.msra.mxu0 %v5980
    %7549 = vmatprep.subr.mxu0 0.0
    %7550 = vmatpush1.msra.mxu0 %v5981
    %7551 = vmatprep.subr.mxu0 0.0
    %7552 = vmatpush1.msra.mxu0 %v5982
    %7553 = vmatprep.subr.mxu0 0.0
    %7554 = vmatpush1.msra.mxu0 %v5983
    %7555 = vmatprep.subr.mxu0 0.0
    %7556 = vmatpush1.msra.mxu0 %v5984
    %7557 = vmatprep.subr.mxu0 0.0
    %7558 = vmatpush1.msra.mxu0 %v5985
    %7559 = vmatprep.subr.mxu0 0.0
    %7560 = vmatpush1.msra.mxu0 %v5986
    %7561 = vmatprep.subr.mxu0 0.0
    %7562 = vmatpush1.msra.mxu0 %v5987
    %7563 = vmatprep.subr.mxu0 0.0
    %7564 = vmatpush1.msra.mxu0 %v5988
    %7565 = vmatprep.subr.mxu0 0.0
    %7566 = vmatpush1.msra.mxu0 %v5989
    %7567 = vmatprep.subr.mxu0 0.0
    %7568 = vmatpush1.msra.mxu0 %v5990
    %7569 = vmatprep.subr.mxu0 0.0
    %7570 = vmatpush1.msra.mxu0 %v5991
    %7571 = vmatprep.subr.mxu0 0.0
    %7572 = vmatpush1.msra.mxu0 %v5992
    %7573 = vmatprep.subr.mxu0 0.0
    %7574 = vmatpush1.msra.mxu0 0.0
    %7575 = vmatprep.subr.mxu0 0.0
    %7576 = vmatpush1.msra.mxu0 0.0
    %7577 = vmatprep.subr.mxu0 0.0
    %7578 = vmatpush1.msra.mxu0 0.0
    %7579 = vmatprep.subr.mxu0 0.0
    %7580 = vmatpush1.msra.mxu0 0.0
    %7581 = vmatprep.subr.mxu0 0.0
    %7582 = vmatpush1.msra.mxu0 0.0
    %7583 = vmatprep.subr.mxu0 0.0
    %7584 = vmatpush1.msra.mxu0 0.0
    %7585 = vmatprep.subr.mxu0 0.0
    %7586 = vmatpush1.msra.mxu0 0.0
    %7587 = vmatprep.subr.mxu0 0.0
    %7588 = vmatpush1.msra.mxu0 0.0
    %7589 = vmatprep.subr.mxu0 0.0
    %7590 = vmatpush1.msra.mxu0 0.0
    %7591 = vmatprep.subr.mxu0 0.0
    %7592 = vmatpush1.msra.mxu0 0.0
    %7593 = vmatprep.subr.mxu0 0.0
    %7594 = vmatpush1.msra.mxu0 0.0
    %7595 = vmatprep.subr.mxu0 0.0
    %7596 = vmatpush1.msra.mxu0 0.0
    %7597 = vmatprep.subr.mxu0 0.0
    %7598 = vmatpush1.msra.mxu0 0.0
    %7599 = vmatprep.subr.mxu0 0.0
    %7600 = vmatpush1.msra.mxu0 0.0
    %7601 = vmatprep.subr.mxu0 0.0
    %7602 = vmatpush1.msra.mxu0 0.0
    %7603 = vmatprep.subr.mxu0 0.0
    %7604 = vmatpush1.msra.mxu0 0.0
    %7605 = vmatprep.mubr.f32.mxu0 0.0
    %7606 = vmatmul.mubr.f32.gmra.mrb[0].mxu0 %v7537
    %v7607 = vpop.f32.mrb[0].mxu0
    %v7608 = vadd.f32 0.0, %v7607
    %v7609 = vpop.f32.mrb[0].mxu0
    %7610 = vmatprep.mubr.f32.mxu0 0.0
    %7611 = vmatmul.mubr.f32.gmra.mrb[0].mxu0 %v7538
    %v7612 = vpop.f32.mrb[0].mxu0
    %v7613 = vadd.f32 0.0, %v7612
    %v7614 = vpop.f32.mrb[0].mxu0
    %7615 = vmatprep.mubr.f32.mxu0 0.0
    %7616 = vmatmul.mubr.f32.gmra.mrb[0].mxu0 %v7539
    %v7617 = vpop.f32.mrb[0].mxu0
    %v7618 = vadd.f32 0.0, %v7617
    %v7619 = vpop.f32.mrb[0].mxu0
    %7620 = vmatprep.mubr.f32.mxu0 0.0
    %7621 = vmatmul.mubr.f32.gmra.mrb[0].mxu0 %v7540
    %v7622 = vpop.f32.mrb[0].mxu0
    %v7623 = vadd.f32 0.0, %v7622
    %v7624 = vpop.f32.mrb[0].mxu0
    %7625 = vdwg.mxu0
    %s7626 = scalar_lea.vmem [#allocation11], 128
    %v7627 = vld [vmem:[%s7626] sm:$0xff]
    %v7628 = vld [vmem:[%s7626 + $0x8] sm:$0xff]
    %v7630 = vsel %vm6177, %v7608, 0
    %v7633 = vsel %vm6177, %v7613, 0
    %v7636 = vsel %vm6177, %v7618, 0
    %v7639 = vsel %vm6177, %v7623, 0
    %7641 = vmatprep.subr.mxu0 0.0
    %7642 = vmatpush1.msra.mxu0 %v7627
    %7643 = vmatprep.subr.mxu0 0.0
    %7644 = vmatpush1.msra.mxu0 %v7628
    %7645 = vmatprep.subr.mxu0 0.0
    %7646 = vmatpush1.msra.mxu0 0.0
    %7647 = vmatprep.subr.mxu0 0.0
    %7648 = vmatpush1.msra.mxu0 0.0
    %7649 = vmatprep.subr.mxu0 0.0
    %7650 = vmatpush1.msra.mxu0 0.0
    %7651 = vmatprep.subr.mxu0 0.0
    %7652 = vmatpush1.msra.mxu0 0.0
    %7653 = vmatprep.subr.mxu0 0.0
    %7654 = vmatpush1.msra.mxu0 0.0
    %7655 = vmatprep.subr.mxu0 0.0
    %7656 = vmatpush1.msra.mxu0 0.0
    %7657 = vmatprep.subr.mxu0 0.0
    %7658 = vmatpush1.msra.mxu0 0.0
    %7659 = vmatprep.subr.mxu0 0.0
    %7660 = vmatpush1.msra.mxu0 0.0
    %7661 = vmatprep.subr.mxu0 0.0
    %7662 = vmatpush1.msra.mxu0 0.0
    %7663 = vmatprep.subr.mxu0 0.0
    %7664 = vmatpush1.msra.mxu0 0.0
    %7665 = vmatprep.subr.mxu0 0.0
    %7666 = vmatpush1.msra.mxu0 0.0
    %7667 = vmatprep.subr.mxu0 0.0
    %7668 = vmatpush1.msra.mxu0 0.0
    %7669 = vmatprep.subr.mxu0 0.0
    %7670 = vmatpush1.msra.mxu0 0.0
    %7671 = vmatprep.subr.mxu0 0.0
    %7672 = vmatpush1.msra.mxu0 0.0
    %7673 = vmatprep.subr.mxu0 0.0
    %7674 = vmatpush1.msra.mxu0 0.0
    %7675 = vmatprep.subr.mxu0 0.0
    %7676 = vmatpush1.msra.mxu0 0.0
    %7677 = vmatprep.subr.mxu0 0.0
    %7678 = vmatpush1.msra.mxu0 0.0
    %7679 = vmatprep.subr.mxu0 0.0
    %7680 = vmatpush1.msra.mxu0 0.0
    %7681 = vmatprep.subr.mxu0 0.0
    %7682 = vmatpush1.msra.mxu0 0.0
    %7683 = vmatprep.subr.mxu0 0.0
    %7684 = vmatpush1.msra.mxu0 0.0
    %7685 = vmatprep.subr.mxu0 0.0
    %7686 = vmatpush1.msra.mxu0 0.0
    %7687 = vmatprep.subr.mxu0 0.0
    %7688 = vmatpush1.msra.mxu0 0.0
    %7689 = vmatprep.subr.mxu0 0.0
    %7690 = vmatpush1.msra.mxu0 0.0
    %7691 = vmatprep.subr.mxu0 0.0
    %7692 = vmatpush1.msra.mxu0 0.0
    %7693 = vmatprep.subr.mxu0 0.0
    %7694 = vmatpush1.msra.mxu0 0.0
    %7695 = vmatprep.subr.mxu0 0.0
    %7696 = vmatpush1.msra.mxu0 0.0
    %7697 = vmatprep.subr.mxu0 0.0
    %7698 = vmatpush1.msra.mxu0 0.0
    %7699 = vmatprep.subr.mxu0 0.0
    %7700 = vmatpush1.msra.mxu0 0.0
    %7701 = vmatprep.subr.mxu0 0.0
    %7702 = vmatpush1.msra.mxu0 0.0
    %7703 = vmatprep.subr.mxu0 0.0
    %7704 = vmatpush1.msra.mxu0 0.0
    %7705 = vmatprep.mubr.f32.mxu0 0.0
    %7706 = vmatmul.mubr.f32.gmra.mrb[0].mxu0 %v7630
    %v7707 = vpop.f32.mrb[0].mxu0
    %v7708 = vadd.f32 0.0, %v7707
    %v7709 = vpop.f32.mrb[0].mxu0
    %7710 = vmatprep.mubr.f32.mxu0 0.0
    %7711 = vmatmul.mubr.f32.gmra.mrb[0].mxu0 %v7633
    %v7712 = vpop.f32.mrb[0].mxu0
    %v7713 = vadd.f32 0.0, %v7712
    %v7714 = vpop.f32.mrb[0].mxu0
    %7715 = vmatprep.mubr.f32.mxu0 0.0
    %7716 = vmatmul.mubr.f32.gmra.mrb[0].mxu0 %v7636
    %v7717 = vpop.f32.mrb[0].mxu0
    %v7718 = vadd.f32 0.0, %v7717
    %v7719 = vpop.f32.mrb[0].mxu0
    %7720 = vmatprep.mubr.f32.mxu0 0.0
    %7721 = vmatmul.mubr.f32.gmra.mrb[0].mxu0 %v7639
    %v7722 = vpop.f32.mrb[0].mxu0
    %v7723 = vadd.f32 0.0, %v7722
    %v7724 = vpop.f32.mrb[0].mxu0
    %7725 = vdwg.mxu0
    %v7726 = vadd.f32 %v7532, %v7708
    %v7727 = vadd.f32 %v7533, %v7713
    %v7728 = vadd.f32 %v7534, %v7718
    %v7729 = vadd.f32 %v7535, %v7723
    %v7730 = vld [vmem:[#allocation13] sm:$0x1]
    %v7732 = vlaneseq
    %v7733 = vshrl.u32 %v7732, 7
    %v7734 = vsub.s32 0, %v7733
    %v7735 = vrot.slane %v7730, %v7734
    %v7737 = vadd.f32 %v7726, %v7735
    %v7738 = vadd.f32 %v7727, %v7735
    %v7739 = vadd.f32 %v7728, %v7735
    %v7740 = vadd.f32 %v7729, %v7735
    %v7741 = vmax.f32 %v7737, 0.0
    %v7742 = vmax.f32 %v7738, 0.0
    %v7743 = vmax.f32 %v7739, 0.0
    %v7744 = vmax.f32 %v7740, 0.0
    %v7745 = vld [vmem:[#allocation14] sm:$0x3]
    %vm7746 = vcmask 261120
    %v7748 = vsel %vm7746, %v7745, 0
    %7750 = vmatprep.subr.mxu0 0.0
    %7751 = vmatpush1.msra.mxu0 %v7741
    %7752 = vmatprep.subr.mxu0 0.0
    %7753 = vmatpush1.msra.mxu0 %v7742
    %7754 = vmatprep.subr.mxu0 0.0
    %7755 = vmatpush1.msra.mxu0 %v7743
    %7756 = vmatprep.subr.mxu0 0.0
    %7757 = vmatpush1.msra.mxu0 %v7744
    %7758 = vmatprep.subr.mxu0 0.0
    %7759 = vmatpush1.msra.mxu0 0.0
    %7760 = vmatprep.subr.mxu0 0.0
    %7761 = vmatpush1.msra.mxu0 0.0
    %7762 = vmatprep.subr.mxu0 0.0
    %7763 = vmatpush1.msra.mxu0 0.0
    %7764 = vmatprep.subr.mxu0 0.0
    %7765 = vmatpush1.msra.mxu0 0.0
    %7766 = vmatprep.subr.mxu0 0.0
    %7767 = vmatpush1.msra.mxu0 0.0
    %7768 = vmatprep.subr.mxu0 0.0
    %7769 = vmatpush1.msra.mxu0 0.0
    %7770 = vmatprep.subr.mxu0 0.0
    %7771 = vmatpush1.msra.mxu0 0.0
    %7772 = vmatprep.subr.mxu0 0.0
    %7773 = vmatpush1.msra.mxu0 0.0
    %7774 = vmatprep.subr.mxu0 0.0
    %7775 = vmatpush1.msra.mxu0 0.0
    %7776 = vmatprep.subr.mxu0 0.0
    %7777 = vmatpush1.msra.mxu0 0.0
    %7778 = vmatprep.subr.mxu0 0.0
    %7779 = vmatpush1.msra.mxu0 0.0
    %7780 = vmatprep.subr.mxu0 0.0
    %7781 = vmatpush1.msra.mxu0 0.0
    %7782 = vmatprep.subr.mxu0 0.0
    %7783 = vmatpush1.msra.mxu0 0.0
    %7784 = vmatprep.subr.mxu0 0.0
    %7785 = vmatpush1.msra.mxu0 0.0
    %7786 = vmatprep.subr.mxu0 0.0
    %7787 = vmatpush1.msra.mxu0 0.0
    %7788 = vmatprep.subr.mxu0 0.0
    %7789 = vmatpush1.msra.mxu0 0.0
    %7790 = vmatprep.subr.mxu0 0.0
    %7791 = vmatpush1.msra.mxu0 0.0
    %7792 = vmatprep.subr.mxu0 0.0
    %7793 = vmatpush1.msra.mxu0 0.0
    %7794 = vmatprep.subr.mxu0 0.0
    %7795 = vmatpush1.msra.mxu0 0.0
    %7796 = vmatprep.subr.mxu0 0.0
    %7797 = vmatpush1.msra.mxu0 0.0
    %7798 = vmatprep.subr.mxu0 0.0
    %7799 = vmatpush1.msra.mxu0 0.0
    %7800 = vmatprep.subr.mxu0 0.0
    %7801 = vmatpush1.msra.mxu0 0.0
    %7802 = vmatprep.subr.mxu0 0.0
    %7803 = vmatpush1.msra.mxu0 0.0
    %7804 = vmatprep.subr.mxu0 0.0
    %7805 = vmatpush1.msra.mxu0 0.0
    %7806 = vmatprep.subr.mxu0 0.0
    %7807 = vmatpush1.msra.mxu0 0.0
    %7808 = vmatprep.subr.mxu0 0.0
    %7809 = vmatpush1.msra.mxu0 0.0
    %7810 = vmatprep.subr.mxu0 0.0
    %7811 = vmatpush1.msra.mxu0 0.0
    %7812 = vmatprep.subr.mxu0 0.0
    %7813 = vmatpush1.msra.mxu0 0.0
    %7814 = vmatprep.mubr.f32.mxu0 0.0
    %7815 = vmatmul.mubr.f32.gmra.mrb[0].mxu0 %v7748
    %v7816 = vpop.f32.mrb[0].mxu0
    %v7817 = vadd.f32 0.0, %v7816
    %v7818 = vpop.f32.mrb[0].mxu0
    %7819 = vdwg.mxu0
    %v7820 = vld [vmem:[%s10] sm:$0xff]
    %v7821 = vld [vmem:[%s10 + $0x8] sm:$0xff]
    %v7822 = vld [vmem:[%s10 + $0x10] sm:$0xff]
    %v7823 = vld [vmem:[%s10 + $0x18] sm:$0xff]
    %s7824 = scalar_lea.vmem [#allocation14], 2
    %v7825 = vld [vmem:[%s7824] sm:$0x3]
    %v7827 = vsel %vm7746, %v7825, 0
    %7829 = vmatprep.subr.mxu0 0.0
    %7830 = vmatpush1.msra.mxu0 %v7741
    %7831 = vmatprep.subr.mxu0 0.0
    %7832 = vmatpush1.msra.mxu0 %v7742
    %7833 = vmatprep.subr.mxu0 0.0
    %7834 = vmatpush1.msra.mxu0 %v7743
    %7835 = vmatprep.subr.mxu0 0.0
    %7836 = vmatpush1.msra.mxu0 %v7744
    %7837 = vmatprep.subr.mxu0 0.0
    %7838 = vmatpush1.msra.mxu0 0.0
    %7839 = vmatprep.subr.mxu0 0.0
    %7840 = vmatpush1.msra.mxu0 0.0
    %7841 = vmatprep.subr.mxu0 0.0
    %7842 = vmatpush1.msra.mxu0 0.0
    %7843 = vmatprep.subr.mxu0 0.0
    %7844 = vmatpush1.msra.mxu0 0.0
    %7845 = vmatprep.subr.mxu0 0.0
    %7846 = vmatpush1.msra.mxu0 0.0
    %7847 = vmatprep.subr.mxu0 0.0
    %7848 = vmatpush1.msra.mxu0 0.0
    %7849 = vmatprep.subr.mxu0 0.0
    %7850 = vmatpush1.msra.mxu0 0.0
    %7851 = vmatprep.subr.mxu0 0.0
    %7852 = vmatpush1.msra.mxu0 0.0
    %7853 = vmatprep.subr.mxu0 0.0
    %7854 = vmatpush1.msra.mxu0 0.0
    %7855 = vmatprep.subr.mxu0 0.0
    %7856 = vmatpush1.msra.mxu0 0.0
    %7857 = vmatprep.subr.mxu0 0.0
    %7858 = vmatpush1.msra.mxu0 0.0
    %7859 = vmatprep.subr.mxu0 0.0
    %7860 = vmatpush1.msra.mxu0 0.0
    %7861 = vmatprep.subr.mxu0 0.0
    %7862 = vmatpush1.msra.mxu0 0.0
    %7863 = vmatprep.subr.mxu0 0.0
    %7864 = vmatpush1.msra.mxu0 0.0
    %7865 = vmatprep.subr.mxu0 0.0
    %7866 = vmatpush1.msra.mxu0 0.0
    %7867 = vmatprep.subr.mxu0 0.0
    %7868 = vmatpush1.msra.mxu0 0.0
    %7869 = vmatprep.subr.mxu0 0.0
    %7870 = vmatpush1.msra.mxu0 0.0
    %7871 = vmatprep.subr.mxu0 0.0
    %7872 = vmatpush1.msra.mxu0 0.0
    %7873 = vmatprep.subr.mxu0 0.0
    %7874 = vmatpush1.msra.mxu0 0.0
    %7875 = vmatprep.subr.mxu0 0.0
    %7876 = vmatpush1.msra.mxu0 0.0
    %7877 = vmatprep.subr.mxu0 0.0
    %7878 = vmatpush1.msra.mxu0 0.0
    %7879 = vmatprep.subr.mxu0 0.0
    %7880 = vmatpush1.msra.mxu0 0.0
    %7881 = vmatprep.subr.mxu0 0.0
    %7882 = vmatpush1.msra.mxu0 0.0
    %7883 = vmatprep.subr.mxu0 0.0
    %7884 = vmatpush1.msra.mxu0 0.0
    %7885 = vmatprep.subr.mxu0 0.0
    %7886 = vmatpush1.msra.mxu0 0.0
    %7887 = vmatprep.subr.mxu0 0.0
    %7888 = vmatpush1.msra.mxu0 0.0
    %7889 = vmatprep.subr.mxu0 0.0
    %7890 = vmatpush1.msra.mxu0 0.0
    %7891 = vmatprep.subr.mxu0 0.0
    %7892 = vmatpush1.msra.mxu0 0.0
    %7893 = vmatprep.mubr.f32.mxu0 0.0
    %7894 = vmatmul.mubr.f32.gmra.mrb[0].mxu0 %v7827
    %v7895 = vpop.f32.mrb[0].mxu0
    %v7896 = vadd.f32 0.0, %v7895
    %v7897 = vpop.f32.mrb[0].mxu0
    %7898 = vdwg.mxu0
    %s7899 = scalar_lea.vmem %s10, 32
    %v7900 = vld [vmem:[%s7899] sm:$0xff]
    %v7901 = vld [vmem:[%s7899 + $0x8] sm:$0xff]
    %v7902 = vld [vmem:[%s7899 + $0x10] sm:$0xff]
    %v7903 = vld [vmem:[%s7899 + $0x18] sm:$0xff]
    %v7905 = vsel %vm7746, %v7896, 0
    %7907 = vmatprep.subr.mxu0 0.0
    %7908 = vmatpush1.msra.mxu0 %v7900
    %7909 = vmatprep.subr.mxu0 0.0
    %7910 = vmatpush1.msra.mxu0 %v7901
    %7911 = vmatprep.subr.mxu0 0.0
    %7912 = vmatpush1.msra.mxu0 %v7902
    %7913 = vmatprep.subr.mxu0 0.0
    %7914 = vmatpush1.msra.mxu0 %v7903
    %7915 = vmatprep.subr.mxu0 0.0
    %7916 = vmatpush1.msra.mxu0 0.0
    %7917 = vmatprep.subr.mxu0 0.0
    %7918 = vmatpush1.msra.mxu0 0.0
    %7919 = vmatprep.subr.mxu0 0.0
    %7920 = vmatpush1.msra.mxu0 0.0
    %7921 = vmatprep.subr.mxu0 0.0
    %7922 = vmatpush1.msra.mxu0 0.0
    %7923 = vmatprep.subr.mxu0 0.0
    %7924 = vmatpush1.msra.mxu0 0.0
    %7925 = vmatprep.subr.mxu0 0.0
    %7926 = vmatpush1.msra.mxu0 0.0
    %7927 = vmatprep.subr.mxu0 0.0
    %7928 = vmatpush1.msra.mxu0 0.0
    %7929 = vmatprep.subr.mxu0 0.0
    %7930 = vmatpush1.msra.mxu0 0.0
    %7931 = vmatprep.subr.mxu0 0.0
    %7932 = vmatpush1.msra.mxu0 0.0
    %7933 = vmatprep.subr.mxu0 0.0
    %7934 = vmatpush1.msra.mxu0 0.0
    %7935 = vmatprep.subr.mxu0 0.0
    %7936 = vmatpush1.msra.mxu0 0.0
    %7937 = vmatprep.subr.mxu0 0.0
    %7938 = vmatpush1.msra.mxu0 0.0
    %7939 = vmatprep.subr.mxu0 0.0
    %7940 = vmatpush1.msra.mxu0 0.0
    %7941 = vmatprep.subr.mxu0 0.0
    %7942 = vmatpush1.msra.mxu0 0.0
    %7943 = vmatprep.subr.mxu0 0.0
    %7944 = vmatpush1.msra.mxu0 0.0
    %7945 = vmatprep.subr.mxu0 0.0
    %7946 = vmatpush1.msra.mxu0 0.0
    %7947 = vmatprep.subr.mxu0 0.0
    %7948 = vmatpush1.msra.mxu0 0.0
    %7949 = vmatprep.subr.mxu0 0.0
    %7950 = vmatpush1.msra.mxu0 0.0
    %7951 = vmatprep.subr.mxu0 0.0
    %7952 = vmatpush1.msra.mxu0 0.0
    %7953 = vmatprep.subr.mxu0 0.0
    %7954 = vmatpush1.msra.mxu0 0.0
    %7955 = vmatprep.subr.mxu0 0.0
    %7956 = vmatpush1.msra.mxu0 0.0
    %7957 = vmatprep.subr.mxu0 0.0
    %7958 = vmatpush1.msra.mxu0 0.0
    %7959 = vmatprep.subr.mxu0 0.0
    %7960 = vmatpush1.msra.mxu0 0.0
    %7961 = vmatprep.subr.mxu0 0.0
    %7962 = vmatpush1.msra.mxu0 0.0
    %7963 = vmatprep.subr.mxu0 0.0
    %7964 = vmatpush1.msra.mxu0 0.0
    %7965 = vmatprep.subr.mxu0 0.0
    %7966 = vmatpush1.msra.mxu0 0.0
    %7967 = vmatprep.subr.mxu0 0.0
    %7968 = vmatpush1.msra.mxu0 0.0
    %7969 = vmatprep.subr.mxu0 0.0
    %7970 = vmatpush1.msra.mxu0 0.0
    %7971 = vmatprep.mubr.f32.mxu0 0.0
    %7972 = vmatmul.mubr.f32.gmra.mrb[0].mxu0 %v7905
    %v7973 = vpop.f32.mrb[0].mxu0
    %v7974 = vadd.f32 0.0, %v7973
    %v7975 = vpop.f32.mrb[0].mxu0
    %7976 = vdwg.mxu0
    %v7978 = vsel %vm7746, %v7817, 0
    %7980 = vmatprep.subr.mxu0 0.0
    %7981 = vmatpush1.msra.mxu0 %v7820
    %7982 = vmatprep.subr.mxu0 0.0
    %7983 = vmatpush1.msra.mxu0 %v7821
    %7984 = vmatprep.subr.mxu0 0.0
    %7985 = vmatpush1.msra.mxu0 %v7822
    %7986 = vmatprep.subr.mxu0 0.0
    %7987 = vmatpush1.msra.mxu0 %v7823
    %7988 = vmatprep.subr.mxu0 0.0
    %7989 = vmatpush1.msra.mxu0 0.0
    %7990 = vmatprep.subr.mxu0 0.0
    %7991 = vmatpush1.msra.mxu0 0.0
    %7992 = vmatprep.subr.mxu0 0.0
    %7993 = vmatpush1.msra.mxu0 0.0
    %7994 = vmatprep.subr.mxu0 0.0
    %7995 = vmatpush1.msra.mxu0 0.0
    %7996 = vmatprep.subr.mxu0 0.0
    %7997 = vmatpush1.msra.mxu0 0.0
    %7998 = vmatprep.subr.mxu0 0.0
    %7999 = vmatpush1.msra.mxu0 0.0
    %8000 = vmatprep.subr.mxu0 0.0
    %8001 = vmatpush1.msra.mxu0 0.0
    %8002 = vmatprep.subr.mxu0 0.0
    %8003 = vmatpush1.msra.mxu0 0.0
    %8004 = vmatprep.subr.mxu0 0.0
    %8005 = vmatpush1.msra.mxu0 0.0
    %8006 = vmatprep.subr.mxu0 0.0
    %8007 = vmatpush1.msra.mxu0 0.0
    %8008 = vmatprep.subr.mxu0 0.0
    %8009 = vmatpush1.msra.mxu0 0.0
    %8010 = vmatprep.subr.mxu0 0.0
    %8011 = vmatpush1.msra.mxu0 0.0
    %8012 = vmatprep.subr.mxu0 0.0
    %8013 = vmatpush1.msra.mxu0 0.0
    %8014 = vmatprep.subr.mxu0 0.0
    %8015 = vmatpush1.msra.mxu0 0.0
    %8016 = vmatprep.subr.mxu0 0.0
    %8017 = vmatpush1.msra.mxu0 0.0
    %8018 = vmatprep.subr.mxu0 0.0
    %8019 = vmatpush1.msra.mxu0 0.0
    %8020 = vmatprep.subr.mxu0 0.0
    %8021 = vmatpush1.msra.mxu0 0.0
    %8022 = vmatprep.subr.mxu0 0.0
    %8023 = vmatpush1.msra.mxu0 0.0
    %8024 = vmatprep.subr.mxu0 0.0
    %8025 = vmatpush1.msra.mxu0 0.0
    %8026 = vmatprep.subr.mxu0 0.0
    %8027 = vmatpush1.msra.mxu0 0.0
    %8028 = vmatprep.subr.mxu0 0.0
    %8029 = vmatpush1.msra.mxu0 0.0
    %8030 = vmatprep.subr.mxu0 0.0
    %8031 = vmatpush1.msra.mxu0 0.0
    %8032 = vmatprep.subr.mxu0 0.0
    %8033 = vmatpush1.msra.mxu0 0.0
    %8034 = vmatprep.subr.mxu0 0.0
    %8035 = vmatpush1.msra.mxu0 0.0
    %8036 = vmatprep.subr.mxu0 0.0
    %8037 = vmatpush1.msra.mxu0 0.0
    %8038 = vmatprep.subr.mxu0 0.0
    %8039 = vmatpush1.msra.mxu0 0.0
    %8040 = vmatprep.subr.mxu0 0.0
    %8041 = vmatpush1.msra.mxu0 0.0
    %8042 = vmatprep.subr.mxu0 0.0
    %8043 = vmatpush1.msra.mxu0 0.0
    %8044 = vmatprep.mubr.f32.mxu0 0.0
    %8045 = vmatmul.mubr.f32.gmra.mrb[0].mxu0 %v7978
    %v8046 = vpop.f32.mrb[0].mxu0
    %v8047 = vadd.f32 %v7974, %v8046
    %v8048 = vpop.f32.mrb[0].mxu0
    %8049 = vdwg.mxu0
    %s8050 = scalar_lea.vmem [#allocation14], 4
    %v8051 = vld [vmem:[%s8050] sm:$0x3]
    %v8053 = vsel %vm7746, %v8051, 0
    %8055 = vmatprep.subr.mxu0 0.0
    %8056 = vmatpush1.msra.mxu0 %v7741
    %8057 = vmatprep.subr.mxu0 0.0
    %8058 = vmatpush1.msra.mxu0 %v7742
    %8059 = vmatprep.subr.mxu0 0.0
    %8060 = vmatpush1.msra.mxu0 %v7743
    %8061 = vmatprep.subr.mxu0 0.0
    %8062 = vmatpush1.msra.mxu0 %v7744
    %8063 = vmatprep.subr.mxu0 0.0
    %8064 = vmatpush1.msra.mxu0 0.0
    %8065 = vmatprep.subr.mxu0 0.0
    %8066 = vmatpush1.msra.mxu0 0.0
    %8067 = vmatprep.subr.mxu0 0.0
    %8068 = vmatpush1.msra.mxu0 0.0
    %8069 = vmatprep.subr.mxu0 0.0
    %8070 = vmatpush1.msra.mxu0 0.0
    %8071 = vmatprep.subr.mxu0 0.0
    %8072 = vmatpush1.msra.mxu0 0.0
    %8073 = vmatprep.subr.mxu0 0.0
    %8074 = vmatpush1.msra.mxu0 0.0
    %8075 = vmatprep.subr.mxu0 0.0
    %8076 = vmatpush1.msra.mxu0 0.0
    %8077 = vmatprep.subr.mxu0 0.0
    %8078 = vmatpush1.msra.mxu0 0.0
    %8079 = vmatprep.subr.mxu0 0.0
    %8080 = vmatpush1.msra.mxu0 0.0
    %8081 = vmatprep.subr.mxu0 0.0
    %8082 = vmatpush1.msra.mxu0 0.0
    %8083 = vmatprep.subr.mxu0 0.0
    %8084 = vmatpush1.msra.mxu0 0.0
    %8085 = vmatprep.subr.mxu0 0.0
    %8086 = vmatpush1.msra.mxu0 0.0
    %8087 = vmatprep.subr.mxu0 0.0
    %8088 = vmatpush1.msra.mxu0 0.0
    %8089 = vmatprep.subr.mxu0 0.0
    %8090 = vmatpush1.msra.mxu0 0.0
    %8091 = vmatprep.subr.mxu0 0.0
    %8092 = vmatpush1.msra.mxu0 0.0
    %8093 = vmatprep.subr.mxu0 0.0
    %8094 = vmatpush1.msra.mxu0 0.0
    %8095 = vmatprep.subr.mxu0 0.0
    %8096 = vmatpush1.msra.mxu0 0.0
    %8097 = vmatprep.subr.mxu0 0.0
    %8098 = vmatpush1.msra.mxu0 0.0
    %8099 = vmatprep.subr.mxu0 0.0
    %8100 = vmatpush1.msra.mxu0 0.0
    %8101 = vmatprep.subr.mxu0 0.0
    %8102 = vmatpush1.msra.mxu0 0.0
    %8103 = vmatprep.subr.mxu0 0.0
    %8104 = vmatpush1.msra.mxu0 0.0
    %8105 = vmatprep.subr.mxu0 0.0
    %8106 = vmatpush1.msra.mxu0 0.0
    %8107 = vmatprep.subr.mxu0 0.0
    %8108 = vmatpush1.msra.mxu0 0.0
    %8109 = vmatprep.subr.mxu0 0.0
    %8110 = vmatpush1.msra.mxu0 0.0
    %8111 = vmatprep.subr.mxu0 0.0
    %8112 = vmatpush1.msra.mxu0 0.0
    %8113 = vmatprep.subr.mxu0 0.0
    %8114 = vmatpush1.msra.mxu0 0.0
    %8115 = vmatprep.subr.mxu0 0.0
    %8116 = vmatpush1.msra.mxu0 0.0
    %8117 = vmatprep.subr.mxu0 0.0
    %8118 = vmatpush1.msra.mxu0 0.0
    %8119 = vmatprep.mubr.f32.mxu0 0.0
    %8120 = vmatmul.mubr.f32.gmra.mrb[0].mxu0 %v8053
    %v8121 = vpop.f32.mrb[0].mxu0
    %v8122 = vadd.f32 0.0, %v8121
    %v8123 = vpop.f32.mrb[0].mxu0
    %8124 = vdwg.mxu0
    %s8125 = scalar_lea.vmem %s10, 64
    %v8126 = vld [vmem:[%s8125] sm:$0xff]
    %v8127 = vld [vmem:[%s8125 + $0x8] sm:$0xff]
    %v8128 = vld [vmem:[%s8125 + $0x10] sm:$0xff]
    %v8129 = vld [vmem:[%s8125 + $0x18] sm:$0xff]
    %v8131 = vsel %vm7746, %v8122, 0
    %8133 = vmatprep.subr.mxu0 0.0
    %8134 = vmatpush1.msra.mxu0 %v8126
    %8135 = vmatprep.subr.mxu0 0.0
    %8136 = vmatpush1.msra.mxu0 %v8127
    %8137 = vmatprep.subr.mxu0 0.0
    %8138 = vmatpush1.msra.mxu0 %v8128
    %8139 = vmatprep.subr.mxu0 0.0
    %8140 = vmatpush1.msra.mxu0 %v8129
    %8141 = vmatprep.subr.mxu0 0.0
    %8142 = vmatpush1.msra.mxu0 0.0
    %8143 = vmatprep.subr.mxu0 0.0
    %8144 = vmatpush1.msra.mxu0 0.0
    %8145 = vmatprep.subr.mxu0 0.0
    %8146 = vmatpush1.msra.mxu0 0.0
    %8147 = vmatprep.subr.mxu0 0.0
    %8148 = vmatpush1.msra.mxu0 0.0
    %8149 = vmatprep.subr.mxu0 0.0
    %8150 = vmatpush1.msra.mxu0 0.0
    %8151 = vmatprep.subr.mxu0 0.0
    %8152 = vmatpush1.msra.mxu0 0.0
    %8153 = vmatprep.subr.mxu0 0.0
    %8154 = vmatpush1.msra.mxu0 0.0
    %8155 = vmatprep.subr.mxu0 0.0
    %8156 = vmatpush1.msra.mxu0 0.0
    %8157 = vmatprep.subr.mxu0 0.0
    %8158 = vmatpush1.msra.mxu0 0.0
    %8159 = vmatprep.subr.mxu0 0.0
    %8160 = vmatpush1.msra.mxu0 0.0
    %8161 = vmatprep.subr.mxu0 0.0
    %8162 = vmatpush1.msra.mxu0 0.0
    %8163 = vmatprep.subr.mxu0 0.0
    %8164 = vmatpush1.msra.mxu0 0.0
    %8165 = vmatprep.subr.mxu0 0.0
    %8166 = vmatpush1.msra.mxu0 0.0
    %8167 = vmatprep.subr.mxu0 0.0
    %8168 = vmatpush1.msra.mxu0 0.0
    %8169 = vmatprep.subr.mxu0 0.0
    %8170 = vmatpush1.msra.mxu0 0.0
    %8171 = vmatprep.subr.mxu0 0.0
    %8172 = vmatpush1.msra.mxu0 0.0
    %8173 = vmatprep.subr.mxu0 0.0
    %8174 = vmatpush1.msra.mxu0 0.0
    %8175 = vmatprep.subr.mxu0 0.0
    %8176 = vmatpush1.msra.mxu0 0.0
    %8177 = vmatprep.subr.mxu0 0.0
    %8178 = vmatpush1.msra.mxu0 0.0
    %8179 = vmatprep.subr.mxu0 0.0
    %8180 = vmatpush1.msra.mxu0 0.0
    %8181 = vmatprep.subr.mxu0 0.0
    %8182 = vmatpush1.msra.mxu0 0.0
    %8183 = vmatprep.subr.mxu0 0.0
    %8184 = vmatpush1.msra.mxu0 0.0
    %8185 = vmatprep.subr.mxu0 0.0
    %8186 = vmatpush1.msra.mxu0 0.0
    %8187 = vmatprep.subr.mxu0 0.0
    %8188 = vmatpush1.msra.mxu0 0.0
    %8189 = vmatprep.subr.mxu0 0.0
    %8190 = vmatpush1.msra.mxu0 0.0
    %8191 = vmatprep.subr.mxu0 0.0
    %8192 = vmatpush1.msra.mxu0 0.0
    %8193 = vmatprep.subr.mxu0 0.0
    %8194 = vmatpush1.msra.mxu0 0.0
    %8195 = vmatprep.subr.mxu0 0.0
    %8196 = vmatpush1.msra.mxu0 0.0
    %8197 = vmatprep.mubr.f32.mxu0 0.0
    %8198 = vmatmul.mubr.f32.gmra.mrb[0].mxu0 %v8131
    %v8199 = vpop.f32.mrb[0].mxu0
    %v8200 = vadd.f32 0.0, %v8199
    %v8201 = vpop.f32.mrb[0].mxu0
    %8202 = vdwg.mxu0
    %v8203 = vadd.f32 %v8047, %v8200
    %s8204 = scalar_lea.vmem [#allocation14], 6
    %v8205 = vld [vmem:[%s8204] sm:$0x3]
    %v8207 = vsel %vm7746, %v8205, 0
    %8209 = vmatprep.subr.mxu0 0.0
    %8210 = vmatpush1.msra.mxu0 %v7741
    %8211 = vmatprep.subr.mxu0 0.0
    %8212 = vmatpush1.msra.mxu0 %v7742
    %8213 = vmatprep.subr.mxu0 0.0
    %8214 = vmatpush1.msra.mxu0 %v7743
    %8215 = vmatprep.subr.mxu0 0.0
    %8216 = vmatpush1.msra.mxu0 %v7744
    %8217 = vmatprep.subr.mxu0 0.0
    %8218 = vmatpush1.msra.mxu0 0.0
    %8219 = vmatprep.subr.mxu0 0.0
    %8220 = vmatpush1.msra.mxu0 0.0
    %8221 = vmatprep.subr.mxu0 0.0
    %8222 = vmatpush1.msra.mxu0 0.0
    %8223 = vmatprep.subr.mxu0 0.0
    %8224 = vmatpush1.msra.mxu0 0.0
    %8225 = vmatprep.subr.mxu0 0.0
    %8226 = vmatpush1.msra.mxu0 0.0
    %8227 = vmatprep.subr.mxu0 0.0
    %8228 = vmatpush1.msra.mxu0 0.0
    %8229 = vmatprep.subr.mxu0 0.0
    %8230 = vmatpush1.msra.mxu0 0.0
    %8231 = vmatprep.subr.mxu0 0.0
    %8232 = vmatpush1.msra.mxu0 0.0
    %8233 = vmatprep.subr.mxu0 0.0
    %8234 = vmatpush1.msra.mxu0 0.0
    %8235 = vmatprep.subr.mxu0 0.0
    %8236 = vmatpush1.msra.mxu0 0.0
    %8237 = vmatprep.subr.mxu0 0.0
    %8238 = vmatpush1.msra.mxu0 0.0
    %8239 = vmatprep.subr.mxu0 0.0
    %8240 = vmatpush1.msra.mxu0 0.0
    %8241 = vmatprep.subr.mxu0 0.0
    %8242 = vmatpush1.msra.mxu0 0.0
    %8243 = vmatprep.subr.mxu0 0.0
    %8244 = vmatpush1.msra.mxu0 0.0
    %8245 = vmatprep.subr.mxu0 0.0
    %8246 = vmatpush1.msra.mxu0 0.0
    %8247 = vmatprep.subr.mxu0 0.0
    %8248 = vmatpush1.msra.mxu0 0.0
    %8249 = vmatprep.subr.mxu0 0.0
    %8250 = vmatpush1.msra.mxu0 0.0
    %8251 = vmatprep.subr.mxu0 0.0
    %8252 = vmatpush1.msra.mxu0 0.0
    %8253 = vmatprep.subr.mxu0 0.0
    %8254 = vmatpush1.msra.mxu0 0.0
    %8255 = vmatprep.subr.mxu0 0.0
    %8256 = vmatpush1.msra.mxu0 0.0
    %8257 = vmatprep.subr.mxu0 0.0
    %8258 = vmatpush1.msra.mxu0 0.0
    %8259 = vmatprep.subr.mxu0 0.0
    %8260 = vmatpush1.msra.mxu0 0.0
    %8261 = vmatprep.subr.mxu0 0.0
    %8262 = vmatpush1.msra.mxu0 0.0
    %8263 = vmatprep.subr.mxu0 0.0
    %8264 = vmatpush1.msra.mxu0 0.0
    %8265 = vmatprep.subr.mxu0 0.0
    %8266 = vmatpush1.msra.mxu0 0.0
    %8267 = vmatprep.subr.mxu0 0.0
    %8268 = vmatpush1.msra.mxu0 0.0
    %8269 = vmatprep.subr.mxu0 0.0
    %8270 = vmatpush1.msra.mxu0 0.0
    %8271 = vmatprep.subr.mxu0 0.0
    %8272 = vmatpush1.msra.mxu0 0.0
    %8273 = vmatprep.mubr.f32.mxu0 0.0
    %8274 = vmatmul.mubr.f32.gmra.mrb[0].mxu0 %v8207
    %v8275 = vpop.f32.mrb[0].mxu0
    %v8276 = vadd.f32 0.0, %v8275
    %v8277 = vpop.f32.mrb[0].mxu0
    %8278 = vdwg.mxu0
    %s8279 = scalar_lea.vmem %s10, 96
    %v8280 = vld [vmem:[%s8279] sm:$0xff]
    %v8281 = vld [vmem:[%s8279 + $0x8] sm:$0xff]
    %v8282 = vld [vmem:[%s8279 + $0x10] sm:$0xff]
    %v8283 = vld [vmem:[%s8279 + $0x18] sm:$0xff]
    %v8285 = vsel %vm7746, %v8276, 0
    %8287 = vmatprep.subr.mxu0 0.0
    %8288 = vmatpush1.msra.mxu0 %v8280
    %8289 = vmatprep.subr.mxu0 0.0
    %8290 = vmatpush1.msra.mxu0 %v8281
    %8291 = vmatprep.subr.mxu0 0.0
    %8292 = vmatpush1.msra.mxu0 %v8282
    %8293 = vmatprep.subr.mxu0 0.0
    %8294 = vmatpush1.msra.mxu0 %v8283
    %8295 = vmatprep.subr.mxu0 0.0
    %8296 = vmatpush1.msra.mxu0 0.0
    %8297 = vmatprep.subr.mxu0 0.0
    %8298 = vmatpush1.msra.mxu0 0.0
    %8299 = vmatprep.subr.mxu0 0.0
    %8300 = vmatpush1.msra.mxu0 0.0
    %8301 = vmatprep.subr.mxu0 0.0
    %8302 = vmatpush1.msra.mxu0 0.0
    %8303 = vmatprep.subr.mxu0 0.0
    %8304 = vmatpush1.msra.mxu0 0.0
    %8305 = vmatprep.subr.mxu0 0.0
    %8306 = vmatpush1.msra.mxu0 0.0
    %8307 = vmatprep.subr.mxu0 0.0
    %8308 = vmatpush1.msra.mxu0 0.0
    %8309 = vmatprep.subr.mxu0 0.0
    %8310 = vmatpush1.msra.mxu0 0.0
    %8311 = vmatprep.subr.mxu0 0.0
    %8312 = vmatpush1.msra.mxu0 0.0
    %8313 = vmatprep.subr.mxu0 0.0
    %8314 = vmatpush1.msra.mxu0 0.0
    %8315 = vmatprep.subr.mxu0 0.0
    %8316 = vmatpush1.msra.mxu0 0.0
    %8317 = vmatprep.subr.mxu0 0.0
    %8318 = vmatpush1.msra.mxu0 0.0
    %8319 = vmatprep.subr.mxu0 0.0
    %8320 = vmatpush1.msra.mxu0 0.0
    %8321 = vmatprep.subr.mxu0 0.0
    %8322 = vmatpush1.msra.mxu0 0.0
    %8323 = vmatprep.subr.mxu0 0.0
    %8324 = vmatpush1.msra.mxu0 0.0
    %8325 = vmatprep.subr.mxu0 0.0
    %8326 = vmatpush1.msra.mxu0 0.0
    %8327 = vmatprep.subr.mxu0 0.0
    %8328 = vmatpush1.msra.mxu0 0.0
    %8329 = vmatprep.subr.mxu0 0.0
    %8330 = vmatpush1.msra.mxu0 0.0
    %8331 = vmatprep.subr.mxu0 0.0
    %8332 = vmatpush1.msra.mxu0 0.0
    %8333 = vmatprep.subr.mxu0 0.0
    %8334 = vmatpush1.msra.mxu0 0.0
    %8335 = vmatprep.subr.mxu0 0.0
    %8336 = vmatpush1.msra.mxu0 0.0
    %8337 = vmatprep.subr.mxu0 0.0
    %8338 = vmatpush1.msra.mxu0 0.0
    %8339 = vmatprep.subr.mxu0 0.0
    %8340 = vmatpush1.msra.mxu0 0.0
    %8341 = vmatprep.subr.mxu0 0.0
    %8342 = vmatpush1.msra.mxu0 0.0
    %8343 = vmatprep.subr.mxu0 0.0
    %8344 = vmatpush1.msra.mxu0 0.0
    %8345 = vmatprep.subr.mxu0 0.0
    %8346 = vmatpush1.msra.mxu0 0.0
    %8347 = vmatprep.subr.mxu0 0.0
    %8348 = vmatpush1.msra.mxu0 0.0
    %8349 = vmatprep.subr.mxu0 0.0
    %8350 = vmatpush1.msra.mxu0 0.0
    %8351 = vmatprep.mubr.f32.mxu0 0.0
    %8352 = vmatmul.mubr.f32.gmra.mrb[0].mxu0 %v8285
    %v8353 = vpop.f32.mrb[0].mxu0
    %v8354 = vadd.f32 0.0, %v8353
    %v8355 = vpop.f32.mrb[0].mxu0
    %8356 = vdwg.mxu0
    %v8357 = vadd.f32 %v8203, %v8354
    %s8358 = scalar_lea.vmem [#allocation14], 8
    %v8359 = vld [vmem:[%s8358] sm:$0x3]
    %v8361 = vsel %vm7746, %v8359, 0
    %8363 = vmatprep.subr.mxu0 0.0
    %8364 = vmatpush1.msra.mxu0 %v7741
    %8365 = vmatprep.subr.mxu0 0.0
    %8366 = vmatpush1.msra.mxu0 %v7742
    %8367 = vmatprep.subr.mxu0 0.0
    %8368 = vmatpush1.msra.mxu0 %v7743
    %8369 = vmatprep.subr.mxu0 0.0
    %8370 = vmatpush1.msra.mxu0 %v7744
    %8371 = vmatprep.subr.mxu0 0.0
    %8372 = vmatpush1.msra.mxu0 0.0
    %8373 = vmatprep.subr.mxu0 0.0
    %8374 = vmatpush1.msra.mxu0 0.0
    %8375 = vmatprep.subr.mxu0 0.0
    %8376 = vmatpush1.msra.mxu0 0.0
    %8377 = vmatprep.subr.mxu0 0.0
    %8378 = vmatpush1.msra.mxu0 0.0
    %8379 = vmatprep.subr.mxu0 0.0
    %8380 = vmatpush1.msra.mxu0 0.0
    %8381 = vmatprep.subr.mxu0 0.0
    %8382 = vmatpush1.msra.mxu0 0.0
    %8383 = vmatprep.subr.mxu0 0.0
    %8384 = vmatpush1.msra.mxu0 0.0
    %8385 = vmatprep.subr.mxu0 0.0
    %8386 = vmatpush1.msra.mxu0 0.0
    %8387 = vmatprep.subr.mxu0 0.0
    %8388 = vmatpush1.msra.mxu0 0.0
    %8389 = vmatprep.subr.mxu0 0.0
    %8390 = vmatpush1.msra.mxu0 0.0
    %8391 = vmatprep.subr.mxu0 0.0
    %8392 = vmatpush1.msra.mxu0 0.0
    %8393 = vmatprep.subr.mxu0 0.0
    %8394 = vmatpush1.msra.mxu0 0.0
    %8395 = vmatprep.subr.mxu0 0.0
    %8396 = vmatpush1.msra.mxu0 0.0
    %8397 = vmatprep.subr.mxu0 0.0
    %8398 = vmatpush1.msra.mxu0 0.0
    %8399 = vmatprep.subr.mxu0 0.0
    %8400 = vmatpush1.msra.mxu0 0.0
    %8401 = vmatprep.subr.mxu0 0.0
    %8402 = vmatpush1.msra.mxu0 0.0
    %8403 = vmatprep.subr.mxu0 0.0
    %8404 = vmatpush1.msra.mxu0 0.0
    %8405 = vmatprep.subr.mxu0 0.0
    %8406 = vmatpush1.msra.mxu0 0.0
    %8407 = vmatprep.subr.mxu0 0.0
    %8408 = vmatpush1.msra.mxu0 0.0
    %8409 = vmatprep.subr.mxu0 0.0
    %8410 = vmatpush1.msra.mxu0 0.0
    %8411 = vmatprep.subr.mxu0 0.0
    %8412 = vmatpush1.msra.mxu0 0.0
    %8413 = vmatprep.subr.mxu0 0.0
    %8414 = vmatpush1.msra.mxu0 0.0
    %8415 = vmatprep.subr.mxu0 0.0
    %8416 = vmatpush1.msra.mxu0 0.0
    %8417 = vmatprep.subr.mxu0 0.0
    %8418 = vmatpush1.msra.mxu0 0.0
    %8419 = vmatprep.subr.mxu0 0.0
    %8420 = vmatpush1.msra.mxu0 0.0
    %8421 = vmatprep.subr.mxu0 0.0
    %8422 = vmatpush1.msra.mxu0 0.0
    %8423 = vmatprep.subr.mxu0 0.0
    %8424 = vmatpush1.msra.mxu0 0.0
    %8425 = vmatprep.subr.mxu0 0.0
    %8426 = vmatpush1.msra.mxu0 0.0
    %8427 = vmatprep.mubr.f32.mxu0 0.0
    %8428 = vmatmul.mubr.f32.gmra.mrb[0].mxu0 %v8361
    %v8429 = vpop.f32.mrb[0].mxu0
    %v8430 = vadd.f32 0.0, %v8429
    %v8431 = vpop.f32.mrb[0].mxu0
    %8432 = vdwg.mxu0
    %s8433 = scalar_lea.vmem %s10, 128
    %v8434 = vld [vmem:[%s8433] sm:$0xff]
    %v8435 = vld [vmem:[%s8433 + $0x8] sm:$0xff]
    %v8436 = vld [vmem:[%s8433 + $0x10] sm:$0xff]
    %v8437 = vld [vmem:[%s8433 + $0x18] sm:$0xff]
    %v8439 = vsel %vm7746, %v8430, 0
    %8441 = vmatprep.subr.mxu0 0.0
    %8442 = vmatpush1.msra.mxu0 %v8434
    %8443 = vmatprep.subr.mxu0 0.0
    %8444 = vmatpush1.msra.mxu0 %v8435
    %8445 = vmatprep.subr.mxu0 0.0
    %8446 = vmatpush1.msra.mxu0 %v8436
    %8447 = vmatprep.subr.mxu0 0.0
    %8448 = vmatpush1.msra.mxu0 %v8437
    %8449 = vmatprep.subr.mxu0 0.0
    %8450 = vmatpush1.msra.mxu0 0.0
    %8451 = vmatprep.subr.mxu0 0.0
    %8452 = vmatpush1.msra.mxu0 0.0
    %8453 = vmatprep.subr.mxu0 0.0
    %8454 = vmatpush1.msra.mxu0 0.0
    %8455 = vmatprep.subr.mxu0 0.0
    %8456 = vmatpush1.msra.mxu0 0.0
    %8457 = vmatprep.subr.mxu0 0.0
    %8458 = vmatpush1.msra.mxu0 0.0
    %8459 = vmatprep.subr.mxu0 0.0
    %8460 = vmatpush1.msra.mxu0 0.0
    %8461 = vmatprep.subr.mxu0 0.0
    %8462 = vmatpush1.msra.mxu0 0.0
    %8463 = vmatprep.subr.mxu0 0.0
    %8464 = vmatpush1.msra.mxu0 0.0
    %8465 = vmatprep.subr.mxu0 0.0
    %8466 = vmatpush1.msra.mxu0 0.0
    %8467 = vmatprep.subr.mxu0 0.0
    %8468 = vmatpush1.msra.mxu0 0.0
    %8469 = vmatprep.subr.mxu0 0.0
    %8470 = vmatpush1.msra.mxu0 0.0
    %8471 = vmatprep.subr.mxu0 0.0
    %8472 = vmatpush1.msra.mxu0 0.0
    %8473 = vmatprep.subr.mxu0 0.0
    %8474 = vmatpush1.msra.mxu0 0.0
    %8475 = vmatprep.subr.mxu0 0.0
    %8476 = vmatpush1.msra.mxu0 0.0
    %8477 = vmatprep.subr.mxu0 0.0
    %8478 = vmatpush1.msra.mxu0 0.0
    %8479 = vmatprep.subr.mxu0 0.0
    %8480 = vmatpush1.msra.mxu0 0.0
    %8481 = vmatprep.subr.mxu0 0.0
    %8482 = vmatpush1.msra.mxu0 0.0
    %8483 = vmatprep.subr.mxu0 0.0
    %8484 = vmatpush1.msra.mxu0 0.0
    %8485 = vmatprep.subr.mxu0 0.0
    %8486 = vmatpush1.msra.mxu0 0.0
    %8487 = vmatprep.subr.mxu0 0.0
    %8488 = vmatpush1.msra.mxu0 0.0
    %8489 = vmatprep.subr.mxu0 0.0
    %8490 = vmatpush1.msra.mxu0 0.0
    %8491 = vmatprep.subr.mxu0 0.0
    %8492 = vmatpush1.msra.mxu0 0.0
    %8493 = vmatprep.subr.mxu0 0.0
    %8494 = vmatpush1.msra.mxu0 0.0
    %8495 = vmatprep.subr.mxu0 0.0
    %8496 = vmatpush1.msra.mxu0 0.0
    %8497 = vmatprep.subr.mxu0 0.0
    %8498 = vmatpush1.msra.mxu0 0.0
    %8499 = vmatprep.subr.mxu0 0.0
    %8500 = vmatpush1.msra.mxu0 0.0
    %8501 = vmatprep.subr.mxu0 0.0
    %8502 = vmatpush1.msra.mxu0 0.0
    %8503 = vmatprep.subr.mxu0 0.0
    %8504 = vmatpush1.msra.mxu0 0.0
    %8505 = vmatprep.mubr.f32.mxu0 0.0
    %8506 = vmatmul.mubr.f32.gmra.mrb[0].mxu0 %v8439
    %v8507 = vpop.f32.mrb[0].mxu0
    %v8508 = vadd.f32 0.0, %v8507
    %v8509 = vpop.f32.mrb[0].mxu0
    %8510 = vdwg.mxu0
    %v8511 = vadd.f32 %v8357, %v8508
    %s8512 = scalar_lea.vmem [#allocation14], 10
    %v8513 = vld [vmem:[%s8512] sm:$0x3]
    %v8515 = vsel %vm7746, %v8513, 0
    %8517 = vmatprep.subr.mxu0 0.0
    %8518 = vmatpush1.msra.mxu0 %v7741
    %8519 = vmatprep.subr.mxu0 0.0
    %8520 = vmatpush1.msra.mxu0 %v7742
    %8521 = vmatprep.subr.mxu0 0.0
    %8522 = vmatpush1.msra.mxu0 %v7743
    %8523 = vmatprep.subr.mxu0 0.0
    %8524 = vmatpush1.msra.mxu0 %v7744
    %8525 = vmatprep.subr.mxu0 0.0
    %8526 = vmatpush1.msra.mxu0 0.0
    %8527 = vmatprep.subr.mxu0 0.0
    %8528 = vmatpush1.msra.mxu0 0.0
    %8529 = vmatprep.subr.mxu0 0.0
    %8530 = vmatpush1.msra.mxu0 0.0
    %8531 = vmatprep.subr.mxu0 0.0
    %8532 = vmatpush1.msra.mxu0 0.0
    %8533 = vmatprep.subr.mxu0 0.0
    %8534 = vmatpush1.msra.mxu0 0.0
    %8535 = vmatprep.subr.mxu0 0.0
    %8536 = vmatpush1.msra.mxu0 0.0
    %8537 = vmatprep.subr.mxu0 0.0
    %8538 = vmatpush1.msra.mxu0 0.0
    %8539 = vmatprep.subr.mxu0 0.0
    %8540 = vmatpush1.msra.mxu0 0.0
    %8541 = vmatprep.subr.mxu0 0.0
    %8542 = vmatpush1.msra.mxu0 0.0
    %8543 = vmatprep.subr.mxu0 0.0
    %8544 = vmatpush1.msra.mxu0 0.0
    %8545 = vmatprep.subr.mxu0 0.0
    %8546 = vmatpush1.msra.mxu0 0.0
    %8547 = vmatprep.subr.mxu0 0.0
    %8548 = vmatpush1.msra.mxu0 0.0
    %8549 = vmatprep.subr.mxu0 0.0
    %8550 = vmatpush1.msra.mxu0 0.0
    %8551 = vmatprep.subr.mxu0 0.0
    %8552 = vmatpush1.msra.mxu0 0.0
    %8553 = vmatprep.subr.mxu0 0.0
    %8554 = vmatpush1.msra.mxu0 0.0
    %8555 = vmatprep.subr.mxu0 0.0
    %8556 = vmatpush1.msra.mxu0 0.0
    %8557 = vmatprep.subr.mxu0 0.0
    %8558 = vmatpush1.msra.mxu0 0.0
    %8559 = vmatprep.subr.mxu0 0.0
    %8560 = vmatpush1.msra.mxu0 0.0
    %8561 = vmatprep.subr.mxu0 0.0
    %8562 = vmatpush1.msra.mxu0 0.0
    %8563 = vmatprep.subr.mxu0 0.0
    %8564 = vmatpush1.msra.mxu0 0.0
    %8565 = vmatprep.subr.mxu0 0.0
    %8566 = vmatpush1.msra.mxu0 0.0
    %8567 = vmatprep.subr.mxu0 0.0
    %8568 = vmatpush1.msra.mxu0 0.0
    %8569 = vmatprep.subr.mxu0 0.0
    %8570 = vmatpush1.msra.mxu0 0.0
    %8571 = vmatprep.subr.mxu0 0.0
    %8572 = vmatpush1.msra.mxu0 0.0
    %8573 = vmatprep.subr.mxu0 0.0
    %8574 = vmatpush1.msra.mxu0 0.0
    %8575 = vmatprep.subr.mxu0 0.0
    %8576 = vmatpush1.msra.mxu0 0.0
    %8577 = vmatprep.subr.mxu0 0.0
    %8578 = vmatpush1.msra.mxu0 0.0
    %8579 = vmatprep.subr.mxu0 0.0
    %8580 = vmatpush1.msra.mxu0 0.0
    %8581 = vmatprep.mubr.f32.mxu0 0.0
    %8582 = vmatmul.mubr.f32.gmra.mrb[0].mxu0 %v8515
    %v8583 = vpop.f32.mrb[0].mxu0
    %v8584 = vadd.f32 0.0, %v8583
    %v8585 = vpop.f32.mrb[0].mxu0
    %8586 = vdwg.mxu0
    %s8587 = scalar_lea.vmem %s10, 160
    %v8588 = vld [vmem:[%s8587] sm:$0xff]
    %v8589 = vld [vmem:[%s8587 + $0x8] sm:$0xff]
    %v8590 = vld [vmem:[%s8587 + $0x10] sm:$0xff]
    %v8591 = vld [vmem:[%s8587 + $0x18] sm:$0xff]
    %v8593 = vsel %vm7746, %v8584, 0
    %8595 = vmatprep.subr.mxu0 0.0
    %8596 = vmatpush1.msra.mxu0 %v8588
    %8597 = vmatprep.subr.mxu0 0.0
    %8598 = vmatpush1.msra.mxu0 %v8589
    %8599 = vmatprep.subr.mxu0 0.0
    %8600 = vmatpush1.msra.mxu0 %v8590
    %8601 = vmatprep.subr.mxu0 0.0
    %8602 = vmatpush1.msra.mxu0 %v8591
    %8603 = vmatprep.subr.mxu0 0.0
    %8604 = vmatpush1.msra.mxu0 0.0
    %8605 = vmatprep.subr.mxu0 0.0
    %8606 = vmatpush1.msra.mxu0 0.0
    %8607 = vmatprep.subr.mxu0 0.0
    %8608 = vmatpush1.msra.mxu0 0.0
    %8609 = vmatprep.subr.mxu0 0.0
    %8610 = vmatpush1.msra.mxu0 0.0
    %8611 = vmatprep.subr.mxu0 0.0
    %8612 = vmatpush1.msra.mxu0 0.0
    %8613 = vmatprep.subr.mxu0 0.0
    %8614 = vmatpush1.msra.mxu0 0.0
    %8615 = vmatprep.subr.mxu0 0.0
    %8616 = vmatpush1.msra.mxu0 0.0
    %8617 = vmatprep.subr.mxu0 0.0
    %8618 = vmatpush1.msra.mxu0 0.0
    %8619 = vmatprep.subr.mxu0 0.0
    %8620 = vmatpush1.msra.mxu0 0.0
    %8621 = vmatprep.subr.mxu0 0.0
    %8622 = vmatpush1.msra.mxu0 0.0
    %8623 = vmatprep.subr.mxu0 0.0
    %8624 = vmatpush1.msra.mxu0 0.0
    %8625 = vmatprep.subr.mxu0 0.0
    %8626 = vmatpush1.msra.mxu0 0.0
    %8627 = vmatprep.subr.mxu0 0.0
    %8628 = vmatpush1.msra.mxu0 0.0
    %8629 = vmatprep.subr.mxu0 0.0
    %8630 = vmatpush1.msra.mxu0 0.0
    %8631 = vmatprep.subr.mxu0 0.0
    %8632 = vmatpush1.msra.mxu0 0.0
    %8633 = vmatprep.subr.mxu0 0.0
    %8634 = vmatpush1.msra.mxu0 0.0
    %8635 = vmatprep.subr.mxu0 0.0
    %8636 = vmatpush1.msra.mxu0 0.0
    %8637 = vmatprep.subr.mxu0 0.0
    %8638 = vmatpush1.msra.mxu0 0.0
    %8639 = vmatprep.subr.mxu0 0.0
    %8640 = vmatpush1.msra.mxu0 0.0
    %8641 = vmatprep.subr.mxu0 0.0
    %8642 = vmatpush1.msra.mxu0 0.0
    %8643 = vmatprep.subr.mxu0 0.0
    %8644 = vmatpush1.msra.mxu0 0.0
    %8645 = vmatprep.subr.mxu0 0.0
    %8646 = vmatpush1.msra.mxu0 0.0
    %8647 = vmatprep.subr.mxu0 0.0
    %8648 = vmatpush1.msra.mxu0 0.0
    %8649 = vmatprep.subr.mxu0 0.0
    %8650 = vmatpush1.msra.mxu0 0.0
    %8651 = vmatprep.subr.mxu0 0.0
    %8652 = vmatpush1.msra.mxu0 0.0
    %8653 = vmatprep.subr.mxu0 0.0
    %8654 = vmatpush1.msra.mxu0 0.0
    %8655 = vmatprep.subr.mxu0 0.0
    %8656 = vmatpush1.msra.mxu0 0.0
    %8657 = vmatprep.subr.mxu0 0.0
    %8658 = vmatpush1.msra.mxu0 0.0
    %8659 = vmatprep.mubr.f32.mxu0 0.0
    %8660 = vmatmul.mubr.f32.gmra.mrb[0].mxu0 %v8593
    %v8661 = vpop.f32.mrb[0].mxu0
    %v8662 = vadd.f32 0.0, %v8661
    %v8663 = vpop.f32.mrb[0].mxu0
    %8664 = vdwg.mxu0
    %v8665 = vadd.f32 %v8511, %v8662
    %s8666 = scalar_lea.vmem [#allocation14], 12
    %v8667 = vld [vmem:[%s8666] sm:$0x3]
    %v8669 = vsel %vm7746, %v8667, 0
    %8671 = vmatprep.subr.mxu0 0.0
    %8672 = vmatpush1.msra.mxu0 %v7741
    %8673 = vmatprep.subr.mxu0 0.0
    %8674 = vmatpush1.msra.mxu0 %v7742
    %8675 = vmatprep.subr.mxu0 0.0
    %8676 = vmatpush1.msra.mxu0 %v7743
    %8677 = vmatprep.subr.mxu0 0.0
    %8678 = vmatpush1.msra.mxu0 %v7744
    %8679 = vmatprep.subr.mxu0 0.0
    %8680 = vmatpush1.msra.mxu0 0.0
    %8681 = vmatprep.subr.mxu0 0.0
    %8682 = vmatpush1.msra.mxu0 0.0
    %8683 = vmatprep.subr.mxu0 0.0
    %8684 = vmatpush1.msra.mxu0 0.0
    %8685 = vmatprep.subr.mxu0 0.0
    %8686 = vmatpush1.msra.mxu0 0.0
    %8687 = vmatprep.subr.mxu0 0.0
    %8688 = vmatpush1.msra.mxu0 0.0
    %8689 = vmatprep.subr.mxu0 0.0
    %8690 = vmatpush1.msra.mxu0 0.0
    %8691 = vmatprep.subr.mxu0 0.0
    %8692 = vmatpush1.msra.mxu0 0.0
    %8693 = vmatprep.subr.mxu0 0.0
    %8694 = vmatpush1.msra.mxu0 0.0
    %8695 = vmatprep.subr.mxu0 0.0
    %8696 = vmatpush1.msra.mxu0 0.0
    %8697 = vmatprep.subr.mxu0 0.0
    %8698 = vmatpush1.msra.mxu0 0.0
    %8699 = vmatprep.subr.mxu0 0.0
    %8700 = vmatpush1.msra.mxu0 0.0
    %8701 = vmatprep.subr.mxu0 0.0
    %8702 = vmatpush1.msra.mxu0 0.0
    %8703 = vmatprep.subr.mxu0 0.0
    %8704 = vmatpush1.msra.mxu0 0.0
    %8705 = vmatprep.subr.mxu0 0.0
    %8706 = vmatpush1.msra.mxu0 0.0
    %8707 = vmatprep.subr.mxu0 0.0
    %8708 = vmatpush1.msra.mxu0 0.0
    %8709 = vmatprep.subr.mxu0 0.0
    %8710 = vmatpush1.msra.mxu0 0.0
    %8711 = vmatprep.subr.mxu0 0.0
    %8712 = vmatpush1.msra.mxu0 0.0
    %8713 = vmatprep.subr.mxu0 0.0
    %8714 = vmatpush1.msra.mxu0 0.0
    %8715 = vmatprep.subr.mxu0 0.0
    %8716 = vmatpush1.msra.mxu0 0.0
    %8717 = vmatprep.subr.mxu0 0.0
    %8718 = vmatpush1.msra.mxu0 0.0
    %8719 = vmatprep.subr.mxu0 0.0
    %8720 = vmatpush1.msra.mxu0 0.0
    %8721 = vmatprep.subr.mxu0 0.0
    %8722 = vmatpush1.msra.mxu0 0.0
    %8723 = vmatprep.subr.mxu0 0.0
    %8724 = vmatpush1.msra.mxu0 0.0
    %8725 = vmatprep.subr.mxu0 0.0
    %8726 = vmatpush1.msra.mxu0 0.0
    %8727 = vmatprep.subr.mxu0 0.0
    %8728 = vmatpush1.msra.mxu0 0.0
    %8729 = vmatprep.subr.mxu0 0.0
    %8730 = vmatpush1.msra.mxu0 0.0
    %8731 = vmatprep.subr.mxu0 0.0
    %8732 = vmatpush1.msra.mxu0 0.0
    %8733 = vmatprep.subr.mxu0 0.0
    %8734 = vmatpush1.msra.mxu0 0.0
    %8735 = vmatprep.mubr.f32.mxu0 0.0
    %8736 = vmatmul.mubr.f32.gmra.mrb[0].mxu0 %v8669
    %v8737 = vpop.f32.mrb[0].mxu0
    %v8738 = vadd.f32 0.0, %v8737
    %v8739 = vpop.f32.mrb[0].mxu0
    %8740 = vdwg.mxu0
    %s8741 = scalar_lea.vmem %s10, 192
    %v8742 = vld [vmem:[%s8741] sm:$0xff]
    %v8743 = vld [vmem:[%s8741 + $0x8] sm:$0xff]
    %v8744 = vld [vmem:[%s8741 + $0x10] sm:$0xff]
    %v8745 = vld [vmem:[%s8741 + $0x18] sm:$0xff]
    %v8747 = vsel %vm7746, %v8738, 0
    %8749 = vmatprep.subr.mxu0 0.0
    %8750 = vmatpush1.msra.mxu0 %v8742
    %8751 = vmatprep.subr.mxu0 0.0
    %8752 = vmatpush1.msra.mxu0 %v8743
    %8753 = vmatprep.subr.mxu0 0.0
    %8754 = vmatpush1.msra.mxu0 %v8744
    %8755 = vmatprep.subr.mxu0 0.0
    %8756 = vmatpush1.msra.mxu0 %v8745
    %8757 = vmatprep.subr.mxu0 0.0
    %8758 = vmatpush1.msra.mxu0 0.0
    %8759 = vmatprep.subr.mxu0 0.0
    %8760 = vmatpush1.msra.mxu0 0.0
    %8761 = vmatprep.subr.mxu0 0.0
    %8762 = vmatpush1.msra.mxu0 0.0
    %8763 = vmatprep.subr.mxu0 0.0
    %8764 = vmatpush1.msra.mxu0 0.0
    %8765 = vmatprep.subr.mxu0 0.0
    %8766 = vmatpush1.msra.mxu0 0.0
    %8767 = vmatprep.subr.mxu0 0.0
    %8768 = vmatpush1.msra.mxu0 0.0
    %8769 = vmatprep.subr.mxu0 0.0
    %8770 = vmatpush1.msra.mxu0 0.0
    %8771 = vmatprep.subr.mxu0 0.0
    %8772 = vmatpush1.msra.mxu0 0.0
    %8773 = vmatprep.subr.mxu0 0.0
    %8774 = vmatpush1.msra.mxu0 0.0
    %8775 = vmatprep.subr.mxu0 0.0
    %8776 = vmatpush1.msra.mxu0 0.0
    %8777 = vmatprep.subr.mxu0 0.0
    %8778 = vmatpush1.msra.mxu0 0.0
    %8779 = vmatprep.subr.mxu0 0.0
    %8780 = vmatpush1.msra.mxu0 0.0
    %8781 = vmatprep.subr.mxu0 0.0
    %8782 = vmatpush1.msra.mxu0 0.0
    %8783 = vmatprep.subr.mxu0 0.0
    %8784 = vmatpush1.msra.mxu0 0.0
    %8785 = vmatprep.subr.mxu0 0.0
    %8786 = vmatpush1.msra.mxu0 0.0
    %8787 = vmatprep.subr.mxu0 0.0
    %8788 = vmatpush1.msra.mxu0 0.0
    %8789 = vmatprep.subr.mxu0 0.0
    %8790 = vmatpush1.msra.mxu0 0.0
    %8791 = vmatprep.subr.mxu0 0.0
    %8792 = vmatpush1.msra.mxu0 0.0
    %8793 = vmatprep.subr.mxu0 0.0
    %8794 = vmatpush1.msra.mxu0 0.0
    %8795 = vmatprep.subr.mxu0 0.0
    %8796 = vmatpush1.msra.mxu0 0.0
    %8797 = vmatprep.subr.mxu0 0.0
    %8798 = vmatpush1.msra.mxu0 0.0
    %8799 = vmatprep.subr.mxu0 0.0
    %8800 = vmatpush1.msra.mxu0 0.0
    %8801 = vmatprep.subr.mxu0 0.0
    %8802 = vmatpush1.msra.mxu0 0.0
    %8803 = vmatprep.subr.mxu0 0.0
    %8804 = vmatpush1.msra.mxu0 0.0
    %8805 = vmatprep.subr.mxu0 0.0
    %8806 = vmatpush1.msra.mxu0 0.0
    %8807 = vmatprep.subr.mxu0 0.0
    %8808 = vmatpush1.msra.mxu0 0.0
    %8809 = vmatprep.subr.mxu0 0.0
    %8810 = vmatpush1.msra.mxu0 0.0
    %8811 = vmatprep.subr.mxu0 0.0
    %8812 = vmatpush1.msra.mxu0 0.0
    %8813 = vmatprep.mubr.f32.mxu0 0.0
    %8814 = vmatmul.mubr.f32.gmra.mrb[0].mxu0 %v8747
    %v8815 = vpop.f32.mrb[0].mxu0
    %v8816 = vadd.f32 0.0, %v8815
    %v8817 = vpop.f32.mrb[0].mxu0
    %8818 = vdwg.mxu0
    %v8819 = vadd.f32 %v8665, %v8816
    %s8820 = scalar_lea.vmem [#allocation14], 14
    %v8821 = vld [vmem:[%s8820] sm:$0x3]
    %v8823 = vsel %vm7746, %v8821, 0
    %8825 = vmatprep.subr.mxu0 0.0
    %8826 = vmatpush1.msra.mxu0 %v7741
    %8827 = vmatprep.subr.mxu0 0.0
    %8828 = vmatpush1.msra.mxu0 %v7742
    %8829 = vmatprep.subr.mxu0 0.0
    %8830 = vmatpush1.msra.mxu0 %v7743
    %8831 = vmatprep.subr.mxu0 0.0
    %8832 = vmatpush1.msra.mxu0 %v7744
    %8833 = vmatprep.subr.mxu0 0.0
    %8834 = vmatpush1.msra.mxu0 0.0
    %8835 = vmatprep.subr.mxu0 0.0
    %8836 = vmatpush1.msra.mxu0 0.0
    %8837 = vmatprep.subr.mxu0 0.0
    %8838 = vmatpush1.msra.mxu0 0.0
    %8839 = vmatprep.subr.mxu0 0.0
    %8840 = vmatpush1.msra.mxu0 0.0
    %8841 = vmatprep.subr.mxu0 0.0
    %8842 = vmatpush1.msra.mxu0 0.0
    %8843 = vmatprep.subr.mxu0 0.0
    %8844 = vmatpush1.msra.mxu0 0.0
    %8845 = vmatprep.subr.mxu0 0.0
    %8846 = vmatpush1.msra.mxu0 0.0
    %8847 = vmatprep.subr.mxu0 0.0
    %8848 = vmatpush1.msra.mxu0 0.0
    %8849 = vmatprep.subr.mxu0 0.0
    %8850 = vmatpush1.msra.mxu0 0.0
    %8851 = vmatprep.subr.mxu0 0.0
    %8852 = vmatpush1.msra.mxu0 0.0
    %8853 = vmatprep.subr.mxu0 0.0
    %8854 = vmatpush1.msra.mxu0 0.0
    %8855 = vmatprep.subr.mxu0 0.0
    %8856 = vmatpush1.msra.mxu0 0.0
    %8857 = vmatprep.subr.mxu0 0.0
    %8858 = vmatpush1.msra.mxu0 0.0
    %8859 = vmatprep.subr.mxu0 0.0
    %8860 = vmatpush1.msra.mxu0 0.0
    %8861 = vmatprep.subr.mxu0 0.0
    %8862 = vmatpush1.msra.mxu0 0.0
    %8863 = vmatprep.subr.mxu0 0.0
    %8864 = vmatpush1.msra.mxu0 0.0
    %8865 = vmatprep.subr.mxu0 0.0
    %8866 = vmatpush1.msra.mxu0 0.0
    %8867 = vmatprep.subr.mxu0 0.0
    %8868 = vmatpush1.msra.mxu0 0.0
    %8869 = vmatprep.subr.mxu0 0.0
    %8870 = vmatpush1.msra.mxu0 0.0
    %8871 = vmatprep.subr.mxu0 0.0
    %8872 = vmatpush1.msra.mxu0 0.0
    %8873 = vmatprep.subr.mxu0 0.0
    %8874 = vmatpush1.msra.mxu0 0.0
    %8875 = vmatprep.subr.mxu0 0.0
    %8876 = vmatpush1.msra.mxu0 0.0
    %8877 = vmatprep.subr.mxu0 0.0
    %8878 = vmatpush1.msra.mxu0 0.0
    %8879 = vmatprep.subr.mxu0 0.0
    %8880 = vmatpush1.msra.mxu0 0.0
    %8881 = vmatprep.subr.mxu0 0.0
    %8882 = vmatpush1.msra.mxu0 0.0
    %8883 = vmatprep.subr.mxu0 0.0
    %8884 = vmatpush1.msra.mxu0 0.0
    %8885 = vmatprep.subr.mxu0 0.0
    %8886 = vmatpush1.msra.mxu0 0.0
    %8887 = vmatprep.subr.mxu0 0.0
    %8888 = vmatpush1.msra.mxu0 0.0
    %8889 = vmatprep.mubr.f32.mxu0 0.0
    %8890 = vmatmul.mubr.f32.gmra.mrb[0].mxu0 %v8823
    %v8891 = vpop.f32.mrb[0].mxu0
    %v8892 = vadd.f32 0.0, %v8891
    %v8893 = vpop.f32.mrb[0].mxu0
    %8894 = vdwg.mxu0
    %s8895 = scalar_lea.vmem %s10, 224
    %v8896 = vld [vmem:[%s8895] sm:$0xff]
    %v8897 = vld [vmem:[%s8895 + $0x8] sm:$0xff]
    %v8898 = vld [vmem:[%s8895 + $0x10] sm:$0xff]
    %v8899 = vld [vmem:[%s8895 + $0x18] sm:$0xff]
    %v8901 = vsel %vm7746, %v8892, 0
    %8903 = vmatprep.subr.mxu0 0.0
    %8904 = vmatpush1.msra.mxu0 %v8896
    %8905 = vmatprep.subr.mxu0 0.0
    %8906 = vmatpush1.msra.mxu0 %v8897
    %8907 = vmatprep.subr.mxu0 0.0
    %8908 = vmatpush1.msra.mxu0 %v8898
    %8909 = vmatprep.subr.mxu0 0.0
    %8910 = vmatpush1.msra.mxu0 %v8899
    %8911 = vmatprep.subr.mxu0 0.0
    %8912 = vmatpush1.msra.mxu0 0.0
    %8913 = vmatprep.subr.mxu0 0.0
    %8914 = vmatpush1.msra.mxu0 0.0
    %8915 = vmatprep.subr.mxu0 0.0
    %8916 = vmatpush1.msra.mxu0 0.0
    %8917 = vmatprep.subr.mxu0 0.0
    %8918 = vmatpush1.msra.mxu0 0.0
    %8919 = vmatprep.subr.mxu0 0.0
    %8920 = vmatpush1.msra.mxu0 0.0
    %8921 = vmatprep.subr.mxu0 0.0
    %8922 = vmatpush1.msra.mxu0 0.0
    %8923 = vmatprep.subr.mxu0 0.0
    %8924 = vmatpush1.msra.mxu0 0.0
    %8925 = vmatprep.subr.mxu0 0.0
    %8926 = vmatpush1.msra.mxu0 0.0
    %8927 = vmatprep.subr.mxu0 0.0
    %8928 = vmatpush1.msra.mxu0 0.0
    %8929 = vmatprep.subr.mxu0 0.0
    %8930 = vmatpush1.msra.mxu0 0.0
    %8931 = vmatprep.subr.mxu0 0.0
    %8932 = vmatpush1.msra.mxu0 0.0
    %8933 = vmatprep.subr.mxu0 0.0
    %8934 = vmatpush1.msra.mxu0 0.0
    %8935 = vmatprep.subr.mxu0 0.0
    %8936 = vmatpush1.msra.mxu0 0.0
    %8937 = vmatprep.subr.mxu0 0.0
    %8938 = vmatpush1.msra.mxu0 0.0
    %8939 = vmatprep.subr.mxu0 0.0
    %8940 = vmatpush1.msra.mxu0 0.0
    %8941 = vmatprep.subr.mxu0 0.0
    %8942 = vmatpush1.msra.mxu0 0.0
    %8943 = vmatprep.subr.mxu0 0.0
    %8944 = vmatpush1.msra.mxu0 0.0
    %8945 = vmatprep.subr.mxu0 0.0
    %8946 = vmatpush1.msra.mxu0 0.0
    %8947 = vmatprep.subr.mxu0 0.0
    %8948 = vmatpush1.msra.mxu0 0.0
    %8949 = vmatprep.subr.mxu0 0.0
    %8950 = vmatpush1.msra.mxu0 0.0
    %8951 = vmatprep.subr.mxu0 0.0
    %8952 = vmatpush1.msra.mxu0 0.0
    %8953 = vmatprep.subr.mxu0 0.0
    %8954 = vmatpush1.msra.mxu0 0.0
    %8955 = vmatprep.subr.mxu0 0.0
    %8956 = vmatpush1.msra.mxu0 0.0
    %8957 = vmatprep.subr.mxu0 0.0
    %8958 = vmatpush1.msra.mxu0 0.0
    %8959 = vmatprep.subr.mxu0 0.0
    %8960 = vmatpush1.msra.mxu0 0.0
    %8961 = vmatprep.subr.mxu0 0.0
    %8962 = vmatpush1.msra.mxu0 0.0
    %8963 = vmatprep.subr.mxu0 0.0
    %8964 = vmatpush1.msra.mxu0 0.0
    %8965 = vmatprep.subr.mxu0 0.0
    %8966 = vmatpush1.msra.mxu0 0.0
    %8967 = vmatprep.mubr.f32.mxu0 0.0
    %8968 = vmatmul.mubr.f32.gmra.mrb[0].mxu0 %v8901
    %v8969 = vpop.f32.mrb[0].mxu0
    %v8970 = vadd.f32 0.0, %v8969
    %v8971 = vpop.f32.mrb[0].mxu0
    %8972 = vdwg.mxu0
    %v8973 = vadd.f32 %v8819, %v8970
    %s8974 = scalar_lea.vmem [#allocation14], 16
    %v8975 = vld [vmem:[%s8974] sm:$0x3]
    %v8977 = vsel %vm7746, %v8975, 0
    %8979 = vmatprep.subr.mxu0 0.0
    %8980 = vmatpush1.msra.mxu0 %v7741
    %8981 = vmatprep.subr.mxu0 0.0
    %8982 = vmatpush1.msra.mxu0 %v7742
    %8983 = vmatprep.subr.mxu0 0.0
    %8984 = vmatpush1.msra.mxu0 %v7743
    %8985 = vmatprep.subr.mxu0 0.0
    %8986 = vmatpush1.msra.mxu0 %v7744
    %8987 = vmatprep.subr.mxu0 0.0
    %8988 = vmatpush1.msra.mxu0 0.0
    %8989 = vmatprep.subr.mxu0 0.0
    %8990 = vmatpush1.msra.mxu0 0.0
    %8991 = vmatprep.subr.mxu0 0.0
    %8992 = vmatpush1.msra.mxu0 0.0
    %8993 = vmatprep.subr.mxu0 0.0
    %8994 = vmatpush1.msra.mxu0 0.0
    %8995 = vmatprep.subr.mxu0 0.0
    %8996 = vmatpush1.msra.mxu0 0.0
    %8997 = vmatprep.subr.mxu0 0.0
    %8998 = vmatpush1.msra.mxu0 0.0
    %8999 = vmatprep.subr.mxu0 0.0
    %9000 = vmatpush1.msra.mxu0 0.0
    %9001 = vmatprep.subr.mxu0 0.0
    %9002 = vmatpush1.msra.mxu0 0.0
    %9003 = vmatprep.subr.mxu0 0.0
    %9004 = vmatpush1.msra.mxu0 0.0
    %9005 = vmatprep.subr.mxu0 0.0
    %9006 = vmatpush1.msra.mxu0 0.0
    %9007 = vmatprep.subr.mxu0 0.0
    %9008 = vmatpush1.msra.mxu0 0.0
    %9009 = vmatprep.subr.mxu0 0.0
    %9010 = vmatpush1.msra.mxu0 0.0
    %9011 = vmatprep.subr.mxu0 0.0
    %9012 = vmatpush1.msra.mxu0 0.0
    %9013 = vmatprep.subr.mxu0 0.0
    %9014 = vmatpush1.msra.mxu0 0.0
    %9015 = vmatprep.subr.mxu0 0.0
    %9016 = vmatpush1.msra.mxu0 0.0
    %9017 = vmatprep.subr.mxu0 0.0
    %9018 = vmatpush1.msra.mxu0 0.0
    %9019 = vmatprep.subr.mxu0 0.0
    %9020 = vmatpush1.msra.mxu0 0.0
    %9021 = vmatprep.subr.mxu0 0.0
    %9022 = vmatpush1.msra.mxu0 0.0
    %9023 = vmatprep.subr.mxu0 0.0
    %9024 = vmatpush1.msra.mxu0 0.0
    %9025 = vmatprep.subr.mxu0 0.0
    %9026 = vmatpush1.msra.mxu0 0.0
    %9027 = vmatprep.subr.mxu0 0.0
    %9028 = vmatpush1.msra.mxu0 0.0
    %9029 = vmatprep.subr.mxu0 0.0
    %9030 = vmatpush1.msra.mxu0 0.0
    %9031 = vmatprep.subr.mxu0 0.0
    %9032 = vmatpush1.msra.mxu0 0.0
    %9033 = vmatprep.subr.mxu0 0.0
    %9034 = vmatpush1.msra.mxu0 0.0
    %9035 = vmatprep.subr.mxu0 0.0
    %9036 = vmatpush1.msra.mxu0 0.0
    %9037 = vmatprep.subr.mxu0 0.0
    %9038 = vmatpush1.msra.mxu0 0.0
    %9039 = vmatprep.subr.mxu0 0.0
    %9040 = vmatpush1.msra.mxu0 0.0
    %9041 = vmatprep.subr.mxu0 0.0
    %9042 = vmatpush1.msra.mxu0 0.0
    %9043 = vmatprep.mubr.f32.mxu0 0.0
    %9044 = vmatmul.mubr.f32.gmra.mrb[0].mxu0 %v8977
    %v9045 = vpop.f32.mrb[0].mxu0
    %v9046 = vadd.f32 0.0, %v9045
    %v9047 = vpop.f32.mrb[0].mxu0
    %9048 = vdwg.mxu0
    %s9049 = scalar_lea.vmem %s10, 256
    %v9050 = vld [vmem:[%s9049] sm:$0xff]
    %v9051 = vld [vmem:[%s9049 + $0x8] sm:$0xff]
    %v9052 = vld [vmem:[%s9049 + $0x10] sm:$0xff]
    %v9053 = vld [vmem:[%s9049 + $0x18] sm:$0xff]
    %v9055 = vsel %vm7746, %v9046, 0
    %9057 = vmatprep.subr.mxu0 0.0
    %9058 = vmatpush1.msra.mxu0 %v9050
    %9059 = vmatprep.subr.mxu0 0.0
    %9060 = vmatpush1.msra.mxu0 %v9051
    %9061 = vmatprep.subr.mxu0 0.0
    %9062 = vmatpush1.msra.mxu0 %v9052
    %9063 = vmatprep.subr.mxu0 0.0
    %9064 = vmatpush1.msra.mxu0 %v9053
    %9065 = vmatprep.subr.mxu0 0.0
    %9066 = vmatpush1.msra.mxu0 0.0
    %9067 = vmatprep.subr.mxu0 0.0
    %9068 = vmatpush1.msra.mxu0 0.0
    %9069 = vmatprep.subr.mxu0 0.0
    %9070 = vmatpush1.msra.mxu0 0.0
    %9071 = vmatprep.subr.mxu0 0.0
    %9072 = vmatpush1.msra.mxu0 0.0
    %9073 = vmatprep.subr.mxu0 0.0
    %9074 = vmatpush1.msra.mxu0 0.0
    %9075 = vmatprep.subr.mxu0 0.0
    %9076 = vmatpush1.msra.mxu0 0.0
    %9077 = vmatprep.subr.mxu0 0.0
    %9078 = vmatpush1.msra.mxu0 0.0
    %9079 = vmatprep.subr.mxu0 0.0
    %9080 = vmatpush1.msra.mxu0 0.0
    %9081 = vmatprep.subr.mxu0 0.0
    %9082 = vmatpush1.msra.mxu0 0.0
    %9083 = vmatprep.subr.mxu0 0.0
    %9084 = vmatpush1.msra.mxu0 0.0
    %9085 = vmatprep.subr.mxu0 0.0
    %9086 = vmatpush1.msra.mxu0 0.0
    %9087 = vmatprep.subr.mxu0 0.0
    %9088 = vmatpush1.msra.mxu0 0.0
    %9089 = vmatprep.subr.mxu0 0.0
    %9090 = vmatpush1.msra.mxu0 0.0
    %9091 = vmatprep.subr.mxu0 0.0
    %9092 = vmatpush1.msra.mxu0 0.0
    %9093 = vmatprep.subr.mxu0 0.0
    %9094 = vmatpush1.msra.mxu0 0.0
    %9095 = vmatprep.subr.mxu0 0.0
    %9096 = vmatpush1.msra.mxu0 0.0
    %9097 = vmatprep.subr.mxu0 0.0
    %9098 = vmatpush1.msra.mxu0 0.0
    %9099 = vmatprep.subr.mxu0 0.0
    %9100 = vmatpush1.msra.mxu0 0.0
    %9101 = vmatprep.subr.mxu0 0.0
    %9102 = vmatpush1.msra.mxu0 0.0
    %9103 = vmatprep.subr.mxu0 0.0
    %9104 = vmatpush1.msra.mxu0 0.0
    %9105 = vmatprep.subr.mxu0 0.0
    %9106 = vmatpush1.msra.mxu0 0.0
    %9107 = vmatprep.subr.mxu0 0.0
    %9108 = vmatpush1.msra.mxu0 0.0
    %9109 = vmatprep.subr.mxu0 0.0
    %9110 = vmatpush1.msra.mxu0 0.0
    %9111 = vmatprep.subr.mxu0 0.0
    %9112 = vmatpush1.msra.mxu0 0.0
    %9113 = vmatprep.subr.mxu0 0.0
    %9114 = vmatpush1.msra.mxu0 0.0
    %9115 = vmatprep.subr.mxu0 0.0
    %9116 = vmatpush1.msra.mxu0 0.0
    %9117 = vmatprep.subr.mxu0 0.0
    %9118 = vmatpush1.msra.mxu0 0.0
    %9119 = vmatprep.subr.mxu0 0.0
    %9120 = vmatpush1.msra.mxu0 0.0
    %9121 = vmatprep.mubr.f32.mxu0 0.0
    %9122 = vmatmul.mubr.f32.gmra.mrb[0].mxu0 %v9055
    %v9123 = vpop.f32.mrb[0].mxu0
    %v9124 = vadd.f32 0.0, %v9123
    %v9125 = vpop.f32.mrb[0].mxu0
    %9126 = vdwg.mxu0
    %v9127 = vadd.f32 %v8973, %v9124
    %s9128 = scalar_lea.vmem [#allocation14], 18
    %v9129 = vld [vmem:[%s9128] sm:$0x3]
    %v9131 = vsel %vm7746, %v9129, 0
    %9133 = vmatprep.subr.mxu0 0.0
    %9134 = vmatpush1.msra.mxu0 %v7741
    %9135 = vmatprep.subr.mxu0 0.0
    %9136 = vmatpush1.msra.mxu0 %v7742
    %9137 = vmatprep.subr.mxu0 0.0
    %9138 = vmatpush1.msra.mxu0 %v7743
    %9139 = vmatprep.subr.mxu0 0.0
    %9140 = vmatpush1.msra.mxu0 %v7744
    %9141 = vmatprep.subr.mxu0 0.0
    %9142 = vmatpush1.msra.mxu0 0.0
    %9143 = vmatprep.subr.mxu0 0.0
    %9144 = vmatpush1.msra.mxu0 0.0
    %9145 = vmatprep.subr.mxu0 0.0
    %9146 = vmatpush1.msra.mxu0 0.0
    %9147 = vmatprep.subr.mxu0 0.0
    %9148 = vmatpush1.msra.mxu0 0.0
    %9149 = vmatprep.subr.mxu0 0.0
    %9150 = vmatpush1.msra.mxu0 0.0
    %9151 = vmatprep.subr.mxu0 0.0
    %9152 = vmatpush1.msra.mxu0 0.0
    %9153 = vmatprep.subr.mxu0 0.0
    %9154 = vmatpush1.msra.mxu0 0.0
    %9155 = vmatprep.subr.mxu0 0.0
    %9156 = vmatpush1.msra.mxu0 0.0
    %9157 = vmatprep.subr.mxu0 0.0
    %9158 = vmatpush1.msra.mxu0 0.0
    %9159 = vmatprep.subr.mxu0 0.0
    %9160 = vmatpush1.msra.mxu0 0.0
    %9161 = vmatprep.subr.mxu0 0.0
    %9162 = vmatpush1.msra.mxu0 0.0
    %9163 = vmatprep.subr.mxu0 0.0
    %9164 = vmatpush1.msra.mxu0 0.0
    %9165 = vmatprep.subr.mxu0 0.0
    %9166 = vmatpush1.msra.mxu0 0.0
    %9167 = vmatprep.subr.mxu0 0.0
    %9168 = vmatpush1.msra.mxu0 0.0
    %9169 = vmatprep.subr.mxu0 0.0
    %9170 = vmatpush1.msra.mxu0 0.0
    %9171 = vmatprep.subr.mxu0 0.0
    %9172 = vmatpush1.msra.mxu0 0.0
    %9173 = vmatprep.subr.mxu0 0.0
    %9174 = vmatpush1.msra.mxu0 0.0
    %9175 = vmatprep.subr.mxu0 0.0
    %9176 = vmatpush1.msra.mxu0 0.0
    %9177 = vmatprep.subr.mxu0 0.0
    %9178 = vmatpush1.msra.mxu0 0.0
    %9179 = vmatprep.subr.mxu0 0.0
    %9180 = vmatpush1.msra.mxu0 0.0
    %9181 = vmatprep.subr.mxu0 0.0
    %9182 = vmatpush1.msra.mxu0 0.0
    %9183 = vmatprep.subr.mxu0 0.0
    %9184 = vmatpush1.msra.mxu0 0.0
    %9185 = vmatprep.subr.mxu0 0.0
    %9186 = vmatpush1.msra.mxu0 0.0
    %9187 = vmatprep.subr.mxu0 0.0
    %9188 = vmatpush1.msra.mxu0 0.0
    %9189 = vmatprep.subr.mxu0 0.0
    %9190 = vmatpush1.msra.mxu0 0.0
    %9191 = vmatprep.subr.mxu0 0.0
    %9192 = vmatpush1.msra.mxu0 0.0
    %9193 = vmatprep.subr.mxu0 0.0
    %9194 = vmatpush1.msra.mxu0 0.0
    %9195 = vmatprep.subr.mxu0 0.0
    %9196 = vmatpush1.msra.mxu0 0.0
    %9197 = vmatprep.mubr.f32.mxu0 0.0
    %9198 = vmatmul.mubr.f32.gmra.mrb[0].mxu0 %v9131
    %v9199 = vpop.f32.mrb[0].mxu0
    %v9200 = vadd.f32 0.0, %v9199
    %v9201 = vpop.f32.mrb[0].mxu0
    %9202 = vdwg.mxu0
    %s9203 = scalar_lea.vmem %s10, 288
    %v9204 = vld [vmem:[%s9203] sm:$0xff]
    %v9205 = vld [vmem:[%s9203 + $0x8] sm:$0xff]
    %v9206 = vld [vmem:[%s9203 + $0x10] sm:$0xff]
    %v9207 = vld [vmem:[%s9203 + $0x18] sm:$0xff]
    %v9209 = vsel %vm7746, %v9200, 0
    %9211 = vmatprep.subr.mxu0 0.0
    %9212 = vmatpush1.msra.mxu0 %v9204
    %9213 = vmatprep.subr.mxu0 0.0
    %9214 = vmatpush1.msra.mxu0 %v9205
    %9215 = vmatprep.subr.mxu0 0.0
    %9216 = vmatpush1.msra.mxu0 %v9206
    %9217 = vmatprep.subr.mxu0 0.0
    %9218 = vmatpush1.msra.mxu0 %v9207
    %9219 = vmatprep.subr.mxu0 0.0
    %9220 = vmatpush1.msra.mxu0 0.0
    %9221 = vmatprep.subr.mxu0 0.0
    %9222 = vmatpush1.msra.mxu0 0.0
    %9223 = vmatprep.subr.mxu0 0.0
    %9224 = vmatpush1.msra.mxu0 0.0
    %9225 = vmatprep.subr.mxu0 0.0
    %9226 = vmatpush1.msra.mxu0 0.0
    %9227 = vmatprep.subr.mxu0 0.0
    %9228 = vmatpush1.msra.mxu0 0.0
    %9229 = vmatprep.subr.mxu0 0.0
    %9230 = vmatpush1.msra.mxu0 0.0
    %9231 = vmatprep.subr.mxu0 0.0
    %9232 = vmatpush1.msra.mxu0 0.0
    %9233 = vmatprep.subr.mxu0 0.0
    %9234 = vmatpush1.msra.mxu0 0.0
    %9235 = vmatprep.subr.mxu0 0.0
    %9236 = vmatpush1.msra.mxu0 0.0
    %9237 = vmatprep.subr.mxu0 0.0
    %9238 = vmatpush1.msra.mxu0 0.0
    %9239 = vmatprep.subr.mxu0 0.0
    %9240 = vmatpush1.msra.mxu0 0.0
    %9241 = vmatprep.subr.mxu0 0.0
    %9242 = vmatpush1.msra.mxu0 0.0
    %9243 = vmatprep.subr.mxu0 0.0
    %9244 = vmatpush1.msra.mxu0 0.0
    %9245 = vmatprep.subr.mxu0 0.0
    %9246 = vmatpush1.msra.mxu0 0.0
    %9247 = vmatprep.subr.mxu0 0.0
    %9248 = vmatpush1.msra.mxu0 0.0
    %9249 = vmatprep.subr.mxu0 0.0
    %9250 = vmatpush1.msra.mxu0 0.0
    %9251 = vmatprep.subr.mxu0 0.0
    %9252 = vmatpush1.msra.mxu0 0.0
    %9253 = vmatprep.subr.mxu0 0.0
    %9254 = vmatpush1.msra.mxu0 0.0
    %9255 = vmatprep.subr.mxu0 0.0
    %9256 = vmatpush1.msra.mxu0 0.0
    %9257 = vmatprep.subr.mxu0 0.0
    %9258 = vmatpush1.msra.mxu0 0.0
    %9259 = vmatprep.subr.mxu0 0.0
    %9260 = vmatpush1.msra.mxu0 0.0
    %9261 = vmatprep.subr.mxu0 0.0
    %9262 = vmatpush1.msra.mxu0 0.0
    %9263 = vmatprep.subr.mxu0 0.0
    %9264 = vmatpush1.msra.mxu0 0.0
    %9265 = vmatprep.subr.mxu0 0.0
    %9266 = vmatpush1.msra.mxu0 0.0
    %9267 = vmatprep.subr.mxu0 0.0
    %9268 = vmatpush1.msra.mxu0 0.0
    %9269 = vmatprep.subr.mxu0 0.0
    %9270 = vmatpush1.msra.mxu0 0.0
    %9271 = vmatprep.subr.mxu0 0.0
    %9272 = vmatpush1.msra.mxu0 0.0
    %9273 = vmatprep.subr.mxu0 0.0
    %9274 = vmatpush1.msra.mxu0 0.0
    %9275 = vmatprep.mubr.f32.mxu0 0.0
    %9276 = vmatmul.mubr.f32.gmra.mrb[0].mxu0 %v9209
    %v9277 = vpop.f32.mrb[0].mxu0
    %v9278 = vadd.f32 0.0, %v9277
    %v9279 = vpop.f32.mrb[0].mxu0
    %9280 = vdwg.mxu0
    %v9281 = vadd.f32 %v9127, %v9278
    %s9282 = scalar_lea.vmem [#allocation14], 20
    %v9283 = vld [vmem:[%s9282] sm:$0x3]
    %v9285 = vsel %vm7746, %v9283, 0
    %9287 = vmatprep.subr.mxu0 0.0
    %9288 = vmatpush1.msra.mxu0 %v7741
    %9289 = vmatprep.subr.mxu0 0.0
    %9290 = vmatpush1.msra.mxu0 %v7742
    %9291 = vmatprep.subr.mxu0 0.0
    %9292 = vmatpush1.msra.mxu0 %v7743
    %9293 = vmatprep.subr.mxu0 0.0
    %9294 = vmatpush1.msra.mxu0 %v7744
    %9295 = vmatprep.subr.mxu0 0.0
    %9296 = vmatpush1.msra.mxu0 0.0
    %9297 = vmatprep.subr.mxu0 0.0
    %9298 = vmatpush1.msra.mxu0 0.0
    %9299 = vmatprep.subr.mxu0 0.0
    %9300 = vmatpush1.msra.mxu0 0.0
    %9301 = vmatprep.subr.mxu0 0.0
    %9302 = vmatpush1.msra.mxu0 0.0
    %9303 = vmatprep.subr.mxu0 0.0
    %9304 = vmatpush1.msra.mxu0 0.0
    %9305 = vmatprep.subr.mxu0 0.0
    %9306 = vmatpush1.msra.mxu0 0.0
    %9307 = vmatprep.subr.mxu0 0.0
    %9308 = vmatpush1.msra.mxu0 0.0
    %9309 = vmatprep.subr.mxu0 0.0
    %9310 = vmatpush1.msra.mxu0 0.0
    %9311 = vmatprep.subr.mxu0 0.0
    %9312 = vmatpush1.msra.mxu0 0.0
    %9313 = vmatprep.subr.mxu0 0.0
    %9314 = vmatpush1.msra.mxu0 0.0
    %9315 = vmatprep.subr.mxu0 0.0
    %9316 = vmatpush1.msra.mxu0 0.0
    %9317 = vmatprep.subr.mxu0 0.0
    %9318 = vmatpush1.msra.mxu0 0.0
    %9319 = vmatprep.subr.mxu0 0.0
    %9320 = vmatpush1.msra.mxu0 0.0
    %9321 = vmatprep.subr.mxu0 0.0
    %9322 = vmatpush1.msra.mxu0 0.0
    %9323 = vmatprep.subr.mxu0 0.0
    %9324 = vmatpush1.msra.mxu0 0.0
    %9325 = vmatprep.subr.mxu0 0.0
    %9326 = vmatpush1.msra.mxu0 0.0
    %9327 = vmatprep.subr.mxu0 0.0
    %9328 = vmatpush1.msra.mxu0 0.0
    %9329 = vmatprep.subr.mxu0 0.0
    %9330 = vmatpush1.msra.mxu0 0.0
    %9331 = vmatprep.subr.mxu0 0.0
    %9332 = vmatpush1.msra.mxu0 0.0
    %9333 = vmatprep.subr.mxu0 0.0
    %9334 = vmatpush1.msra.mxu0 0.0
    %9335 = vmatprep.subr.mxu0 0.0
    %9336 = vmatpush1.msra.mxu0 0.0
    %9337 = vmatprep.subr.mxu0 0.0
    %9338 = vmatpush1.msra.mxu0 0.0
    %9339 = vmatprep.subr.mxu0 0.0
    %9340 = vmatpush1.msra.mxu0 0.0
    %9341 = vmatprep.subr.mxu0 0.0
    %9342 = vmatpush1.msra.mxu0 0.0
    %9343 = vmatprep.subr.mxu0 0.0
    %9344 = vmatpush1.msra.mxu0 0.0
    %9345 = vmatprep.subr.mxu0 0.0
    %9346 = vmatpush1.msra.mxu0 0.0
    %9347 = vmatprep.subr.mxu0 0.0
    %9348 = vmatpush1.msra.mxu0 0.0
    %9349 = vmatprep.subr.mxu0 0.0
    %9350 = vmatpush1.msra.mxu0 0.0
    %9351 = vmatprep.mubr.f32.mxu0 0.0
    %9352 = vmatmul.mubr.f32.gmra.mrb[0].mxu0 %v9285
    %v9353 = vpop.f32.mrb[0].mxu0
    %v9354 = vadd.f32 0.0, %v9353
    %v9355 = vpop.f32.mrb[0].mxu0
    %9356 = vdwg.mxu0
    %s9357 = scalar_lea.vmem %s10, 320
    %v9358 = vld [vmem:[%s9357] sm:$0xff]
    %v9359 = vld [vmem:[%s9357 + $0x8] sm:$0xff]
    %v9360 = vld [vmem:[%s9357 + $0x10] sm:$0xff]
    %v9361 = vld [vmem:[%s9357 + $0x18] sm:$0xff]
    %v9363 = vsel %vm7746, %v9354, 0
    %9365 = vmatprep.subr.mxu0 0.0
    %9366 = vmatpush1.msra.mxu0 %v9358
    %9367 = vmatprep.subr.mxu0 0.0
    %9368 = vmatpush1.msra.mxu0 %v9359
    %9369 = vmatprep.subr.mxu0 0.0
    %9370 = vmatpush1.msra.mxu0 %v9360
    %9371 = vmatprep.subr.mxu0 0.0
    %9372 = vmatpush1.msra.mxu0 %v9361
    %9373 = vmatprep.subr.mxu0 0.0
    %9374 = vmatpush1.msra.mxu0 0.0
    %9375 = vmatprep.subr.mxu0 0.0
    %9376 = vmatpush1.msra.mxu0 0.0
    %9377 = vmatprep.subr.mxu0 0.0
    %9378 = vmatpush1.msra.mxu0 0.0
    %9379 = vmatprep.subr.mxu0 0.0
    %9380 = vmatpush1.msra.mxu0 0.0
    %9381 = vmatprep.subr.mxu0 0.0
    %9382 = vmatpush1.msra.mxu0 0.0
    %9383 = vmatprep.subr.mxu0 0.0
    %9384 = vmatpush1.msra.mxu0 0.0
    %9385 = vmatprep.subr.mxu0 0.0
    %9386 = vmatpush1.msra.mxu0 0.0
    %9387 = vmatprep.subr.mxu0 0.0
    %9388 = vmatpush1.msra.mxu0 0.0
    %9389 = vmatprep.subr.mxu0 0.0
    %9390 = vmatpush1.msra.mxu0 0.0
    %9391 = vmatprep.subr.mxu0 0.0
    %9392 = vmatpush1.msra.mxu0 0.0
    %9393 = vmatprep.subr.mxu0 0.0
    %9394 = vmatpush1.msra.mxu0 0.0
    %9395 = vmatprep.subr.mxu0 0.0
    %9396 = vmatpush1.msra.mxu0 0.0
    %9397 = vmatprep.subr.mxu0 0.0
    %9398 = vmatpush1.msra.mxu0 0.0
    %9399 = vmatprep.subr.mxu0 0.0
    %9400 = vmatpush1.msra.mxu0 0.0
    %9401 = vmatprep.subr.mxu0 0.0
    %9402 = vmatpush1.msra.mxu0 0.0
    %9403 = vmatprep.subr.mxu0 0.0
    %9404 = vmatpush1.msra.mxu0 0.0
    %9405 = vmatprep.subr.mxu0 0.0
    %9406 = vmatpush1.msra.mxu0 0.0
    %9407 = vmatprep.subr.mxu0 0.0
    %9408 = vmatpush1.msra.mxu0 0.0
    %9409 = vmatprep.subr.mxu0 0.0
    %9410 = vmatpush1.msra.mxu0 0.0
    %9411 = vmatprep.subr.mxu0 0.0
    %9412 = vmatpush1.msra.mxu0 0.0
    %9413 = vmatprep.subr.mxu0 0.0
    %9414 = vmatpush1.msra.mxu0 0.0
    %9415 = vmatprep.subr.mxu0 0.0
    %9416 = vmatpush1.msra.mxu0 0.0
    %9417 = vmatprep.subr.mxu0 0.0
    %9418 = vmatpush1.msra.mxu0 0.0
    %9419 = vmatprep.subr.mxu0 0.0
    %9420 = vmatpush1.msra.mxu0 0.0
    %9421 = vmatprep.subr.mxu0 0.0
    %9422 = vmatpush1.msra.mxu0 0.0
    %9423 = vmatprep.subr.mxu0 0.0
    %9424 = vmatpush1.msra.mxu0 0.0
    %9425 = vmatprep.subr.mxu0 0.0
    %9426 = vmatpush1.msra.mxu0 0.0
    %9427 = vmatprep.subr.mxu0 0.0
    %9428 = vmatpush1.msra.mxu0 0.0
    %9429 = vmatprep.mubr.f32.mxu0 0.0
    %9430 = vmatmul.mubr.f32.gmra.mrb[0].mxu0 %v9363
    %v9431 = vpop.f32.mrb[0].mxu0
    %v9432 = vadd.f32 0.0, %v9431
    %v9433 = vpop.f32.mrb[0].mxu0
    %9434 = vdwg.mxu0
    %v9435 = vadd.f32 %v9281, %v9432
    %s9436 = scalar_lea.vmem [#allocation14], 22
    %v9437 = vld [vmem:[%s9436] sm:$0x3]
    %v9439 = vsel %vm7746, %v9437, 0
    %9441 = vmatprep.subr.mxu0 0.0
    %9442 = vmatpush1.msra.mxu0 %v7741
    %9443 = vmatprep.subr.mxu0 0.0
    %9444 = vmatpush1.msra.mxu0 %v7742
    %9445 = vmatprep.subr.mxu0 0.0
    %9446 = vmatpush1.msra.mxu0 %v7743
    %9447 = vmatprep.subr.mxu0 0.0
    %9448 = vmatpush1.msra.mxu0 %v7744
    %9449 = vmatprep.subr.mxu0 0.0
    %9450 = vmatpush1.msra.mxu0 0.0
    %9451 = vmatprep.subr.mxu0 0.0
    %9452 = vmatpush1.msra.mxu0 0.0
    %9453 = vmatprep.subr.mxu0 0.0
    %9454 = vmatpush1.msra.mxu0 0.0
    %9455 = vmatprep.subr.mxu0 0.0
    %9456 = vmatpush1.msra.mxu0 0.0
    %9457 = vmatprep.subr.mxu0 0.0
    %9458 = vmatpush1.msra.mxu0 0.0
    %9459 = vmatprep.subr.mxu0 0.0
    %9460 = vmatpush1.msra.mxu0 0.0
    %9461 = vmatprep.subr.mxu0 0.0
    %9462 = vmatpush1.msra.mxu0 0.0
    %9463 = vmatprep.subr.mxu0 0.0
    %9464 = vmatpush1.msra.mxu0 0.0
    %9465 = vmatprep.subr.mxu0 0.0
    %9466 = vmatpush1.msra.mxu0 0.0
    %9467 = vmatprep.subr.mxu0 0.0
    %9468 = vmatpush1.msra.mxu0 0.0
    %9469 = vmatprep.subr.mxu0 0.0
    %9470 = vmatpush1.msra.mxu0 0.0
    %9471 = vmatprep.subr.mxu0 0.0
    %9472 = vmatpush1.msra.mxu0 0.0
    %9473 = vmatprep.subr.mxu0 0.0
    %9474 = vmatpush1.msra.mxu0 0.0
    %9475 = vmatprep.subr.mxu0 0.0
    %9476 = vmatpush1.msra.mxu0 0.0
    %9477 = vmatprep.subr.mxu0 0.0
    %9478 = vmatpush1.msra.mxu0 0.0
    %9479 = vmatprep.subr.mxu0 0.0
    %9480 = vmatpush1.msra.mxu0 0.0
    %9481 = vmatprep.subr.mxu0 0.0
    %9482 = vmatpush1.msra.mxu0 0.0
    %9483 = vmatprep.subr.mxu0 0.0
    %9484 = vmatpush1.msra.mxu0 0.0
    %9485 = vmatprep.subr.mxu0 0.0
    %9486 = vmatpush1.msra.mxu0 0.0
    %9487 = vmatprep.subr.mxu0 0.0
    %9488 = vmatpush1.msra.mxu0 0.0
    %9489 = vmatprep.subr.mxu0 0.0
    %9490 = vmatpush1.msra.mxu0 0.0
    %9491 = vmatprep.subr.mxu0 0.0
    %9492 = vmatpush1.msra.mxu0 0.0
    %9493 = vmatprep.subr.mxu0 0.0
    %9494 = vmatpush1.msra.mxu0 0.0
    %9495 = vmatprep.subr.mxu0 0.0
    %9496 = vmatpush1.msra.mxu0 0.0
    %9497 = vmatprep.subr.mxu0 0.0
    %9498 = vmatpush1.msra.mxu0 0.0
    %9499 = vmatprep.subr.mxu0 0.0
    %9500 = vmatpush1.msra.mxu0 0.0
    %9501 = vmatprep.subr.mxu0 0.0
    %9502 = vmatpush1.msra.mxu0 0.0
    %9503 = vmatprep.subr.mxu0 0.0
    %9504 = vmatpush1.msra.mxu0 0.0
    %9505 = vmatprep.mubr.f32.mxu0 0.0
    %9506 = vmatmul.mubr.f32.gmra.mrb[0].mxu0 %v9439
    %v9507 = vpop.f32.mrb[0].mxu0
    %v9508 = vadd.f32 0.0, %v9507
    %v9509 = vpop.f32.mrb[0].mxu0
    %9510 = vdwg.mxu0
    %s9511 = scalar_lea.vmem %s10, 352
    %v9512 = vld [vmem:[%s9511] sm:$0xff]
    %v9513 = vld [vmem:[%s9511 + $0x8] sm:$0xff]
    %v9514 = vld [vmem:[%s9511 + $0x10] sm:$0xff]
    %v9515 = vld [vmem:[%s9511 + $0x18] sm:$0xff]
    %v9517 = vsel %vm7746, %v9508, 0
    %9519 = vmatprep.subr.mxu0 0.0
    %9520 = vmatpush1.msra.mxu0 %v9512
    %9521 = vmatprep.subr.mxu0 0.0
    %9522 = vmatpush1.msra.mxu0 %v9513
    %9523 = vmatprep.subr.mxu0 0.0
    %9524 = vmatpush1.msra.mxu0 %v9514
    %9525 = vmatprep.subr.mxu0 0.0
    %9526 = vmatpush1.msra.mxu0 %v9515
    %9527 = vmatprep.subr.mxu0 0.0
    %9528 = vmatpush1.msra.mxu0 0.0
    %9529 = vmatprep.subr.mxu0 0.0
    %9530 = vmatpush1.msra.mxu0 0.0
    %9531 = vmatprep.subr.mxu0 0.0
    %9532 = vmatpush1.msra.mxu0 0.0
    %9533 = vmatprep.subr.mxu0 0.0
    %9534 = vmatpush1.msra.mxu0 0.0
    %9535 = vmatprep.subr.mxu0 0.0
    %9536 = vmatpush1.msra.mxu0 0.0
    %9537 = vmatprep.subr.mxu0 0.0
    %9538 = vmatpush1.msra.mxu0 0.0
    %9539 = vmatprep.subr.mxu0 0.0
    %9540 = vmatpush1.msra.mxu0 0.0
    %9541 = vmatprep.subr.mxu0 0.0
    %9542 = vmatpush1.msra.mxu0 0.0
    %9543 = vmatprep.subr.mxu0 0.0
    %9544 = vmatpush1.msra.mxu0 0.0
    %9545 = vmatprep.subr.mxu0 0.0
    %9546 = vmatpush1.msra.mxu0 0.0
    %9547 = vmatprep.subr.mxu0 0.0
    %9548 = vmatpush1.msra.mxu0 0.0
    %9549 = vmatprep.subr.mxu0 0.0
    %9550 = vmatpush1.msra.mxu0 0.0
    %9551 = vmatprep.subr.mxu0 0.0
    %9552 = vmatpush1.msra.mxu0 0.0
    %9553 = vmatprep.subr.mxu0 0.0
    %9554 = vmatpush1.msra.mxu0 0.0
    %9555 = vmatprep.subr.mxu0 0.0
    %9556 = vmatpush1.msra.mxu0 0.0
    %9557 = vmatprep.subr.mxu0 0.0
    %9558 = vmatpush1.msra.mxu0 0.0
    %9559 = vmatprep.subr.mxu0 0.0
    %9560 = vmatpush1.msra.mxu0 0.0
    %9561 = vmatprep.subr.mxu0 0.0
    %9562 = vmatpush1.msra.mxu0 0.0
    %9563 = vmatprep.subr.mxu0 0.0
    %9564 = vmatpush1.msra.mxu0 0.0
    %9565 = vmatprep.subr.mxu0 0.0
    %9566 = vmatpush1.msra.mxu0 0.0
    %9567 = vmatprep.subr.mxu0 0.0
    %9568 = vmatpush1.msra.mxu0 0.0
    %9569 = vmatprep.subr.mxu0 0.0
    %9570 = vmatpush1.msra.mxu0 0.0
    %9571 = vmatprep.subr.mxu0 0.0
    %9572 = vmatpush1.msra.mxu0 0.0
    %9573 = vmatprep.subr.mxu0 0.0
    %9574 = vmatpush1.msra.mxu0 0.0
    %9575 = vmatprep.subr.mxu0 0.0
    %9576 = vmatpush1.msra.mxu0 0.0
    %9577 = vmatprep.subr.mxu0 0.0
    %9578 = vmatpush1.msra.mxu0 0.0
    %9579 = vmatprep.subr.mxu0 0.0
    %9580 = vmatpush1.msra.mxu0 0.0
    %9581 = vmatprep.subr.mxu0 0.0
    %9582 = vmatpush1.msra.mxu0 0.0
    %9583 = vmatprep.mubr.f32.mxu0 0.0
    %9584 = vmatmul.mubr.f32.gmra.mrb[0].mxu0 %v9517
    %v9585 = vpop.f32.mrb[0].mxu0
    %v9586 = vadd.f32 0.0, %v9585
    %v9587 = vpop.f32.mrb[0].mxu0
    %9588 = vdwg.mxu0
    %v9589 = vadd.f32 %v9435, %v9586
    %s9590 = scalar_lea.vmem [#allocation14], 24
    %v9591 = vld [vmem:[%s9590] sm:$0x3]
    %v9593 = vsel %vm7746, %v9591, 0
    %9595 = vmatprep.subr.mxu0 0.0
    %9596 = vmatpush1.msra.mxu0 %v7741
    %9597 = vmatprep.subr.mxu0 0.0
    %9598 = vmatpush1.msra.mxu0 %v7742
    %9599 = vmatprep.subr.mxu0 0.0
    %9600 = vmatpush1.msra.mxu0 %v7743
    %9601 = vmatprep.subr.mxu0 0.0
    %9602 = vmatpush1.msra.mxu0 %v7744
    %9603 = vmatprep.subr.mxu0 0.0
    %9604 = vmatpush1.msra.mxu0 0.0
    %9605 = vmatprep.subr.mxu0 0.0
    %9606 = vmatpush1.msra.mxu0 0.0
    %9607 = vmatprep.subr.mxu0 0.0
    %9608 = vmatpush1.msra.mxu0 0.0
    %9609 = vmatprep.subr.mxu0 0.0
    %9610 = vmatpush1.msra.mxu0 0.0
    %9611 = vmatprep.subr.mxu0 0.0
    %9612 = vmatpush1.msra.mxu0 0.0
    %9613 = vmatprep.subr.mxu0 0.0
    %9614 = vmatpush1.msra.mxu0 0.0
    %9615 = vmatprep.subr.mxu0 0.0
    %9616 = vmatpush1.msra.mxu0 0.0
    %9617 = vmatprep.subr.mxu0 0.0
    %9618 = vmatpush1.msra.mxu0 0.0
    %9619 = vmatprep.subr.mxu0 0.0
    %9620 = vmatpush1.msra.mxu0 0.0
    %9621 = vmatprep.subr.mxu0 0.0
    %9622 = vmatpush1.msra.mxu0 0.0
    %9623 = vmatprep.subr.mxu0 0.0
    %9624 = vmatpush1.msra.mxu0 0.0
    %9625 = vmatprep.subr.mxu0 0.0
    %9626 = vmatpush1.msra.mxu0 0.0
    %9627 = vmatprep.subr.mxu0 0.0
    %9628 = vmatpush1.msra.mxu0 0.0
    %9629 = vmatprep.subr.mxu0 0.0
    %9630 = vmatpush1.msra.mxu0 0.0
    %9631 = vmatprep.subr.mxu0 0.0
    %9632 = vmatpush1.msra.mxu0 0.0
    %9633 = vmatprep.subr.mxu0 0.0
    %9634 = vmatpush1.msra.mxu0 0.0
    %9635 = vmatprep.subr.mxu0 0.0
    %9636 = vmatpush1.msra.mxu0 0.0
    %9637 = vmatprep.subr.mxu0 0.0
    %9638 = vmatpush1.msra.mxu0 0.0
    %9639 = vmatprep.subr.mxu0 0.0
    %9640 = vmatpush1.msra.mxu0 0.0
    %9641 = vmatprep.subr.mxu0 0.0
    %9642 = vmatpush1.msra.mxu0 0.0
    %9643 = vmatprep.subr.mxu0 0.0
    %9644 = vmatpush1.msra.mxu0 0.0
    %9645 = vmatprep.subr.mxu0 0.0
    %9646 = vmatpush1.msra.mxu0 0.0
    %9647 = vmatprep.subr.mxu0 0.0
    %9648 = vmatpush1.msra.mxu0 0.0
    %9649 = vmatprep.subr.mxu0 0.0
    %9650 = vmatpush1.msra.mxu0 0.0
    %9651 = vmatprep.subr.mxu0 0.0
    %9652 = vmatpush1.msra.mxu0 0.0
    %9653 = vmatprep.subr.mxu0 0.0
    %9654 = vmatpush1.msra.mxu0 0.0
    %9655 = vmatprep.subr.mxu0 0.0
    %9656 = vmatpush1.msra.mxu0 0.0
    %9657 = vmatprep.subr.mxu0 0.0
    %9658 = vmatpush1.msra.mxu0 0.0
    %9659 = vmatprep.mubr.f32.mxu0 0.0
    %9660 = vmatmul.mubr.f32.gmra.mrb[0].mxu0 %v9593
    %v9661 = vpop.f32.mrb[0].mxu0
    %v9662 = vadd.f32 0.0, %v9661
    %v9663 = vpop.f32.mrb[0].mxu0
    %9664 = vdwg.mxu0
    %s9665 = scalar_lea.vmem %s10, 384
    %v9666 = vld [vmem:[%s9665] sm:$0xff]
    %v9667 = vld [vmem:[%s9665 + $0x8] sm:$0xff]
    %v9668 = vld [vmem:[%s9665 + $0x10] sm:$0xff]
    %v9669 = vld [vmem:[%s9665 + $0x18] sm:$0xff]
    %v9671 = vsel %vm7746, %v9662, 0
    %9673 = vmatprep.subr.mxu0 0.0
    %9674 = vmatpush1.msra.mxu0 %v9666
    %9675 = vmatprep.subr.mxu0 0.0
    %9676 = vmatpush1.msra.mxu0 %v9667
    %9677 = vmatprep.subr.mxu0 0.0
    %9678 = vmatpush1.msra.mxu0 %v9668
    %9679 = vmatprep.subr.mxu0 0.0
    %9680 = vmatpush1.msra.mxu0 %v9669
    %9681 = vmatprep.subr.mxu0 0.0
    %9682 = vmatpush1.msra.mxu0 0.0
    %9683 = vmatprep.subr.mxu0 0.0
    %9684 = vmatpush1.msra.mxu0 0.0
    %9685 = vmatprep.subr.mxu0 0.0
    %9686 = vmatpush1.msra.mxu0 0.0
    %9687 = vmatprep.subr.mxu0 0.0
    %9688 = vmatpush1.msra.mxu0 0.0
    %9689 = vmatprep.subr.mxu0 0.0
    %9690 = vmatpush1.msra.mxu0 0.0
    %9691 = vmatprep.subr.mxu0 0.0
    %9692 = vmatpush1.msra.mxu0 0.0
    %9693 = vmatprep.subr.mxu0 0.0
    %9694 = vmatpush1.msra.mxu0 0.0
    %9695 = vmatprep.subr.mxu0 0.0
    %9696 = vmatpush1.msra.mxu0 0.0
    %9697 = vmatprep.subr.mxu0 0.0
    %9698 = vmatpush1.msra.mxu0 0.0
    %9699 = vmatprep.subr.mxu0 0.0
    %9700 = vmatpush1.msra.mxu0 0.0
    %9701 = vmatprep.subr.mxu0 0.0
    %9702 = vmatpush1.msra.mxu0 0.0
    %9703 = vmatprep.subr.mxu0 0.0
    %9704 = vmatpush1.msra.mxu0 0.0
    %9705 = vmatprep.subr.mxu0 0.0
    %9706 = vmatpush1.msra.mxu0 0.0
    %9707 = vmatprep.subr.mxu0 0.0
    %9708 = vmatpush1.msra.mxu0 0.0
    %9709 = vmatprep.subr.mxu0 0.0
    %9710 = vmatpush1.msra.mxu0 0.0
    %9711 = vmatprep.subr.mxu0 0.0
    %9712 = vmatpush1.msra.mxu0 0.0
    %9713 = vmatprep.subr.mxu0 0.0
    %9714 = vmatpush1.msra.mxu0 0.0
    %9715 = vmatprep.subr.mxu0 0.0
    %9716 = vmatpush1.msra.mxu0 0.0
    %9717 = vmatprep.subr.mxu0 0.0
    %9718 = vmatpush1.msra.mxu0 0.0
    %9719 = vmatprep.subr.mxu0 0.0
    %9720 = vmatpush1.msra.mxu0 0.0
    %9721 = vmatprep.subr.mxu0 0.0
    %9722 = vmatpush1.msra.mxu0 0.0
    %9723 = vmatprep.subr.mxu0 0.0
    %9724 = vmatpush1.msra.mxu0 0.0
    %9725 = vmatprep.subr.mxu0 0.0
    %9726 = vmatpush1.msra.mxu0 0.0
    %9727 = vmatprep.subr.mxu0 0.0
    %9728 = vmatpush1.msra.mxu0 0.0
    %9729 = vmatprep.subr.mxu0 0.0
    %9730 = vmatpush1.msra.mxu0 0.0
    %9731 = vmatprep.subr.mxu0 0.0
    %9732 = vmatpush1.msra.mxu0 0.0
    %9733 = vmatprep.subr.mxu0 0.0
    %9734 = vmatpush1.msra.mxu0 0.0
    %9735 = vmatprep.subr.mxu0 0.0
    %9736 = vmatpush1.msra.mxu0 0.0
    %9737 = vmatprep.mubr.f32.mxu0 0.0
    %9738 = vmatmul.mubr.f32.gmra.mrb[0].mxu0 %v9671
    %v9739 = vpop.f32.mrb[0].mxu0
    %v9740 = vadd.f32 0.0, %v9739
    %v9741 = vpop.f32.mrb[0].mxu0
    %9742 = vdwg.mxu0
    %v9743 = vadd.f32 %v9589, %v9740
    %s9744 = scalar_lea.vmem [#allocation14], 26
    %v9745 = vld [vmem:[%s9744] sm:$0x3]
    %v9747 = vsel %vm7746, %v9745, 0
    %9749 = vmatprep.subr.mxu0 0.0
    %9750 = vmatpush1.msra.mxu0 %v7741
    %9751 = vmatprep.subr.mxu0 0.0
    %9752 = vmatpush1.msra.mxu0 %v7742
    %9753 = vmatprep.subr.mxu0 0.0
    %9754 = vmatpush1.msra.mxu0 %v7743
    %9755 = vmatprep.subr.mxu0 0.0
    %9756 = vmatpush1.msra.mxu0 %v7744
    %9757 = vmatprep.subr.mxu0 0.0
    %9758 = vmatpush1.msra.mxu0 0.0
    %9759 = vmatprep.subr.mxu0 0.0
    %9760 = vmatpush1.msra.mxu0 0.0
    %9761 = vmatprep.subr.mxu0 0.0
    %9762 = vmatpush1.msra.mxu0 0.0
    %9763 = vmatprep.subr.mxu0 0.0
    %9764 = vmatpush1.msra.mxu0 0.0
    %9765 = vmatprep.subr.mxu0 0.0
    %9766 = vmatpush1.msra.mxu0 0.0
    %9767 = vmatprep.subr.mxu0 0.0
    %9768 = vmatpush1.msra.mxu0 0.0
    %9769 = vmatprep.subr.mxu0 0.0
    %9770 = vmatpush1.msra.mxu0 0.0
    %9771 = vmatprep.subr.mxu0 0.0
    %9772 = vmatpush1.msra.mxu0 0.0
    %9773 = vmatprep.subr.mxu0 0.0
    %9774 = vmatpush1.msra.mxu0 0.0
    %9775 = vmatprep.subr.mxu0 0.0
    %9776 = vmatpush1.msra.mxu0 0.0
    %9777 = vmatprep.subr.mxu0 0.0
    %9778 = vmatpush1.msra.mxu0 0.0
    %9779 = vmatprep.subr.mxu0 0.0
    %9780 = vmatpush1.msra.mxu0 0.0
    %9781 = vmatprep.subr.mxu0 0.0
    %9782 = vmatpush1.msra.mxu0 0.0
    %9783 = vmatprep.subr.mxu0 0.0
    %9784 = vmatpush1.msra.mxu0 0.0
    %9785 = vmatprep.subr.mxu0 0.0
    %9786 = vmatpush1.msra.mxu0 0.0
    %9787 = vmatprep.subr.mxu0 0.0
    %9788 = vmatpush1.msra.mxu0 0.0
    %9789 = vmatprep.subr.mxu0 0.0
    %9790 = vmatpush1.msra.mxu0 0.0
    %9791 = vmatprep.subr.mxu0 0.0
    %9792 = vmatpush1.msra.mxu0 0.0
    %9793 = vmatprep.subr.mxu0 0.0
    %9794 = vmatpush1.msra.mxu0 0.0
    %9795 = vmatprep.subr.mxu0 0.0
    %9796 = vmatpush1.msra.mxu0 0.0
    %9797 = vmatprep.subr.mxu0 0.0
    %9798 = vmatpush1.msra.mxu0 0.0
    %9799 = vmatprep.subr.mxu0 0.0
    %9800 = vmatpush1.msra.mxu0 0.0
    %9801 = vmatprep.subr.mxu0 0.0
    %9802 = vmatpush1.msra.mxu0 0.0
    %9803 = vmatprep.subr.mxu0 0.0
    %9804 = vmatpush1.msra.mxu0 0.0
    %9805 = vmatprep.subr.mxu0 0.0
    %9806 = vmatpush1.msra.mxu0 0.0
    %9807 = vmatprep.subr.mxu0 0.0
    %9808 = vmatpush1.msra.mxu0 0.0
    %9809 = vmatprep.subr.mxu0 0.0
    %9810 = vmatpush1.msra.mxu0 0.0
    %9811 = vmatprep.subr.mxu0 0.0
    %9812 = vmatpush1.msra.mxu0 0.0
    %9813 = vmatprep.mubr.f32.mxu0 0.0
    %9814 = vmatmul.mubr.f32.gmra.mrb[0].mxu0 %v9747
    %v9815 = vpop.f32.mrb[0].mxu0
    %v9816 = vadd.f32 0.0, %v9815
    %v9817 = vpop.f32.mrb[0].mxu0
    %9818 = vdwg.mxu0
    %s9819 = scalar_lea.vmem %s10, 416
    %v9820 = vld [vmem:[%s9819] sm:$0xff]
    %v9821 = vld [vmem:[%s9819 + $0x8] sm:$0xff]
    %v9822 = vld [vmem:[%s9819 + $0x10] sm:$0xff]
    %v9823 = vld [vmem:[%s9819 + $0x18] sm:$0xff]
    %v9825 = vsel %vm7746, %v9816, 0
    %9827 = vmatprep.subr.mxu0 0.0
    %9828 = vmatpush1.msra.mxu0 %v9820
    %9829 = vmatprep.subr.mxu0 0.0
    %9830 = vmatpush1.msra.mxu0 %v9821
    %9831 = vmatprep.subr.mxu0 0.0
    %9832 = vmatpush1.msra.mxu0 %v9822
    %9833 = vmatprep.subr.mxu0 0.0
    %9834 = vmatpush1.msra.mxu0 %v9823
    %9835 = vmatprep.subr.mxu0 0.0
    %9836 = vmatpush1.msra.mxu0 0.0
    %9837 = vmatprep.subr.mxu0 0.0
    %9838 = vmatpush1.msra.mxu0 0.0
    %9839 = vmatprep.subr.mxu0 0.0
    %9840 = vmatpush1.msra.mxu0 0.0
    %9841 = vmatprep.subr.mxu0 0.0
    %9842 = vmatpush1.msra.mxu0 0.0
    %9843 = vmatprep.subr.mxu0 0.0
    %9844 = vmatpush1.msra.mxu0 0.0
    %9845 = vmatprep.subr.mxu0 0.0
    %9846 = vmatpush1.msra.mxu0 0.0
    %9847 = vmatprep.subr.mxu0 0.0
    %9848 = vmatpush1.msra.mxu0 0.0
    %9849 = vmatprep.subr.mxu0 0.0
    %9850 = vmatpush1.msra.mxu0 0.0
    %9851 = vmatprep.subr.mxu0 0.0
    %9852 = vmatpush1.msra.mxu0 0.0
    %9853 = vmatprep.subr.mxu0 0.0
    %9854 = vmatpush1.msra.mxu0 0.0
    %9855 = vmatprep.subr.mxu0 0.0
    %9856 = vmatpush1.msra.mxu0 0.0
    %9857 = vmatprep.subr.mxu0 0.0
    %9858 = vmatpush1.msra.mxu0 0.0
    %9859 = vmatprep.subr.mxu0 0.0
    %9860 = vmatpush1.msra.mxu0 0.0
    %9861 = vmatprep.subr.mxu0 0.0
    %9862 = vmatpush1.msra.mxu0 0.0
    %9863 = vmatprep.subr.mxu0 0.0
    %9864 = vmatpush1.msra.mxu0 0.0
    %9865 = vmatprep.subr.mxu0 0.0
    %9866 = vmatpush1.msra.mxu0 0.0
    %9867 = vmatprep.subr.mxu0 0.0
    %9868 = vmatpush1.msra.mxu0 0.0
    %9869 = vmatprep.subr.mxu0 0.0
    %9870 = vmatpush1.msra.mxu0 0.0
    %9871 = vmatprep.subr.mxu0 0.0
    %9872 = vmatpush1.msra.mxu0 0.0
    %9873 = vmatprep.subr.mxu0 0.0
    %9874 = vmatpush1.msra.mxu0 0.0
    %9875 = vmatprep.subr.mxu0 0.0
    %9876 = vmatpush1.msra.mxu0 0.0
    %9877 = vmatprep.subr.mxu0 0.0
    %9878 = vmatpush1.msra.mxu0 0.0
    %9879 = vmatprep.subr.mxu0 0.0
    %9880 = vmatpush1.msra.mxu0 0.0
    %9881 = vmatprep.subr.mxu0 0.0
    %9882 = vmatpush1.msra.mxu0 0.0
    %9883 = vmatprep.subr.mxu0 0.0
    %9884 = vmatpush1.msra.mxu0 0.0
    %9885 = vmatprep.subr.mxu0 0.0
    %9886 = vmatpush1.msra.mxu0 0.0
    %9887 = vmatprep.subr.mxu0 0.0
    %9888 = vmatpush1.msra.mxu0 0.0
    %9889 = vmatprep.subr.mxu0 0.0
    %9890 = vmatpush1.msra.mxu0 0.0
    %9891 = vmatprep.mubr.f32.mxu0 0.0
    %9892 = vmatmul.mubr.f32.gmra.mrb[0].mxu0 %v9825
    %v9893 = vpop.f32.mrb[0].mxu0
    %v9894 = vadd.f32 0.0, %v9893
    %v9895 = vpop.f32.mrb[0].mxu0
    %9896 = vdwg.mxu0
    %v9897 = vadd.f32 %v9743, %v9894
    %s9898 = scalar_lea.vmem [#allocation14], 28
    %v9899 = vld [vmem:[%s9898] sm:$0x3]
    %v9901 = vsel %vm7746, %v9899, 0
    %9903 = vmatprep.subr.mxu0 0.0
    %9904 = vmatpush1.msra.mxu0 %v7741
    %9905 = vmatprep.subr.mxu0 0.0
    %9906 = vmatpush1.msra.mxu0 %v7742
    %9907 = vmatprep.subr.mxu0 0.0
    %9908 = vmatpush1.msra.mxu0 %v7743
    %9909 = vmatprep.subr.mxu0 0.0
    %9910 = vmatpush1.msra.mxu0 %v7744
    %9911 = vmatprep.subr.mxu0 0.0
    %9912 = vmatpush1.msra.mxu0 0.0
    %9913 = vmatprep.subr.mxu0 0.0
    %9914 = vmatpush1.msra.mxu0 0.0
    %9915 = vmatprep.subr.mxu0 0.0
    %9916 = vmatpush1.msra.mxu0 0.0
    %9917 = vmatprep.subr.mxu0 0.0
    %9918 = vmatpush1.msra.mxu0 0.0
    %9919 = vmatprep.subr.mxu0 0.0
    %9920 = vmatpush1.msra.mxu0 0.0
    %9921 = vmatprep.subr.mxu0 0.0
    %9922 = vmatpush1.msra.mxu0 0.0
    %9923 = vmatprep.subr.mxu0 0.0
    %9924 = vmatpush1.msra.mxu0 0.0
    %9925 = vmatprep.subr.mxu0 0.0
    %9926 = vmatpush1.msra.mxu0 0.0
    %9927 = vmatprep.subr.mxu0 0.0
    %9928 = vmatpush1.msra.mxu0 0.0
    %9929 = vmatprep.subr.mxu0 0.0
    %9930 = vmatpush1.msra.mxu0 0.0
    %9931 = vmatprep.subr.mxu0 0.0
    %9932 = vmatpush1.msra.mxu0 0.0
    %9933 = vmatprep.subr.mxu0 0.0
    %9934 = vmatpush1.msra.mxu0 0.0
    %9935 = vmatprep.subr.mxu0 0.0
    %9936 = vmatpush1.msra.mxu0 0.0
    %9937 = vmatprep.subr.mxu0 0.0
    %9938 = vmatpush1.msra.mxu0 0.0
    %9939 = vmatprep.subr.mxu0 0.0
    %9940 = vmatpush1.msra.mxu0 0.0
    %9941 = vmatprep.subr.mxu0 0.0
    %9942 = vmatpush1.msra.mxu0 0.0
    %9943 = vmatprep.subr.mxu0 0.0
    %9944 = vmatpush1.msra.mxu0 0.0
    %9945 = vmatprep.subr.mxu0 0.0
    %9946 = vmatpush1.msra.mxu0 0.0
    %9947 = vmatprep.subr.mxu0 0.0
    %9948 = vmatpush1.msra.mxu0 0.0
    %9949 = vmatprep.subr.mxu0 0.0
    %9950 = vmatpush1.msra.mxu0 0.0
    %9951 = vmatprep.subr.mxu0 0.0
    %9952 = vmatpush1.msra.mxu0 0.0
    %9953 = vmatprep.subr.mxu0 0.0
    %9954 = vmatpush1.msra.mxu0 0.0
    %9955 = vmatprep.subr.mxu0 0.0
    %9956 = vmatpush1.msra.mxu0 0.0
    %9957 = vmatprep.subr.mxu0 0.0
    %9958 = vmatpush1.msra.mxu0 0.0
    %9959 = vmatprep.subr.mxu0 0.0
    %9960 = vmatpush1.msra.mxu0 0.0
    %9961 = vmatprep.subr.mxu0 0.0
    %9962 = vmatpush1.msra.mxu0 0.0
    %9963 = vmatprep.subr.mxu0 0.0
    %9964 = vmatpush1.msra.mxu0 0.0
    %9965 = vmatprep.subr.mxu0 0.0
    %9966 = vmatpush1.msra.mxu0 0.0
    %9967 = vmatprep.mubr.f32.mxu0 0.0
    %9968 = vmatmul.mubr.f32.gmra.mrb[0].mxu0 %v9901
    %v9969 = vpop.f32.mrb[0].mxu0
    %v9970 = vadd.f32 0.0, %v9969
    %v9971 = vpop.f32.mrb[0].mxu0
    %9972 = vdwg.mxu0
    %s9973 = scalar_lea.vmem %s10, 448
    %v9974 = vld [vmem:[%s9973] sm:$0xff]
    %v9975 = vld [vmem:[%s9973 + $0x8] sm:$0xff]
    %v9976 = vld [vmem:[%s9973 + $0x10] sm:$0xff]
    %v9977 = vld [vmem:[%s9973 + $0x18] sm:$0xff]
    %v9979 = vsel %vm7746, %v9970, 0
    %9981 = vmatprep.subr.mxu0 0.0
    %9982 = vmatpush1.msra.mxu0 %v9974
    %9983 = vmatprep.subr.mxu0 0.0
    %9984 = vmatpush1.msra.mxu0 %v9975
    %9985 = vmatprep.subr.mxu0 0.0
    %9986 = vmatpush1.msra.mxu0 %v9976
    %9987 = vmatprep.subr.mxu0 0.0
    %9988 = vmatpush1.msra.mxu0 %v9977
    %9989 = vmatprep.subr.mxu0 0.0
    %9990 = vmatpush1.msra.mxu0 0.0
    %9991 = vmatprep.subr.mxu0 0.0
    %9992 = vmatpush1.msra.mxu0 0.0
    %9993 = vmatprep.subr.mxu0 0.0
    %9994 = vmatpush1.msra.mxu0 0.0
    %9995 = vmatprep.subr.mxu0 0.0
    %9996 = vmatpush1.msra.mxu0 0.0
    %9997 = vmatprep.subr.mxu0 0.0
    %9998 = vmatpush1.msra.mxu0 0.0
    %9999 = vmatprep.subr.mxu0 0.0
    %10000 = vmatpush1.msra.mxu0 0.0
    %10001 = vmatprep.subr.mxu0 0.0
    %10002 = vmatpush1.msra.mxu0 0.0
    %10003 = vmatprep.subr.mxu0 0.0
    %10004 = vmatpush1.msra.mxu0 0.0
    %10005 = vmatprep.subr.mxu0 0.0
    %10006 = vmatpush1.msra.mxu0 0.0
    %10007 = vmatprep.subr.mxu0 0.0
    %10008 = vmatpush1.msra.mxu0 0.0
    %10009 = vmatprep.subr.mxu0 0.0
    %10010 = vmatpush1.msra.mxu0 0.0
    %10011 = vmatprep.subr.mxu0 0.0
    %10012 = vmatpush1.msra.mxu0 0.0
    %10013 = vmatprep.subr.mxu0 0.0
    %10014 = vmatpush1.msra.mxu0 0.0
    %10015 = vmatprep.subr.mxu0 0.0
    %10016 = vmatpush1.msra.mxu0 0.0
    %10017 = vmatprep.subr.mxu0 0.0
    %10018 = vmatpush1.msra.mxu0 0.0
    %10019 = vmatprep.subr.mxu0 0.0
    %10020 = vmatpush1.msra.mxu0 0.0
    %10021 = vmatprep.subr.mxu0 0.0
    %10022 = vmatpush1.msra.mxu0 0.0
    %10023 = vmatprep.subr.mxu0 0.0
    %10024 = vmatpush1.msra.mxu0 0.0
    %10025 = vmatprep.subr.mxu0 0.0
    %10026 = vmatpush1.msra.mxu0 0.0
    %10027 = vmatprep.subr.mxu0 0.0
    %10028 = vmatpush1.msra.mxu0 0.0
    %10029 = vmatprep.subr.mxu0 0.0
    %10030 = vmatpush1.msra.mxu0 0.0
    %10031 = vmatprep.subr.mxu0 0.0
    %10032 = vmatpush1.msra.mxu0 0.0
    %10033 = vmatprep.subr.mxu0 0.0
    %10034 = vmatpush1.msra.mxu0 0.0
    %10035 = vmatprep.subr.mxu0 0.0
    %10036 = vmatpush1.msra.mxu0 0.0
    %10037 = vmatprep.subr.mxu0 0.0
    %10038 = vmatpush1.msra.mxu0 0.0
    %10039 = vmatprep.subr.mxu0 0.0
    %10040 = vmatpush1.msra.mxu0 0.0
    %10041 = vmatprep.subr.mxu0 0.0
    %10042 = vmatpush1.msra.mxu0 0.0
    %10043 = vmatprep.subr.mxu0 0.0
    %10044 = vmatpush1.msra.mxu0 0.0
    %10045 = vmatprep.mubr.f32.mxu0 0.0
    %10046 = vmatmul.mubr.f32.gmra.mrb[0].mxu0 %v9979
    %v10047 = vpop.f32.mrb[0].mxu0
    %v10048 = vadd.f32 0.0, %v10047
    %v10049 = vpop.f32.mrb[0].mxu0
    %10050 = vdwg.mxu0
    %v10051 = vadd.f32 %v9897, %v10048
    %s10052 = scalar_lea.vmem [#allocation14], 30
    %v10053 = vld [vmem:[%s10052] sm:$0x3]
    %v10055 = vsel %vm7746, %v10053, 0
    %10057 = vmatprep.subr.mxu0 0.0
    %10058 = vmatpush1.msra.mxu0 %v7741
    %10059 = vmatprep.subr.mxu0 0.0
    %10060 = vmatpush1.msra.mxu0 %v7742
    %10061 = vmatprep.subr.mxu0 0.0
    %10062 = vmatpush1.msra.mxu0 %v7743
    %10063 = vmatprep.subr.mxu0 0.0
    %10064 = vmatpush1.msra.mxu0 %v7744
    %10065 = vmatprep.subr.mxu0 0.0
    %10066 = vmatpush1.msra.mxu0 0.0
    %10067 = vmatprep.subr.mxu0 0.0
    %10068 = vmatpush1.msra.mxu0 0.0
    %10069 = vmatprep.subr.mxu0 0.0
    %10070 = vmatpush1.msra.mxu0 0.0
    %10071 = vmatprep.subr.mxu0 0.0
    %10072 = vmatpush1.msra.mxu0 0.0
    %10073 = vmatprep.subr.mxu0 0.0
    %10074 = vmatpush1.msra.mxu0 0.0
    %10075 = vmatprep.subr.mxu0 0.0
    %10076 = vmatpush1.msra.mxu0 0.0
    %10077 = vmatprep.subr.mxu0 0.0
    %10078 = vmatpush1.msra.mxu0 0.0
    %10079 = vmatprep.subr.mxu0 0.0
    %10080 = vmatpush1.msra.mxu0 0.0
    %10081 = vmatprep.subr.mxu0 0.0
    %10082 = vmatpush1.msra.mxu0 0.0
    %10083 = vmatprep.subr.mxu0 0.0
    %10084 = vmatpush1.msra.mxu0 0.0
    %10085 = vmatprep.subr.mxu0 0.0
    %10086 = vmatpush1.msra.mxu0 0.0
    %10087 = vmatprep.subr.mxu0 0.0
    %10088 = vmatpush1.msra.mxu0 0.0
    %10089 = vmatprep.subr.mxu0 0.0
    %10090 = vmatpush1.msra.mxu0 0.0
    %10091 = vmatprep.subr.mxu0 0.0
    %10092 = vmatpush1.msra.mxu0 0.0
    %10093 = vmatprep.subr.mxu0 0.0
    %10094 = vmatpush1.msra.mxu0 0.0
    %10095 = vmatprep.subr.mxu0 0.0
    %10096 = vmatpush1.msra.mxu0 0.0
    %10097 = vmatprep.subr.mxu0 0.0
    %10098 = vmatpush1.msra.mxu0 0.0
    %10099 = vmatprep.subr.mxu0 0.0
    %10100 = vmatpush1.msra.mxu0 0.0
    %10101 = vmatprep.subr.mxu0 0.0
    %10102 = vmatpush1.msra.mxu0 0.0
    %10103 = vmatprep.subr.mxu0 0.0
    %10104 = vmatpush1.msra.mxu0 0.0
    %10105 = vmatprep.subr.mxu0 0.0
    %10106 = vmatpush1.msra.mxu0 0.0
    %10107 = vmatprep.subr.mxu0 0.0
    %10108 = vmatpush1.msra.mxu0 0.0
    %10109 = vmatprep.subr.mxu0 0.0
    %10110 = vmatpush1.msra.mxu0 0.0
    %10111 = vmatprep.subr.mxu0 0.0
    %10112 = vmatpush1.msra.mxu0 0.0
    %10113 = vmatprep.subr.mxu0 0.0
    %10114 = vmatpush1.msra.mxu0 0.0
    %10115 = vmatprep.subr.mxu0 0.0
    %10116 = vmatpush1.msra.mxu0 0.0
    %10117 = vmatprep.subr.mxu0 0.0
    %10118 = vmatpush1.msra.mxu0 0.0
    %10119 = vmatprep.subr.mxu0 0.0
    %10120 = vmatpush1.msra.mxu0 0.0
    %10121 = vmatprep.mubr.f32.mxu0 0.0
    %10122 = vmatmul.mubr.f32.gmra.mrb[0].mxu0 %v10055
    %v10123 = vpop.f32.mrb[0].mxu0
    %v10124 = vadd.f32 0.0, %v10123
    %v10125 = vpop.f32.mrb[0].mxu0
    %10126 = vdwg.mxu0
    %s10127 = scalar_lea.vmem %s10, 480
    %v10128 = vld [vmem:[%s10127] sm:$0xff]
    %v10129 = vld [vmem:[%s10127 + $0x8] sm:$0xff]
    %v10130 = vld [vmem:[%s10127 + $0x10] sm:$0xff]
    %v10131 = vld [vmem:[%s10127 + $0x18] sm:$0xff]
    %v10133 = vsel %vm7746, %v10124, 0
    %10135 = vmatprep.subr.mxu0 0.0
    %10136 = vmatpush1.msra.mxu0 %v10128
    %10137 = vmatprep.subr.mxu0 0.0
    %10138 = vmatpush1.msra.mxu0 %v10129
    %10139 = vmatprep.subr.mxu0 0.0
    %10140 = vmatpush1.msra.mxu0 %v10130
    %10141 = vmatprep.subr.mxu0 0.0
    %10142 = vmatpush1.msra.mxu0 %v10131
    %10143 = vmatprep.subr.mxu0 0.0
    %10144 = vmatpush1.msra.mxu0 0.0
    %10145 = vmatprep.subr.mxu0 0.0
    %10146 = vmatpush1.msra.mxu0 0.0
    %10147 = vmatprep.subr.mxu0 0.0
    %10148 = vmatpush1.msra.mxu0 0.0
    %10149 = vmatprep.subr.mxu0 0.0
    %10150 = vmatpush1.msra.mxu0 0.0
    %10151 = vmatprep.subr.mxu0 0.0
    %10152 = vmatpush1.msra.mxu0 0.0
    %10153 = vmatprep.subr.mxu0 0.0
    %10154 = vmatpush1.msra.mxu0 0.0
    %10155 = vmatprep.subr.mxu0 0.0
    %10156 = vmatpush1.msra.mxu0 0.0
    %10157 = vmatprep.subr.mxu0 0.0
    %10158 = vmatpush1.msra.mxu0 0.0
    %10159 = vmatprep.subr.mxu0 0.0
    %10160 = vmatpush1.msra.mxu0 0.0
    %10161 = vmatprep.subr.mxu0 0.0
    %10162 = vmatpush1.msra.mxu0 0.0
    %10163 = vmatprep.subr.mxu0 0.0
    %10164 = vmatpush1.msra.mxu0 0.0
    %10165 = vmatprep.subr.mxu0 0.0
    %10166 = vmatpush1.msra.mxu0 0.0
    %10167 = vmatprep.subr.mxu0 0.0
    %10168 = vmatpush1.msra.mxu0 0.0
    %10169 = vmatprep.subr.mxu0 0.0
    %10170 = vmatpush1.msra.mxu0 0.0
    %10171 = vmatprep.subr.mxu0 0.0
    %10172 = vmatpush1.msra.mxu0 0.0
    %10173 = vmatprep.subr.mxu0 0.0
    %10174 = vmatpush1.msra.mxu0 0.0
    %10175 = vmatprep.subr.mxu0 0.0
    %10176 = vmatpush1.msra.mxu0 0.0
    %10177 = vmatprep.subr.mxu0 0.0
    %10178 = vmatpush1.msra.mxu0 0.0
    %10179 = vmatprep.subr.mxu0 0.0
    %10180 = vmatpush1.msra.mxu0 0.0
    %10181 = vmatprep.subr.mxu0 0.0
    %10182 = vmatpush1.msra.mxu0 0.0
    %10183 = vmatprep.subr.mxu0 0.0
    %10184 = vmatpush1.msra.mxu0 0.0
    %10185 = vmatprep.subr.mxu0 0.0
    %10186 = vmatpush1.msra.mxu0 0.0
    %10187 = vmatprep.subr.mxu0 0.0
    %10188 = vmatpush1.msra.mxu0 0.0
    %10189 = vmatprep.subr.mxu0 0.0
    %10190 = vmatpush1.msra.mxu0 0.0
    %10191 = vmatprep.subr.mxu0 0.0
    %10192 = vmatpush1.msra.mxu0 0.0
    %10193 = vmatprep.subr.mxu0 0.0
    %10194 = vmatpush1.msra.mxu0 0.0
    %10195 = vmatprep.subr.mxu0 0.0
    %10196 = vmatpush1.msra.mxu0 0.0
    %10197 = vmatprep.subr.mxu0 0.0
    %10198 = vmatpush1.msra.mxu0 0.0
    %10199 = vmatprep.mubr.f32.mxu0 0.0
    %10200 = vmatmul.mubr.f32.gmra.mrb[0].mxu0 %v10133
    %v10201 = vpop.f32.mrb[0].mxu0
    %v10202 = vadd.f32 0.0, %v10201
    %v10203 = vpop.f32.mrb[0].mxu0
    %10204 = vdwg.mxu0
    %v10205 = vadd.f32 %v10051, %v10202
    %v10206 = vld [vmem:[#allocation16] sm:$0x1]
    %v10208 = vlaneseq
    %v10209 = vshrl.u32 %v10208, 7
    %v10210 = vsub.s32 0, %v10209
    %v10211 = vrot.slane %v10206, %v10210
    %v10213 = vadd.f32 %v10205, %v10211
    %v10214 = vmax.f32 %v10213, 0.0
    %v10215 = vld [vmem:[%s12] sm:$0xff]
    %v10216 = vld [vmem:[%s12 + $0x8] sm:$0xff]
    %v10217 = vld [vmem:[%s12 + $0x10] sm:$0xff]
    %v10218 = vld [vmem:[%s12 + $0x18] sm:$0xff]
    %v10219 = vld [vmem:[%s12 + $0x20] sm:$0xff]
    %v10220 = vld [vmem:[%s12 + $0x28] sm:$0xff]
    %v10221 = vld [vmem:[%s12 + $0x30] sm:$0xff]
    %v10222 = vld [vmem:[%s12 + $0x38] sm:$0xff]
    %v10223 = vld [vmem:[#allocation17] sm:$0x1]
    %v10225 = vlaneseq
    %v10226 = vshrl.u32 %v10225, 7
    %v10227 = vsub.s32 0, %v10226
    %v10228 = vrot.slane %v10223, %v10227
    %vm10230 = vcmask 523264
    %v10232 = vsel %vm10230, %v10214, 0
    %10234 = vmatprep.subr.mxu0 0.0
    %10235 = vmatpush1.msra.mxu0 %v10215
    %10236 = vmatprep.subr.mxu0 0.0
    %10237 = vmatpush1.msra.mxu0 %v10216
    %10238 = vmatprep.subr.mxu0 0.0
    %10239 = vmatpush1.msra.mxu0 %v10217
    %10240 = vmatprep.subr.mxu0 0.0
    %10241 = vmatpush1.msra.mxu0 %v10218
    %10242 = vmatprep.subr.mxu0 0.0
    %10243 = vmatpush1.msra.mxu0 %v10219
    %10244 = vmatprep.subr.mxu0 0.0
    %10245 = vmatpush1.msra.mxu0 %v10220
    %10246 = vmatprep.subr.mxu0 0.0
    %10247 = vmatpush1.msra.mxu0 %v10221
    %10248 = vmatprep.subr.mxu0 0.0
    %10249 = vmatpush1.msra.mxu0 %v10222
    %10250 = vmatprep.subr.mxu0 0.0
    %10251 = vmatpush1.msra.mxu0 0.0
    %10252 = vmatprep.subr.mxu0 0.0
    %10253 = vmatpush1.msra.mxu0 0.0
    %10254 = vmatprep.subr.mxu0 0.0
    %10255 = vmatpush1.msra.mxu0 0.0
    %10256 = vmatprep.subr.mxu0 0.0
    %10257 = vmatpush1.msra.mxu0 0.0
    %10258 = vmatprep.subr.mxu0 0.0
    %10259 = vmatpush1.msra.mxu0 0.0
    %10260 = vmatprep.subr.mxu0 0.0
    %10261 = vmatpush1.msra.mxu0 0.0
    %10262 = vmatprep.subr.mxu0 0.0
    %10263 = vmatpush1.msra.mxu0 0.0
    %10264 = vmatprep.subr.mxu0 0.0
    %10265 = vmatpush1.msra.mxu0 0.0
    %10266 = vmatprep.subr.mxu0 0.0
    %10267 = vmatpush1.msra.mxu0 0.0
    %10268 = vmatprep.subr.mxu0 0.0
    %10269 = vmatpush1.msra.mxu0 0.0
    %10270 = vmatprep.subr.mxu0 0.0
    %10271 = vmatpush1.msra.mxu0 0.0
    %10272 = vmatprep.subr.mxu0 0.0
    %10273 = vmatpush1.msra.mxu0 0.0
    %10274 = vmatprep.subr.mxu0 0.0
    %10275 = vmatpush1.msra.mxu0 0.0
    %10276 = vmatprep.subr.mxu0 0.0
    %10277 = vmatpush1.msra.mxu0 0.0
    %10278 = vmatprep.subr.mxu0 0.0
    %10279 = vmatpush1.msra.mxu0 0.0
    %10280 = vmatprep.subr.mxu0 0.0
    %10281 = vmatpush1.msra.mxu0 0.0
    %10282 = vmatprep.subr.mxu0 0.0
    %10283 = vmatpush1.msra.mxu0 0.0
    %10284 = vmatprep.subr.mxu0 0.0
    %10285 = vmatpush1.msra.mxu0 0.0
    %10286 = vmatprep.subr.mxu0 0.0
    %10287 = vmatpush1.msra.mxu0 0.0
    %10288 = vmatprep.subr.mxu0 0.0
    %10289 = vmatpush1.msra.mxu0 0.0
    %10290 = vmatprep.subr.mxu0 0.0
    %10291 = vmatpush1.msra.mxu0 0.0
    %10292 = vmatprep.subr.mxu0 0.0
    %10293 = vmatpush1.msra.mxu0 0.0
    %10294 = vmatprep.subr.mxu0 0.0
    %10295 = vmatpush1.msra.mxu0 0.0
    %10296 = vmatprep.subr.mxu0 0.0
    %10297 = vmatpush1.msra.mxu0 0.0
    %10298 = vmatprep.mubr.f32.mxu0 0.0
    %10299 = vmatmul.mubr.f32.gmra.mrb[0].mxu0 %v10232
    %v10300 = vpop.f32.mrb[0].mxu0
    %v10301 = vadd.f32 %v10228, %v10300
    %v10302 = vpop.f32.mrb[0].mxu0
    %10303 = vdwg.mxu0
    %vm10304 = vcmask 254976
    %10305 = vst.msk [vmem:[#allocation19] sm:$0x3] %vm10304, %v10301
    // Predicated region
    $region98: #{lip_trainer_forward.1} parent=1 // pred_check
      _
    $region99: #{lip_trainer_forward.1} parent=1 // pred_check_branch
      %10307 = sbr.rel (0) target = $region101
    $region100: #{lip_trainer_forward.1} parent=1 // pred_region
      %s10309 = ssub.s32 32, 32
      %10310 = vsyncadd [#allocation4], %s10309
      %s10312 = sshll.u32 [#allocation19], 4
      %s10313 = int_to_ptr.vmem [resolvable:$true] %s10312
      %10315 = dma.vmem_to_hbm [thread:$0]  %s10313, 32, %s14, [#allocation4]
    $region101: #{lip_trainer_forward.1} parent=1 // pred_fallthru
      _
    // Predicated region
    $region102: #{lip_trainer_forward.1} parent=1 // pred_check
      _
    $region103: #{lip_trainer_forward.1} parent=1 // pred_check_branch
      %10317 = sbr.rel (0) target = $region105
    $region104: #{lip_trainer_forward.1} parent=1 // pred_region
      %10318 = dma.done [#allocation4], 32
    $region105: #{lip_trainer_forward.1} parent=1 // pred_fallthru
      _
    %10319 = vsyncpa [#allocation3], 1
    %10320 = vsyncpa [#allocation6], 1
    %10321 = vsyncpa [#allocation9], 1
    %10322 = vsyncpa [#allocation12], 1
    %10323 = vsyncpa [#allocation15], 1
    %10324 = vsyncpa [#allocation18], 1
    %10325 = vsyncpa [#allocation4], 1

</llo_original>
